<compile_context>
chip_gen: v7x
topology: tpu7x:2x2x1
jax: 0.10.0
libtpu: 0.0.40
codegen_flags: <defaults>
</compile_context>

<pallas_src>
import jax
import jax.numpy as jnp
from jax import lax
from jax.experimental import pallas as pl
from jax.experimental.pallas import tpu as pltpu

THICKNESS = 8        # nn.Conv2d out_channels ("thickness")
LATENT = 16          # latent_space
IN_CHANNEL = 1
IMG = 28             # 28 -> 14 -> 7  (SHRINKAGE = 7)
NEG_SLOPE = 0.01     # nn.LeakyReLU default
BN_EPS = 1e-5        # nn.BatchNorm2d default


def _lrelu(x):
    return jnp.maximum(x, NEG_SLOPE * x)


# ----------------------------- host-side weight / selection-matrix prep ------

def _toeplitz(w, width):
    """(F, Cin, 3, 3) conv weight -> (3, Cin*width, F*width) row-Toeplitz mats.

    T[ky, c*width + wi, f*width + wo] = w[f, c, ky, wi - wo + 1] when the kx
    offset is in [0, 3), else 0 (encodes the horizontal zero padding)."""
    wi = jnp.arange(width)[:, None]
    wo = jnp.arange(width)[None, :]
    kx = wi - wo + 1
    valid = ((kx >= 0) & (kx < 3)).astype(jnp.float32)
    kxc = jnp.clip(kx, 0, 2)
    t = w.astype(jnp.float32)[:, :, :, kxc] * valid[None, None, None]
    # (F, Cin, 3, wi, wo) -> (ky, Cin, wi, F, wo)
    t = jnp.transpose(t, (2, 1, 3, 0, 4))
    f, cin = w.shape[0], w.shape[1]
    return t.reshape(3, cin * width, f * width)


def _bias_row(b, width):
    """(F,) bias -> (1, F*width) row broadcast over width positions."""
    return jnp.repeat(b.astype(jnp.float32), width).reshape(1, -1)


def _channel_mats(c, width):
    """Channel-sum (C*W, C) 0/1 matrix and its transpose (for BN stats)."""
    ch = jnp.arange(c * width) // width
    s = (ch[:, None] == jnp.arange(c)[None, :]).astype(jnp.float32)
    return s, s.T


def _pool_lane_sel(c, width):
    """(2, C*width, C*(width//2)) even/odd lane-selection matrices (W pooling)."""
    half = width // 2
    rows = jnp.arange(c * width)
    cols = jnp.arange(c * half)
    cr, wr = rows // width, rows % width
    cc, jc = cols // half, cols % half
    same_c = cr[:, None] == cc[None, :]
    even = (same_c & (wr[:, None] == 2 * jc[None, :])).astype(jnp.float32)
    odd = (same_c & (wr[:, None] == 2 * jc[None, :] + 1)).astype(jnp.float32)
    return jnp.stack([even, odd])


def _pool_row_sel(h, n):
    """(2, (h//2)*n, h*n) even/odd row-selection matrices (H pooling),
    for the row layout row = h*n + sample."""
    rows = jnp.arange((h // 2) * n)
    cols = jnp.arange(h * n)
    jr, nr = rows // n, rows % n
    hc, nc = cols // n, cols % n
    same_n = nr[:, None] == nc[None, :]
    even = (same_n & (hc[None, :] == 2 * jr[:, None])).astype(jnp.float32)
    odd = (same_n & (hc[None, :] == 2 * jr[:, None] + 1)).astype(jnp.float32)
    return jnp.stack([even, odd])


def _head_weights(mean_w, mean_b, std_w, std_b, c, hh):
    """Concat mean/std heads and permute to slab layout.

    Returns wh: (hh, c*hh, 2L) with wh[h, c*hh + w, l] = Wcat[l, c*hh*hh + h*hh + w]
    (PyTorch Flatten order), and bh: (1, 2L)."""
    wcat = jnp.concatenate([mean_w, std_w], axis=0).astype(jnp.float32)
    twol = wcat.shape[0]
    wr = wcat.reshape(twol, c, hh, hh)
    wh = jnp.transpose(wr, (2, 1, 3, 0)).reshape(hh, c * hh, twol)
    bh = jnp.concatenate([mean_b, std_b]).astype(jnp.float32).reshape(1, twol)
    return wh, bh


# ----------------------------- fused Pallas kernel ---------------------------

def _encoder_kernel(x_ref,
                    t1, b1, t2, b2, t3, b3, g1, bt1, s1, s1t, psel1, gsel1,
                    t4, b4, t5, b5, t6, b6, g2, bt2, s2, s2t, psel2, gsel2,
                    wh, bh,
                    mean_ref, std_ref,
                    pad1, pad2):
    n = mean_ref.shape[0]
    latent = mean_ref.shape[1]
    h1 = x_ref.shape[0] // n - 2       # 28
    h2 = h1 // 2                       # 14
    h3 = h2 // 2                       # 7
    cw1 = t1.shape[2]                  # C*28
    cw2 = t4.shape[2]                  # C*14

    def conv(src_ref, t_ref, b_ref, h):
        # src_ref: vertically padded slab ((h+2)*n, K); t_ref: (3, K, FW)
        out = None
        for ky in range(3):
            lhs = src_ref[ky * n:(ky + h) * n, :]                       # (h*n, K)
            term = jnp.dot(lhs, t_ref[ky], preferred_element_type=jnp.float32)
            out = term if out is None else out + term
        return out + b_ref[...]                                         # (1, FW) bias row

    def batchnorm(x, g_ref, bt_ref, s_ref, st_ref):
        width = s_ref.shape[0] // s_ref.shape[1]
        cnt = float(x.shape[0] * width)                                 # N*H*W per channel
        sums = jnp.sum(x, axis=0, keepdims=True)                        # (1, CW)
        sqs = jnp.sum(x * x, axis=0, keepdims=True)
        mean_c = jnp.dot(sums, s_ref[...], preferred_element_type=jnp.float32) / cnt
        msq_c = jnp.dot(sqs, s_ref[...], preferred_element_type=jnp.float32) / cnt
        var_c = jnp.maximum(msq_c - mean_c * mean_c, 0.0)               # biased var, clamped
        scale_c = g_ref[...] * lax.rsqrt(var_c + BN_EPS)                # (1, C)
        shift_c = bt_ref[...] - mean_c * scale_c
        scale = jnp.dot(scale_c, st_ref[...], preferred_element_type=jnp.float32)   # (1, CW)
        shift = jnp.dot(shift_c, st_ref[...], preferred_element_type=jnp.float32)
        return x * scale + shift

    def maxpool(x, psel_ref, gsel_ref):
        # lane (W) compaction from the right, row (H) compaction from the left
        xc = jnp.maximum(
            jnp.dot(x, psel_ref[0], preferred_element_type=jnp.float32),
            jnp.dot(x, psel_ref[1], preferred_element_type=jnp.float32))
        return jnp.maximum(
            jnp.dot(gsel_ref[0], xc, preferred_element_type=jnp.float32),
            jnp.dot(gsel_ref[1], xc, preferred_element_type=jnp.float32))

    # ---------------- stage 1 : 28x28 ----------------
    act = _lrelu(conv(x_ref, t1, b1, h1))                   # (h1*n, cw1)

    zero1 = jnp.zeros((n, cw1), jnp.float32)                # zero borders ONCE
    pad1[0:n, :] = zero1
    pad1[(h1 + 1) * n:(h1 + 2) * n, :] = zero1

    pad1[n:(h1 + 1) * n, :] = act
    act = _lrelu(conv(pad1, t2, b2, h1))
    pad1[n:(h1 + 1) * n, :] = act
    act = _lrelu(conv(pad1, t3, b3, h1))

    act = batchnorm(act, g1, bt1, s1, s1t)
    act = maxpool(act, psel1, gsel1)                        # (h2*n, cw2)

    # ---------------- stage 2 : 14x14 ----------------
    zero2 = jnp.zeros((n, cw2), jnp.float32)
    pad2[0:n, :] = zero2
    pad2[(h2 + 1) * n:(h2 + 2) * n, :] = zero2

    pad2[n:(h2 + 1) * n, :] = act
    act = _lrelu(conv(pad2, t4, b4, h2))
    pad2[n:(h2 + 1) * n, :] = act
    act = _lrelu(conv(pad2, t5, b5, h2))
    pad2[n:(h2 + 1) * n, :] = act
    act = _lrelu(conv(pad2, t6, b6, h2))

    act = batchnorm(act, g2, bt2, s2, s2t)
    feat = maxpool(act, psel2, gsel2)                       # (h3*n, c*h3)

    # ---------------- fused heads (Flatten + Linear x2) ----------------
    logits = jnp.zeros((n, 2 * latent), jnp.float32) + bh[...]
    for hh in range(h3):
        logits = logits + jnp.dot(feat[hh * n:(hh + 1) * n, :], wh[hh],
                                  preferred_element_type=jnp.float32)
    m = logits[:, :latent]
    mean_ref[...] = jnp.maximum(m, NEG_SLOPE * m)           # LeakyReLU
    std_ref[...] = jnp.exp(logits[:, latent:])              # exp head


# ----------------------------- wrapper ---------------------------------------

def encoder_forward(params, x, return_std=True):
    n, cin, himg, wimg = x.shape
    c = params['conv1_w'].shape[0]
    latent = params['mean_w'].shape[0]
    h1, w1 = himg, wimg
    h2, w2 = h1 // 2, w1 // 2
    h3 = h2 // 2
    cw1, cw2 = c * w1, c * w2
    f32 = jnp.float32

    # Input slab: rows = padded_h * N + sample, lanes = cin*W + w
    x_t = jnp.transpose(x.astype(f32), (2, 0, 1, 3))        # (H, N, Cin, W)
    x_t = jnp.pad(x_t, ((1, 1), (0, 0), (0, 0), (0, 0)))    # vertical zero pad
    x_slab = x_t.reshape((h1 + 2) * n, cin * w1)

    s1, s1t = _channel_mats(c, w1)
    s2, s2t = _channel_mats(c, w2)
    psel1, psel2 = _pool_lane_sel(c, w1), _pool_lane_sel(c, w2)
    gsel1, gsel2 = _pool_row_sel(h1, n), _pool_row_sel(h2, n)
    wh, bh = _head_weights(params['mean_w'], params['mean_b'],
                           params['std_w'], params['std_b'], c, h3)

    ops = [
        x_slab,
        _toeplitz(params['conv1_w'], w1), _bias_row(params['conv1_b'], w1),
        _toeplitz(params['conv2_w'], w1), _bias_row(params['conv2_b'], w1),
        _toeplitz(params['conv3_w'], w1), _bias_row(params['conv3_b'], w1),
        params['bn1_g'].astype(f32).reshape(1, c),
        params['bn1_b'].astype(f32).reshape(1, c),
        s1, s1t, psel1, gsel1,
        _toeplitz(params['conv4_w'], w2), _bias_row(params['conv4_b'], w2),
        _toeplitz(params['conv5_w'], w2), _bias_row(params['conv5_b'], w2),
        _toeplitz(params['conv6_w'], w2), _bias_row(params['conv6_b'], w2),
        params['bn2_g'].astype(f32).reshape(1, c),
        params['bn2_b'].astype(f32).reshape(1, c),
        s2, s2t, psel2, gsel2,
        wh, bh,
    ]

    mean, std = pl.pallas_call(
        _encoder_kernel,
        out_shape=(jax.ShapeDtypeStruct((n, latent), f32),
                   jax.ShapeDtypeStruct((n, latent), f32)),
        in_specs=[pl.BlockSpec(memory_space=pltpu.MemorySpace.VMEM)] * len(ops),
        out_specs=(pl.BlockSpec(memory_space=pltpu.MemorySpace.VMEM),
                   pl.BlockSpec(memory_space=pltpu.MemorySpace.VMEM)),
        scratch_shapes=[
            pltpu.VMEM(((h1 + 2) * n, cw1), f32),    # padded 28x28-stage slab
            pltpu.VMEM(((h2 + 2) * n, cw2), f32),    # padded 14x14-stage slab
        ],
    )(*ops)

    if return_std:
        return mean, std
    return mean


# ----------------------------- params & reference ----------------------------

def init_params(key, thickness=THICKNESS, latent=LATENT, in_channel=IN_CHANNEL):
    ks = jax.random.split(key, 16)
    nrm = lambda k, shp, s: s * jax.random.normal(k, shp, jnp.float32)
    p = {}
    p['conv1_w'] = nrm(ks[0], (thickness, in_channel, 3, 3), 0.2)
    p['conv1_b'] = nrm(ks[1], (thickness,), 0.1)
    p['conv2_w'] = nrm(ks[2], (thickness, thickness, 3, 3), 0.1)
    p['conv2_b'] = nrm(ks[3], (thickness,), 0.1)
    p['conv3_w'] = nrm(ks[4], (thickness, thickness, 3, 3), 0.1)
    p['conv3_b'] = nrm(ks[5], (thickness,), 0.1)
    p['bn1_g'] = 1.0 + 0.1 * jax.random.normal(ks[6], (thickness,), jnp.float32)
    p['bn1_b'] = 0.1 * jax.random.normal(ks[7], (thickness,), jnp.float32)
    p['conv4_w'] = nrm(ks[8], (thickness, thickness, 3, 3), 0.1)
    p['conv4_b'] = nrm(ks[9], (thickness,), 0.1)
    p['conv5_w'] = nrm(ks[10], (thickness, thickness, 3, 3), 0.1)
    p['conv5_b'] = nrm(ks[11], (thickness,), 0.1)
    p['conv6_w'] = nrm(ks[12], (thickness, thickness, 3, 3), 0.1)
    p['conv6_b'] = nrm(ks[13], (thickness,), 0.1)
    p['bn2_g'] = 1.0 + 0.1 * jax.random.normal(ks[14], (thickness,), jnp.float32)
    p['bn2_b'] = jnp.zeros((thickness,), jnp.float32)
    k2 = jax.random.split(ks[15], 4)
    kdim = thickness * 7 * 7
    p['mean_w'] = 0.05 * jax.random.normal(k2[0], (latent, kdim), jnp.float32)
    p['mean_b'] = 0.05 * jax.random.normal(k2[1], (latent,), jnp.float32)
    p['std_w'] = 0.05 * jax.random.normal(k2[2], (latent, kdim), jnp.float32)
    p['std_b'] = 0.05 * jax.random.normal(k2[3], (latent,), jnp.float32)
    return p


def reference_forward(params, x, return_std=True):
    """Pure-JAX (XLA) reference mirroring the PyTorch forward, for validation."""
    prec = lax.Precision.HIGHEST

    def conv(h, w, b):
        y = lax.conv_general_dilated(h, w, (1, 1), 'SAME',
                                     dimension_numbers=('NCHW', 'OIHW', 'NCHW'),
                                     precision=prec)
        return y + b[None, :, None, None]

    def bn(h, g, bt):
        mu = jnp.mean(h, axis=(0, 2, 3), keepdims=True)
        var = jnp.mean(h * h, axis=(0, 2, 3), keepdims=True) - mu * mu
        return (h - mu) * lax.rsqrt(var + BN_EPS) * g[None, :, None, None] + bt[None, :, None, None]

    def pool(h):
        return lax.reduce_window(h, -jnp.inf, lax.max, (1, 1, 2, 2), (1, 1, 2, 2), 'VALID')

    h = x
    h = _lrelu(conv(h, params['conv1_w'], params['conv1_b']))
    h = _lrelu(conv(h, params['conv2_w'], params['conv2_b']))
    h = _lrelu(conv(h, params['conv3_w'], params['conv3_b']))
    h = pool(bn(h, params['bn1_g'], params['bn1_b']))
    h = _lrelu(conv(h, params['conv4_w'], params['conv4_b']))
    h = _lrelu(conv(h, params['conv5_w'], params['conv5_b']))
    h = _lrelu(conv(h, params['conv6_w'], params['conv6_b']))
    h = pool(bn(h, params['bn2_g'], params['bn2_b']))
    flat = h.reshape(h.shape[0], -1)
    mean = _lrelu(flat @ params['mean_w'].T + params['mean_b'])
    std = jnp.exp(flat @ params['std_w'].T + params['std_b'])
    if return_std:
        return mean, std
    return mean


if __name__ == "__main__":
    key = jax.random.PRNGKey(0)
    kx, kp = jax.random.split(key)
    x = jax.random.normal(kx, (2, IN_CHANNEL, IMG, IMG), jnp.float32)
    params = init_params(kp)

    mean, std = encoder_forward(params, x, return_std=True)
    jax.block_until_ready((mean, std))

    ref_mean, ref_std = reference_forward(params, x, return_std=True)
    assert mean.shape == (2, LATENT) and std.shape == (2, LATENT)
    assert jnp.allclose(mean, ref_mean, rtol=1e-2, atol=1e-2), "mean mismatch vs reference"
    assert jnp.allclose(std, ref_std, rtol=1e-2, atol=1e-2), "std mismatch vs reference"
    print("KERNEL_OK")
</pallas_src>

<mosaic_0001>
module attributes {stable_mosaic.version = 11 : i64} {
  func.func @_encoder_kernel(%arg0: memref<60x28xf32, #tpu.memory_space<vmem>>, %arg1: memref<3x28x224xf32, #tpu.memory_space<vmem>>, %arg2: memref<1x224xf32, #tpu.memory_space<vmem>>, %arg3: memref<3x224x224xf32, #tpu.memory_space<vmem>>, %arg4: memref<1x224xf32, #tpu.memory_space<vmem>>, %arg5: memref<3x224x224xf32, #tpu.memory_space<vmem>>, %arg6: memref<1x224xf32, #tpu.memory_space<vmem>>, %arg7: memref<1x8xf32, #tpu.memory_space<vmem>>, %arg8: memref<1x8xf32, #tpu.memory_space<vmem>>, %arg9: memref<224x8xf32, #tpu.memory_space<vmem>>, %arg10: memref<8x224xf32, #tpu.memory_space<vmem>>, %arg11: memref<2x224x112xf32, #tpu.memory_space<vmem>>, %arg12: memref<2x28x56xf32, #tpu.memory_space<vmem>>, %arg13: memref<3x112x112xf32, #tpu.memory_space<vmem>>, %arg14: memref<1x112xf32, #tpu.memory_space<vmem>>, %arg15: memref<3x112x112xf32, #tpu.memory_space<vmem>>, %arg16: memref<1x112xf32, #tpu.memory_space<vmem>>, %arg17: memref<3x112x112xf32, #tpu.memory_space<vmem>>, %arg18: memref<1x112xf32, #tpu.memory_space<vmem>>, %arg19: memref<1x8xf32, #tpu.memory_space<vmem>>, %arg20: memref<1x8xf32, #tpu.memory_space<vmem>>, %arg21: memref<112x8xf32, #tpu.memory_space<vmem>>, %arg22: memref<8x112xf32, #tpu.memory_space<vmem>>, %arg23: memref<2x112x56xf32, #tpu.memory_space<vmem>>, %arg24: memref<2x14x28xf32, #tpu.memory_space<vmem>>, %arg25: memref<7x56x32xf32, #tpu.memory_space<vmem>>, %arg26: memref<1x32xf32, #tpu.memory_space<vmem>>, %arg27: memref<2x16xf32, #tpu.memory_space<vmem>>, %arg28: memref<2x16xf32, #tpu.memory_space<vmem>>, %arg29: memref<60x224xf32, #tpu.memory_space<vmem>>, %arg30: memref<32x112xf32, #tpu.memory_space<vmem>>) attributes {dimension_semantics = [], scalar_prefetch = 0 : i64, scratch_operands = 2 : i64, tpu.core_type = #tpu.core_type<tc>} {
    %c0 = arith.constant 0 : index
    %c0_0 = arith.constant 0 : index
    %0 = vector.load %arg0[%c0, %c0_0] : memref<60x28xf32, #tpu.memory_space<vmem>>, vector<56x28xf32>
    %c0_1 = arith.constant 0 : index
    %c0_2 = arith.constant 0 : index
    %c0_3 = arith.constant 0 : index
    %1 = vector.load %arg1[%c0_1, %c0_2, %c0_3] : memref<3x28x224xf32, #tpu.memory_space<vmem>>, vector<1x28x224xf32>
    %2 = vector.shape_cast %1 : vector<1x28x224xf32> to vector<28x224xf32>
    %cst = arith.constant dense<0.000000e+00> : vector<56x224xf32>
    %3 = tpu.matmul %0, %2, %cst {dimension_numbers = #tpu.dot_dimension_numbers<[1], [0], [0], [1], [0, 0, 1, 1], [], []>} : vector<56x28xf32>, vector<28x224xf32>, vector<56x224xf32> -> vector<56x224xf32>
    %c2 = arith.constant 2 : index
    %c0_4 = arith.constant 0 : index
    %4 = vector.load %arg0[%c2, %c0_4] : memref<60x28xf32, #tpu.memory_space<vmem>>, vector<56x28xf32>
    %c1 = arith.constant 1 : index
    %c0_5 = arith.constant 0 : index
    %c0_6 = arith.constant 0 : index
    %5 = vector.load %arg1[%c1, %c0_5, %c0_6] : memref<3x28x224xf32, #tpu.memory_space<vmem>>, vector<1x28x224xf32>
    %6 = vector.shape_cast %5 : vector<1x28x224xf32> to vector<28x224xf32>
    %cst_7 = arith.constant dense<0.000000e+00> : vector<56x224xf32>
    %7 = tpu.matmul %4, %6, %cst_7 {dimension_numbers = #tpu.dot_dimension_numbers<[1], [0], [0], [1], [0, 0, 1, 1], [], []>} : vector<56x28xf32>, vector<28x224xf32>, vector<56x224xf32> -> vector<56x224xf32>
    %8 = arith.addf %3, %7 : vector<56x224xf32>
    %c4 = arith.constant 4 : index
    %c0_8 = arith.constant 0 : index
    %9 = vector.load %arg0[%c4, %c0_8] : memref<60x28xf32, #tpu.memory_space<vmem>>, vector<56x28xf32>
    %c2_9 = arith.constant 2 : index
    %c0_10 = arith.constant 0 : index
    %c0_11 = arith.constant 0 : index
    %10 = vector.load %arg1[%c2_9, %c0_10, %c0_11] : memref<3x28x224xf32, #tpu.memory_space<vmem>>, vector<1x28x224xf32>
    %11 = vector.shape_cast %10 : vector<1x28x224xf32> to vector<28x224xf32>
    %cst_12 = arith.constant dense<0.000000e+00> : vector<56x224xf32>
    %12 = tpu.matmul %9, %11, %cst_12 {dimension_numbers = #tpu.dot_dimension_numbers<[1], [0], [0], [1], [0, 0, 1, 1], [], []>} : vector<56x28xf32>, vector<28x224xf32>, vector<56x224xf32> -> vector<56x224xf32>
    %13 = arith.addf %8, %12 : vector<56x224xf32>
    %c0_13 = arith.constant 0 : index
    %c0_14 = arith.constant 0 : index
    %14 = vector.load %arg2[%c0_13, %c0_14] : memref<1x224xf32, #tpu.memory_space<vmem>>, vector<1x224xf32>
    %15 = vector.broadcast %14 : vector<1x224xf32> to vector<56x224xf32>
    %16 = arith.addf %13, %15 : vector<56x224xf32>
    %cst_15 = arith.constant 0.00999999977 : f32
    %17 = vector.broadcast %cst_15 : f32 to vector<56x224xf32>
    %18 = arith.mulf %17, %16 : vector<56x224xf32>
    %19 = arith.maximumf %16, %18 : vector<56x224xf32>
    %cst_16 = arith.constant 0.000000e+00 : f32
    %20 = vector.broadcast %cst_16 : f32 to vector<2x224xf32>
    %c0_17 = arith.constant 0 : index
    %c0_18 = arith.constant 0 : index
    %21 = vector.load %arg29[%c0_17, %c0_18] : memref<60x224xf32, #tpu.memory_space<vmem>>, vector<2x224xf32>
    tpu.vector_store %arg29[%c0_17, %c0_18], %20 {strides = array<i32>} : memref<60x224xf32, #tpu.memory_space<vmem>>, vector<2x224xf32>,
    %c58 = arith.constant 58 : index
    %c0_19 = arith.constant 0 : index
    %22 = vector.load %arg29[%c58, %c0_19] : memref<60x224xf32, #tpu.memory_space<vmem>>, vector<2x224xf32>
    tpu.vector_store %arg29[%c58, %c0_19], %20 {strides = array<i32>} : memref<60x224xf32, #tpu.memory_space<vmem>>, vector<2x224xf32>,
    %c2_20 = arith.constant 2 : index
    %c0_21 = arith.constant 0 : index
    %23 = vector.load %arg29[%c2_20, %c0_21] : memref<60x224xf32, #tpu.memory_space<vmem>>, vector<56x224xf32>
    tpu.vector_store %arg29[%c2_20, %c0_21], %19 {strides = array<i32>} : memref<60x224xf32, #tpu.memory_space<vmem>>, vector<56x224xf32>,
    %c0_22 = arith.constant 0 : index
    %c0_23 = arith.constant 0 : index
    %24 = vector.load %arg29[%c0_22, %c0_23] : memref<60x224xf32, #tpu.memory_space<vmem>>, vector<56x224xf32>
    %c0_24 = arith.constant 0 : index
    %c0_25 = arith.constant 0 : index
    %c0_26 = arith.constant 0 : index
    %25 = vector.load %arg3[%c0_24, %c0_25, %c0_26] : memref<3x224x224xf32, #tpu.memory_space<vmem>>, vector<1x224x224xf32>
    %26 = vector.shape_cast %25 : vector<1x224x224xf32> to vector<224x224xf32>
    %cst_27 = arith.constant dense<0.000000e+00> : vector<56x224xf32>
    %27 = tpu.matmul %24, %26, %cst_27 {dimension_numbers = #tpu.dot_dimension_numbers<[1], [0], [0], [1], [0, 0, 1, 1], [], []>} : vector<56x224xf32>, vector<224x224xf32>, vector<56x224xf32> -> vector<56x224xf32>
    %c2_28 = arith.constant 2 : index
    %c0_29 = arith.constant 0 : index
    %28 = vector.load %arg29[%c2_28, %c0_29] : memref<60x224xf32, #tpu.memory_space<vmem>>, vector<56x224xf32>
    %c1_30 = arith.constant 1 : index
    %c0_31 = arith.constant 0 : index
    %c0_32 = arith.constant 0 : index
    %29 = vector.load %arg3[%c1_30, %c0_31, %c0_32] : memref<3x224x224xf32, #tpu.memory_space<vmem>>, vector<1x224x224xf32>
    %30 = vector.shape_cast %29 : vector<1x224x224xf32> to vector<224x224xf32>
    %cst_33 = arith.constant dense<0.000000e+00> : vector<56x224xf32>
    %31 = tpu.matmul %28, %30, %cst_33 {dimension_numbers = #tpu.dot_dimension_numbers<[1], [0], [0], [1], [0, 0, 1, 1], [], []>} : vector<56x224xf32>, vector<224x224xf32>, vector<56x224xf32> -> vector<56x224xf32>
    %32 = arith.addf %27, %31 : vector<56x224xf32>
    %c4_34 = arith.constant 4 : index
    %c0_35 = arith.constant 0 : index
    %33 = vector.load %arg29[%c4_34, %c0_35] : memref<60x224xf32, #tpu.memory_space<vmem>>, vector<56x224xf32>
    %c2_36 = arith.constant 2 : index
    %c0_37 = arith.constant 0 : index
    %c0_38 = arith.constant 0 : index
    %34 = vector.load %arg3[%c2_36, %c0_37, %c0_38] : memref<3x224x224xf32, #tpu.memory_space<vmem>>, vector<1x224x224xf32>
    %35 = vector.shape_cast %34 : vector<1x224x224xf32> to vector<224x224xf32>
    %cst_39 = arith.constant dense<0.000000e+00> : vector<56x224xf32>
    %36 = tpu.matmul %33, %35, %cst_39 {dimension_numbers = #tpu.dot_dimension_numbers<[1], [0], [0], [1], [0, 0, 1, 1], [], []>} : vector<56x224xf32>, vector<224x224xf32>, vector<56x224xf32> -> vector<56x224xf32>
    %37 = arith.addf %32, %36 : vector<56x224xf32>
    %c0_40 = arith.constant 0 : index
    %c0_41 = arith.constant 0 : index
    %38 = vector.load %arg4[%c0_40, %c0_41] : memref<1x224xf32, #tpu.memory_space<vmem>>, vector<1x224xf32>
    %39 = vector.broadcast %38 : vector<1x224xf32> to vector<56x224xf32>
    %40 = arith.addf %37, %39 : vector<56x224xf32>
    %cst_42 = arith.constant 0.00999999977 : f32
    %41 = vector.broadcast %cst_42 : f32 to vector<56x224xf32>
    %42 = arith.mulf %41, %40 : vector<56x224xf32>
    %43 = arith.maximumf %40, %42 : vector<56x224xf32>
    %c2_43 = arith.constant 2 : index
    %c0_44 = arith.constant 0 : index
    %44 = vector.load %arg29[%c2_43, %c0_44] : memref<60x224xf32, #tpu.memory_space<vmem>>, vector<56x224xf32>
    tpu.vector_store %arg29[%c2_43, %c0_44], %43 {strides = array<i32>} : memref<60x224xf32, #tpu.memory_space<vmem>>, vector<56x224xf32>,
    %c0_45 = arith.constant 0 : index
    %c0_46 = arith.constant 0 : index
    %45 = vector.load %arg29[%c0_45, %c0_46] : memref<60x224xf32, #tpu.memory_space<vmem>>, vector<56x224xf32>
    %c0_47 = arith.constant 0 : index
    %c0_48 = arith.constant 0 : index
    %c0_49 = arith.constant 0 : index
    %46 = vector.load %arg5[%c0_47, %c0_48, %c0_49] : memref<3x224x224xf32, #tpu.memory_space<vmem>>, vector<1x224x224xf32>
    %47 = vector.shape_cast %46 : vector<1x224x224xf32> to vector<224x224xf32>
    %cst_50 = arith.constant dense<0.000000e+00> : vector<56x224xf32>
    %48 = tpu.matmul %45, %47, %cst_50 {dimension_numbers = #tpu.dot_dimension_numbers<[1], [0], [0], [1], [0, 0, 1, 1], [], []>} : vector<56x224xf32>, vector<224x224xf32>, vector<56x224xf32> -> vector<56x224xf32>
    %c2_51 = arith.constant 2 : index
    %c0_52 = arith.constant 0 : index
    %49 = vector.load %arg29[%c2_51, %c0_52] : memref<60x224xf32, #tpu.memory_space<vmem>>, vector<56x224xf32>
    %c1_53 = arith.constant 1 : index
    %c0_54 = arith.constant 0 : index
    %c0_55 = arith.constant 0 : index
    %50 = vector.load %arg5[%c1_53, %c0_54, %c0_55] : memref<3x224x224xf32, #tpu.memory_space<vmem>>, vector<1x224x224xf32>
    %51 = vector.shape_cast %50 : vector<1x224x224xf32> to vector<224x224xf32>
    %cst_56 = arith.constant dense<0.000000e+00> : vector<56x224xf32>
    %52 = tpu.matmul %49, %51, %cst_56 {dimension_numbers = #tpu.dot_dimension_numbers<[1], [0], [0], [1], [0, 0, 1, 1], [], []>} : vector<56x224xf32>, vector<224x224xf32>, vector<56x224xf32> -> vector<56x224xf32>
    %53 = arith.addf %48, %52 : vector<56x224xf32>
    %c4_57 = arith.constant 4 : index
    %c0_58 = arith.constant 0 : index
    %54 = vector.load %arg29[%c4_57, %c0_58] : memref<60x224xf32, #tpu.memory_space<vmem>>, vector<56x224xf32>
    %c2_59 = arith.constant 2 : index
    %c0_60 = arith.constant 0 : index
    %c0_61 = arith.constant 0 : index
    %55 = vector.load %arg5[%c2_59, %c0_60, %c0_61] : memref<3x224x224xf32, #tpu.memory_space<vmem>>, vector<1x224x224xf32>
    %56 = vector.shape_cast %55 : vector<1x224x224xf32> to vector<224x224xf32>
    %cst_62 = arith.constant dense<0.000000e+00> : vector<56x224xf32>
    %57 = tpu.matmul %54, %56, %cst_62 {dimension_numbers = #tpu.dot_dimension_numbers<[1], [0], [0], [1], [0, 0, 1, 1], [], []>} : vector<56x224xf32>, vector<224x224xf32>, vector<56x224xf32> -> vector<56x224xf32>
    %58 = arith.addf %53, %57 : vector<56x224xf32>
    %c0_63 = arith.constant 0 : index
    %c0_64 = arith.constant 0 : index
    %59 = vector.load %arg6[%c0_63, %c0_64] : memref<1x224xf32, #tpu.memory_space<vmem>>, vector<1x224xf32>
    %60 = vector.broadcast %59 : vector<1x224xf32> to vector<56x224xf32>
    %61 = arith.addf %58, %60 : vector<56x224xf32>
    %cst_65 = arith.constant 0.00999999977 : f32
    %62 = vector.broadcast %cst_65 : f32 to vector<56x224xf32>
    %63 = arith.mulf %62, %61 : vector<56x224xf32>
    %64 = arith.maximumf %61, %63 : vector<56x224xf32>
    %cst_66 = arith.constant dense<0.000000e+00> : vector<224xf32>
    %65 = vector.multi_reduction <add>, %64, %cst_66 [0] : vector<56x224xf32> to vector<224xf32>
    %66 = vector.shape_cast %65 : vector<224xf32> to vector<1x224xf32>
    %67 = arith.mulf %64, %64 : vector<56x224xf32>
    %cst_67 = arith.constant dense<0.000000e+00> : vector<224xf32>
    %68 = vector.multi_reduction <add>, %67, %cst_67 [0] : vector<56x224xf32> to vector<224xf32>
    %69 = vector.shape_cast %68 : vector<224xf32> to vector<1x224xf32>
    %c0_68 = arith.constant 0 : index
    %c0_69 = arith.constant 0 : index
    %70 = vector.load %arg9[%c0_68, %c0_69] : memref<224x8xf32, #tpu.memory_space<vmem>>, vector<224x8xf32>
    %cst_70 = arith.constant dense<0.000000e+00> : vector<1x8xf32>
    %71 = tpu.matmul %66, %70, %cst_70 {dimension_numbers = #tpu.dot_dimension_numbers<[1], [0], [0], [1], [0, 0, 1, 1], [], []>} : vector<1x224xf32>, vector<224x8xf32>, vector<1x8xf32> -> vector<1x8xf32>
    %cst_71 = arith.constant 1.568000e+03 : f32
    %72 = vector.broadcast %cst_71 : f32 to vector<1x8xf32>
    %73 = arith.divf %71, %72 : vector<1x8xf32>
    %c0_72 = arith.constant 0 : index
    %c0_73 = arith.constant 0 : index
    %74 = vector.load %arg9[%c0_72, %c0_73] : memref<224x8xf32, #tpu.memory_space<vmem>>, vector<224x8xf32>
    %cst_74 = arith.constant dense<0.000000e+00> : vector<1x8xf32>
    %75 = tpu.matmul %69, %74, %cst_74 {dimension_numbers = #tpu.dot_dimension_numbers<[1], [0], [0], [1], [0, 0, 1, 1], [], []>} : vector<1x224xf32>, vector<224x8xf32>, vector<1x8xf32> -> vector<1x8xf32>
    %cst_75 = arith.constant 1.568000e+03 : f32
    %76 = vector.broadcast %cst_75 : f32 to vector<1x8xf32>
    %77 = arith.divf %75, %76 : vector<1x8xf32>
    %78 = arith.mulf %73, %73 : vector<1x8xf32>
    %79 = arith.subf %77, %78 : vector<1x8xf32>
    %cst_76 = arith.constant 0.000000e+00 : f32
    %80 = vector.broadcast %cst_76 : f32 to vector<1x8xf32>
    %81 = arith.maximumf %79, %80 : vector<1x8xf32>
    %c0_77 = arith.constant 0 : index
    %c0_78 = arith.constant 0 : index
    %82 = vector.load %arg7[%c0_77, %c0_78] : memref<1x8xf32, #tpu.memory_space<vmem>>, vector<1x8xf32>
    %cst_79 = arith.constant 9.99999974E-6 : f32
    %83 = vector.broadcast %cst_79 : f32 to vector<1x8xf32>
    %84 = arith.addf %81, %83 : vector<1x8xf32>
    %85 = math.rsqrt %84 : vector<1x8xf32>
    %86 = arith.mulf %82, %85 : vector<1x8xf32>
    %c0_80 = arith.constant 0 : index
    %c0_81 = arith.constant 0 : index
    %87 = vector.load %arg8[%c0_80, %c0_81] : memref<1x8xf32, #tpu.memory_space<vmem>>, vector<1x8xf32>
    %88 = arith.mulf %73, %86 : vector<1x8xf32>
    %89 = arith.subf %87, %88 : vector<1x8xf32>
    %c0_82 = arith.constant 0 : index
    %c0_83 = arith.constant 0 : index
    %90 = vector.load %arg10[%c0_82, %c0_83] : memref<8x224xf32, #tpu.memory_space<vmem>>, vector<8x224xf32>
    %cst_84 = arith.constant dense<0.000000e+00> : vector<1x224xf32>
    %91 = tpu.matmul %86, %90, %cst_84 {dimension_numbers = #tpu.dot_dimension_numbers<[1], [0], [0], [1], [0, 0, 1, 1], [], []>} : vector<1x8xf32>, vector<8x224xf32>, vector<1x224xf32> -> vector<1x224xf32>
    %c0_85 = arith.constant 0 : index
    %c0_86 = arith.constant 0 : index
    %92 = vector.load %arg10[%c0_85, %c0_86] : memref<8x224xf32, #tpu.memory_space<vmem>>, vector<8x224xf32>
    %cst_87 = arith.constant dense<0.000000e+00> : vector<1x224xf32>
    %93 = tpu.matmul %89, %92, %cst_87 {dimension_numbers = #tpu.dot_dimension_numbers<[1], [0], [0], [1], [0, 0, 1, 1], [], []>} : vector<1x8xf32>, vector<8x224xf32>, vector<1x224xf32> -> vector<1x224xf32>
    %94 = vector.broadcast %91 : vector<1x224xf32> to vector<56x224xf32>
    %95 = arith.mulf %64, %94 : vector<56x224xf32>
    %96 = vector.broadcast %93 : vector<1x224xf32> to vector<56x224xf32>
    %97 = arith.addf %95, %96 : vector<56x224xf32>
    %c0_88 = arith.constant 0 : index
    %c0_89 = arith.constant 0 : index
    %c0_90 = arith.constant 0 : index
    %98 = vector.load %arg11[%c0_88, %c0_89, %c0_90] : memref<2x224x112xf32, #tpu.memory_space<vmem>>, vector<1x224x112xf32>
    %99 = vector.shape_cast %98 : vector<1x224x112xf32> to vector<224x112xf32>
    %cst_91 = arith.constant dense<0.000000e+00> : vector<56x112xf32>
    %100 = tpu.matmul %97, %99, %cst_91 {dimension_numbers = #tpu.dot_dimension_numbers<[1], [0], [0], [1], [0, 0, 1, 1], [], []>} : vector<56x224xf32>, vector<224x112xf32>, vector<56x112xf32> -> vector<56x112xf32>
    %c1_92 = arith.constant 1 : index
    %c0_93 = arith.constant 0 : index
    %c0_94 = arith.constant 0 : index
    %101 = vector.load %arg11[%c1_92, %c0_93, %c0_94] : memref<2x224x112xf32, #tpu.memory_space<vmem>>, vector<1x224x112xf32>
    %102 = vector.shape_cast %101 : vector<1x224x112xf32> to vector<224x112xf32>
    %cst_95 = arith.constant dense<0.000000e+00> : vector<56x112xf32>
    %103 = tpu.matmul %97, %102, %cst_95 {dimension_numbers = #tpu.dot_dimension_numbers<[1], [0], [0], [1], [0, 0, 1, 1], [], []>} : vector<56x224xf32>, vector<224x112xf32>, vector<56x112xf32> -> vector<56x112xf32>
    %104 = arith.maximumf %100, %103 : vector<56x112xf32>
    %c0_96 = arith.constant 0 : index
    %c0_97 = arith.constant 0 : index
    %c0_98 = arith.constant 0 : index
    %105 = vector.load %arg12[%c0_96, %c0_97, %c0_98] : memref<2x28x56xf32, #tpu.memory_space<vmem>>, vector<1x28x56xf32>
    %106 = vector.shape_cast %105 : vector<1x28x56xf32> to vector<28x56xf32>
    %cst_99 = arith.constant dense<0.000000e+00> : vector<28x112xf32>
    %107 = tpu.matmul %106, %104, %cst_99 {dimension_numbers = #tpu.dot_dimension_numbers<[1], [0], [0], [1], [0, 0, 1, 1], [], []>} : vector<28x56xf32>, vector<56x112xf32>, vector<28x112xf32> -> vector<28x112xf32>
    %c1_100 = arith.constant 1 : index
    %c0_101 = arith.constant 0 : index
    %c0_102 = arith.constant 0 : index
    %108 = vector.load %arg12[%c1_100, %c0_101, %c0_102] : memref<2x28x56xf32, #tpu.memory_space<vmem>>, vector<1x28x56xf32>
    %109 = vector.shape_cast %108 : vector<1x28x56xf32> to vector<28x56xf32>
    %cst_103 = arith.constant dense<0.000000e+00> : vector<28x112xf32>
    %110 = tpu.matmul %109, %104, %cst_103 {dimension_numbers = #tpu.dot_dimension_numbers<[1], [0], [0], [1], [0, 0, 1, 1], [], []>} : vector<28x56xf32>, vector<56x112xf32>, vector<28x112xf32> -> vector<28x112xf32>
    %111 = arith.maximumf %107, %110 : vector<28x112xf32>
    %cst_104 = arith.constant 0.000000e+00 : f32
    %112 = vector.broadcast %cst_104 : f32 to vector<2x112xf32>
    %c0_105 = arith.constant 0 : index
    %c0_106 = arith.constant 0 : index
    %113 = vector.load %arg30[%c0_105, %c0_106] : memref<32x112xf32, #tpu.memory_space<vmem>>, vector<2x112xf32>
    tpu.vector_store %arg30[%c0_105, %c0_106], %112 {strides = array<i32>} : memref<32x112xf32, #tpu.memory_space<vmem>>, vector<2x112xf32>,
    %c30 = arith.constant 30 : index
    %c0_107 = arith.constant 0 : index
    %114 = vector.load %arg30[%c30, %c0_107] : memref<32x112xf32, #tpu.memory_space<vmem>>, vector<2x112xf32>
    tpu.vector_store %arg30[%c30, %c0_107], %112 {strides = array<i32>} : memref<32x112xf32, #tpu.memory_space<vmem>>, vector<2x112xf32>,
    %c2_108 = arith.constant 2 : index
    %c0_109 = arith.constant 0 : index
    %115 = vector.load %arg30[%c2_108, %c0_109] : memref<32x112xf32, #tpu.memory_space<vmem>>, vector<28x112xf32>
    tpu.vector_store %arg30[%c2_108, %c0_109], %111 {strides = array<i32>} : memref<32x112xf32, #tpu.memory_space<vmem>>, vector<28x112xf32>,
    %c0_110 = arith.constant 0 : index
    %c0_111 = arith.constant 0 : index
    %116 = vector.load %arg30[%c0_110, %c0_111] : memref<32x112xf32, #tpu.memory_space<vmem>>, vector<28x112xf32>
    %c0_112 = arith.constant 0 : index
    %c0_113 = arith.constant 0 : index
    %c0_114 = arith.constant 0 : index
    %117 = vector.load %arg13[%c0_112, %c0_113, %c0_114] : memref<3x112x112xf32, #tpu.memory_space<vmem>>, vector<1x112x112xf32>
    %118 = vector.shape_cast %117 : vector<1x112x112xf32> to vector<112x112xf32>
    %cst_115 = arith.constant dense<0.000000e+00> : vector<28x112xf32>
    %119 = tpu.matmul %116, %118, %cst_115 {dimension_numbers = #tpu.dot_dimension_numbers<[1], [0], [0], [1], [0, 0, 1, 1], [], []>} : vector<28x112xf32>, vector<112x112xf32>, vector<28x112xf32> -> vector<28x112xf32>
    %c2_116 = arith.constant 2 : index
    %c0_117 = arith.constant 0 : index
    %120 = vector.load %arg30[%c2_116, %c0_117] : memref<32x112xf32, #tpu.memory_space<vmem>>, vector<28x112xf32>
    %c1_118 = arith.constant 1 : index
    %c0_119 = arith.constant 0 : index
    %c0_120 = arith.constant 0 : index
    %121 = vector.load %arg13[%c1_118, %c0_119, %c0_120] : memref<3x112x112xf32, #tpu.memory_space<vmem>>, vector<1x112x112xf32>
    %122 = vector.shape_cast %121 : vector<1x112x112xf32> to vector<112x112xf32>
    %cst_121 = arith.constant dense<0.000000e+00> : vector<28x112xf32>
    %123 = tpu.matmul %120, %122, %cst_121 {dimension_numbers = #tpu.dot_dimension_numbers<[1], [0], [0], [1], [0, 0, 1, 1], [], []>} : vector<28x112xf32>, vector<112x112xf32>, vector<28x112xf32> -> vector<28x112xf32>
    %124 = arith.addf %119, %123 : vector<28x112xf32>
    %c4_122 = arith.constant 4 : index
    %c0_123 = arith.constant 0 : index
    %125 = vector.load %arg30[%c4_122, %c0_123] : memref<32x112xf32, #tpu.memory_space<vmem>>, vector<28x112xf32>
    %c2_124 = arith.constant 2 : index
    %c0_125 = arith.constant 0 : index
    %c0_126 = arith.constant 0 : index
    %126 = vector.load %arg13[%c2_124, %c0_125, %c0_126] : memref<3x112x112xf32, #tpu.memory_space<vmem>>, vector<1x112x112xf32>
    %127 = vector.shape_cast %126 : vector<1x112x112xf32> to vector<112x112xf32>
    %cst_127 = arith.constant dense<0.000000e+00> : vector<28x112xf32>
    %128 = tpu.matmul %125, %127, %cst_127 {dimension_numbers = #tpu.dot_dimension_numbers<[1], [0], [0], [1], [0, 0, 1, 1], [], []>} : vector<28x112xf32>, vector<112x112xf32>, vector<28x112xf32> -> vector<28x112xf32>
    %129 = arith.addf %124, %128 : vector<28x112xf32>
    %c0_128 = arith.constant 0 : index
    %c0_129 = arith.constant 0 : index
    %130 = vector.load %arg14[%c0_128, %c0_129] : memref<1x112xf32, #tpu.memory_space<vmem>>, vector<1x112xf32>
    %131 = vector.broadcast %130 : vector<1x112xf32> to vector<28x112xf32>
    %132 = arith.addf %129, %131 : vector<28x112xf32>
    %cst_130 = arith.constant 0.00999999977 : f32
    %133 = vector.broadcast %cst_130 : f32 to vector<28x112xf32>
    %134 = arith.mulf %133, %132 : vector<28x112xf32>
    %135 = arith.maximumf %132, %134 : vector<28x112xf32>
    %c2_131 = arith.constant 2 : index
    %c0_132 = arith.constant 0 : index
    %136 = vector.load %arg30[%c2_131, %c0_132] : memref<32x112xf32, #tpu.memory_space<vmem>>, vector<28x112xf32>
    tpu.vector_store %arg30[%c2_131, %c0_132], %135 {strides = array<i32>} : memref<32x112xf32, #tpu.memory_space<vmem>>, vector<28x112xf32>,
    %c0_133 = arith.constant 0 : index
    %c0_134 = arith.constant 0 : index
    %137 = vector.load %arg30[%c0_133, %c0_134] : memref<32x112xf32, #tpu.memory_space<vmem>>, vector<28x112xf32>
    %c0_135 = arith.constant 0 : index
    %c0_136 = arith.constant 0 : index
    %c0_137 = arith.constant 0 : index
    %138 = vector.load %arg15[%c0_135, %c0_136, %c0_137] : memref<3x112x112xf32, #tpu.memory_space<vmem>>, vector<1x112x112xf32>
    %139 = vector.shape_cast %138 : vector<1x112x112xf32> to vector<112x112xf32>
    %cst_138 = arith.constant dense<0.000000e+00> : vector<28x112xf32>
    %140 = tpu.matmul %137, %139, %cst_138 {dimension_numbers = #tpu.dot_dimension_numbers<[1], [0], [0], [1], [0, 0, 1, 1], [], []>} : vector<28x112xf32>, vector<112x112xf32>, vector<28x112xf32> -> vector<28x112xf32>
    %c2_139 = arith.constant 2 : index
    %c0_140 = arith.constant 0 : index
    %141 = vector.load %arg30[%c2_139, %c0_140] : memref<32x112xf32, #tpu.memory_space<vmem>>, vector<28x112xf32>
    %c1_141 = arith.constant 1 : index
    %c0_142 = arith.constant 0 : index
    %c0_143 = arith.constant 0 : index
    %142 = vector.load %arg15[%c1_141, %c0_142, %c0_143] : memref<3x112x112xf32, #tpu.memory_space<vmem>>, vector<1x112x112xf32>
    %143 = vector.shape_cast %142 : vector<1x112x112xf32> to vector<112x112xf32>
    %cst_144 = arith.constant dense<0.000000e+00> : vector<28x112xf32>
    %144 = tpu.matmul %141, %143, %cst_144 {dimension_numbers = #tpu.dot_dimension_numbers<[1], [0], [0], [1], [0, 0, 1, 1], [], []>} : vector<28x112xf32>, vector<112x112xf32>, vector<28x112xf32> -> vector<28x112xf32>
    %145 = arith.addf %140, %144 : vector<28x112xf32>
    %c4_145 = arith.constant 4 : index
    %c0_146 = arith.constant 0 : index
    %146 = vector.load %arg30[%c4_145, %c0_146] : memref<32x112xf32, #tpu.memory_space<vmem>>, vector<28x112xf32>
    %c2_147 = arith.constant 2 : index
    %c0_148 = arith.constant 0 : index
    %c0_149 = arith.constant 0 : index
    %147 = vector.load %arg15[%c2_147, %c0_148, %c0_149] : memref<3x112x112xf32, #tpu.memory_space<vmem>>, vector<1x112x112xf32>
    %148 = vector.shape_cast %147 : vector<1x112x112xf32> to vector<112x112xf32>
    %cst_150 = arith.constant dense<0.000000e+00> : vector<28x112xf32>
    %149 = tpu.matmul %146, %148, %cst_150 {dimension_numbers = #tpu.dot_dimension_numbers<[1], [0], [0], [1], [0, 0, 1, 1], [], []>} : vector<28x112xf32>, vector<112x112xf32>, vector<28x112xf32> -> vector<28x112xf32>
    %150 = arith.addf %145, %149 : vector<28x112xf32>
    %c0_151 = arith.constant 0 : index
    %c0_152 = arith.constant 0 : index
    %151 = vector.load %arg16[%c0_151, %c0_152] : memref<1x112xf32, #tpu.memory_space<vmem>>, vector<1x112xf32>
    %152 = vector.broadcast %151 : vector<1x112xf32> to vector<28x112xf32>
    %153 = arith.addf %150, %152 : vector<28x112xf32>
    %cst_153 = arith.constant 0.00999999977 : f32
    %154 = vector.broadcast %cst_153 : f32 to vector<28x112xf32>
    %155 = arith.mulf %154, %153 : vector<28x112xf32>
    %156 = arith.maximumf %153, %155 : vector<28x112xf32>
    %c2_154 = arith.constant 2 : index
    %c0_155 = arith.constant 0 : index
    %157 = vector.load %arg30[%c2_154, %c0_155] : memref<32x112xf32, #tpu.memory_space<vmem>>, vector<28x112xf32>
    tpu.vector_store %arg30[%c2_154, %c0_155], %156 {strides = array<i32>} : memref<32x112xf32, #tpu.memory_space<vmem>>, vector<28x112xf32>,
    %c0_156 = arith.constant 0 : index
    %c0_157 = arith.constant 0 : index
    %158 = vector.load %arg30[%c0_156, %c0_157] : memref<32x112xf32, #tpu.memory_space<vmem>>, vector<28x112xf32>
    %c0_158 = arith.constant 0 : index
    %c0_159 = arith.constant 0 : index
    %c0_160 = arith.constant 0 : index
    %159 = vector.load %arg17[%c0_158, %c0_159, %c0_160] : memref<3x112x112xf32, #tpu.memory_space<vmem>>, vector<1x112x112xf32>
    %160 = vector.shape_cast %159 : vector<1x112x112xf32> to vector<112x112xf32>
    %cst_161 = arith.constant dense<0.000000e+00> : vector<28x112xf32>
    %161 = tpu.matmul %158, %160, %cst_161 {dimension_numbers = #tpu.dot_dimension_numbers<[1], [0], [0], [1], [0, 0, 1, 1], [], []>} : vector<28x112xf32>, vector<112x112xf32>, vector<28x112xf32> -> vector<28x112xf32>
    %c2_162 = arith.constant 2 : index
    %c0_163 = arith.constant 0 : index
    %162 = vector.load %arg30[%c2_162, %c0_163] : memref<32x112xf32, #tpu.memory_space<vmem>>, vector<28x112xf32>
    %c1_164 = arith.constant 1 : index
    %c0_165 = arith.constant 0 : index
    %c0_166 = arith.constant 0 : index
    %163 = vector.load %arg17[%c1_164, %c0_165, %c0_166] : memref<3x112x112xf32, #tpu.memory_space<vmem>>, vector<1x112x112xf32>
    %164 = vector.shape_cast %163 : vector<1x112x112xf32> to vector<112x112xf32>
    %cst_167 = arith.constant dense<0.000000e+00> : vector<28x112xf32>
    %165 = tpu.matmul %162, %164, %cst_167 {dimension_numbers = #tpu.dot_dimension_numbers<[1], [0], [0], [1], [0, 0, 1, 1], [], []>} : vector<28x112xf32>, vector<112x112xf32>, vector<28x112xf32> -> vector<28x112xf32>
    %166 = arith.addf %161, %165 : vector<28x112xf32>
    %c4_168 = arith.constant 4 : index
    %c0_169 = arith.constant 0 : index
    %167 = vector.load %arg30[%c4_168, %c0_169] : memref<32x112xf32, #tpu.memory_space<vmem>>, vector<28x112xf32>
    %c2_170 = arith.constant 2 : index
    %c0_171 = arith.constant 0 : index
    %c0_172 = arith.constant 0 : index
    %168 = vector.load %arg17[%c2_170, %c0_171, %c0_172] : memref<3x112x112xf32, #tpu.memory_space<vmem>>, vector<1x112x112xf32>
    %169 = vector.shape_cast %168 : vector<1x112x112xf32> to vector<112x112xf32>
    %cst_173 = arith.constant dense<0.000000e+00> : vector<28x112xf32>
    %170 = tpu.matmul %167, %169, %cst_173 {dimension_numbers = #tpu.dot_dimension_numbers<[1], [0], [0], [1], [0, 0, 1, 1], [], []>} : vector<28x112xf32>, vector<112x112xf32>, vector<28x112xf32> -> vector<28x112xf32>
    %171 = arith.addf %166, %170 : vector<28x112xf32>
    %c0_174 = arith.constant 0 : index
    %c0_175 = arith.constant 0 : index
    %172 = vector.load %arg18[%c0_174, %c0_175] : memref<1x112xf32, #tpu.memory_space<vmem>>, vector<1x112xf32>
    %173 = vector.broadcast %172 : vector<1x112xf32> to vector<28x112xf32>
    %174 = arith.addf %171, %173 : vector<28x112xf32>
    %cst_176 = arith.constant 0.00999999977 : f32
    %175 = vector.broadcast %cst_176 : f32 to vector<28x112xf32>
    %176 = arith.mulf %175, %174 : vector<28x112xf32>
    %177 = arith.maximumf %174, %176 : vector<28x112xf32>
    %cst_177 = arith.constant dense<0.000000e+00> : vector<112xf32>
    %178 = vector.multi_reduction <add>, %177, %cst_177 [0] : vector<28x112xf32> to vector<112xf32>
    %179 = vector.shape_cast %178 : vector<112xf32> to vector<1x112xf32>
    %180 = arith.mulf %177, %177 : vector<28x112xf32>
    %cst_178 = arith.constant dense<0.000000e+00> : vector<112xf32>
    %181 = vector.multi_reduction <add>, %180, %cst_178 [0] : vector<28x112xf32> to vector<112xf32>
    %182 = vector.shape_cast %181 : vector<112xf32> to vector<1x112xf32>
    %c0_179 = arith.constant 0 : index
    %c0_180 = arith.constant 0 : index
    %183 = vector.load %arg21[%c0_179, %c0_180] : memref<112x8xf32, #tpu.memory_space<vmem>>, vector<112x8xf32>
    %cst_181 = arith.constant dense<0.000000e+00> : vector<1x8xf32>
    %184 = tpu.matmul %179, %183, %cst_181 {dimension_numbers = #tpu.dot_dimension_numbers<[1], [0], [0], [1], [0, 0, 1, 1], [], []>} : vector<1x112xf32>, vector<112x8xf32>, vector<1x8xf32> -> vector<1x8xf32>
    %cst_182 = arith.constant 3.920000e+02 : f32
    %185 = vector.broadcast %cst_182 : f32 to vector<1x8xf32>
    %186 = arith.divf %184, %185 : vector<1x8xf32>
    %c0_183 = arith.constant 0 : index
    %c0_184 = arith.constant 0 : index
    %187 = vector.load %arg21[%c0_183, %c0_184] : memref<112x8xf32, #tpu.memory_space<vmem>>, vector<112x8xf32>
    %cst_185 = arith.constant dense<0.000000e+00> : vector<1x8xf32>
    %188 = tpu.matmul %182, %187, %cst_185 {dimension_numbers = #tpu.dot_dimension_numbers<[1], [0], [0], [1], [0, 0, 1, 1], [], []>} : vector<1x112xf32>, vector<112x8xf32>, vector<1x8xf32> -> vector<1x8xf32>
    %cst_186 = arith.constant 3.920000e+02 : f32
    %189 = vector.broadcast %cst_186 : f32 to vector<1x8xf32>
    %190 = arith.divf %188, %189 : vector<1x8xf32>
    %191 = arith.mulf %186, %186 : vector<1x8xf32>
    %192 = arith.subf %190, %191 : vector<1x8xf32>
    %cst_187 = arith.constant 0.000000e+00 : f32
    %193 = vector.broadcast %cst_187 : f32 to vector<1x8xf32>
    %194 = arith.maximumf %192, %193 : vector<1x8xf32>
    %c0_188 = arith.constant 0 : index
    %c0_189 = arith.constant 0 : index
    %195 = vector.load %arg19[%c0_188, %c0_189] : memref<1x8xf32, #tpu.memory_space<vmem>>, vector<1x8xf32>
    %cst_190 = arith.constant 9.99999974E-6 : f32
    %196 = vector.broadcast %cst_190 : f32 to vector<1x8xf32>
    %197 = arith.addf %194, %196 : vector<1x8xf32>
    %198 = math.rsqrt %197 : vector<1x8xf32>
    %199 = arith.mulf %195, %198 : vector<1x8xf32>
    %c0_191 = arith.constant 0 : index
    %c0_192 = arith.constant 0 : index
    %200 = vector.load %arg20[%c0_191, %c0_192] : memref<1x8xf32, #tpu.memory_space<vmem>>, vector<1x8xf32>
    %201 = arith.mulf %186, %199 : vector<1x8xf32>
    %202 = arith.subf %200, %201 : vector<1x8xf32>
    %c0_193 = arith.constant 0 : index
    %c0_194 = arith.constant 0 : index
    %203 = vector.load %arg22[%c0_193, %c0_194] : memref<8x112xf32, #tpu.memory_space<vmem>>, vector<8x112xf32>
    %cst_195 = arith.constant dense<0.000000e+00> : vector<1x112xf32>
    %204 = tpu.matmul %199, %203, %cst_195 {dimension_numbers = #tpu.dot_dimension_numbers<[1], [0], [0], [1], [0, 0, 1, 1], [], []>} : vector<1x8xf32>, vector<8x112xf32>, vector<1x112xf32> -> vector<1x112xf32>
    %c0_196 = arith.constant 0 : index
    %c0_197 = arith.constant 0 : index
    %205 = vector.load %arg22[%c0_196, %c0_197] : memref<8x112xf32, #tpu.memory_space<vmem>>, vector<8x112xf32>
    %cst_198 = arith.constant dense<0.000000e+00> : vector<1x112xf32>
    %206 = tpu.matmul %202, %205, %cst_198 {dimension_numbers = #tpu.dot_dimension_numbers<[1], [0], [0], [1], [0, 0, 1, 1], [], []>} : vector<1x8xf32>, vector<8x112xf32>, vector<1x112xf32> -> vector<1x112xf32>
    %207 = vector.broadcast %204 : vector<1x112xf32> to vector<28x112xf32>
    %208 = arith.mulf %177, %207 : vector<28x112xf32>
    %209 = vector.broadcast %206 : vector<1x112xf32> to vector<28x112xf32>
    %210 = arith.addf %208, %209 : vector<28x112xf32>
    %c0_199 = arith.constant 0 : index
    %c0_200 = arith.constant 0 : index
    %c0_201 = arith.constant 0 : index
    %211 = vector.load %arg23[%c0_199, %c0_200, %c0_201] : memref<2x112x56xf32, #tpu.memory_space<vmem>>, vector<1x112x56xf32>
    %212 = vector.shape_cast %211 : vector<1x112x56xf32> to vector<112x56xf32>
    %cst_202 = arith.constant dense<0.000000e+00> : vector<28x56xf32>
    %213 = tpu.matmul %210, %212, %cst_202 {dimension_numbers = #tpu.dot_dimension_numbers<[1], [0], [0], [1], [0, 0, 1, 1], [], []>} : vector<28x112xf32>, vector<112x56xf32>, vector<28x56xf32> -> vector<28x56xf32>
    %c1_203 = arith.constant 1 : index
    %c0_204 = arith.constant 0 : index
    %c0_205 = arith.constant 0 : index
    %214 = vector.load %arg23[%c1_203, %c0_204, %c0_205] : memref<2x112x56xf32, #tpu.memory_space<vmem>>, vector<1x112x56xf32>
    %215 = vector.shape_cast %214 : vector<1x112x56xf32> to vector<112x56xf32>
    %cst_206 = arith.constant dense<0.000000e+00> : vector<28x56xf32>
    %216 = tpu.matmul %210, %215, %cst_206 {dimension_numbers = #tpu.dot_dimension_numbers<[1], [0], [0], [1], [0, 0, 1, 1], [], []>} : vector<28x112xf32>, vector<112x56xf32>, vector<28x56xf32> -> vector<28x56xf32>
    %217 = arith.maximumf %213, %216 : vector<28x56xf32>
    %c0_207 = arith.constant 0 : index
    %c0_208 = arith.constant 0 : index
    %c0_209 = arith.constant 0 : index
    %218 = vector.load %arg24[%c0_207, %c0_208, %c0_209] : memref<2x14x28xf32, #tpu.memory_space<vmem>>, vector<1x14x28xf32>
    %219 = vector.shape_cast %218 : vector<1x14x28xf32> to vector<14x28xf32>
    %cst_210 = arith.constant dense<0.000000e+00> : vector<14x56xf32>
    %220 = tpu.matmul %219, %217, %cst_210 {dimension_numbers = #tpu.dot_dimension_numbers<[1], [0], [0], [1], [0, 0, 1, 1], [], []>} : vector<14x28xf32>, vector<28x56xf32>, vector<14x56xf32> -> vector<14x56xf32>
    %c1_211 = arith.constant 1 : index
    %c0_212 = arith.constant 0 : index
    %c0_213 = arith.constant 0 : index
    %221 = vector.load %arg24[%c1_211, %c0_212, %c0_213] : memref<2x14x28xf32, #tpu.memory_space<vmem>>, vector<1x14x28xf32>
    %222 = vector.shape_cast %221 : vector<1x14x28xf32> to vector<14x28xf32>
    %cst_214 = arith.constant dense<0.000000e+00> : vector<14x56xf32>
    %223 = tpu.matmul %222, %217, %cst_214 {dimension_numbers = #tpu.dot_dimension_numbers<[1], [0], [0], [1], [0, 0, 1, 1], [], []>} : vector<14x28xf32>, vector<28x56xf32>, vector<14x56xf32> -> vector<14x56xf32>
    %224 = arith.maximumf %220, %223 : vector<14x56xf32>
    %cst_215 = arith.constant 0.000000e+00 : f32
    %225 = vector.broadcast %cst_215 : f32 to vector<2x32xf32>
    %c0_216 = arith.constant 0 : index
    %c0_217 = arith.constant 0 : index
    %226 = vector.load %arg26[%c0_216, %c0_217] : memref<1x32xf32, #tpu.memory_space<vmem>>, vector<1x32xf32>
    %227 = vector.broadcast %226 : vector<1x32xf32> to vector<2x32xf32>
    %228 = arith.addf %225, %227 : vector<2x32xf32>
    %229 = vector.extract_strided_slice %224 {offsets = [0, 0], sizes = [2, 56], strides = [1, 1]} : vector<14x56xf32> to vector<2x56xf32>
    %c0_218 = arith.constant 0 : index
    %c0_219 = arith.constant 0 : index
    %c0_220 = arith.constant 0 : index
    %230 = vector.load %arg25[%c0_218, %c0_219, %c0_220] : memref<7x56x32xf32, #tpu.memory_space<vmem>>, vector<1x56x32xf32>
    %231 = vector.shape_cast %230 : vector<1x56x32xf32> to vector<56x32xf32>
    %cst_221 = arith.constant dense<0.000000e+00> : vector<2x32xf32>
    %232 = tpu.matmul %229, %231, %cst_221 {dimension_numbers = #tpu.dot_dimension_numbers<[1], [0], [0], [1], [0, 0, 1, 1], [], []>} : vector<2x56xf32>, vector<56x32xf32>, vector<2x32xf32> -> vector<2x32xf32>
    %233 = arith.addf %228, %232 : vector<2x32xf32>
    %234 = vector.extract_strided_slice %224 {offsets = [2, 0], sizes = [2, 56], strides = [1, 1]} : vector<14x56xf32> to vector<2x56xf32>
    %c1_222 = arith.constant 1 : index
    %c0_223 = arith.constant 0 : index
    %c0_224 = arith.constant 0 : index
    %235 = vector.load %arg25[%c1_222, %c0_223, %c0_224] : memref<7x56x32xf32, #tpu.memory_space<vmem>>, vector<1x56x32xf32>
    %236 = vector.shape_cast %235 : vector<1x56x32xf32> to vector<56x32xf32>
    %cst_225 = arith.constant dense<0.000000e+00> : vector<2x32xf32>
    %237 = tpu.matmul %234, %236, %cst_225 {dimension_numbers = #tpu.dot_dimension_numbers<[1], [0], [0], [1], [0, 0, 1, 1], [], []>} : vector<2x56xf32>, vector<56x32xf32>, vector<2x32xf32> -> vector<2x32xf32>
    %238 = arith.addf %233, %237 : vector<2x32xf32>
    %239 = vector.extract_strided_slice %224 {offsets = [4, 0], sizes = [2, 56], strides = [1, 1]} : vector<14x56xf32> to vector<2x56xf32>
    %c2_226 = arith.constant 2 : index
    %c0_227 = arith.constant 0 : index
    %c0_228 = arith.constant 0 : index
    %240 = vector.load %arg25[%c2_226, %c0_227, %c0_228] : memref<7x56x32xf32, #tpu.memory_space<vmem>>, vector<1x56x32xf32>
    %241 = vector.shape_cast %240 : vector<1x56x32xf32> to vector<56x32xf32>
    %cst_229 = arith.constant dense<0.000000e+00> : vector<2x32xf32>
    %242 = tpu.matmul %239, %241, %cst_229 {dimension_numbers = #tpu.dot_dimension_numbers<[1], [0], [0], [1], [0, 0, 1, 1], [], []>} : vector<2x56xf32>, vector<56x32xf32>, vector<2x32xf32> -> vector<2x32xf32>
    %243 = arith.addf %238, %242 : vector<2x32xf32>
    %244 = vector.extract_strided_slice %224 {offsets = [6, 0], sizes = [2, 56], strides = [1, 1]} : vector<14x56xf32> to vector<2x56xf32>
    %c3 = arith.constant 3 : index
    %c0_230 = arith.constant 0 : index
    %c0_231 = arith.constant 0 : index
    %245 = vector.load %arg25[%c3, %c0_230, %c0_231] : memref<7x56x32xf32, #tpu.memory_space<vmem>>, vector<1x56x32xf32>
    %246 = vector.shape_cast %245 : vector<1x56x32xf32> to vector<56x32xf32>
    %cst_232 = arith.constant dense<0.000000e+00> : vector<2x32xf32>
    %247 = tpu.matmul %244, %246, %cst_232 {dimension_numbers = #tpu.dot_dimension_numbers<[1], [0], [0], [1], [0, 0, 1, 1], [], []>} : vector<2x56xf32>, vector<56x32xf32>, vector<2x32xf32> -> vector<2x32xf32>
    %248 = arith.addf %243, %247 : vector<2x32xf32>
    %249 = vector.extract_strided_slice %224 {offsets = [8, 0], sizes = [2, 56], strides = [1, 1]} : vector<14x56xf32> to vector<2x56xf32>
    %c4_233 = arith.constant 4 : index
    %c0_234 = arith.constant 0 : index
    %c0_235 = arith.constant 0 : index
    %250 = vector.load %arg25[%c4_233, %c0_234, %c0_235] : memref<7x56x32xf32, #tpu.memory_space<vmem>>, vector<1x56x32xf32>
    %251 = vector.shape_cast %250 : vector<1x56x32xf32> to vector<56x32xf32>
    %cst_236 = arith.constant dense<0.000000e+00> : vector<2x32xf32>
    %252 = tpu.matmul %249, %251, %cst_236 {dimension_numbers = #tpu.dot_dimension_numbers<[1], [0], [0], [1], [0, 0, 1, 1], [], []>} : vector<2x56xf32>, vector<56x32xf32>, vector<2x32xf32> -> vector<2x32xf32>
    %253 = arith.addf %248, %252 : vector<2x32xf32>
    %254 = vector.extract_strided_slice %224 {offsets = [10, 0], sizes = [2, 56], strides = [1, 1]} : vector<14x56xf32> to vector<2x56xf32>
    %c5 = arith.constant 5 : index
    %c0_237 = arith.constant 0 : index
    %c0_238 = arith.constant 0 : index
    %255 = vector.load %arg25[%c5, %c0_237, %c0_238] : memref<7x56x32xf32, #tpu.memory_space<vmem>>, vector<1x56x32xf32>
    %256 = vector.shape_cast %255 : vector<1x56x32xf32> to vector<56x32xf32>
    %cst_239 = arith.constant dense<0.000000e+00> : vector<2x32xf32>
    %257 = tpu.matmul %254, %256, %cst_239 {dimension_numbers = #tpu.dot_dimension_numbers<[1], [0], [0], [1], [0, 0, 1, 1], [], []>} : vector<2x56xf32>, vector<56x32xf32>, vector<2x32xf32> -> vector<2x32xf32>
    %258 = arith.addf %253, %257 : vector<2x32xf32>
    %259 = vector.extract_strided_slice %224 {offsets = [12, 0], sizes = [2, 56], strides = [1, 1]} : vector<14x56xf32> to vector<2x56xf32>
    %c6 = arith.constant 6 : index
    %c0_240 = arith.constant 0 : index
    %c0_241 = arith.constant 0 : index
    %260 = vector.load %arg25[%c6, %c0_240, %c0_241] : memref<7x56x32xf32, #tpu.memory_space<vmem>>, vector<1x56x32xf32>
    %261 = vector.shape_cast %260 : vector<1x56x32xf32> to vector<56x32xf32>
    %cst_242 = arith.constant dense<0.000000e+00> : vector<2x32xf32>
    %262 = tpu.matmul %259, %261, %cst_242 {dimension_numbers = #tpu.dot_dimension_numbers<[1], [0], [0], [1], [0, 0, 1, 1], [], []>} : vector<2x56xf32>, vector<56x32xf32>, vector<2x32xf32> -> vector<2x32xf32>
    %263 = arith.addf %258, %262 : vector<2x32xf32>
    %264 = vector.extract_strided_slice %263 {offsets = [0, 0], sizes = [2, 16], strides = [1, 1]} : vector<2x32xf32> to vector<2x16xf32>
    %cst_243 = arith.constant 0.00999999977 : f32
    %265 = vector.broadcast %cst_243 : f32 to vector<2x16xf32>
    %266 = arith.mulf %265, %264 : vector<2x16xf32>
    %267 = arith.maximumf %264, %266 : vector<2x16xf32>
    %c0_244 = arith.constant 0 : index
    %c0_245 = arith.constant 0 : index
    %268 = vector.load %arg27[%c0_244, %c0_245] : memref<2x16xf32, #tpu.memory_space<vmem>>, vector<2x16xf32>
    tpu.vector_store %arg27[%c0_244, %c0_245], %267 {strides = array<i32>} : memref<2x16xf32, #tpu.memory_space<vmem>>, vector<2x16xf32>,
    %269 = vector.extract_strided_slice %263 {offsets = [0, 16], sizes = [2, 16], strides = [1, 1]} : vector<2x32xf32> to vector<2x16xf32>
    %270 = math.exp %269 : vector<2x16xf32>
    %c0_246 = arith.constant 0 : index
    %c0_247 = arith.constant 0 : index
    %271 = vector.load %arg28[%c0_246, %c0_247] : memref<2x16xf32, #tpu.memory_space<vmem>>, vector<2x16xf32>
    tpu.vector_store %arg28[%c0_246, %c0_247], %270 {strides = array<i32>} : memref<2x16xf32, #tpu.memory_space<vmem>>, vector<2x16xf32>,
    return
  }
}

</mosaic_0001>

<llo_original>
// kernel: tpu_custom_call.1
$region0: #{tpu_custom_call.1}
  #allocation0 [shape = 'u32[]', space=smem, size = 0x4, offset = 0x4, fixed_abs, tag = 'smem constant byte address 0x4 - core index']
  #allocation1 [shape = 'u32[144,128]{1,0:T(1,128)}', space=vmem, size = 0x12000, scoped, tag = 'internal scratch']
  #allocation2 [shape = 'f32[60,224]{1,0:T(8,128)}', space=vmem, size = 0x10000, scoped, tag = 'scratch operand']
  #allocation3 [shape = 'f32[32,112]{1,0:T(8,128)}', space=vmem, size = 0x4000, scoped, tag = 'scratch operand']
  %s0 = inlined_call_operand.vmem [shape: f32[60,28], index: 0, kind: input, shape index: {}]
  %s1 = inlined_call_operand.hbm [shape: f32[3,28,224], index: 1, kind: input, shape index: {}]
  %s2 = inlined_call_operand.hbm [shape: f32[1,224], index: 2, kind: input, shape index: {}]
  %s3 = inlined_call_operand.vmem [shape: f32[3,224,224], index: 3, kind: input, shape index: {}]
  %s4 = inlined_call_operand.hbm [shape: f32[1,224], index: 4, kind: input, shape index: {}]
  %s5 = inlined_call_operand.hbm [shape: f32[3,224,224], index: 5, kind: input, shape index: {}]
  %s6 = inlined_call_operand.hbm [shape: f32[1,224], index: 6, kind: input, shape index: {}]
  %s7 = inlined_call_operand.hbm [shape: f32[1,8], index: 7, kind: input, shape index: {}]
  %s8 = inlined_call_operand.hbm [shape: f32[1,8], index: 8, kind: input, shape index: {}]
  %s9 = inlined_call_operand.vmem [shape: f32[224,8], index: 9, kind: input, shape index: {}]
  %s10 = inlined_call_operand.hbm [shape: f32[8,224], index: 10, kind: input, shape index: {}]
  %s11 = inlined_call_operand.hbm [shape: f32[2,224,112], index: 11, kind: input, shape index: {}]
  %s12 = inlined_call_operand.vmem [shape: f32[2,28,56], index: 12, kind: input, shape index: {}]
  %s13 = inlined_call_operand.hbm [shape: f32[3,112,112], index: 13, kind: input, shape index: {}]
  %s14 = inlined_call_operand.hbm [shape: f32[1,112], index: 14, kind: input, shape index: {}]
  %s15 = inlined_call_operand.hbm [shape: f32[3,112,112], index: 15, kind: input, shape index: {}]
  %s16 = inlined_call_operand.hbm [shape: f32[1,112], index: 16, kind: input, shape index: {}]
  %s17 = inlined_call_operand.hbm [shape: f32[3,112,112], index: 17, kind: input, shape index: {}]
  %s18 = inlined_call_operand.hbm [shape: f32[1,112], index: 18, kind: input, shape index: {}]
  %s19 = inlined_call_operand.hbm [shape: f32[1,8], index: 19, kind: input, shape index: {}]
  %s20 = inlined_call_operand.vmem [shape: f32[1,8], index: 20, kind: input, shape index: {}]
  %s21 = inlined_call_operand.vmem [shape: f32[112,8], index: 21, kind: input, shape index: {}]
  %s22 = inlined_call_operand.vmem [shape: f32[8,112], index: 22, kind: input, shape index: {}]
  %s23 = inlined_call_operand.vmem [shape: f32[2,112,56], index: 23, kind: input, shape index: {}]
  %s24 = inlined_call_operand.vmem [shape: f32[2,14,28], index: 24, kind: input, shape index: {}]
  %s25 = inlined_call_operand.vmem [shape: f32[7,56,32], index: 25, kind: input, shape index: {}]
  %s26 = inlined_call_operand.vmem [shape: f32[1,32], index: 26, kind: input, shape index: {}]
  %s27 = inlined_call_operand.hbm [shape: f32[2,16], index: 27, kind: output, shape index: {0}]
  %s28 = inlined_call_operand.hbm [shape: f32[2,16], index: 28, kind: output, shape index: {1}]
  %29 = xla_tuple %s27, %s28
  %s30 = sld [smem:[#allocation0]]
  $region190: #{tpu_custom_call.1} parent=0
    _
  %s32 = ssub.s32 1, %s30
  %s33 = scalar_select 0, %s32, %s30
  $region1: #{tpu_custom_call.1} parent=0
    #allocation4 [shape = 'u8[98304]{0}', space=vmem, size = 0x18000, scoped, tag = 'input window, operand 1, single buffered']
    #allocation5 [shape = 's32[1]{0}', space=sflag, size = 0x4, scoped, tag = 'scoped memory for tpu_custom_call.1']
    #allocation6 [shape = 's32[1]{0}', space=sflag, size = 0x4, scoped, tag = 'scoped memory for tpu_custom_call.1']
    #allocation7 [shape = 'u8[1024]{0}', space=vmem, size = 0x400, scoped, tag = 'input window, operand 2, single buffered']
    #allocation8 [shape = 's32[1]{0}', space=sflag, size = 0x4, scoped, tag = 'scoped memory for tpu_custom_call.1']
    #allocation9 [shape = 'u8[1024]{0}', space=vmem, size = 0x400, scoped, tag = 'input window, operand 4, single buffered']
    #allocation10 [shape = 'u8[688128]{0}', space=vmem, size = 0xa8000, scoped, tag = 'input window, operand 5, single buffered']
    #allocation11 [shape = 's32[1]{0}', space=sflag, size = 0x4, scoped, tag = 'scoped memory for tpu_custom_call.1']
    #allocation12 [shape = 'u8[1024]{0}', space=vmem, size = 0x400, scoped, tag = 'input window, operand 6, single buffered']
    #allocation13 [shape = 'u8[512]{0}', space=vmem, size = 0x400, scoped, tag = 'input window, operand 7, single buffered']
    #allocation14 [shape = 's32[1]{0}', space=sflag, size = 0x4, scoped, tag = 'scoped memory for tpu_custom_call.1']
    #allocation15 [shape = 'u8[512]{0}', space=vmem, size = 0x400, scoped, tag = 'input window, operand 8, single buffered']
    #allocation16 [shape = 'u8[8192]{0}', space=vmem, size = 0x2000, scoped, tag = 'input window, operand 10, single buffered']
    #allocation17 [shape = 's32[1]{0}', space=sflag, size = 0x4, scoped, tag = 'scoped memory for tpu_custom_call.1']
    #allocation18 [shape = 'u8[229376]{0}', space=vmem, size = 0x38000, scoped, tag = 'input window, operand 11, single buffered']
    #allocation19 [shape = 'u8[172032]{0}', space=vmem, size = 0x2a000, scoped, tag = 'input window, operand 13, single buffered']
    #allocation20 [shape = 's32[1]{0}', space=sflag, size = 0x4, scoped, tag = 'scoped memory for tpu_custom_call.1']
    #allocation21 [shape = 'u8[512]{0}', space=vmem, size = 0x400, scoped, tag = 'input window, operand 14, single buffered']
    #allocation22 [shape = 'u8[172032]{0}', space=vmem, size = 0x2a000, scoped, tag = 'input window, operand 15, single buffered']
    #allocation23 [shape = 's32[1]{0}', space=sflag, size = 0x4, scoped, tag = 'scoped memory for tpu_custom_call.1']
    #allocation24 [shape = 'u8[512]{0}', space=vmem, size = 0x400, scoped, tag = 'input window, operand 16, single buffered']
    #allocation25 [shape = 'u8[172032]{0}', space=vmem, size = 0x2a000, scoped, tag = 'input window, operand 17, single buffered']
    #allocation26 [shape = 's32[1]{0}', space=sflag, size = 0x4, scoped, tag = 'scoped memory for tpu_custom_call.1']
    #allocation27 [shape = 'u8[512]{0}', space=vmem, size = 0x400, scoped, tag = 'input window, operand 18, single buffered']
    #allocation28 [shape = 'u8[512]{0}', space=vmem, size = 0x400, scoped, tag = 'input window, operand 19, single buffered']
    #allocation29 [shape = 's32[1]{0}', space=sflag, size = 0x4, scoped, tag = 'scoped memory for tpu_custom_call.1']
    #allocation30 [shape = 'u8[1024]{0}', space=vmem, size = 0x400, scoped, tag = 'output window, operand 0, single buffered']
    #allocation31 [shape = 'u8[1024]{0}', space=vmem, size = 0x400, scoped, tag = 'output window, operand 1, single buffered']
    #allocation32 [shape = 's32[1]{0}', space=sflag, size = 0x4, scoped, tag = 'scoped memory for tpu_custom_call.1']
    %34 = vsyncpa [#allocation5], 0
    %35 = vsyncpa [#allocation8], 0
    %36 = vsyncpa [#allocation11], 0
    %37 = vsyncpa [#allocation14], 0
    %38 = vsyncpa [#allocation17], 0
    %39 = vsyncpa [#allocation20], 0
    %40 = vsyncpa [#allocation23], 0
    %41 = vsyncpa [#allocation26], 0
    %42 = vsyncpa [#allocation29], 0
    %43 = vsyncpa [#allocation6], 0
    %44 = vsyncpa [#allocation32], 0
    // Predicated region
    $region2: #{tpu_custom_call.1} parent=1 // pred_check
      _
    $region3: #{tpu_custom_call.1} parent=1 // pred_check_branch
      %46 = sbr.rel (0) target = $region5
    $region4: #{tpu_custom_call.1} parent=1 // pred_region
      _
    $region5: #{tpu_custom_call.1} parent=1 // pred_fallthru
      _
    // Predicated region
    $region6: #{tpu_custom_call.1} parent=1 // pred_check
      _
    $region7: #{tpu_custom_call.1} parent=1 // pred_check_branch
      %48 = sbr.rel (0) target = $region9
    $region8: #{tpu_custom_call.1} parent=1 // pred_region
      %s50 = ssub.s32 3072, 3072
      %51 = vsyncadd [#allocation5], %s50
      %s52 = sshll.u32 [#allocation4], 4
      %s53 = int_to_ptr.vmem [resolvable:$true] %s52
      %58 = dma.hbm_to_vmem [thread:$0]  %s1, 3072, %s53, [#allocation5], 256, 256, 16
    $region9: #{tpu_custom_call.1} parent=1 // pred_fallthru
      _
    // Predicated region
    $region10: #{tpu_custom_call.1} parent=1 // pred_check
      _
    $region11: #{tpu_custom_call.1} parent=1 // pred_check_branch
      %60 = sbr.rel (0) target = $region13
    $region12: #{tpu_custom_call.1} parent=1 // pred_region
      %s62 = ssub.s32 32, 32
      %63 = vsyncadd [#allocation8], %s62
      %s65 = sshll.u32 [#allocation7], 4
      %s66 = int_to_ptr.vmem [resolvable:$true] %s65
      %68 = dma.hbm_to_vmem [thread:$0]  %s2, 32, %s66, [#allocation8]
    $region13: #{tpu_custom_call.1} parent=1 // pred_fallthru
      _
    // Predicated region
    $region14: #{tpu_custom_call.1} parent=1 // pred_check
      _
    $region15: #{tpu_custom_call.1} parent=1 // pred_check_branch
      %70 = sbr.rel (0) target = $region17
    $region16: #{tpu_custom_call.1} parent=1 // pred_region
      _
    $region17: #{tpu_custom_call.1} parent=1 // pred_fallthru
      _
    // Predicated region
    $region18: #{tpu_custom_call.1} parent=1 // pred_check
      _
    $region19: #{tpu_custom_call.1} parent=1 // pred_check_branch
      %72 = sbr.rel (0) target = $region21
    $region20: #{tpu_custom_call.1} parent=1 // pred_region
      %s74 = ssub.s32 32, 32
      %75 = vsyncadd [#allocation8], %s74
      %s77 = sshll.u32 [#allocation9], 4
      %s78 = int_to_ptr.vmem [resolvable:$true] %s77
      %80 = dma.hbm_to_vmem [thread:$0]  %s4, 32, %s78, [#allocation8]
    $region21: #{tpu_custom_call.1} parent=1 // pred_fallthru
      _
    // Predicated region
    $region22: #{tpu_custom_call.1} parent=1 // pred_check
      _
    $region23: #{tpu_custom_call.1} parent=1 // pred_check_branch
      %82 = sbr.rel (0) target = $region25
    $region24: #{tpu_custom_call.1} parent=1 // pred_region
      %s84 = ssub.s32 21504, 21504
      %85 = vsyncadd [#allocation11], %s84
      %s86 = sshll.u32 [#allocation10], 4
      %s87 = int_to_ptr.vmem [resolvable:$true] %s86
      %92 = dma.hbm_to_vmem [thread:$0]  %s5, 21504, %s87, [#allocation11], 256, 256, 16
    $region25: #{tpu_custom_call.1} parent=1 // pred_fallthru
      _
    // Predicated region
    $region26: #{tpu_custom_call.1} parent=1 // pred_check
      _
    $region27: #{tpu_custom_call.1} parent=1 // pred_check_branch
      %94 = sbr.rel (0) target = $region29
    $region28: #{tpu_custom_call.1} parent=1 // pred_region
      %s96 = ssub.s32 32, 32
      %97 = vsyncadd [#allocation11], %s96
      %s99 = sshll.u32 [#allocation12], 4
      %s100 = int_to_ptr.vmem [resolvable:$true] %s99
      %102 = dma.hbm_to_vmem [thread:$0]  %s6, 32, %s100, [#allocation11]
    $region29: #{tpu_custom_call.1} parent=1 // pred_fallthru
      _
    // Predicated region
    $region30: #{tpu_custom_call.1} parent=1 // pred_check
      _
    $region31: #{tpu_custom_call.1} parent=1 // pred_check_branch
      %104 = sbr.rel (0) target = $region33
    $region32: #{tpu_custom_call.1} parent=1 // pred_region
      %s106 = ssub.s32 16, 16
      %107 = vsyncadd [#allocation14], %s106
      %s109 = sshll.u32 [#allocation13], 4
      %s110 = int_to_ptr.vmem [resolvable:$true] %s109
      %112 = dma.hbm_to_vmem [thread:$0]  %s7, 16, %s110, [#allocation14]
    $region33: #{tpu_custom_call.1} parent=1 // pred_fallthru
      _
    // Predicated region
    $region34: #{tpu_custom_call.1} parent=1 // pred_check
      _
    $region35: #{tpu_custom_call.1} parent=1 // pred_check_branch
      %114 = sbr.rel (0) target = $region37
    $region36: #{tpu_custom_call.1} parent=1 // pred_region
      %s116 = ssub.s32 16, 16
      %117 = vsyncadd [#allocation14], %s116
      %s119 = sshll.u32 [#allocation15], 4
      %s120 = int_to_ptr.vmem [resolvable:$true] %s119
      %122 = dma.hbm_to_vmem [thread:$0]  %s8, 16, %s120, [#allocation14]
    $region37: #{tpu_custom_call.1} parent=1 // pred_fallthru
      _
    // Predicated region
    $region38: #{tpu_custom_call.1} parent=1 // pred_check
      _
    $region39: #{tpu_custom_call.1} parent=1 // pred_check_branch
      %124 = sbr.rel (0) target = $region41
    $region40: #{tpu_custom_call.1} parent=1 // pred_region
      _
    $region41: #{tpu_custom_call.1} parent=1 // pred_fallthru
      _
    // Predicated region
    $region42: #{tpu_custom_call.1} parent=1 // pred_check
      _
    $region43: #{tpu_custom_call.1} parent=1 // pred_check_branch
      %126 = sbr.rel (0) target = $region45
    $region44: #{tpu_custom_call.1} parent=1 // pred_region
      %s128 = ssub.s32 256, 256
      %129 = vsyncadd [#allocation17], %s128
      %s131 = sshll.u32 [#allocation16], 4
      %s132 = int_to_ptr.vmem [resolvable:$true] %s131
      %134 = dma.hbm_to_vmem [thread:$0]  %s10, 256, %s132, [#allocation17]
    $region45: #{tpu_custom_call.1} parent=1 // pred_fallthru
      _
    // Predicated region
    $region46: #{tpu_custom_call.1} parent=1 // pred_check
      _
    $region47: #{tpu_custom_call.1} parent=1 // pred_check_branch
      %136 = sbr.rel (0) target = $region49
    $region48: #{tpu_custom_call.1} parent=1 // pred_region
      %s138 = ssub.s32 7168, 7168
      %139 = vsyncadd [#allocation17], %s138
      %s140 = sshll.u32 [#allocation18], 4
      %s141 = int_to_ptr.vmem [resolvable:$true] %s140
      %146 = dma.hbm_to_vmem [thread:$0]  %s11, 7168, %s141, [#allocation17], 128, 128, 8
    $region49: #{tpu_custom_call.1} parent=1 // pred_fallthru
      _
    // Predicated region
    $region50: #{tpu_custom_call.1} parent=1 // pred_check
      _
    $region51: #{tpu_custom_call.1} parent=1 // pred_check_branch
      %148 = sbr.rel (0) target = $region53
    $region52: #{tpu_custom_call.1} parent=1 // pred_region
      _
    $region53: #{tpu_custom_call.1} parent=1 // pred_fallthru
      _
    // Predicated region
    $region54: #{tpu_custom_call.1} parent=1 // pred_check
      _
    $region55: #{tpu_custom_call.1} parent=1 // pred_check_branch
      %150 = sbr.rel (0) target = $region57
    $region56: #{tpu_custom_call.1} parent=1 // pred_region
      %s152 = ssub.s32 5376, 5376
      %153 = vsyncadd [#allocation20], %s152
      %s154 = sshll.u32 [#allocation19], 4
      %s155 = int_to_ptr.vmem [resolvable:$true] %s154
      %160 = dma.hbm_to_vmem [thread:$0]  %s13, 5376, %s155, [#allocation20], 128, 128, 8
    $region57: #{tpu_custom_call.1} parent=1 // pred_fallthru
      _
    // Predicated region
    $region58: #{tpu_custom_call.1} parent=1 // pred_check
      _
    $region59: #{tpu_custom_call.1} parent=1 // pred_check_branch
      %162 = sbr.rel (0) target = $region61
    $region60: #{tpu_custom_call.1} parent=1 // pred_region
      %s164 = ssub.s32 16, 16
      %165 = vsyncadd [#allocation20], %s164
      %s167 = sshll.u32 [#allocation21], 4
      %s168 = int_to_ptr.vmem [resolvable:$true] %s167
      %170 = dma.hbm_to_vmem [thread:$0]  %s14, 16, %s168, [#allocation20]
    $region61: #{tpu_custom_call.1} parent=1 // pred_fallthru
      _
    // Predicated region
    $region62: #{tpu_custom_call.1} parent=1 // pred_check
      _
    $region63: #{tpu_custom_call.1} parent=1 // pred_check_branch
      %172 = sbr.rel (0) target = $region65
    $region64: #{tpu_custom_call.1} parent=1 // pred_region
      %s174 = ssub.s32 5376, 5376
      %175 = vsyncadd [#allocation23], %s174
      %s176 = sshll.u32 [#allocation22], 4
      %s177 = int_to_ptr.vmem [resolvable:$true] %s176
      %182 = dma.hbm_to_vmem [thread:$0]  %s15, 5376, %s177, [#allocation23], 128, 128, 8
    $region65: #{tpu_custom_call.1} parent=1 // pred_fallthru
      _
    // Predicated region
    $region66: #{tpu_custom_call.1} parent=1 // pred_check
      _
    $region67: #{tpu_custom_call.1} parent=1 // pred_check_branch
      %184 = sbr.rel (0) target = $region69
    $region68: #{tpu_custom_call.1} parent=1 // pred_region
      %s186 = ssub.s32 16, 16
      %187 = vsyncadd [#allocation23], %s186
      %s189 = sshll.u32 [#allocation24], 4
      %s190 = int_to_ptr.vmem [resolvable:$true] %s189
      %192 = dma.hbm_to_vmem [thread:$0]  %s16, 16, %s190, [#allocation23]
    $region69: #{tpu_custom_call.1} parent=1 // pred_fallthru
      _
    // Predicated region
    $region70: #{tpu_custom_call.1} parent=1 // pred_check
      _
    $region71: #{tpu_custom_call.1} parent=1 // pred_check_branch
      %194 = sbr.rel (0) target = $region73
    $region72: #{tpu_custom_call.1} parent=1 // pred_region
      %s196 = ssub.s32 5376, 5376
      %197 = vsyncadd [#allocation26], %s196
      %s198 = sshll.u32 [#allocation25], 4
      %s199 = int_to_ptr.vmem [resolvable:$true] %s198
      %204 = dma.hbm_to_vmem [thread:$0]  %s17, 5376, %s199, [#allocation26], 128, 128, 8
    $region73: #{tpu_custom_call.1} parent=1 // pred_fallthru
      _
    // Predicated region
    $region74: #{tpu_custom_call.1} parent=1 // pred_check
      _
    $region75: #{tpu_custom_call.1} parent=1 // pred_check_branch
      %206 = sbr.rel (0) target = $region77
    $region76: #{tpu_custom_call.1} parent=1 // pred_region
      %s208 = ssub.s32 16, 16
      %209 = vsyncadd [#allocation26], %s208
      %s211 = sshll.u32 [#allocation27], 4
      %s212 = int_to_ptr.vmem [resolvable:$true] %s211
      %214 = dma.hbm_to_vmem [thread:$0]  %s18, 16, %s212, [#allocation26]
    $region77: #{tpu_custom_call.1} parent=1 // pred_fallthru
      _
    // Predicated region
    $region78: #{tpu_custom_call.1} parent=1 // pred_check
      _
    $region79: #{tpu_custom_call.1} parent=1 // pred_check_branch
      %216 = sbr.rel (0) target = $region81
    $region80: #{tpu_custom_call.1} parent=1 // pred_region
      %s218 = ssub.s32 16, 16
      %219 = vsyncadd [#allocation29], %s218
      %s221 = sshll.u32 [#allocation28], 4
      %s222 = int_to_ptr.vmem [resolvable:$true] %s221
      %224 = dma.hbm_to_vmem [thread:$0]  %s19, 16, %s222, [#allocation29]
    $region81: #{tpu_custom_call.1} parent=1 // pred_fallthru
      _
    // Predicated region
    $region82: #{tpu_custom_call.1} parent=1 // pred_check
      _
    $region83: #{tpu_custom_call.1} parent=1 // pred_check_branch
      %226 = sbr.rel (0) target = $region85
    $region84: #{tpu_custom_call.1} parent=1 // pred_region
      _
    $region85: #{tpu_custom_call.1} parent=1 // pred_fallthru
      _
    // Predicated region
    $region86: #{tpu_custom_call.1} parent=1 // pred_check
      _
    $region87: #{tpu_custom_call.1} parent=1 // pred_check_branch
      %228 = sbr.rel (0) target = $region89
    $region88: #{tpu_custom_call.1} parent=1 // pred_region
      _
    $region89: #{tpu_custom_call.1} parent=1 // pred_fallthru
      _
    // Predicated region
    $region90: #{tpu_custom_call.1} parent=1 // pred_check
      _
    $region91: #{tpu_custom_call.1} parent=1 // pred_check_branch
      %230 = sbr.rel (0) target = $region93
    $region92: #{tpu_custom_call.1} parent=1 // pred_region
      _
    $region93: #{tpu_custom_call.1} parent=1 // pred_fallthru
      _
    // Predicated region
    $region94: #{tpu_custom_call.1} parent=1 // pred_check
      _
    $region95: #{tpu_custom_call.1} parent=1 // pred_check_branch
      %232 = sbr.rel (0) target = $region97
    $region96: #{tpu_custom_call.1} parent=1 // pred_region
      _
    $region97: #{tpu_custom_call.1} parent=1 // pred_fallthru
      _
    // Predicated region
    $region98: #{tpu_custom_call.1} parent=1 // pred_check
      _
    $region99: #{tpu_custom_call.1} parent=1 // pred_check_branch
      %234 = sbr.rel (0) target = $region101
    $region100: #{tpu_custom_call.1} parent=1 // pred_region
      _
    $region101: #{tpu_custom_call.1} parent=1 // pred_fallthru
      _
    // Predicated region
    $region102: #{tpu_custom_call.1} parent=1 // pred_check
      _
    $region103: #{tpu_custom_call.1} parent=1 // pred_check_branch
      %236 = sbr.rel (0) target = $region105
    $region104: #{tpu_custom_call.1} parent=1 // pred_region
      _
    $region105: #{tpu_custom_call.1} parent=1 // pred_fallthru
      _
    // Predicated region
    $region106: #{tpu_custom_call.1} parent=1 // pred_check
      _
    $region107: #{tpu_custom_call.1} parent=1 // pred_check_branch
      %238 = sbr.rel (0) target = $region109
    $region108: #{tpu_custom_call.1} parent=1 // pred_region
      _
    $region109: #{tpu_custom_call.1} parent=1 // pred_fallthru
      _
    // Predicated region
    $region110: #{tpu_custom_call.1} parent=1 // pred_check
      _
    $region111: #{tpu_custom_call.1} parent=1 // pred_check_branch
      %240 = sbr.rel (0) target = $region113
    $region112: #{tpu_custom_call.1} parent=1 // pred_region
      %241 = dma.done [#allocation5], 3072
    $region113: #{tpu_custom_call.1} parent=1 // pred_fallthru
      _
    // Predicated region
    $region114: #{tpu_custom_call.1} parent=1 // pred_check
      _
    $region115: #{tpu_custom_call.1} parent=1 // pred_check_branch
      %243 = sbr.rel (0) target = $region117
    $region116: #{tpu_custom_call.1} parent=1 // pred_region
      %244 = dma.done [#allocation8], 32
    $region117: #{tpu_custom_call.1} parent=1 // pred_fallthru
      _
    // Predicated region
    $region118: #{tpu_custom_call.1} parent=1 // pred_check
      _
    $region119: #{tpu_custom_call.1} parent=1 // pred_check_branch
      %246 = sbr.rel (0) target = $region121
    $region120: #{tpu_custom_call.1} parent=1 // pred_region
      %247 = dma.done [#allocation8], 32
    $region121: #{tpu_custom_call.1} parent=1 // pred_fallthru
      _
    // Predicated region
    $region122: #{tpu_custom_call.1} parent=1 // pred_check
      _
    $region123: #{tpu_custom_call.1} parent=1 // pred_check_branch
      %249 = sbr.rel (0) target = $region125
    $region124: #{tpu_custom_call.1} parent=1 // pred_region
      %250 = dma.done [#allocation11], 21504
    $region125: #{tpu_custom_call.1} parent=1 // pred_fallthru
      _
    // Predicated region
    $region126: #{tpu_custom_call.1} parent=1 // pred_check
      _
    $region127: #{tpu_custom_call.1} parent=1 // pred_check_branch
      %252 = sbr.rel (0) target = $region129
    $region128: #{tpu_custom_call.1} parent=1 // pred_region
      %253 = dma.done [#allocation11], 32
    $region129: #{tpu_custom_call.1} parent=1 // pred_fallthru
      _
    // Predicated region
    $region130: #{tpu_custom_call.1} parent=1 // pred_check
      _
    $region131: #{tpu_custom_call.1} parent=1 // pred_check_branch
      %255 = sbr.rel (0) target = $region133
    $region132: #{tpu_custom_call.1} parent=1 // pred_region
      %256 = dma.done [#allocation14], 16
    $region133: #{tpu_custom_call.1} parent=1 // pred_fallthru
      _
    // Predicated region
    $region134: #{tpu_custom_call.1} parent=1 // pred_check
      _
    $region135: #{tpu_custom_call.1} parent=1 // pred_check_branch
      %258 = sbr.rel (0) target = $region137
    $region136: #{tpu_custom_call.1} parent=1 // pred_region
      %259 = dma.done [#allocation14], 16
    $region137: #{tpu_custom_call.1} parent=1 // pred_fallthru
      _
    // Predicated region
    $region138: #{tpu_custom_call.1} parent=1 // pred_check
      _
    $region139: #{tpu_custom_call.1} parent=1 // pred_check_branch
      %261 = sbr.rel (0) target = $region141
    $region140: #{tpu_custom_call.1} parent=1 // pred_region
      %262 = dma.done [#allocation17], 256
    $region141: #{tpu_custom_call.1} parent=1 // pred_fallthru
      _
    // Predicated region
    $region142: #{tpu_custom_call.1} parent=1 // pred_check
      _
    $region143: #{tpu_custom_call.1} parent=1 // pred_check_branch
      %264 = sbr.rel (0) target = $region145
    $region144: #{tpu_custom_call.1} parent=1 // pred_region
      %265 = dma.done [#allocation17], 7168
    $region145: #{tpu_custom_call.1} parent=1 // pred_fallthru
      _
    // Predicated region
    $region146: #{tpu_custom_call.1} parent=1 // pred_check
      _
    $region147: #{tpu_custom_call.1} parent=1 // pred_check_branch
      %267 = sbr.rel (0) target = $region149
    $region148: #{tpu_custom_call.1} parent=1 // pred_region
      %268 = dma.done [#allocation20], 5376
    $region149: #{tpu_custom_call.1} parent=1 // pred_fallthru
      _
    // Predicated region
    $region150: #{tpu_custom_call.1} parent=1 // pred_check
      _
    $region151: #{tpu_custom_call.1} parent=1 // pred_check_branch
      %270 = sbr.rel (0) target = $region153
    $region152: #{tpu_custom_call.1} parent=1 // pred_region
      %271 = dma.done [#allocation20], 16
    $region153: #{tpu_custom_call.1} parent=1 // pred_fallthru
      _
    // Predicated region
    $region154: #{tpu_custom_call.1} parent=1 // pred_check
      _
    $region155: #{tpu_custom_call.1} parent=1 // pred_check_branch
      %273 = sbr.rel (0) target = $region157
    $region156: #{tpu_custom_call.1} parent=1 // pred_region
      %274 = dma.done [#allocation23], 5376
    $region157: #{tpu_custom_call.1} parent=1 // pred_fallthru
      _
    // Predicated region
    $region158: #{tpu_custom_call.1} parent=1 // pred_check
      _
    $region159: #{tpu_custom_call.1} parent=1 // pred_check_branch
      %276 = sbr.rel (0) target = $region161
    $region160: #{tpu_custom_call.1} parent=1 // pred_region
      %277 = dma.done [#allocation23], 16
    $region161: #{tpu_custom_call.1} parent=1 // pred_fallthru
      _
    // Predicated region
    $region162: #{tpu_custom_call.1} parent=1 // pred_check
      _
    $region163: #{tpu_custom_call.1} parent=1 // pred_check_branch
      %279 = sbr.rel (0) target = $region165
    $region164: #{tpu_custom_call.1} parent=1 // pred_region
      %280 = dma.done [#allocation26], 5376
    $region165: #{tpu_custom_call.1} parent=1 // pred_fallthru
      _
    // Predicated region
    $region166: #{tpu_custom_call.1} parent=1 // pred_check
      _
    $region167: #{tpu_custom_call.1} parent=1 // pred_check_branch
      %282 = sbr.rel (0) target = $region169
    $region168: #{tpu_custom_call.1} parent=1 // pred_region
      %283 = dma.done [#allocation26], 16
    $region169: #{tpu_custom_call.1} parent=1 // pred_fallthru
      _
    // Predicated region
    $region170: #{tpu_custom_call.1} parent=1 // pred_check
      _
    $region171: #{tpu_custom_call.1} parent=1 // pred_check_branch
      %285 = sbr.rel (0) target = $region173
    $region172: #{tpu_custom_call.1} parent=1 // pred_region
      %286 = dma.done [#allocation29], 16
    $region173: #{tpu_custom_call.1} parent=1 // pred_fallthru
      _
    %v287 = vld [vmem:[%s0] sm:$0xff]
    %v288 = vld [vmem:[%s0 + $0x8] sm:$0xff]
    %v289 = vld [vmem:[%s0 + $0x10] sm:$0xff]
    %v290 = vld [vmem:[%s0 + $0x18] sm:$0xff]
    %v291 = vld [vmem:[%s0 + $0x20] sm:$0xff]
    %v292 = vld [vmem:[%s0 + $0x28] sm:$0xff]
    %v293 = vld [vmem:[%s0 + $0x30] sm:$0xff]
    %v294 = vld [vmem:[#allocation4] sm:$0xff]
    %v295 = vld [vmem:[#allocation4 + $0x8] sm:$0xff]
    %v296 = vld [vmem:[#allocation4 + $0x10] sm:$0xff]
    %v297 = vld [vmem:[#allocation4 + $0x18] sm:$0xff]
    %v298 = vld [vmem:[#allocation4 + $0x20] sm:$0xff]
    %v299 = vld [vmem:[#allocation4 + $0x28] sm:$0xff]
    %v300 = vld [vmem:[#allocation4 + $0x30] sm:$0xf]
    %v301 = vld [vmem:[#allocation4 + $0x38] sm:$0xf]
    %v302 = vld [vmem:[%s0 + $0x2] sm:$0xff]
    %v303 = vld [vmem:[%s0 + $0xa] sm:$0xff]
    %v304 = vld [vmem:[%s0 + $0x12] sm:$0xff]
    %v305 = vld [vmem:[%s0 + $0x1a] sm:$0xff]
    %v306 = vld [vmem:[%s0 + $0x22] sm:$0xff]
    %v307 = vld [vmem:[%s0 + $0x2a] sm:$0xff]
    %v308 = vld [vmem:[%s0 + $0x32] sm:$0xff]
    %s309 = scalar_lea.vmem [#allocation4], 64
    %v310 = vld [vmem:[%s309] sm:$0xff]
    %v311 = vld [vmem:[%s309 + $0x8] sm:$0xff]
    %v312 = vld [vmem:[%s309 + $0x10] sm:$0xff]
    %v313 = vld [vmem:[%s309 + $0x18] sm:$0xff]
    %v314 = vld [vmem:[%s309 + $0x20] sm:$0xff]
    %v315 = vld [vmem:[%s309 + $0x28] sm:$0xff]
    %v316 = vld [vmem:[%s309 + $0x30] sm:$0xf]
    %v317 = vld [vmem:[%s309 + $0x38] sm:$0xf]
    %vm318 = vcmask 228352
    %v320 = vsel %vm318, %v302, 0
    %v323 = vsel %vm318, %v303, 0
    %v326 = vsel %vm318, %v304, 0
    %v329 = vsel %vm318, %v305, 0
    %v332 = vsel %vm318, %v306, 0
    %v335 = vsel %vm318, %v307, 0
    %v338 = vsel %vm318, %v308, 0
    %vm340 = vcmask 1043456
    %v342 = vsel %vm340, %v316, 0
    %v345 = vsel %vm340, %v317, 0
    %347 = vmatprep.subr.mxu0 %v311
    %348 = vmatpush1.msra.mxu0 %v310
    %349 = vmatprep.subr.mxu0 %v313
    %350 = vmatpush1.msra.mxu0 %v312
    %351 = vmatprep.subr.mxu0 %v315
    %352 = vmatpush1.msra.mxu0 %v314
    %353 = vmatprep.subr.mxu0 %v345
    %354 = vmatpush1.msra.mxu0 %v342
    %355 = vmatprep.subr.mxu0 0.0
    %356 = vmatpush1.msra.mxu0 0.0
    %357 = vmatprep.subr.mxu0 0.0
    %358 = vmatpush1.msra.mxu0 0.0
    %359 = vmatprep.subr.mxu0 0.0
    %360 = vmatpush1.msra.mxu0 0.0
    %361 = vmatprep.subr.mxu0 0.0
    %362 = vmatpush1.msra.mxu0 0.0
    %363 = vmatprep.subr.mxu0 0.0
    %364 = vmatpush1.msra.mxu0 0.0
    %365 = vmatprep.subr.mxu0 0.0
    %366 = vmatpush1.msra.mxu0 0.0
    %367 = vmatprep.subr.mxu0 0.0
    %368 = vmatpush1.msra.mxu0 0.0
    %369 = vmatprep.subr.mxu0 0.0
    %370 = vmatpush1.msra.mxu0 0.0
    %371 = vmatprep.subr.mxu0 0.0
    %372 = vmatpush1.msra.mxu0 0.0
    %373 = vmatprep.subr.mxu0 0.0
    %374 = vmatpush1.msra.mxu0 0.0
    %375 = vmatprep.subr.mxu0 0.0
    %376 = vmatpush1.msra.mxu0 0.0
    %377 = vmatprep.subr.mxu0 0.0
    %378 = vmatpush1.msra.mxu0 0.0
    %379 = vmatprep.subr.mxu0 0.0
    %380 = vmatpush1.msra.mxu0 0.0
    %381 = vmatprep.subr.mxu0 0.0
    %382 = vmatpush1.msra.mxu0 0.0
    %383 = vmatprep.subr.mxu0 0.0
    %384 = vmatpush1.msra.mxu0 0.0
    %385 = vmatprep.subr.mxu0 0.0
    %386 = vmatpush1.msra.mxu0 0.0
    %387 = vmatprep.subr.mxu0 0.0
    %388 = vmatpush1.msra.mxu0 0.0
    %389 = vmatprep.subr.mxu0 0.0
    %390 = vmatpush1.msra.mxu0 0.0
    %391 = vmatprep.subr.mxu0 0.0
    %392 = vmatpush1.msra.mxu0 0.0
    %393 = vmatprep.subr.mxu0 0.0
    %394 = vmatpush1.msra.mxu0 0.0
    %395 = vmatprep.subr.mxu0 0.0
    %396 = vmatpush1.msra.mxu0 0.0
    %397 = vmatprep.subr.mxu0 0.0
    %398 = vmatpush1.msra.mxu0 0.0
    %399 = vmatprep.subr.mxu0 0.0
    %400 = vmatpush1.msra.mxu0 0.0
    %401 = vmatprep.subr.mxu0 0.0
    %402 = vmatpush1.msra.mxu0 0.0
    %403 = vmatprep.subr.mxu0 0.0
    %404 = vmatpush1.msra.mxu0 0.0
    %405 = vmatprep.subr.mxu0 0.0
    %406 = vmatpush1.msra.mxu0 0.0
    %407 = vmatprep.subr.mxu0 0.0
    %408 = vmatpush1.msra.mxu0 0.0
    %409 = vmatprep.subr.mxu0 0.0
    %410 = vmatpush1.msra.mxu0 0.0
    %411 = vmatprep.mubr.f32.mxu0 0.0
    %412 = vmatmul.mubr.f32.gmra.mrb[0].mxu0 %v320
    %v413 = vpop.f32.mrb[0].mxu0
    %v414 = vadd.f32 0.0, %v413
    %v415 = vpop.f32.mrb[0].mxu0
    %v416 = vadd.f32 0.0, %v415
    %417 = vmatprep.mubr.f32.mxu0 0.0
    %418 = vmatmul.mubr.f32.gmra.mrb[0].mxu0 %v323
    %v419 = vpop.f32.mrb[0].mxu0
    %v420 = vadd.f32 0.0, %v419
    %v421 = vpop.f32.mrb[0].mxu0
    %v422 = vadd.f32 0.0, %v421
    %423 = vmatprep.mubr.f32.mxu0 0.0
    %424 = vmatmul.mubr.f32.gmra.mrb[0].mxu0 %v326
    %v425 = vpop.f32.mrb[0].mxu0
    %v426 = vadd.f32 0.0, %v425
    %v427 = vpop.f32.mrb[0].mxu0
    %v428 = vadd.f32 0.0, %v427
    %429 = vmatprep.mubr.f32.mxu0 0.0
    %430 = vmatmul.mubr.f32.gmra.mrb[0].mxu0 %v329
    %v431 = vpop.f32.mrb[0].mxu0
    %v432 = vadd.f32 0.0, %v431
    %v433 = vpop.f32.mrb[0].mxu0
    %v434 = vadd.f32 0.0, %v433
    %435 = vmatprep.mubr.f32.mxu0 0.0
    %436 = vmatmul.mubr.f32.gmra.mrb[0].mxu0 %v332
    %v437 = vpop.f32.mrb[0].mxu0
    %v438 = vadd.f32 0.0, %v437
    %v439 = vpop.f32.mrb[0].mxu0
    %v440 = vadd.f32 0.0, %v439
    %441 = vmatprep.mubr.f32.mxu0 0.0
    %442 = vmatmul.mubr.f32.gmra.mrb[0].mxu0 %v335
    %v443 = vpop.f32.mrb[0].mxu0
    %v444 = vadd.f32 0.0, %v443
    %v445 = vpop.f32.mrb[0].mxu0
    %v446 = vadd.f32 0.0, %v445
    %447 = vmatprep.mubr.f32.mxu0 0.0
    %448 = vmatmul.mubr.f32.gmra.mrb[0].mxu0 %v338
    %v449 = vpop.f32.mrb[0].mxu0
    %v450 = vadd.f32 0.0, %v449
    %v451 = vpop.f32.mrb[0].mxu0
    %v452 = vadd.f32 0.0, %v451
    %453 = vdwg.mxu0
    %v455 = vsel %vm318, %v287, 0
    %v458 = vsel %vm318, %v288, 0
    %v461 = vsel %vm318, %v289, 0
    %v464 = vsel %vm318, %v290, 0
    %v467 = vsel %vm318, %v291, 0
    %v470 = vsel %vm318, %v292, 0
    %v473 = vsel %vm318, %v293, 0
    %v476 = vsel %vm340, %v300, 0
    %v479 = vsel %vm340, %v301, 0
    %481 = vmatprep.subr.mxu0 %v295
    %482 = vmatpush1.msra.mxu0 %v294
    %483 = vmatprep.subr.mxu0 %v297
    %484 = vmatpush1.msra.mxu0 %v296
    %485 = vmatprep.subr.mxu0 %v299
    %486 = vmatpush1.msra.mxu0 %v298
    %487 = vmatprep.subr.mxu0 %v479
    %488 = vmatpush1.msra.mxu0 %v476
    %489 = vmatprep.subr.mxu0 0.0
    %490 = vmatpush1.msra.mxu0 0.0
    %491 = vmatprep.subr.mxu0 0.0
    %492 = vmatpush1.msra.mxu0 0.0
    %493 = vmatprep.subr.mxu0 0.0
    %494 = vmatpush1.msra.mxu0 0.0
    %495 = vmatprep.subr.mxu0 0.0
    %496 = vmatpush1.msra.mxu0 0.0
    %497 = vmatprep.subr.mxu0 0.0
    %498 = vmatpush1.msra.mxu0 0.0
    %499 = vmatprep.subr.mxu0 0.0
    %500 = vmatpush1.msra.mxu0 0.0
    %501 = vmatprep.subr.mxu0 0.0
    %502 = vmatpush1.msra.mxu0 0.0
    %503 = vmatprep.subr.mxu0 0.0
    %504 = vmatpush1.msra.mxu0 0.0
    %505 = vmatprep.subr.mxu0 0.0
    %506 = vmatpush1.msra.mxu0 0.0
    %507 = vmatprep.subr.mxu0 0.0
    %508 = vmatpush1.msra.mxu0 0.0
    %509 = vmatprep.subr.mxu0 0.0
    %510 = vmatpush1.msra.mxu0 0.0
    %511 = vmatprep.subr.mxu0 0.0
    %512 = vmatpush1.msra.mxu0 0.0
    %513 = vmatprep.subr.mxu0 0.0
    %514 = vmatpush1.msra.mxu0 0.0
    %515 = vmatprep.subr.mxu0 0.0
    %516 = vmatpush1.msra.mxu0 0.0
    %517 = vmatprep.subr.mxu0 0.0
    %518 = vmatpush1.msra.mxu0 0.0
    %519 = vmatprep.subr.mxu0 0.0
    %520 = vmatpush1.msra.mxu0 0.0
    %521 = vmatprep.subr.mxu0 0.0
    %522 = vmatpush1.msra.mxu0 0.0
    %523 = vmatprep.subr.mxu0 0.0
    %524 = vmatpush1.msra.mxu0 0.0
    %525 = vmatprep.subr.mxu0 0.0
    %526 = vmatpush1.msra.mxu0 0.0
    %527 = vmatprep.subr.mxu0 0.0
    %528 = vmatpush1.msra.mxu0 0.0
    %529 = vmatprep.subr.mxu0 0.0
    %530 = vmatpush1.msra.mxu0 0.0
    %531 = vmatprep.subr.mxu0 0.0
    %532 = vmatpush1.msra.mxu0 0.0
    %533 = vmatprep.subr.mxu0 0.0
    %534 = vmatpush1.msra.mxu0 0.0
    %535 = vmatprep.subr.mxu0 0.0
    %536 = vmatpush1.msra.mxu0 0.0
    %537 = vmatprep.subr.mxu0 0.0
    %538 = vmatpush1.msra.mxu0 0.0
    %539 = vmatprep.subr.mxu0 0.0
    %540 = vmatpush1.msra.mxu0 0.0
    %541 = vmatprep.subr.mxu0 0.0
    %542 = vmatpush1.msra.mxu0 0.0
    %543 = vmatprep.subr.mxu0 0.0
    %544 = vmatpush1.msra.mxu0 0.0
    %545 = vmatprep.mubr.f32.mxu0 0.0
    %546 = vmatmul.mubr.f32.gmra.mrb[0].mxu0 %v455
    %v547 = vpop.f32.mrb[0].mxu0
    %v548 = vadd.f32 %v414, %v547
    %v549 = vpop.f32.mrb[0].mxu0
    %v550 = vadd.f32 %v416, %v549
    %551 = vmatprep.mubr.f32.mxu0 0.0
    %552 = vmatmul.mubr.f32.gmra.mrb[0].mxu0 %v458
    %v553 = vpop.f32.mrb[0].mxu0
    %v554 = vadd.f32 %v420, %v553
    %v555 = vpop.f32.mrb[0].mxu0
    %v556 = vadd.f32 %v422, %v555
    %557 = vmatprep.mubr.f32.mxu0 0.0
    %558 = vmatmul.mubr.f32.gmra.mrb[0].mxu0 %v461
    %v559 = vpop.f32.mrb[0].mxu0
    %v560 = vadd.f32 %v426, %v559
    %v561 = vpop.f32.mrb[0].mxu0
    %v562 = vadd.f32 %v428, %v561
    %563 = vmatprep.mubr.f32.mxu0 0.0
    %564 = vmatmul.mubr.f32.gmra.mrb[0].mxu0 %v464
    %v565 = vpop.f32.mrb[0].mxu0
    %v566 = vadd.f32 %v432, %v565
    %v567 = vpop.f32.mrb[0].mxu0
    %v568 = vadd.f32 %v434, %v567
    %569 = vmatprep.mubr.f32.mxu0 0.0
    %570 = vmatmul.mubr.f32.gmra.mrb[0].mxu0 %v467
    %v571 = vpop.f32.mrb[0].mxu0
    %v572 = vadd.f32 %v438, %v571
    %v573 = vpop.f32.mrb[0].mxu0
    %v574 = vadd.f32 %v440, %v573
    %575 = vmatprep.mubr.f32.mxu0 0.0
    %576 = vmatmul.mubr.f32.gmra.mrb[0].mxu0 %v470
    %v577 = vpop.f32.mrb[0].mxu0
    %v578 = vadd.f32 %v444, %v577
    %v579 = vpop.f32.mrb[0].mxu0
    %v580 = vadd.f32 %v446, %v579
    %581 = vmatprep.mubr.f32.mxu0 0.0
    %582 = vmatmul.mubr.f32.gmra.mrb[0].mxu0 %v473
    %v583 = vpop.f32.mrb[0].mxu0
    %v584 = vadd.f32 %v450, %v583
    %v585 = vpop.f32.mrb[0].mxu0
    %v586 = vadd.f32 %v452, %v585
    %587 = vdwg.mxu0
    %v588 = vld [vmem:[%s0 + $0x4] sm:$0xff]
    %v589 = vld [vmem:[%s0 + $0xc] sm:$0xff]
    %v590 = vld [vmem:[%s0 + $0x14] sm:$0xff]
    %v591 = vld [vmem:[%s0 + $0x1c] sm:$0xff]
    %v592 = vld [vmem:[%s0 + $0x24] sm:$0xff]
    %v593 = vld [vmem:[%s0 + $0x2c] sm:$0xff]
    %v594 = vld [vmem:[%s0 + $0x34] sm:$0xff]
    %s595 = scalar_lea.vmem [#allocation4], 128
    %v596 = vld [vmem:[%s595] sm:$0xff]
    %v597 = vld [vmem:[%s595 + $0x8] sm:$0xff]
    %v598 = vld [vmem:[%s595 + $0x10] sm:$0xff]
    %v599 = vld [vmem:[%s595 + $0x18] sm:$0xff]
    %v600 = vld [vmem:[%s595 + $0x20] sm:$0xff]
    %v601 = vld [vmem:[%s595 + $0x28] sm:$0xff]
    %v602 = vld [vmem:[%s595 + $0x30] sm:$0xf]
    %v603 = vld [vmem:[%s595 + $0x38] sm:$0xf]
    %v605 = vsel %vm318, %v588, 0
    %v608 = vsel %vm318, %v589, 0
    %v611 = vsel %vm318, %v590, 0
    %v614 = vsel %vm318, %v591, 0
    %v617 = vsel %vm318, %v592, 0
    %v620 = vsel %vm318, %v593, 0
    %v623 = vsel %vm318, %v594, 0
    %v626 = vsel %vm340, %v602, 0
    %v629 = vsel %vm340, %v603, 0
    %631 = vmatprep.subr.mxu0 %v597
    %632 = vmatpush1.msra.mxu0 %v596
    %633 = vmatprep.subr.mxu0 %v599
    %634 = vmatpush1.msra.mxu0 %v598
    %635 = vmatprep.subr.mxu0 %v601
    %636 = vmatpush1.msra.mxu0 %v600
    %637 = vmatprep.subr.mxu0 %v629
    %638 = vmatpush1.msra.mxu0 %v626
    %639 = vmatprep.subr.mxu0 0.0
    %640 = vmatpush1.msra.mxu0 0.0
    %641 = vmatprep.subr.mxu0 0.0
    %642 = vmatpush1.msra.mxu0 0.0
    %643 = vmatprep.subr.mxu0 0.0
    %644 = vmatpush1.msra.mxu0 0.0
    %645 = vmatprep.subr.mxu0 0.0
    %646 = vmatpush1.msra.mxu0 0.0
    %647 = vmatprep.subr.mxu0 0.0
    %648 = vmatpush1.msra.mxu0 0.0
    %649 = vmatprep.subr.mxu0 0.0
    %650 = vmatpush1.msra.mxu0 0.0
    %651 = vmatprep.subr.mxu0 0.0
    %652 = vmatpush1.msra.mxu0 0.0
    %653 = vmatprep.subr.mxu0 0.0
    %654 = vmatpush1.msra.mxu0 0.0
    %655 = vmatprep.subr.mxu0 0.0
    %656 = vmatpush1.msra.mxu0 0.0
    %657 = vmatprep.subr.mxu0 0.0
    %658 = vmatpush1.msra.mxu0 0.0
    %659 = vmatprep.subr.mxu0 0.0
    %660 = vmatpush1.msra.mxu0 0.0
    %661 = vmatprep.subr.mxu0 0.0
    %662 = vmatpush1.msra.mxu0 0.0
    %663 = vmatprep.subr.mxu0 0.0
    %664 = vmatpush1.msra.mxu0 0.0
    %665 = vmatprep.subr.mxu0 0.0
    %666 = vmatpush1.msra.mxu0 0.0
    %667 = vmatprep.subr.mxu0 0.0
    %668 = vmatpush1.msra.mxu0 0.0
    %669 = vmatprep.subr.mxu0 0.0
    %670 = vmatpush1.msra.mxu0 0.0
    %671 = vmatprep.subr.mxu0 0.0
    %672 = vmatpush1.msra.mxu0 0.0
    %673 = vmatprep.subr.mxu0 0.0
    %674 = vmatpush1.msra.mxu0 0.0
    %675 = vmatprep.subr.mxu0 0.0
    %676 = vmatpush1.msra.mxu0 0.0
    %677 = vmatprep.subr.mxu0 0.0
    %678 = vmatpush1.msra.mxu0 0.0
    %679 = vmatprep.subr.mxu0 0.0
    %680 = vmatpush1.msra.mxu0 0.0
    %681 = vmatprep.subr.mxu0 0.0
    %682 = vmatpush1.msra.mxu0 0.0
    %683 = vmatprep.subr.mxu0 0.0
    %684 = vmatpush1.msra.mxu0 0.0
    %685 = vmatprep.subr.mxu0 0.0
    %686 = vmatpush1.msra.mxu0 0.0
    %687 = vmatprep.subr.mxu0 0.0
    %688 = vmatpush1.msra.mxu0 0.0
    %689 = vmatprep.subr.mxu0 0.0
    %690 = vmatpush1.msra.mxu0 0.0
    %691 = vmatprep.subr.mxu0 0.0
    %692 = vmatpush1.msra.mxu0 0.0
    %693 = vmatprep.subr.mxu0 0.0
    %694 = vmatpush1.msra.mxu0 0.0
    %695 = vmatprep.mubr.f32.mxu0 0.0
    %696 = vmatmul.mubr.f32.gmra.mrb[0].mxu0 %v605
    %v697 = vpop.f32.mrb[0].mxu0
    %v698 = vadd.f32 0.0, %v697
    %v699 = vpop.f32.mrb[0].mxu0
    %v700 = vadd.f32 0.0, %v699
    %701 = vmatprep.mubr.f32.mxu0 0.0
    %702 = vmatmul.mubr.f32.gmra.mrb[0].mxu0 %v608
    %v703 = vpop.f32.mrb[0].mxu0
    %v704 = vadd.f32 0.0, %v703
    %v705 = vpop.f32.mrb[0].mxu0
    %v706 = vadd.f32 0.0, %v705
    %707 = vmatprep.mubr.f32.mxu0 0.0
    %708 = vmatmul.mubr.f32.gmra.mrb[0].mxu0 %v611
    %v709 = vpop.f32.mrb[0].mxu0
    %v710 = vadd.f32 0.0, %v709
    %v711 = vpop.f32.mrb[0].mxu0
    %v712 = vadd.f32 0.0, %v711
    %713 = vmatprep.mubr.f32.mxu0 0.0
    %714 = vmatmul.mubr.f32.gmra.mrb[0].mxu0 %v614
    %v715 = vpop.f32.mrb[0].mxu0
    %v716 = vadd.f32 0.0, %v715
    %v717 = vpop.f32.mrb[0].mxu0
    %v718 = vadd.f32 0.0, %v717
    %719 = vmatprep.mubr.f32.mxu0 0.0
    %720 = vmatmul.mubr.f32.gmra.mrb[0].mxu0 %v617
    %v721 = vpop.f32.mrb[0].mxu0
    %v722 = vadd.f32 0.0, %v721
    %v723 = vpop.f32.mrb[0].mxu0
    %v724 = vadd.f32 0.0, %v723
    %725 = vmatprep.mubr.f32.mxu0 0.0
    %726 = vmatmul.mubr.f32.gmra.mrb[0].mxu0 %v620
    %v727 = vpop.f32.mrb[0].mxu0
    %v728 = vadd.f32 0.0, %v727
    %v729 = vpop.f32.mrb[0].mxu0
    %v730 = vadd.f32 0.0, %v729
    %731 = vmatprep.mubr.f32.mxu0 0.0
    %732 = vmatmul.mubr.f32.gmra.mrb[0].mxu0 %v623
    %v733 = vpop.f32.mrb[0].mxu0
    %v734 = vadd.f32 0.0, %v733
    %v735 = vpop.f32.mrb[0].mxu0
    %v736 = vadd.f32 0.0, %v735
    %737 = vdwg.mxu0
    %v738 = vadd.f32 %v548, %v698
    %v739 = vadd.f32 %v550, %v700
    %v740 = vadd.f32 %v554, %v704
    %v741 = vadd.f32 %v556, %v706
    %v742 = vadd.f32 %v560, %v710
    %v743 = vadd.f32 %v562, %v712
    %v744 = vadd.f32 %v566, %v716
    %v745 = vadd.f32 %v568, %v718
    %v746 = vadd.f32 %v572, %v722
    %v747 = vadd.f32 %v574, %v724
    %v748 = vadd.f32 %v578, %v728
    %v749 = vadd.f32 %v580, %v730
    %v750 = vadd.f32 %v584, %v734
    %v751 = vadd.f32 %v586, %v736
    %v752 = vld [vmem:[#allocation7] sm:$0x3]
    %v754 = vlaneseq
    %v755 = vshrl.u32 %v754, 7
    %v756 = vsub.s32 0, %v755
    %v757 = vrot.slane %v752, %v756
    %v758 = vlaneseq
    %v759 = vshrl.u32 %v758, 7
    %v760 = vsub.s32 1, %v759
    %v761 = vrot.slane %v752, %v760
    %v764 = vadd.f32 %v738, %v757
    %v765 = vadd.f32 %v739, %v761
    %v766 = vadd.f32 %v740, %v757
    %v767 = vadd.f32 %v741, %v761
    %v768 = vadd.f32 %v742, %v757
    %v769 = vadd.f32 %v743, %v761
    %v770 = vadd.f32 %v744, %v757
    %v771 = vadd.f32 %v745, %v761
    %v772 = vadd.f32 %v746, %v757
    %v773 = vadd.f32 %v747, %v761
    %v774 = vadd.f32 %v748, %v757
    %v775 = vadd.f32 %v749, %v761
    %v776 = vadd.f32 %v750, %v757
    %v777 = vadd.f32 %v751, %v761
    %v778 = vmul.f32 %v764, 0.01
    %v779 = vmul.f32 %v765, 0.01
    %v780 = vmul.f32 %v766, 0.01
    %v781 = vmul.f32 %v767, 0.01
    %v782 = vmul.f32 %v768, 0.01
    %v783 = vmul.f32 %v769, 0.01
    %v784 = vmul.f32 %v770, 0.01
    %v785 = vmul.f32 %v771, 0.01
    %v786 = vmul.f32 %v772, 0.01
    %v787 = vmul.f32 %v773, 0.01
    %v788 = vmul.f32 %v774, 0.01
    %v789 = vmul.f32 %v775, 0.01
    %v790 = vmul.f32 %v776, 0.01
    %v791 = vmul.f32 %v777, 0.01
    %v792 = vmax.f32 %v764, %v778
    %v793 = vmax.f32 %v765, %v779
    %v794 = vmax.f32 %v766, %v780
    %v795 = vmax.f32 %v767, %v781
    %v796 = vmax.f32 %v768, %v782
    %v797 = vmax.f32 %v769, %v783
    %v798 = vmax.f32 %v770, %v784
    %v799 = vmax.f32 %v771, %v785
    %v800 = vmax.f32 %v772, %v786
    %v801 = vmax.f32 %v773, %v787
    %v802 = vmax.f32 %v774, %v788
    %v803 = vmax.f32 %v775, %v789
    %v804 = vmax.f32 %v776, %v790
    %v805 = vmax.f32 %v777, %v791
    %806 = vst [vmem:[#allocation2] sm:$0x3] 0.0
    %vm807 = vcmask 779264
    %808 = vst.msk [vmem:[#allocation2 + $0x8] sm:$0x3] %vm807, 0.0
    %809 = vst [vmem:[#allocation2 + $0x70] sm:$0xc] 0.0
    %vm810 = vcmask 781314
    %811 = vst.msk [vmem:[#allocation2 + $0x78] sm:$0xc] %vm810, 0.0
    %vm826 = vcmask 1041408
    %v827 = vrot.slane %v792, 6
    %v828 = vrot.slane %v793, 6
    %v829 = vrot.slane %v794, 6
    %v830 = vsel %vm826, %v827, %v829
    %v831 = vrot.slane %v795, 6
    %v832 = vsel %vm826, %v828, %v831
    %v833 = vrot.slane %v796, 6
    %v834 = vsel %vm826, %v829, %v833
    %v835 = vrot.slane %v797, 6
    %v836 = vsel %vm826, %v831, %v835
    %v837 = vrot.slane %v798, 6
    %v838 = vsel %vm826, %v833, %v837
    %v839 = vrot.slane %v799, 6
    %v840 = vsel %vm826, %v835, %v839
    %v841 = vrot.slane %v800, 6
    %v842 = vsel %vm826, %v837, %v841
    %v843 = vrot.slane %v801, 6
    %v844 = vsel %vm826, %v839, %v843
    %v845 = vrot.slane %v802, 6
    %v846 = vsel %vm826, %v841, %v845
    %v847 = vrot.slane %v803, 6
    %v848 = vsel %vm826, %v843, %v847
    %v849 = vrot.slane %v804, 6
    %v850 = vsel %vm826, %v845, %v849
    %v851 = vrot.slane %v805, 6
    %v852 = vsel %vm826, %v847, %v851
    %869 = vst [vmem:[#allocation2] sm:$0xfc] %v827
    %vm870 = vcmask 785410
    %871 = vst.msk [vmem:[#allocation2 + $0x8] sm:$0xfc] %vm870, %v828
    %872 = vst [vmem:[#allocation2 + $0x10] sm:$0xff] %v830
    %vm873 = vcmask 785408
    %874 = vst.msk [vmem:[#allocation2 + $0x18] sm:$0xff] %vm873, %v832
    %875 = vst [vmem:[#allocation2 + $0x20] sm:$0xff] %v834
    %876 = vst.msk [vmem:[#allocation2 + $0x28] sm:$0xff] %vm873, %v836
    %877 = vst [vmem:[#allocation2 + $0x30] sm:$0xff] %v838
    %878 = vst.msk [vmem:[#allocation2 + $0x38] sm:$0xff] %vm873, %v840
    %879 = vst [vmem:[#allocation2 + $0x40] sm:$0xff] %v842
    %880 = vst.msk [vmem:[#allocation2 + $0x48] sm:$0xff] %vm873, %v844
    %881 = vst [vmem:[#allocation2 + $0x50] sm:$0xff] %v846
    %882 = vst.msk [vmem:[#allocation2 + $0x58] sm:$0xff] %vm873, %v848
    %883 = vst [vmem:[#allocation2 + $0x60] sm:$0xff] %v850
    %884 = vst.msk [vmem:[#allocation2 + $0x68] sm:$0xff] %vm873, %v852
    %885 = vst [vmem:[#allocation2 + $0x70] sm:$0x3] %v849
    %886 = vst.msk [vmem:[#allocation2 + $0x78] sm:$0x3] %vm807, %v851
    %v887 = vld [vmem:[#allocation2] sm:$0xff]
    %v888 = vld [vmem:[#allocation2 + $0x8] sm:$0xff]
    %v889 = vld [vmem:[#allocation2 + $0x10] sm:$0xff]
    %v890 = vld [vmem:[#allocation2 + $0x18] sm:$0xff]
    %v891 = vld [vmem:[#allocation2 + $0x20] sm:$0xff]
    %v892 = vld [vmem:[#allocation2 + $0x28] sm:$0xff]
    %v893 = vld [vmem:[#allocation2 + $0x30] sm:$0xff]
    %v894 = vld [vmem:[#allocation2 + $0x38] sm:$0xff]
    %v895 = vld [vmem:[#allocation2 + $0x40] sm:$0xff]
    %v896 = vld [vmem:[#allocation2 + $0x48] sm:$0xff]
    %v897 = vld [vmem:[#allocation2 + $0x50] sm:$0xff]
    %v898 = vld [vmem:[#allocation2 + $0x58] sm:$0xff]
    %v899 = vld [vmem:[#allocation2 + $0x60] sm:$0xff]
    %v900 = vld [vmem:[#allocation2 + $0x68] sm:$0xff]
    %v901 = vld [vmem:[%s3] sm:$0xff]
    %v902 = vld [vmem:[%s3 + $0x8] sm:$0xff]
    %v903 = vld [vmem:[%s3 + $0x10] sm:$0xff]
    %v904 = vld [vmem:[%s3 + $0x18] sm:$0xff]
    %v905 = vld [vmem:[%s3 + $0x20] sm:$0xff]
    %v906 = vld [vmem:[%s3 + $0x28] sm:$0xff]
    %v907 = vld [vmem:[%s3 + $0x30] sm:$0xff]
    %v908 = vld [vmem:[%s3 + $0x38] sm:$0xff]
    %v909 = vld [vmem:[%s3 + $0x40] sm:$0xff]
    %v910 = vld [vmem:[%s3 + $0x48] sm:$0xff]
    %v911 = vld [vmem:[%s3 + $0x50] sm:$0xff]
    %v912 = vld [vmem:[%s3 + $0x58] sm:$0xff]
    %v913 = vld [vmem:[%s3 + $0x60] sm:$0xff]
    %v914 = vld [vmem:[%s3 + $0x68] sm:$0xff]
    %v915 = vld [vmem:[%s3 + $0x70] sm:$0xff]
    %v916 = vld [vmem:[%s3 + $0x78] sm:$0xff]
    %v917 = vld [vmem:[%s3 + $0x80] sm:$0xff]
    %v918 = vld [vmem:[%s3 + $0x88] sm:$0xff]
    %v919 = vld [vmem:[%s3 + $0x90] sm:$0xff]
    %v920 = vld [vmem:[%s3 + $0x98] sm:$0xff]
    %v921 = vld [vmem:[%s3 + $0xa0] sm:$0xff]
    %v922 = vld [vmem:[%s3 + $0xa8] sm:$0xff]
    %v923 = vld [vmem:[%s3 + $0xb0] sm:$0xff]
    %v924 = vld [vmem:[%s3 + $0xb8] sm:$0xff]
    %v925 = vld [vmem:[%s3 + $0xc0] sm:$0xff]
    %v926 = vld [vmem:[%s3 + $0xc8] sm:$0xff]
    %v927 = vld [vmem:[%s3 + $0xd0] sm:$0xff]
    %v928 = vld [vmem:[%s3 + $0xd8] sm:$0xff]
    %v929 = vld [vmem:[%s3 + $0xe0] sm:$0xff]
    %v930 = vld [vmem:[%s3 + $0xe8] sm:$0xff]
    %v931 = vld [vmem:[%s3 + $0xf0] sm:$0xff]
    %v932 = vld [vmem:[%s3 + $0xf8] sm:$0xff]
    %v933 = vld [vmem:[%s3 + $0x100] sm:$0xff]
    %v934 = vld [vmem:[%s3 + $0x108] sm:$0xff]
    %v935 = vld [vmem:[%s3 + $0x110] sm:$0xff]
    %v936 = vld [vmem:[%s3 + $0x118] sm:$0xff]
    %v937 = vld [vmem:[%s3 + $0x120] sm:$0xff]
    %v938 = vld [vmem:[%s3 + $0x128] sm:$0xff]
    %v939 = vld [vmem:[%s3 + $0x130] sm:$0xff]
    %v940 = vld [vmem:[%s3 + $0x138] sm:$0xff]
    %v941 = vld [vmem:[%s3 + $0x140] sm:$0xff]
    %v942 = vld [vmem:[%s3 + $0x148] sm:$0xff]
    %v943 = vld [vmem:[%s3 + $0x150] sm:$0xff]
    %v944 = vld [vmem:[%s3 + $0x158] sm:$0xff]
    %v945 = vld [vmem:[%s3 + $0x160] sm:$0xff]
    %v946 = vld [vmem:[%s3 + $0x168] sm:$0xff]
    %v947 = vld [vmem:[%s3 + $0x170] sm:$0xff]
    %v948 = vld [vmem:[%s3 + $0x178] sm:$0xff]
    %v949 = vld [vmem:[%s3 + $0x180] sm:$0xff]
    %v950 = vld [vmem:[%s3 + $0x188] sm:$0xff]
    %v951 = vld [vmem:[%s3 + $0x190] sm:$0xff]
    %v952 = vld [vmem:[%s3 + $0x198] sm:$0xff]
    %v953 = vld [vmem:[%s3 + $0x1a0] sm:$0xff]
    %v954 = vld [vmem:[%s3 + $0x1a8] sm:$0xff]
    %v955 = vld [vmem:[%s3 + $0x1b0] sm:$0xff]
    %v956 = vld [vmem:[%s3 + $0x1b8] sm:$0xff]
    %v957 = vld [vmem:[#allocation2] sm:$0xfc]
    %v958 = vld [vmem:[#allocation2 + $0x8] sm:$0xfc]
    %v959 = vld [vmem:[#allocation2 + $0x70] sm:$0x3]
    %v960 = vld [vmem:[#allocation2 + $0x78] sm:$0x3]
    %s961 = scalar_lea.vmem %s3, 448
    %v962 = vld [vmem:[%s961] sm:$0xff]
    %v963 = vld [vmem:[%s961 + $0x8] sm:$0xff]
    %v964 = vld [vmem:[%s961 + $0x10] sm:$0xff]
    %v965 = vld [vmem:[%s961 + $0x18] sm:$0xff]
    %v966 = vld [vmem:[%s961 + $0x20] sm:$0xff]
    %v967 = vld [vmem:[%s961 + $0x28] sm:$0xff]
    %v968 = vld [vmem:[%s961 + $0x30] sm:$0xff]
    %v969 = vld [vmem:[%s961 + $0x38] sm:$0xff]
    %v970 = vld [vmem:[%s961 + $0x40] sm:$0xff]
    %v971 = vld [vmem:[%s961 + $0x48] sm:$0xff]
    %v972 = vld [vmem:[%s961 + $0x50] sm:$0xff]
    %v973 = vld [vmem:[%s961 + $0x58] sm:$0xff]
    %v974 = vld [vmem:[%s961 + $0x60] sm:$0xff]
    %v975 = vld [vmem:[%s961 + $0x68] sm:$0xff]
    %v976 = vld [vmem:[%s961 + $0x70] sm:$0xff]
    %v977 = vld [vmem:[%s961 + $0x78] sm:$0xff]
    %v978 = vld [vmem:[%s961 + $0x80] sm:$0xff]
    %v979 = vld [vmem:[%s961 + $0x88] sm:$0xff]
    %v980 = vld [vmem:[%s961 + $0x90] sm:$0xff]
    %v981 = vld [vmem:[%s961 + $0x98] sm:$0xff]
    %v982 = vld [vmem:[%s961 + $0xa0] sm:$0xff]
    %v983 = vld [vmem:[%s961 + $0xa8] sm:$0xff]
    %v984 = vld [vmem:[%s961 + $0xb0] sm:$0xff]
    %v985 = vld [vmem:[%s961 + $0xb8] sm:$0xff]
    %v986 = vld [vmem:[%s961 + $0xc0] sm:$0xff]
    %v987 = vld [vmem:[%s961 + $0xc8] sm:$0xff]
    %v988 = vld [vmem:[%s961 + $0xd0] sm:$0xff]
    %v989 = vld [vmem:[%s961 + $0xd8] sm:$0xff]
    %v990 = vld [vmem:[%s961 + $0xe0] sm:$0xff]
    %v991 = vld [vmem:[%s961 + $0xe8] sm:$0xff]
    %v992 = vld [vmem:[%s961 + $0xf0] sm:$0xff]
    %v993 = vld [vmem:[%s961 + $0xf8] sm:$0xff]
    %v994 = vld [vmem:[%s961 + $0x100] sm:$0xff]
    %v995 = vld [vmem:[%s961 + $0x108] sm:$0xff]
    %v996 = vld [vmem:[%s961 + $0x110] sm:$0xff]
    %v997 = vld [vmem:[%s961 + $0x118] sm:$0xff]
    %v998 = vld [vmem:[%s961 + $0x120] sm:$0xff]
    %v999 = vld [vmem:[%s961 + $0x128] sm:$0xff]
    %v1000 = vld [vmem:[%s961 + $0x130] sm:$0xff]
    %v1001 = vld [vmem:[%s961 + $0x138] sm:$0xff]
    %v1002 = vld [vmem:[%s961 + $0x140] sm:$0xff]
    %v1003 = vld [vmem:[%s961 + $0x148] sm:$0xff]
    %v1004 = vld [vmem:[%s961 + $0x150] sm:$0xff]
    %v1005 = vld [vmem:[%s961 + $0x158] sm:$0xff]
    %v1006 = vld [vmem:[%s961 + $0x160] sm:$0xff]
    %v1007 = vld [vmem:[%s961 + $0x168] sm:$0xff]
    %v1008 = vld [vmem:[%s961 + $0x170] sm:$0xff]
    %v1009 = vld [vmem:[%s961 + $0x178] sm:$0xff]
    %v1010 = vld [vmem:[%s961 + $0x180] sm:$0xff]
    %v1011 = vld [vmem:[%s961 + $0x188] sm:$0xff]
    %v1012 = vld [vmem:[%s961 + $0x190] sm:$0xff]
    %v1013 = vld [vmem:[%s961 + $0x198] sm:$0xff]
    %v1014 = vld [vmem:[%s961 + $0x1a0] sm:$0xff]
    %v1015 = vld [vmem:[%s961 + $0x1a8] sm:$0xff]
    %v1016 = vld [vmem:[%s961 + $0x1b0] sm:$0xff]
    %v1017 = vld [vmem:[%s961 + $0x1b8] sm:$0xff]
    %vm1034 = vcmask 1045504
    %v1035 = vrot.slane %v957, 2
    %v1036 = vrot.slane %v889, 2
    %v1037 = vsel %vm1034, %v1035, %v1036
    %v1038 = vrot.slane %v958, 2
    %v1039 = vrot.slane %v890, 2
    %v1040 = vsel %vm1034, %v1038, %v1039
    %v1041 = vrot.slane %v891, 2
    %v1042 = vsel %vm1034, %v1036, %v1041
    %v1043 = vrot.slane %v892, 2
    %v1044 = vsel %vm1034, %v1039, %v1043
    %v1045 = vrot.slane %v893, 2
    %v1046 = vsel %vm1034, %v1041, %v1045
    %v1047 = vrot.slane %v894, 2
    %v1048 = vsel %vm1034, %v1043, %v1047
    %v1049 = vrot.slane %v895, 2
    %v1050 = vsel %vm1034, %v1045, %v1049
    %v1051 = vrot.slane %v896, 2
    %v1052 = vsel %vm1034, %v1047, %v1051
    %v1053 = vrot.slane %v897, 2
    %v1054 = vsel %vm1034, %v1049, %v1053
    %v1055 = vrot.slane %v898, 2
    %v1056 = vsel %vm1034, %v1051, %v1055
    %v1057 = vrot.slane %v899, 2
    %v1058 = vsel %vm1034, %v1053, %v1057
    %v1059 = vrot.slane %v900, 2
    %v1060 = vsel %vm1034, %v1055, %v1059
    %v1061 = vrot.slane %v959, 2
    %v1062 = vsel %vm1034, %v1057, %v1061
    %v1063 = vrot.slane %v960, 2
    %v1064 = vsel %vm1034, %v1059, %v1063
    %v1072 = vsel %vm873, %v1040, 0
    %v1074 = vsel %vm873, %v1044, 0
    %v1076 = vsel %vm873, %v1048, 0
    %v1078 = vsel %vm873, %v1052, 0
    %v1080 = vsel %vm873, %v1056, 0
    %v1082 = vsel %vm873, %v1060, 0
    %v1084 = vsel %vm873, %v1064, 0
    %1086 = vmatprep.subr.mxu0 %v963
    %1087 = vmatpush1.msra.mxu0 %v962
    %1088 = vmatprep.subr.mxu0 %v965
    %1089 = vmatpush1.msra.mxu0 %v964
    %1090 = vmatprep.subr.mxu0 %v967
    %1091 = vmatpush1.msra.mxu0 %v966
    %1092 = vmatprep.subr.mxu0 %v969
    %1093 = vmatpush1.msra.mxu0 %v968
    %1094 = vmatprep.subr.mxu0 %v971
    %1095 = vmatpush1.msra.mxu0 %v970
    %1096 = vmatprep.subr.mxu0 %v973
    %1097 = vmatpush1.msra.mxu0 %v972
    %1098 = vmatprep.subr.mxu0 %v975
    %1099 = vmatpush1.msra.mxu0 %v974
    %1100 = vmatprep.subr.mxu0 %v977
    %1101 = vmatpush1.msra.mxu0 %v976
    %1102 = vmatprep.subr.mxu0 %v979
    %1103 = vmatpush1.msra.mxu0 %v978
    %1104 = vmatprep.subr.mxu0 %v981
    %1105 = vmatpush1.msra.mxu0 %v980
    %1106 = vmatprep.subr.mxu0 %v983
    %1107 = vmatpush1.msra.mxu0 %v982
    %1108 = vmatprep.subr.mxu0 %v985
    %1109 = vmatpush1.msra.mxu0 %v984
    %1110 = vmatprep.subr.mxu0 %v987
    %1111 = vmatpush1.msra.mxu0 %v986
    %1112 = vmatprep.subr.mxu0 %v989
    %1113 = vmatpush1.msra.mxu0 %v988
    %1114 = vmatprep.subr.mxu0 %v991
    %1115 = vmatpush1.msra.mxu0 %v990
    %1116 = vmatprep.subr.mxu0 %v993
    %1117 = vmatpush1.msra.mxu0 %v992
    %1118 = vmatprep.subr.mxu0 %v995
    %1119 = vmatpush1.msra.mxu0 %v994
    %1120 = vmatprep.subr.mxu0 %v997
    %1121 = vmatpush1.msra.mxu0 %v996
    %1122 = vmatprep.subr.mxu0 %v999
    %1123 = vmatpush1.msra.mxu0 %v998
    %1124 = vmatprep.subr.mxu0 %v1001
    %1125 = vmatpush1.msra.mxu0 %v1000
    %1126 = vmatprep.subr.mxu0 %v1003
    %1127 = vmatpush1.msra.mxu0 %v1002
    %1128 = vmatprep.subr.mxu0 %v1005
    %1129 = vmatpush1.msra.mxu0 %v1004
    %1130 = vmatprep.subr.mxu0 %v1007
    %1131 = vmatpush1.msra.mxu0 %v1006
    %1132 = vmatprep.subr.mxu0 %v1009
    %1133 = vmatpush1.msra.mxu0 %v1008
    %1134 = vmatprep.subr.mxu0 %v1011
    %1135 = vmatpush1.msra.mxu0 %v1010
    %1136 = vmatprep.subr.mxu0 %v1013
    %1137 = vmatpush1.msra.mxu0 %v1012
    %1138 = vmatprep.subr.mxu0 %v1015
    %1139 = vmatpush1.msra.mxu0 %v1014
    %1140 = vmatprep.subr.mxu0 %v1017
    %1141 = vmatpush1.msra.mxu0 %v1016
    %1142 = vmatprep.subr.mxu0 0.0
    %1143 = vmatpush1.msra.mxu0 0.0
    %1144 = vmatprep.subr.mxu0 0.0
    %1145 = vmatpush1.msra.mxu0 0.0
    %1146 = vmatprep.subr.mxu0 0.0
    %1147 = vmatpush1.msra.mxu0 0.0
    %1148 = vmatprep.subr.mxu0 0.0
    %1149 = vmatpush1.msra.mxu0 0.0
    %1150 = vmatprep.mubr.f32.mxu0 %v1072
    %1151 = vmatmul.mubr.f32.gmra.mrb[0].mxu0 %v1037
    %v1152 = vpop.f32.mrb[0].mxu0
    %v1153 = vadd.f32 0.0, %v1152
    %v1154 = vpop.f32.mrb[0].mxu0
    %v1155 = vadd.f32 0.0, %v1154
    %1156 = vmatprep.mubr.f32.mxu0 %v1074
    %1157 = vmatmul.mubr.f32.gmra.mrb[0].mxu0 %v1042
    %v1158 = vpop.f32.mrb[0].mxu0
    %v1159 = vadd.f32 0.0, %v1158
    %v1160 = vpop.f32.mrb[0].mxu0
    %v1161 = vadd.f32 0.0, %v1160
    %1162 = vmatprep.mubr.f32.mxu0 %v1076
    %1163 = vmatmul.mubr.f32.gmra.mrb[0].mxu0 %v1046
    %v1164 = vpop.f32.mrb[0].mxu0
    %v1165 = vadd.f32 0.0, %v1164
    %v1166 = vpop.f32.mrb[0].mxu0
    %v1167 = vadd.f32 0.0, %v1166
    %1168 = vmatprep.mubr.f32.mxu0 %v1078
    %1169 = vmatmul.mubr.f32.gmra.mrb[0].mxu0 %v1050
    %v1170 = vpop.f32.mrb[0].mxu0
    %v1171 = vadd.f32 0.0, %v1170
    %v1172 = vpop.f32.mrb[0].mxu0
    %v1173 = vadd.f32 0.0, %v1172
    %1174 = vmatprep.mubr.f32.mxu0 %v1080
    %1175 = vmatmul.mubr.f32.gmra.mrb[0].mxu0 %v1054
    %v1176 = vpop.f32.mrb[0].mxu0
    %v1177 = vadd.f32 0.0, %v1176
    %v1178 = vpop.f32.mrb[0].mxu0
    %v1179 = vadd.f32 0.0, %v1178
    %1180 = vmatprep.mubr.f32.mxu0 %v1082
    %1181 = vmatmul.mubr.f32.gmra.mrb[0].mxu0 %v1058
    %v1182 = vpop.f32.mrb[0].mxu0
    %v1183 = vadd.f32 0.0, %v1182
    %v1184 = vpop.f32.mrb[0].mxu0
    %v1185 = vadd.f32 0.0, %v1184
    %1186 = vmatprep.mubr.f32.mxu0 %v1084
    %1187 = vmatmul.mubr.f32.gmra.mrb[0].mxu0 %v1062
    %v1188 = vpop.f32.mrb[0].mxu0
    %v1189 = vadd.f32 0.0, %v1188
    %v1190 = vpop.f32.mrb[0].mxu0
    %v1191 = vadd.f32 0.0, %v1190
    %1192 = vdwg.mxu0
    %v1194 = vsel %vm873, %v888, 0
    %v1196 = vsel %vm873, %v890, 0
    %v1198 = vsel %vm873, %v892, 0
    %v1200 = vsel %vm873, %v894, 0
    %v1202 = vsel %vm873, %v896, 0
    %v1204 = vsel %vm873, %v898, 0
    %v1206 = vsel %vm873, %v900, 0
    %1208 = vmatprep.subr.mxu0 %v902
    %1209 = vmatpush1.msra.mxu0 %v901
    %1210 = vmatprep.subr.mxu0 %v904
    %1211 = vmatpush1.msra.mxu0 %v903
    %1212 = vmatprep.subr.mxu0 %v906
    %1213 = vmatpush1.msra.mxu0 %v905
    %1214 = vmatprep.subr.mxu0 %v908
    %1215 = vmatpush1.msra.mxu0 %v907
    %1216 = vmatprep.subr.mxu0 %v910
    %1217 = vmatpush1.msra.mxu0 %v909
    %1218 = vmatprep.subr.mxu0 %v912
    %1219 = vmatpush1.msra.mxu0 %v911
    %1220 = vmatprep.subr.mxu0 %v914
    %1221 = vmatpush1.msra.mxu0 %v913
    %1222 = vmatprep.subr.mxu0 %v916
    %1223 = vmatpush1.msra.mxu0 %v915
    %1224 = vmatprep.subr.mxu0 %v918
    %1225 = vmatpush1.msra.mxu0 %v917
    %1226 = vmatprep.subr.mxu0 %v920
    %1227 = vmatpush1.msra.mxu0 %v919
    %1228 = vmatprep.subr.mxu0 %v922
    %1229 = vmatpush1.msra.mxu0 %v921
    %1230 = vmatprep.subr.mxu0 %v924
    %1231 = vmatpush1.msra.mxu0 %v923
    %1232 = vmatprep.subr.mxu0 %v926
    %1233 = vmatpush1.msra.mxu0 %v925
    %1234 = vmatprep.subr.mxu0 %v928
    %1235 = vmatpush1.msra.mxu0 %v927
    %1236 = vmatprep.subr.mxu0 %v930
    %1237 = vmatpush1.msra.mxu0 %v929
    %1238 = vmatprep.subr.mxu0 %v932
    %1239 = vmatpush1.msra.mxu0 %v931
    %1240 = vmatprep.subr.mxu0 %v934
    %1241 = vmatpush1.msra.mxu0 %v933
    %1242 = vmatprep.subr.mxu0 %v936
    %1243 = vmatpush1.msra.mxu0 %v935
    %1244 = vmatprep.subr.mxu0 %v938
    %1245 = vmatpush1.msra.mxu0 %v937
    %1246 = vmatprep.subr.mxu0 %v940
    %1247 = vmatpush1.msra.mxu0 %v939
    %1248 = vmatprep.subr.mxu0 %v942
    %1249 = vmatpush1.msra.mxu0 %v941
    %1250 = vmatprep.subr.mxu0 %v944
    %1251 = vmatpush1.msra.mxu0 %v943
    %1252 = vmatprep.subr.mxu0 %v946
    %1253 = vmatpush1.msra.mxu0 %v945
    %1254 = vmatprep.subr.mxu0 %v948
    %1255 = vmatpush1.msra.mxu0 %v947
    %1256 = vmatprep.subr.mxu0 %v950
    %1257 = vmatpush1.msra.mxu0 %v949
    %1258 = vmatprep.subr.mxu0 %v952
    %1259 = vmatpush1.msra.mxu0 %v951
    %1260 = vmatprep.subr.mxu0 %v954
    %1261 = vmatpush1.msra.mxu0 %v953
    %1262 = vmatprep.subr.mxu0 %v956
    %1263 = vmatpush1.msra.mxu0 %v955
    %1264 = vmatprep.subr.mxu0 0.0
    %1265 = vmatpush1.msra.mxu0 0.0
    %1266 = vmatprep.subr.mxu0 0.0
    %1267 = vmatpush1.msra.mxu0 0.0
    %1268 = vmatprep.subr.mxu0 0.0
    %1269 = vmatpush1.msra.mxu0 0.0
    %1270 = vmatprep.subr.mxu0 0.0
    %1271 = vmatpush1.msra.mxu0 0.0
    %1272 = vmatprep.mubr.f32.mxu0 %v1194
    %1273 = vmatmul.mubr.f32.gmra.mrb[0].mxu0 %v887
    %v1274 = vpop.f32.mrb[0].mxu0
    %v1275 = vadd.f32 %v1153, %v1274
    %v1276 = vpop.f32.mrb[0].mxu0
    %v1277 = vadd.f32 %v1155, %v1276
    %1278 = vmatprep.mubr.f32.mxu0 %v1196
    %1279 = vmatmul.mubr.f32.gmra.mrb[0].mxu0 %v889
    %v1280 = vpop.f32.mrb[0].mxu0
    %v1281 = vadd.f32 %v1159, %v1280
    %v1282 = vpop.f32.mrb[0].mxu0
    %v1283 = vadd.f32 %v1161, %v1282
    %1284 = vmatprep.mubr.f32.mxu0 %v1198
    %1285 = vmatmul.mubr.f32.gmra.mrb[0].mxu0 %v891
    %v1286 = vpop.f32.mrb[0].mxu0
    %v1287 = vadd.f32 %v1165, %v1286
    %v1288 = vpop.f32.mrb[0].mxu0
    %v1289 = vadd.f32 %v1167, %v1288
    %1290 = vmatprep.mubr.f32.mxu0 %v1200
    %1291 = vmatmul.mubr.f32.gmra.mrb[0].mxu0 %v893
    %v1292 = vpop.f32.mrb[0].mxu0
    %v1293 = vadd.f32 %v1171, %v1292
    %v1294 = vpop.f32.mrb[0].mxu0
    %v1295 = vadd.f32 %v1173, %v1294
    %1296 = vmatprep.mubr.f32.mxu0 %v1202
    %1297 = vmatmul.mubr.f32.gmra.mrb[0].mxu0 %v895
    %v1298 = vpop.f32.mrb[0].mxu0
    %v1299 = vadd.f32 %v1177, %v1298
    %v1300 = vpop.f32.mrb[0].mxu0
    %v1301 = vadd.f32 %v1179, %v1300
    %1302 = vmatprep.mubr.f32.mxu0 %v1204
    %1303 = vmatmul.mubr.f32.gmra.mrb[0].mxu0 %v897
    %v1304 = vpop.f32.mrb[0].mxu0
    %v1305 = vadd.f32 %v1183, %v1304
    %v1306 = vpop.f32.mrb[0].mxu0
    %v1307 = vadd.f32 %v1185, %v1306
    %1308 = vmatprep.mubr.f32.mxu0 %v1206
    %1309 = vmatmul.mubr.f32.gmra.mrb[0].mxu0 %v899
    %v1310 = vpop.f32.mrb[0].mxu0
    %v1311 = vadd.f32 %v1189, %v1310
    %v1312 = vpop.f32.mrb[0].mxu0
    %v1313 = vadd.f32 %v1191, %v1312
    %1314 = vdwg.mxu0
    %v1315 = vld [vmem:[#allocation2] sm:$0xf0]
    %v1316 = vld [vmem:[#allocation2 + $0x8] sm:$0xf0]
    %v1317 = vld [vmem:[#allocation2 + $0x70] sm:$0xf]
    %v1318 = vld [vmem:[#allocation2 + $0x78] sm:$0xf]
    %s1319 = scalar_lea.vmem %s3, 896
    %v1320 = vld [vmem:[%s1319] sm:$0xff]
    %v1321 = vld [vmem:[%s1319 + $0x8] sm:$0xff]
    %v1322 = vld [vmem:[%s1319 + $0x10] sm:$0xff]
    %v1323 = vld [vmem:[%s1319 + $0x18] sm:$0xff]
    %v1324 = vld [vmem:[%s1319 + $0x20] sm:$0xff]
    %v1325 = vld [vmem:[%s1319 + $0x28] sm:$0xff]
    %v1326 = vld [vmem:[%s1319 + $0x30] sm:$0xff]
    %v1327 = vld [vmem:[%s1319 + $0x38] sm:$0xff]
    %v1328 = vld [vmem:[%s1319 + $0x40] sm:$0xff]
    %v1329 = vld [vmem:[%s1319 + $0x48] sm:$0xff]
    %v1330 = vld [vmem:[%s1319 + $0x50] sm:$0xff]
    %v1331 = vld [vmem:[%s1319 + $0x58] sm:$0xff]
    %v1332 = vld [vmem:[%s1319 + $0x60] sm:$0xff]
    %v1333 = vld [vmem:[%s1319 + $0x68] sm:$0xff]
    %v1334 = vld [vmem:[%s1319 + $0x70] sm:$0xff]
    %v1335 = vld [vmem:[%s1319 + $0x78] sm:$0xff]
    %v1336 = vld [vmem:[%s1319 + $0x80] sm:$0xff]
    %v1337 = vld [vmem:[%s1319 + $0x88] sm:$0xff]
    %v1338 = vld [vmem:[%s1319 + $0x90] sm:$0xff]
    %v1339 = vld [vmem:[%s1319 + $0x98] sm:$0xff]
    %v1340 = vld [vmem:[%s1319 + $0xa0] sm:$0xff]
    %v1341 = vld [vmem:[%s1319 + $0xa8] sm:$0xff]
    %v1342 = vld [vmem:[%s1319 + $0xb0] sm:$0xff]
    %v1343 = vld [vmem:[%s1319 + $0xb8] sm:$0xff]
    %v1344 = vld [vmem:[%s1319 + $0xc0] sm:$0xff]
    %v1345 = vld [vmem:[%s1319 + $0xc8] sm:$0xff]
    %v1346 = vld [vmem:[%s1319 + $0xd0] sm:$0xff]
    %v1347 = vld [vmem:[%s1319 + $0xd8] sm:$0xff]
    %v1348 = vld [vmem:[%s1319 + $0xe0] sm:$0xff]
    %v1349 = vld [vmem:[%s1319 + $0xe8] sm:$0xff]
    %v1350 = vld [vmem:[%s1319 + $0xf0] sm:$0xff]
    %v1351 = vld [vmem:[%s1319 + $0xf8] sm:$0xff]
    %v1352 = vld [vmem:[%s1319 + $0x100] sm:$0xff]
    %v1353 = vld [vmem:[%s1319 + $0x108] sm:$0xff]
    %v1354 = vld [vmem:[%s1319 + $0x110] sm:$0xff]
    %v1355 = vld [vmem:[%s1319 + $0x118] sm:$0xff]
    %v1356 = vld [vmem:[%s1319 + $0x120] sm:$0xff]
    %v1357 = vld [vmem:[%s1319 + $0x128] sm:$0xff]
    %v1358 = vld [vmem:[%s1319 + $0x130] sm:$0xff]
    %v1359 = vld [vmem:[%s1319 + $0x138] sm:$0xff]
    %v1360 = vld [vmem:[%s1319 + $0x140] sm:$0xff]
    %v1361 = vld [vmem:[%s1319 + $0x148] sm:$0xff]
    %v1362 = vld [vmem:[%s1319 + $0x150] sm:$0xff]
    %v1363 = vld [vmem:[%s1319 + $0x158] sm:$0xff]
    %v1364 = vld [vmem:[%s1319 + $0x160] sm:$0xff]
    %v1365 = vld [vmem:[%s1319 + $0x168] sm:$0xff]
    %v1366 = vld [vmem:[%s1319 + $0x170] sm:$0xff]
    %v1367 = vld [vmem:[%s1319 + $0x178] sm:$0xff]
    %v1368 = vld [vmem:[%s1319 + $0x180] sm:$0xff]
    %v1369 = vld [vmem:[%s1319 + $0x188] sm:$0xff]
    %v1370 = vld [vmem:[%s1319 + $0x190] sm:$0xff]
    %v1371 = vld [vmem:[%s1319 + $0x198] sm:$0xff]
    %v1372 = vld [vmem:[%s1319 + $0x1a0] sm:$0xff]
    %v1373 = vld [vmem:[%s1319 + $0x1a8] sm:$0xff]
    %v1374 = vld [vmem:[%s1319 + $0x1b0] sm:$0xff]
    %v1375 = vld [vmem:[%s1319 + $0x1b8] sm:$0xff]
    %v1380 = vrot.slane %v1315, 4
    %v1381 = vrot.slane %v889, 4
    %v1382 = vsel %vm340, %v1380, %v1381
    %v1383 = vrot.slane %v1316, 4
    %v1384 = vrot.slane %v890, 4
    %v1385 = vsel %vm340, %v1383, %v1384
    %v1386 = vrot.slane %v891, 4
    %v1387 = vsel %vm340, %v1381, %v1386
    %v1388 = vrot.slane %v892, 4
    %v1389 = vsel %vm340, %v1384, %v1388
    %v1390 = vrot.slane %v893, 4
    %v1391 = vsel %vm340, %v1386, %v1390
    %v1392 = vrot.slane %v894, 4
    %v1393 = vsel %vm340, %v1388, %v1392
    %v1394 = vrot.slane %v895, 4
    %v1395 = vsel %vm340, %v1390, %v1394
    %v1396 = vrot.slane %v896, 4
    %v1397 = vsel %vm340, %v1392, %v1396
    %v1398 = vrot.slane %v897, 4
    %v1399 = vsel %vm340, %v1394, %v1398
    %v1400 = vrot.slane %v898, 4
    %v1401 = vsel %vm340, %v1396, %v1400
    %v1402 = vrot.slane %v899, 4
    %v1403 = vsel %vm340, %v1398, %v1402
    %v1404 = vrot.slane %v900, 4
    %v1405 = vsel %vm340, %v1400, %v1404
    %v1406 = vrot.slane %v1317, 4
    %v1407 = vsel %vm340, %v1402, %v1406
    %v1408 = vrot.slane %v1318, 4
    %v1409 = vsel %vm340, %v1404, %v1408
    %v1417 = vsel %vm873, %v1385, 0
    %v1419 = vsel %vm873, %v1389, 0
    %v1421 = vsel %vm873, %v1393, 0
    %v1423 = vsel %vm873, %v1397, 0
    %v1425 = vsel %vm873, %v1401, 0
    %v1427 = vsel %vm873, %v1405, 0
    %v1429 = vsel %vm873, %v1409, 0
    %1431 = vmatprep.subr.mxu0 %v1321
    %1432 = vmatpush1.msra.mxu0 %v1320
    %1433 = vmatprep.subr.mxu0 %v1323
    %1434 = vmatpush1.msra.mxu0 %v1322
    %1435 = vmatprep.subr.mxu0 %v1325
    %1436 = vmatpush1.msra.mxu0 %v1324
    %1437 = vmatprep.subr.mxu0 %v1327
    %1438 = vmatpush1.msra.mxu0 %v1326
    %1439 = vmatprep.subr.mxu0 %v1329
    %1440 = vmatpush1.msra.mxu0 %v1328
    %1441 = vmatprep.subr.mxu0 %v1331
    %1442 = vmatpush1.msra.mxu0 %v1330
    %1443 = vmatprep.subr.mxu0 %v1333
    %1444 = vmatpush1.msra.mxu0 %v1332
    %1445 = vmatprep.subr.mxu0 %v1335
    %1446 = vmatpush1.msra.mxu0 %v1334
    %1447 = vmatprep.subr.mxu0 %v1337
    %1448 = vmatpush1.msra.mxu0 %v1336
    %1449 = vmatprep.subr.mxu0 %v1339
    %1450 = vmatpush1.msra.mxu0 %v1338
    %1451 = vmatprep.subr.mxu0 %v1341
    %1452 = vmatpush1.msra.mxu0 %v1340
    %1453 = vmatprep.subr.mxu0 %v1343
    %1454 = vmatpush1.msra.mxu0 %v1342
    %1455 = vmatprep.subr.mxu0 %v1345
    %1456 = vmatpush1.msra.mxu0 %v1344
    %1457 = vmatprep.subr.mxu0 %v1347
    %1458 = vmatpush1.msra.mxu0 %v1346
    %1459 = vmatprep.subr.mxu0 %v1349
    %1460 = vmatpush1.msra.mxu0 %v1348
    %1461 = vmatprep.subr.mxu0 %v1351
    %1462 = vmatpush1.msra.mxu0 %v1350
    %1463 = vmatprep.subr.mxu0 %v1353
    %1464 = vmatpush1.msra.mxu0 %v1352
    %1465 = vmatprep.subr.mxu0 %v1355
    %1466 = vmatpush1.msra.mxu0 %v1354
    %1467 = vmatprep.subr.mxu0 %v1357
    %1468 = vmatpush1.msra.mxu0 %v1356
    %1469 = vmatprep.subr.mxu0 %v1359
    %1470 = vmatpush1.msra.mxu0 %v1358
    %1471 = vmatprep.subr.mxu0 %v1361
    %1472 = vmatpush1.msra.mxu0 %v1360
    %1473 = vmatprep.subr.mxu0 %v1363
    %1474 = vmatpush1.msra.mxu0 %v1362
    %1475 = vmatprep.subr.mxu0 %v1365
    %1476 = vmatpush1.msra.mxu0 %v1364
    %1477 = vmatprep.subr.mxu0 %v1367
    %1478 = vmatpush1.msra.mxu0 %v1366
    %1479 = vmatprep.subr.mxu0 %v1369
    %1480 = vmatpush1.msra.mxu0 %v1368
    %1481 = vmatprep.subr.mxu0 %v1371
    %1482 = vmatpush1.msra.mxu0 %v1370
    %1483 = vmatprep.subr.mxu0 %v1373
    %1484 = vmatpush1.msra.mxu0 %v1372
    %1485 = vmatprep.subr.mxu0 %v1375
    %1486 = vmatpush1.msra.mxu0 %v1374
    %1487 = vmatprep.subr.mxu0 0.0
    %1488 = vmatpush1.msra.mxu0 0.0
    %1489 = vmatprep.subr.mxu0 0.0
    %1490 = vmatpush1.msra.mxu0 0.0
    %1491 = vmatprep.subr.mxu0 0.0
    %1492 = vmatpush1.msra.mxu0 0.0
    %1493 = vmatprep.subr.mxu0 0.0
    %1494 = vmatpush1.msra.mxu0 0.0
    %1495 = vmatprep.mubr.f32.mxu0 %v1417
    %1496 = vmatmul.mubr.f32.gmra.mrb[0].mxu0 %v1382
    %v1497 = vpop.f32.mrb[0].mxu0
    %v1498 = vadd.f32 0.0, %v1497
    %v1499 = vpop.f32.mrb[0].mxu0
    %v1500 = vadd.f32 0.0, %v1499
    %1501 = vmatprep.mubr.f32.mxu0 %v1419
    %1502 = vmatmul.mubr.f32.gmra.mrb[0].mxu0 %v1387
    %v1503 = vpop.f32.mrb[0].mxu0
    %v1504 = vadd.f32 0.0, %v1503
    %v1505 = vpop.f32.mrb[0].mxu0
    %v1506 = vadd.f32 0.0, %v1505
    %1507 = vmatprep.mubr.f32.mxu0 %v1421
    %1508 = vmatmul.mubr.f32.gmra.mrb[0].mxu0 %v1391
    %v1509 = vpop.f32.mrb[0].mxu0
    %v1510 = vadd.f32 0.0, %v1509
    %v1511 = vpop.f32.mrb[0].mxu0
    %v1512 = vadd.f32 0.0, %v1511
    %1513 = vmatprep.mubr.f32.mxu0 %v1423
    %1514 = vmatmul.mubr.f32.gmra.mrb[0].mxu0 %v1395
    %v1515 = vpop.f32.mrb[0].mxu0
    %v1516 = vadd.f32 0.0, %v1515
    %v1517 = vpop.f32.mrb[0].mxu0
    %v1518 = vadd.f32 0.0, %v1517
    %1519 = vmatprep.mubr.f32.mxu0 %v1425
    %1520 = vmatmul.mubr.f32.gmra.mrb[0].mxu0 %v1399
    %v1521 = vpop.f32.mrb[0].mxu0
    %v1522 = vadd.f32 0.0, %v1521
    %v1523 = vpop.f32.mrb[0].mxu0
    %v1524 = vadd.f32 0.0, %v1523
    %1525 = vmatprep.mubr.f32.mxu0 %v1427
    %1526 = vmatmul.mubr.f32.gmra.mrb[0].mxu0 %v1403
    %v1527 = vpop.f32.mrb[0].mxu0
    %v1528 = vadd.f32 0.0, %v1527
    %v1529 = vpop.f32.mrb[0].mxu0
    %v1530 = vadd.f32 0.0, %v1529
    %1531 = vmatprep.mubr.f32.mxu0 %v1429
    %1532 = vmatmul.mubr.f32.gmra.mrb[0].mxu0 %v1407
    %v1533 = vpop.f32.mrb[0].mxu0
    %v1534 = vadd.f32 0.0, %v1533
    %v1535 = vpop.f32.mrb[0].mxu0
    %v1536 = vadd.f32 0.0, %v1535
    %1537 = vdwg.mxu0
    %v1538 = vadd.f32 %v1275, %v1498
    %v1539 = vadd.f32 %v1277, %v1500
    %v1540 = vadd.f32 %v1281, %v1504
    %v1541 = vadd.f32 %v1283, %v1506
    %v1542 = vadd.f32 %v1287, %v1510
    %v1543 = vadd.f32 %v1289, %v1512
    %v1544 = vadd.f32 %v1293, %v1516
    %v1545 = vadd.f32 %v1295, %v1518
    %v1546 = vadd.f32 %v1299, %v1522
    %v1547 = vadd.f32 %v1301, %v1524
    %v1548 = vadd.f32 %v1305, %v1528
    %v1549 = vadd.f32 %v1307, %v1530
    %v1550 = vadd.f32 %v1311, %v1534
    %v1551 = vadd.f32 %v1313, %v1536
    %v1552 = vld [vmem:[#allocation9] sm:$0x3]
    %v1554 = vlaneseq
    %v1555 = vshrl.u32 %v1554, 7
    %v1556 = vsub.s32 0, %v1555
    %v1557 = vrot.slane %v1552, %v1556
    %v1558 = vlaneseq
    %v1559 = vshrl.u32 %v1558, 7
    %v1560 = vsub.s32 1, %v1559
    %v1561 = vrot.slane %v1552, %v1560
    %v1564 = vadd.f32 %v1538, %v1557
    %v1565 = vadd.f32 %v1539, %v1561
    %v1566 = vadd.f32 %v1540, %v1557
    %v1567 = vadd.f32 %v1541, %v1561
    %v1568 = vadd.f32 %v1542, %v1557
    %v1569 = vadd.f32 %v1543, %v1561
    %v1570 = vadd.f32 %v1544, %v1557
    %v1571 = vadd.f32 %v1545, %v1561
    %v1572 = vadd.f32 %v1546, %v1557
    %v1573 = vadd.f32 %v1547, %v1561
    %v1574 = vadd.f32 %v1548, %v1557
    %v1575 = vadd.f32 %v1549, %v1561
    %v1576 = vadd.f32 %v1550, %v1557
    %v1577 = vadd.f32 %v1551, %v1561
    %v1578 = vmul.f32 %v1564, 0.01
    %v1579 = vmul.f32 %v1565, 0.01
    %v1580 = vmul.f32 %v1566, 0.01
    %v1581 = vmul.f32 %v1567, 0.01
    %v1582 = vmul.f32 %v1568, 0.01
    %v1583 = vmul.f32 %v1569, 0.01
    %v1584 = vmul.f32 %v1570, 0.01
    %v1585 = vmul.f32 %v1571, 0.01
    %v1586 = vmul.f32 %v1572, 0.01
    %v1587 = vmul.f32 %v1573, 0.01
    %v1588 = vmul.f32 %v1574, 0.01
    %v1589 = vmul.f32 %v1575, 0.01
    %v1590 = vmul.f32 %v1576, 0.01
    %v1591 = vmul.f32 %v1577, 0.01
    %v1592 = vmax.f32 %v1564, %v1578
    %v1593 = vmax.f32 %v1565, %v1579
    %v1594 = vmax.f32 %v1566, %v1580
    %v1595 = vmax.f32 %v1567, %v1581
    %v1596 = vmax.f32 %v1568, %v1582
    %v1597 = vmax.f32 %v1569, %v1583
    %v1598 = vmax.f32 %v1570, %v1584
    %v1599 = vmax.f32 %v1571, %v1585
    %v1600 = vmax.f32 %v1572, %v1586
    %v1601 = vmax.f32 %v1573, %v1587
    %v1602 = vmax.f32 %v1574, %v1588
    %v1603 = vmax.f32 %v1575, %v1589
    %v1604 = vmax.f32 %v1576, %v1590
    %v1605 = vmax.f32 %v1577, %v1591
    %v1620 = vrot.slane %v1592, 6
    %v1621 = vrot.slane %v1593, 6
    %v1622 = vrot.slane %v1594, 6
    %v1623 = vsel %vm826, %v1620, %v1622
    %v1624 = vrot.slane %v1595, 6
    %v1625 = vsel %vm826, %v1621, %v1624
    %v1626 = vrot.slane %v1596, 6
    %v1627 = vsel %vm826, %v1622, %v1626
    %v1628 = vrot.slane %v1597, 6
    %v1629 = vsel %vm826, %v1624, %v1628
    %v1630 = vrot.slane %v1598, 6
    %v1631 = vsel %vm826, %v1626, %v1630
    %v1632 = vrot.slane %v1599, 6
    %v1633 = vsel %vm826, %v1628, %v1632
    %v1634 = vrot.slane %v1600, 6
    %v1635 = vsel %vm826, %v1630, %v1634
    %v1636 = vrot.slane %v1601, 6
    %v1637 = vsel %vm826, %v1632, %v1636
    %v1638 = vrot.slane %v1602, 6
    %v1639 = vsel %vm826, %v1634, %v1638
    %v1640 = vrot.slane %v1603, 6
    %v1641 = vsel %vm826, %v1636, %v1640
    %v1642 = vrot.slane %v1604, 6
    %v1643 = vsel %vm826, %v1638, %v1642
    %v1644 = vrot.slane %v1605, 6
    %v1645 = vsel %vm826, %v1640, %v1644
    %1662 = vst [vmem:[#allocation2] sm:$0xfc] %v1620
    %1663 = vst.msk [vmem:[#allocation2 + $0x8] sm:$0xfc] %vm870, %v1621
    %1664 = vst [vmem:[#allocation2 + $0x10] sm:$0xff] %v1623
    %1665 = vst.msk [vmem:[#allocation2 + $0x18] sm:$0xff] %vm873, %v1625
    %1666 = vst [vmem:[#allocation2 + $0x20] sm:$0xff] %v1627
    %1667 = vst.msk [vmem:[#allocation2 + $0x28] sm:$0xff] %vm873, %v1629
    %1668 = vst [vmem:[#allocation2 + $0x30] sm:$0xff] %v1631
    %1669 = vst.msk [vmem:[#allocation2 + $0x38] sm:$0xff] %vm873, %v1633
    %1670 = vst [vmem:[#allocation2 + $0x40] sm:$0xff] %v1635
    %1671 = vst.msk [vmem:[#allocation2 + $0x48] sm:$0xff] %vm873, %v1637
    %1672 = vst [vmem:[#allocation2 + $0x50] sm:$0xff] %v1639
    %1673 = vst.msk [vmem:[#allocation2 + $0x58] sm:$0xff] %vm873, %v1641
    %1674 = vst [vmem:[#allocation2 + $0x60] sm:$0xff] %v1643
    %1675 = vst.msk [vmem:[#allocation2 + $0x68] sm:$0xff] %vm873, %v1645
    %1676 = vst [vmem:[#allocation2 + $0x70] sm:$0x3] %v1642
    %1677 = vst.msk [vmem:[#allocation2 + $0x78] sm:$0x3] %vm807, %v1644
    %v1678 = vld [vmem:[#allocation2] sm:$0xff]
    %v1679 = vld [vmem:[#allocation2 + $0x8] sm:$0xff]
    %v1680 = vld [vmem:[#allocation2 + $0x10] sm:$0xff]
    %v1681 = vld [vmem:[#allocation2 + $0x18] sm:$0xff]
    %v1682 = vld [vmem:[#allocation2 + $0x20] sm:$0xff]
    %v1683 = vld [vmem:[#allocation2 + $0x28] sm:$0xff]
    %v1684 = vld [vmem:[#allocation2 + $0x30] sm:$0xff]
    %v1685 = vld [vmem:[#allocation2 + $0x38] sm:$0xff]
    %v1686 = vld [vmem:[#allocation2 + $0x40] sm:$0xff]
    %v1687 = vld [vmem:[#allocation2 + $0x48] sm:$0xff]
    %v1688 = vld [vmem:[#allocation2 + $0x50] sm:$0xff]
    %v1689 = vld [vmem:[#allocation2 + $0x58] sm:$0xff]
    %v1690 = vld [vmem:[#allocation2 + $0x60] sm:$0xff]
    %v1691 = vld [vmem:[#allocation2 + $0x68] sm:$0xff]
    %v1692 = vld [vmem:[#allocation10] sm:$0xff]
    %v1693 = vld [vmem:[#allocation10 + $0x8] sm:$0xff]
    %v1694 = vld [vmem:[#allocation10 + $0x10] sm:$0xff]
    %v1695 = vld [vmem:[#allocation10 + $0x18] sm:$0xff]
    %v1696 = vld [vmem:[#allocation10 + $0x20] sm:$0xff]
    %v1697 = vld [vmem:[#allocation10 + $0x28] sm:$0xff]
    %v1698 = vld [vmem:[#allocation10 + $0x30] sm:$0xff]
    %v1699 = vld [vmem:[#allocation10 + $0x38] sm:$0xff]
    %v1700 = vld [vmem:[#allocation10 + $0x40] sm:$0xff]
    %v1701 = vld [vmem:[#allocation10 + $0x48] sm:$0xff]
    %v1702 = vld [vmem:[#allocation10 + $0x50] sm:$0xff]
    %v1703 = vld [vmem:[#allocation10 + $0x58] sm:$0xff]
    %v1704 = vld [vmem:[#allocation10 + $0x60] sm:$0xff]
    %v1705 = vld [vmem:[#allocation10 + $0x68] sm:$0xff]
    %v1706 = vld [vmem:[#allocation10 + $0x70] sm:$0xff]
    %v1707 = vld [vmem:[#allocation10 + $0x78] sm:$0xff]
    %v1708 = vld [vmem:[#allocation10 + $0x80] sm:$0xff]
    %v1709 = vld [vmem:[#allocation10 + $0x88] sm:$0xff]
    %v1710 = vld [vmem:[#allocation10 + $0x90] sm:$0xff]
    %v1711 = vld [vmem:[#allocation10 + $0x98] sm:$0xff]
    %v1712 = vld [vmem:[#allocation10 + $0xa0] sm:$0xff]
    %v1713 = vld [vmem:[#allocation10 + $0xa8] sm:$0xff]
    %v1714 = vld [vmem:[#allocation10 + $0xb0] sm:$0xff]
    %v1715 = vld [vmem:[#allocation10 + $0xb8] sm:$0xff]
    %v1716 = vld [vmem:[#allocation10 + $0xc0] sm:$0xff]
    %v1717 = vld [vmem:[#allocation10 + $0xc8] sm:$0xff]
    %v1718 = vld [vmem:[#allocation10 + $0xd0] sm:$0xff]
    %v1719 = vld [vmem:[#allocation10 + $0xd8] sm:$0xff]
    %v1720 = vld [vmem:[#allocation10 + $0xe0] sm:$0xff]
    %v1721 = vld [vmem:[#allocation10 + $0xe8] sm:$0xff]
    %v1722 = vld [vmem:[#allocation10 + $0xf0] sm:$0xff]
    %v1723 = vld [vmem:[#allocation10 + $0xf8] sm:$0xff]
    %v1724 = vld [vmem:[#allocation10 + $0x100] sm:$0xff]
    %v1725 = vld [vmem:[#allocation10 + $0x108] sm:$0xff]
    %v1726 = vld [vmem:[#allocation10 + $0x110] sm:$0xff]
    %v1727 = vld [vmem:[#allocation10 + $0x118] sm:$0xff]
    %v1728 = vld [vmem:[#allocation10 + $0x120] sm:$0xff]
    %v1729 = vld [vmem:[#allocation10 + $0x128] sm:$0xff]
    %v1730 = vld [vmem:[#allocation10 + $0x130] sm:$0xff]
    %v1731 = vld [vmem:[#allocation10 + $0x138] sm:$0xff]
    %v1732 = vld [vmem:[#allocation10 + $0x140] sm:$0xff]
    %v1733 = vld [vmem:[#allocation10 + $0x148] sm:$0xff]
    %v1734 = vld [vmem:[#allocation10 + $0x150] sm:$0xff]
    %v1735 = vld [vmem:[#allocation10 + $0x158] sm:$0xff]
    %v1736 = vld [vmem:[#allocation10 + $0x160] sm:$0xff]
    %v1737 = vld [vmem:[#allocation10 + $0x168] sm:$0xff]
    %v1738 = vld [vmem:[#allocation10 + $0x170] sm:$0xff]
    %v1739 = vld [vmem:[#allocation10 + $0x178] sm:$0xff]
    %v1740 = vld [vmem:[#allocation10 + $0x180] sm:$0xff]
    %v1741 = vld [vmem:[#allocation10 + $0x188] sm:$0xff]
    %v1742 = vld [vmem:[#allocation10 + $0x190] sm:$0xff]
    %v1743 = vld [vmem:[#allocation10 + $0x198] sm:$0xff]
    %v1744 = vld [vmem:[#allocation10 + $0x1a0] sm:$0xff]
    %v1745 = vld [vmem:[#allocation10 + $0x1a8] sm:$0xff]
    %v1746 = vld [vmem:[#allocation10 + $0x1b0] sm:$0xff]
    %v1747 = vld [vmem:[#allocation10 + $0x1b8] sm:$0xff]
    %v1748 = vld [vmem:[#allocation2] sm:$0xfc]
    %v1749 = vld [vmem:[#allocation2 + $0x8] sm:$0xfc]
    %v1750 = vld [vmem:[#allocation2 + $0x70] sm:$0x3]
    %v1751 = vld [vmem:[#allocation2 + $0x78] sm:$0x3]
    %s1752 = scalar_lea.vmem [#allocation10], 448
    %v1753 = vld [vmem:[%s1752] sm:$0xff]
    %v1754 = vld [vmem:[%s1752 + $0x8] sm:$0xff]
    %v1755 = vld [vmem:[%s1752 + $0x10] sm:$0xff]
    %v1756 = vld [vmem:[%s1752 + $0x18] sm:$0xff]
    %v1757 = vld [vmem:[%s1752 + $0x20] sm:$0xff]
    %v1758 = vld [vmem:[%s1752 + $0x28] sm:$0xff]
    %v1759 = vld [vmem:[%s1752 + $0x30] sm:$0xff]
    %v1760 = vld [vmem:[%s1752 + $0x38] sm:$0xff]
    %v1761 = vld [vmem:[%s1752 + $0x40] sm:$0xff]
    %v1762 = vld [vmem:[%s1752 + $0x48] sm:$0xff]
    %v1763 = vld [vmem:[%s1752 + $0x50] sm:$0xff]
    %v1764 = vld [vmem:[%s1752 + $0x58] sm:$0xff]
    %v1765 = vld [vmem:[%s1752 + $0x60] sm:$0xff]
    %v1766 = vld [vmem:[%s1752 + $0x68] sm:$0xff]
    %v1767 = vld [vmem:[%s1752 + $0x70] sm:$0xff]
    %v1768 = vld [vmem:[%s1752 + $0x78] sm:$0xff]
    %v1769 = vld [vmem:[%s1752 + $0x80] sm:$0xff]
    %v1770 = vld [vmem:[%s1752 + $0x88] sm:$0xff]
    %v1771 = vld [vmem:[%s1752 + $0x90] sm:$0xff]
    %v1772 = vld [vmem:[%s1752 + $0x98] sm:$0xff]
    %v1773 = vld [vmem:[%s1752 + $0xa0] sm:$0xff]
    %v1774 = vld [vmem:[%s1752 + $0xa8] sm:$0xff]
    %v1775 = vld [vmem:[%s1752 + $0xb0] sm:$0xff]
    %v1776 = vld [vmem:[%s1752 + $0xb8] sm:$0xff]
    %v1777 = vld [vmem:[%s1752 + $0xc0] sm:$0xff]
    %v1778 = vld [vmem:[%s1752 + $0xc8] sm:$0xff]
    %v1779 = vld [vmem:[%s1752 + $0xd0] sm:$0xff]
    %v1780 = vld [vmem:[%s1752 + $0xd8] sm:$0xff]
    %v1781 = vld [vmem:[%s1752 + $0xe0] sm:$0xff]
    %v1782 = vld [vmem:[%s1752 + $0xe8] sm:$0xff]
    %v1783 = vld [vmem:[%s1752 + $0xf0] sm:$0xff]
    %v1784 = vld [vmem:[%s1752 + $0xf8] sm:$0xff]
    %v1785 = vld [vmem:[%s1752 + $0x100] sm:$0xff]
    %v1786 = vld [vmem:[%s1752 + $0x108] sm:$0xff]
    %v1787 = vld [vmem:[%s1752 + $0x110] sm:$0xff]
    %v1788 = vld [vmem:[%s1752 + $0x118] sm:$0xff]
    %v1789 = vld [vmem:[%s1752 + $0x120] sm:$0xff]
    %v1790 = vld [vmem:[%s1752 + $0x128] sm:$0xff]
    %v1791 = vld [vmem:[%s1752 + $0x130] sm:$0xff]
    %v1792 = vld [vmem:[%s1752 + $0x138] sm:$0xff]
    %v1793 = vld [vmem:[%s1752 + $0x140] sm:$0xff]
    %v1794 = vld [vmem:[%s1752 + $0x148] sm:$0xff]
    %v1795 = vld [vmem:[%s1752 + $0x150] sm:$0xff]
    %v1796 = vld [vmem:[%s1752 + $0x158] sm:$0xff]
    %v1797 = vld [vmem:[%s1752 + $0x160] sm:$0xff]
    %v1798 = vld [vmem:[%s1752 + $0x168] sm:$0xff]
    %v1799 = vld [vmem:[%s1752 + $0x170] sm:$0xff]
    %v1800 = vld [vmem:[%s1752 + $0x178] sm:$0xff]
    %v1801 = vld [vmem:[%s1752 + $0x180] sm:$0xff]
    %v1802 = vld [vmem:[%s1752 + $0x188] sm:$0xff]
    %v1803 = vld [vmem:[%s1752 + $0x190] sm:$0xff]
    %v1804 = vld [vmem:[%s1752 + $0x198] sm:$0xff]
    %v1805 = vld [vmem:[%s1752 + $0x1a0] sm:$0xff]
    %v1806 = vld [vmem:[%s1752 + $0x1a8] sm:$0xff]
    %v1807 = vld [vmem:[%s1752 + $0x1b0] sm:$0xff]
    %v1808 = vld [vmem:[%s1752 + $0x1b8] sm:$0xff]
    %v1825 = vrot.slane %v1748, 2
    %v1826 = vrot.slane %v1680, 2
    %v1827 = vsel %vm1034, %v1825, %v1826
    %v1828 = vrot.slane %v1749, 2
    %v1829 = vrot.slane %v1681, 2
    %v1830 = vsel %vm1034, %v1828, %v1829
    %v1831 = vrot.slane %v1682, 2
    %v1832 = vsel %vm1034, %v1826, %v1831
    %v1833 = vrot.slane %v1683, 2
    %v1834 = vsel %vm1034, %v1829, %v1833
    %v1835 = vrot.slane %v1684, 2
    %v1836 = vsel %vm1034, %v1831, %v1835
    %v1837 = vrot.slane %v1685, 2
    %v1838 = vsel %vm1034, %v1833, %v1837
    %v1839 = vrot.slane %v1686, 2
    %v1840 = vsel %vm1034, %v1835, %v1839
    %v1841 = vrot.slane %v1687, 2
    %v1842 = vsel %vm1034, %v1837, %v1841
    %v1843 = vrot.slane %v1688, 2
    %v1844 = vsel %vm1034, %v1839, %v1843
    %v1845 = vrot.slane %v1689, 2
    %v1846 = vsel %vm1034, %v1841, %v1845
    %v1847 = vrot.slane %v1690, 2
    %v1848 = vsel %vm1034, %v1843, %v1847
    %v1849 = vrot.slane %v1691, 2
    %v1850 = vsel %vm1034, %v1845, %v1849
    %v1851 = vrot.slane %v1750, 2
    %v1852 = vsel %vm1034, %v1847, %v1851
    %v1853 = vrot.slane %v1751, 2
    %v1854 = vsel %vm1034, %v1849, %v1853
    %v1862 = vsel %vm873, %v1830, 0
    %v1864 = vsel %vm873, %v1834, 0
    %v1866 = vsel %vm873, %v1838, 0
    %v1868 = vsel %vm873, %v1842, 0
    %v1870 = vsel %vm873, %v1846, 0
    %v1872 = vsel %vm873, %v1850, 0
    %v1874 = vsel %vm873, %v1854, 0
    %1876 = vmatprep.subr.mxu0 %v1754
    %1877 = vmatpush1.msra.mxu0 %v1753
    %1878 = vmatprep.subr.mxu0 %v1756
    %1879 = vmatpush1.msra.mxu0 %v1755
    %1880 = vmatprep.subr.mxu0 %v1758
    %1881 = vmatpush1.msra.mxu0 %v1757
    %1882 = vmatprep.subr.mxu0 %v1760
    %1883 = vmatpush1.msra.mxu0 %v1759
    %1884 = vmatprep.subr.mxu0 %v1762
    %1885 = vmatpush1.msra.mxu0 %v1761
    %1886 = vmatprep.subr.mxu0 %v1764
    %1887 = vmatpush1.msra.mxu0 %v1763
    %1888 = vmatprep.subr.mxu0 %v1766
    %1889 = vmatpush1.msra.mxu0 %v1765
    %1890 = vmatprep.subr.mxu0 %v1768
    %1891 = vmatpush1.msra.mxu0 %v1767
    %1892 = vmatprep.subr.mxu0 %v1770
    %1893 = vmatpush1.msra.mxu0 %v1769
    %1894 = vmatprep.subr.mxu0 %v1772
    %1895 = vmatpush1.msra.mxu0 %v1771
    %1896 = vmatprep.subr.mxu0 %v1774
    %1897 = vmatpush1.msra.mxu0 %v1773
    %1898 = vmatprep.subr.mxu0 %v1776
    %1899 = vmatpush1.msra.mxu0 %v1775
    %1900 = vmatprep.subr.mxu0 %v1778
    %1901 = vmatpush1.msra.mxu0 %v1777
    %1902 = vmatprep.subr.mxu0 %v1780
    %1903 = vmatpush1.msra.mxu0 %v1779
    %1904 = vmatprep.subr.mxu0 %v1782
    %1905 = vmatpush1.msra.mxu0 %v1781
    %1906 = vmatprep.subr.mxu0 %v1784
    %1907 = vmatpush1.msra.mxu0 %v1783
    %1908 = vmatprep.subr.mxu0 %v1786
    %1909 = vmatpush1.msra.mxu0 %v1785
    %1910 = vmatprep.subr.mxu0 %v1788
    %1911 = vmatpush1.msra.mxu0 %v1787
    %1912 = vmatprep.subr.mxu0 %v1790
    %1913 = vmatpush1.msra.mxu0 %v1789
    %1914 = vmatprep.subr.mxu0 %v1792
    %1915 = vmatpush1.msra.mxu0 %v1791
    %1916 = vmatprep.subr.mxu0 %v1794
    %1917 = vmatpush1.msra.mxu0 %v1793
    %1918 = vmatprep.subr.mxu0 %v1796
    %1919 = vmatpush1.msra.mxu0 %v1795
    %1920 = vmatprep.subr.mxu0 %v1798
    %1921 = vmatpush1.msra.mxu0 %v1797
    %1922 = vmatprep.subr.mxu0 %v1800
    %1923 = vmatpush1.msra.mxu0 %v1799
    %1924 = vmatprep.subr.mxu0 %v1802
    %1925 = vmatpush1.msra.mxu0 %v1801
    %1926 = vmatprep.subr.mxu0 %v1804
    %1927 = vmatpush1.msra.mxu0 %v1803
    %1928 = vmatprep.subr.mxu0 %v1806
    %1929 = vmatpush1.msra.mxu0 %v1805
    %1930 = vmatprep.subr.mxu0 %v1808
    %1931 = vmatpush1.msra.mxu0 %v1807
    %1932 = vmatprep.subr.mxu0 0.0
    %1933 = vmatpush1.msra.mxu0 0.0
    %1934 = vmatprep.subr.mxu0 0.0
    %1935 = vmatpush1.msra.mxu0 0.0
    %1936 = vmatprep.subr.mxu0 0.0
    %1937 = vmatpush1.msra.mxu0 0.0
    %1938 = vmatprep.subr.mxu0 0.0
    %1939 = vmatpush1.msra.mxu0 0.0
    %1940 = vmatprep.mubr.f32.mxu0 %v1862
    %1941 = vmatmul.mubr.f32.gmra.mrb[0].mxu0 %v1827
    %v1942 = vpop.f32.mrb[0].mxu0
    %v1943 = vadd.f32 0.0, %v1942
    %v1944 = vpop.f32.mrb[0].mxu0
    %v1945 = vadd.f32 0.0, %v1944
    %1946 = vmatprep.mubr.f32.mxu0 %v1864
    %1947 = vmatmul.mubr.f32.gmra.mrb[0].mxu0 %v1832
    %v1948 = vpop.f32.mrb[0].mxu0
    %v1949 = vadd.f32 0.0, %v1948
    %v1950 = vpop.f32.mrb[0].mxu0
    %v1951 = vadd.f32 0.0, %v1950
    %1952 = vmatprep.mubr.f32.mxu0 %v1866
    %1953 = vmatmul.mubr.f32.gmra.mrb[0].mxu0 %v1836
    %v1954 = vpop.f32.mrb[0].mxu0
    %v1955 = vadd.f32 0.0, %v1954
    %v1956 = vpop.f32.mrb[0].mxu0
    %v1957 = vadd.f32 0.0, %v1956
    %1958 = vmatprep.mubr.f32.mxu0 %v1868
    %1959 = vmatmul.mubr.f32.gmra.mrb[0].mxu0 %v1840
    %v1960 = vpop.f32.mrb[0].mxu0
    %v1961 = vadd.f32 0.0, %v1960
    %v1962 = vpop.f32.mrb[0].mxu0
    %v1963 = vadd.f32 0.0, %v1962
    %1964 = vmatprep.mubr.f32.mxu0 %v1870
    %1965 = vmatmul.mubr.f32.gmra.mrb[0].mxu0 %v1844
    %v1966 = vpop.f32.mrb[0].mxu0
    %v1967 = vadd.f32 0.0, %v1966
    %v1968 = vpop.f32.mrb[0].mxu0
    %v1969 = vadd.f32 0.0, %v1968
    %1970 = vmatprep.mubr.f32.mxu0 %v1872
    %1971 = vmatmul.mubr.f32.gmra.mrb[0].mxu0 %v1848
    %v1972 = vpop.f32.mrb[0].mxu0
    %v1973 = vadd.f32 0.0, %v1972
    %v1974 = vpop.f32.mrb[0].mxu0
    %v1975 = vadd.f32 0.0, %v1974
    %1976 = vmatprep.mubr.f32.mxu0 %v1874
    %1977 = vmatmul.mubr.f32.gmra.mrb[0].mxu0 %v1852
    %v1978 = vpop.f32.mrb[0].mxu0
    %v1979 = vadd.f32 0.0, %v1978
    %v1980 = vpop.f32.mrb[0].mxu0
    %v1981 = vadd.f32 0.0, %v1980
    %1982 = vdwg.mxu0
    %v1984 = vsel %vm873, %v1679, 0
    %v1986 = vsel %vm873, %v1681, 0
    %v1988 = vsel %vm873, %v1683, 0
    %v1990 = vsel %vm873, %v1685, 0
    %v1992 = vsel %vm873, %v1687, 0
    %v1994 = vsel %vm873, %v1689, 0
    %v1996 = vsel %vm873, %v1691, 0
    %1998 = vmatprep.subr.mxu0 %v1693
    %1999 = vmatpush1.msra.mxu0 %v1692
    %2000 = vmatprep.subr.mxu0 %v1695
    %2001 = vmatpush1.msra.mxu0 %v1694
    %2002 = vmatprep.subr.mxu0 %v1697
    %2003 = vmatpush1.msra.mxu0 %v1696
    %2004 = vmatprep.subr.mxu0 %v1699
    %2005 = vmatpush1.msra.mxu0 %v1698
    %2006 = vmatprep.subr.mxu0 %v1701
    %2007 = vmatpush1.msra.mxu0 %v1700
    %2008 = vmatprep.subr.mxu0 %v1703
    %2009 = vmatpush1.msra.mxu0 %v1702
    %2010 = vmatprep.subr.mxu0 %v1705
    %2011 = vmatpush1.msra.mxu0 %v1704
    %2012 = vmatprep.subr.mxu0 %v1707
    %2013 = vmatpush1.msra.mxu0 %v1706
    %2014 = vmatprep.subr.mxu0 %v1709
    %2015 = vmatpush1.msra.mxu0 %v1708
    %2016 = vmatprep.subr.mxu0 %v1711
    %2017 = vmatpush1.msra.mxu0 %v1710
    %2018 = vmatprep.subr.mxu0 %v1713
    %2019 = vmatpush1.msra.mxu0 %v1712
    %2020 = vmatprep.subr.mxu0 %v1715
    %2021 = vmatpush1.msra.mxu0 %v1714
    %2022 = vmatprep.subr.mxu0 %v1717
    %2023 = vmatpush1.msra.mxu0 %v1716
    %2024 = vmatprep.subr.mxu0 %v1719
    %2025 = vmatpush1.msra.mxu0 %v1718
    %2026 = vmatprep.subr.mxu0 %v1721
    %2027 = vmatpush1.msra.mxu0 %v1720
    %2028 = vmatprep.subr.mxu0 %v1723
    %2029 = vmatpush1.msra.mxu0 %v1722
    %2030 = vmatprep.subr.mxu0 %v1725
    %2031 = vmatpush1.msra.mxu0 %v1724
    %2032 = vmatprep.subr.mxu0 %v1727
    %2033 = vmatpush1.msra.mxu0 %v1726
    %2034 = vmatprep.subr.mxu0 %v1729
    %2035 = vmatpush1.msra.mxu0 %v1728
    %2036 = vmatprep.subr.mxu0 %v1731
    %2037 = vmatpush1.msra.mxu0 %v1730
    %2038 = vmatprep.subr.mxu0 %v1733
    %2039 = vmatpush1.msra.mxu0 %v1732
    %2040 = vmatprep.subr.mxu0 %v1735
    %2041 = vmatpush1.msra.mxu0 %v1734
    %2042 = vmatprep.subr.mxu0 %v1737
    %2043 = vmatpush1.msra.mxu0 %v1736
    %2044 = vmatprep.subr.mxu0 %v1739
    %2045 = vmatpush1.msra.mxu0 %v1738
    %2046 = vmatprep.subr.mxu0 %v1741
    %2047 = vmatpush1.msra.mxu0 %v1740
    %2048 = vmatprep.subr.mxu0 %v1743
    %2049 = vmatpush1.msra.mxu0 %v1742
    %2050 = vmatprep.subr.mxu0 %v1745
    %2051 = vmatpush1.msra.mxu0 %v1744
    %2052 = vmatprep.subr.mxu0 %v1747
    %2053 = vmatpush1.msra.mxu0 %v1746
    %2054 = vmatprep.subr.mxu0 0.0
    %2055 = vmatpush1.msra.mxu0 0.0
    %2056 = vmatprep.subr.mxu0 0.0
    %2057 = vmatpush1.msra.mxu0 0.0
    %2058 = vmatprep.subr.mxu0 0.0
    %2059 = vmatpush1.msra.mxu0 0.0
    %2060 = vmatprep.subr.mxu0 0.0
    %2061 = vmatpush1.msra.mxu0 0.0
    %2062 = vmatprep.mubr.f32.mxu0 %v1984
    %2063 = vmatmul.mubr.f32.gmra.mrb[0].mxu0 %v1678
    %v2064 = vpop.f32.mrb[0].mxu0
    %v2065 = vadd.f32 %v1943, %v2064
    %v2066 = vpop.f32.mrb[0].mxu0
    %v2067 = vadd.f32 %v1945, %v2066
    %2068 = vmatprep.mubr.f32.mxu0 %v1986
    %2069 = vmatmul.mubr.f32.gmra.mrb[0].mxu0 %v1680
    %v2070 = vpop.f32.mrb[0].mxu0
    %v2071 = vadd.f32 %v1949, %v2070
    %v2072 = vpop.f32.mrb[0].mxu0
    %v2073 = vadd.f32 %v1951, %v2072
    %2074 = vmatprep.mubr.f32.mxu0 %v1988
    %2075 = vmatmul.mubr.f32.gmra.mrb[0].mxu0 %v1682
    %v2076 = vpop.f32.mrb[0].mxu0
    %v2077 = vadd.f32 %v1955, %v2076
    %v2078 = vpop.f32.mrb[0].mxu0
    %v2079 = vadd.f32 %v1957, %v2078
    %2080 = vmatprep.mubr.f32.mxu0 %v1990
    %2081 = vmatmul.mubr.f32.gmra.mrb[0].mxu0 %v1684
    %v2082 = vpop.f32.mrb[0].mxu0
    %v2083 = vadd.f32 %v1961, %v2082
    %v2084 = vpop.f32.mrb[0].mxu0
    %v2085 = vadd.f32 %v1963, %v2084
    %2086 = vmatprep.mubr.f32.mxu0 %v1992
    %2087 = vmatmul.mubr.f32.gmra.mrb[0].mxu0 %v1686
    %v2088 = vpop.f32.mrb[0].mxu0
    %v2089 = vadd.f32 %v1967, %v2088
    %v2090 = vpop.f32.mrb[0].mxu0
    %v2091 = vadd.f32 %v1969, %v2090
    %2092 = vmatprep.mubr.f32.mxu0 %v1994
    %2093 = vmatmul.mubr.f32.gmra.mrb[0].mxu0 %v1688
    %v2094 = vpop.f32.mrb[0].mxu0
    %v2095 = vadd.f32 %v1973, %v2094
    %v2096 = vpop.f32.mrb[0].mxu0
    %v2097 = vadd.f32 %v1975, %v2096
    %2098 = vmatprep.mubr.f32.mxu0 %v1996
    %2099 = vmatmul.mubr.f32.gmra.mrb[0].mxu0 %v1690
    %v2100 = vpop.f32.mrb[0].mxu0
    %v2101 = vadd.f32 %v1979, %v2100
    %v2102 = vpop.f32.mrb[0].mxu0
    %v2103 = vadd.f32 %v1981, %v2102
    %2104 = vdwg.mxu0
    %v2105 = vld [vmem:[#allocation2] sm:$0xf0]
    %v2106 = vld [vmem:[#allocation2 + $0x8] sm:$0xf0]
    %v2107 = vld [vmem:[#allocation2 + $0x70] sm:$0xf]
    %v2108 = vld [vmem:[#allocation2 + $0x78] sm:$0xf]
    %s2109 = scalar_lea.vmem [#allocation10], 896
    %v2110 = vld [vmem:[%s2109] sm:$0xff]
    %v2111 = vld [vmem:[%s2109 + $0x8] sm:$0xff]
    %v2112 = vld [vmem:[%s2109 + $0x10] sm:$0xff]
    %v2113 = vld [vmem:[%s2109 + $0x18] sm:$0xff]
    %v2114 = vld [vmem:[%s2109 + $0x20] sm:$0xff]
    %v2115 = vld [vmem:[%s2109 + $0x28] sm:$0xff]
    %v2116 = vld [vmem:[%s2109 + $0x30] sm:$0xff]
    %v2117 = vld [vmem:[%s2109 + $0x38] sm:$0xff]
    %v2118 = vld [vmem:[%s2109 + $0x40] sm:$0xff]
    %v2119 = vld [vmem:[%s2109 + $0x48] sm:$0xff]
    %v2120 = vld [vmem:[%s2109 + $0x50] sm:$0xff]
    %v2121 = vld [vmem:[%s2109 + $0x58] sm:$0xff]
    %v2122 = vld [vmem:[%s2109 + $0x60] sm:$0xff]
    %v2123 = vld [vmem:[%s2109 + $0x68] sm:$0xff]
    %v2124 = vld [vmem:[%s2109 + $0x70] sm:$0xff]
    %v2125 = vld [vmem:[%s2109 + $0x78] sm:$0xff]
    %v2126 = vld [vmem:[%s2109 + $0x80] sm:$0xff]
    %v2127 = vld [vmem:[%s2109 + $0x88] sm:$0xff]
    %v2128 = vld [vmem:[%s2109 + $0x90] sm:$0xff]
    %v2129 = vld [vmem:[%s2109 + $0x98] sm:$0xff]
    %v2130 = vld [vmem:[%s2109 + $0xa0] sm:$0xff]
    %v2131 = vld [vmem:[%s2109 + $0xa8] sm:$0xff]
    %v2132 = vld [vmem:[%s2109 + $0xb0] sm:$0xff]
    %v2133 = vld [vmem:[%s2109 + $0xb8] sm:$0xff]
    %v2134 = vld [vmem:[%s2109 + $0xc0] sm:$0xff]
    %v2135 = vld [vmem:[%s2109 + $0xc8] sm:$0xff]
    %v2136 = vld [vmem:[%s2109 + $0xd0] sm:$0xff]
    %v2137 = vld [vmem:[%s2109 + $0xd8] sm:$0xff]
    %v2138 = vld [vmem:[%s2109 + $0xe0] sm:$0xff]
    %v2139 = vld [vmem:[%s2109 + $0xe8] sm:$0xff]
    %v2140 = vld [vmem:[%s2109 + $0xf0] sm:$0xff]
    %v2141 = vld [vmem:[%s2109 + $0xf8] sm:$0xff]
    %v2142 = vld [vmem:[%s2109 + $0x100] sm:$0xff]
    %v2143 = vld [vmem:[%s2109 + $0x108] sm:$0xff]
    %v2144 = vld [vmem:[%s2109 + $0x110] sm:$0xff]
    %v2145 = vld [vmem:[%s2109 + $0x118] sm:$0xff]
    %v2146 = vld [vmem:[%s2109 + $0x120] sm:$0xff]
    %v2147 = vld [vmem:[%s2109 + $0x128] sm:$0xff]
    %v2148 = vld [vmem:[%s2109 + $0x130] sm:$0xff]
    %v2149 = vld [vmem:[%s2109 + $0x138] sm:$0xff]
    %v2150 = vld [vmem:[%s2109 + $0x140] sm:$0xff]
    %v2151 = vld [vmem:[%s2109 + $0x148] sm:$0xff]
    %v2152 = vld [vmem:[%s2109 + $0x150] sm:$0xff]
    %v2153 = vld [vmem:[%s2109 + $0x158] sm:$0xff]
    %v2154 = vld [vmem:[%s2109 + $0x160] sm:$0xff]
    %v2155 = vld [vmem:[%s2109 + $0x168] sm:$0xff]
    %v2156 = vld [vmem:[%s2109 + $0x170] sm:$0xff]
    %v2157 = vld [vmem:[%s2109 + $0x178] sm:$0xff]
    %v2158 = vld [vmem:[%s2109 + $0x180] sm:$0xff]
    %v2159 = vld [vmem:[%s2109 + $0x188] sm:$0xff]
    %v2160 = vld [vmem:[%s2109 + $0x190] sm:$0xff]
    %v2161 = vld [vmem:[%s2109 + $0x198] sm:$0xff]
    %v2162 = vld [vmem:[%s2109 + $0x1a0] sm:$0xff]
    %v2163 = vld [vmem:[%s2109 + $0x1a8] sm:$0xff]
    %v2164 = vld [vmem:[%s2109 + $0x1b0] sm:$0xff]
    %v2165 = vld [vmem:[%s2109 + $0x1b8] sm:$0xff]
    %v2170 = vrot.slane %v2105, 4
    %v2171 = vrot.slane %v1680, 4
    %v2172 = vsel %vm340, %v2170, %v2171
    %v2173 = vrot.slane %v2106, 4
    %v2174 = vrot.slane %v1681, 4
    %v2175 = vsel %vm340, %v2173, %v2174
    %v2176 = vrot.slane %v1682, 4
    %v2177 = vsel %vm340, %v2171, %v2176
    %v2178 = vrot.slane %v1683, 4
    %v2179 = vsel %vm340, %v2174, %v2178
    %v2180 = vrot.slane %v1684, 4
    %v2181 = vsel %vm340, %v2176, %v2180
    %v2182 = vrot.slane %v1685, 4
    %v2183 = vsel %vm340, %v2178, %v2182
    %v2184 = vrot.slane %v1686, 4
    %v2185 = vsel %vm340, %v2180, %v2184
    %v2186 = vrot.slane %v1687, 4
    %v2187 = vsel %vm340, %v2182, %v2186
    %v2188 = vrot.slane %v1688, 4
    %v2189 = vsel %vm340, %v2184, %v2188
    %v2190 = vrot.slane %v1689, 4
    %v2191 = vsel %vm340, %v2186, %v2190
    %v2192 = vrot.slane %v1690, 4
    %v2193 = vsel %vm340, %v2188, %v2192
    %v2194 = vrot.slane %v1691, 4
    %v2195 = vsel %vm340, %v2190, %v2194
    %v2196 = vrot.slane %v2107, 4
    %v2197 = vsel %vm340, %v2192, %v2196
    %v2198 = vrot.slane %v2108, 4
    %v2199 = vsel %vm340, %v2194, %v2198
    %v2207 = vsel %vm873, %v2175, 0
    %v2209 = vsel %vm873, %v2179, 0
    %v2211 = vsel %vm873, %v2183, 0
    %v2213 = vsel %vm873, %v2187, 0
    %v2215 = vsel %vm873, %v2191, 0
    %v2217 = vsel %vm873, %v2195, 0
    %v2219 = vsel %vm873, %v2199, 0
    %2221 = vmatprep.subr.mxu0 %v2111
    %2222 = vmatpush1.msra.mxu0 %v2110
    %2223 = vmatprep.subr.mxu0 %v2113
    %2224 = vmatpush1.msra.mxu0 %v2112
    %2225 = vmatprep.subr.mxu0 %v2115
    %2226 = vmatpush1.msra.mxu0 %v2114
    %2227 = vmatprep.subr.mxu0 %v2117
    %2228 = vmatpush1.msra.mxu0 %v2116
    %2229 = vmatprep.subr.mxu0 %v2119
    %2230 = vmatpush1.msra.mxu0 %v2118
    %2231 = vmatprep.subr.mxu0 %v2121
    %2232 = vmatpush1.msra.mxu0 %v2120
    %2233 = vmatprep.subr.mxu0 %v2123
    %2234 = vmatpush1.msra.mxu0 %v2122
    %2235 = vmatprep.subr.mxu0 %v2125
    %2236 = vmatpush1.msra.mxu0 %v2124
    %2237 = vmatprep.subr.mxu0 %v2127
    %2238 = vmatpush1.msra.mxu0 %v2126
    %2239 = vmatprep.subr.mxu0 %v2129
    %2240 = vmatpush1.msra.mxu0 %v2128
    %2241 = vmatprep.subr.mxu0 %v2131
    %2242 = vmatpush1.msra.mxu0 %v2130
    %2243 = vmatprep.subr.mxu0 %v2133
    %2244 = vmatpush1.msra.mxu0 %v2132
    %2245 = vmatprep.subr.mxu0 %v2135
    %2246 = vmatpush1.msra.mxu0 %v2134
    %2247 = vmatprep.subr.mxu0 %v2137
    %2248 = vmatpush1.msra.mxu0 %v2136
    %2249 = vmatprep.subr.mxu0 %v2139
    %2250 = vmatpush1.msra.mxu0 %v2138
    %2251 = vmatprep.subr.mxu0 %v2141
    %2252 = vmatpush1.msra.mxu0 %v2140
    %2253 = vmatprep.subr.mxu0 %v2143
    %2254 = vmatpush1.msra.mxu0 %v2142
    %2255 = vmatprep.subr.mxu0 %v2145
    %2256 = vmatpush1.msra.mxu0 %v2144
    %2257 = vmatprep.subr.mxu0 %v2147
    %2258 = vmatpush1.msra.mxu0 %v2146
    %2259 = vmatprep.subr.mxu0 %v2149
    %2260 = vmatpush1.msra.mxu0 %v2148
    %2261 = vmatprep.subr.mxu0 %v2151
    %2262 = vmatpush1.msra.mxu0 %v2150
    %2263 = vmatprep.subr.mxu0 %v2153
    %2264 = vmatpush1.msra.mxu0 %v2152
    %2265 = vmatprep.subr.mxu0 %v2155
    %2266 = vmatpush1.msra.mxu0 %v2154
    %2267 = vmatprep.subr.mxu0 %v2157
    %2268 = vmatpush1.msra.mxu0 %v2156
    %2269 = vmatprep.subr.mxu0 %v2159
    %2270 = vmatpush1.msra.mxu0 %v2158
    %2271 = vmatprep.subr.mxu0 %v2161
    %2272 = vmatpush1.msra.mxu0 %v2160
    %2273 = vmatprep.subr.mxu0 %v2163
    %2274 = vmatpush1.msra.mxu0 %v2162
    %2275 = vmatprep.subr.mxu0 %v2165
    %2276 = vmatpush1.msra.mxu0 %v2164
    %2277 = vmatprep.subr.mxu0 0.0
    %2278 = vmatpush1.msra.mxu0 0.0
    %2279 = vmatprep.subr.mxu0 0.0
    %2280 = vmatpush1.msra.mxu0 0.0
    %2281 = vmatprep.subr.mxu0 0.0
    %2282 = vmatpush1.msra.mxu0 0.0
    %2283 = vmatprep.subr.mxu0 0.0
    %2284 = vmatpush1.msra.mxu0 0.0
    %2285 = vmatprep.mubr.f32.mxu0 %v2207
    %2286 = vmatmul.mubr.f32.gmra.mrb[0].mxu0 %v2172
    %v2287 = vpop.f32.mrb[0].mxu0
    %v2288 = vadd.f32 0.0, %v2287
    %v2289 = vpop.f32.mrb[0].mxu0
    %v2290 = vadd.f32 0.0, %v2289
    %2291 = vmatprep.mubr.f32.mxu0 %v2209
    %2292 = vmatmul.mubr.f32.gmra.mrb[0].mxu0 %v2177
    %v2293 = vpop.f32.mrb[0].mxu0
    %v2294 = vadd.f32 0.0, %v2293
    %v2295 = vpop.f32.mrb[0].mxu0
    %v2296 = vadd.f32 0.0, %v2295
    %2297 = vmatprep.mubr.f32.mxu0 %v2211
    %2298 = vmatmul.mubr.f32.gmra.mrb[0].mxu0 %v2181
    %v2299 = vpop.f32.mrb[0].mxu0
    %v2300 = vadd.f32 0.0, %v2299
    %v2301 = vpop.f32.mrb[0].mxu0
    %v2302 = vadd.f32 0.0, %v2301
    %2303 = vmatprep.mubr.f32.mxu0 %v2213
    %2304 = vmatmul.mubr.f32.gmra.mrb[0].mxu0 %v2185
    %v2305 = vpop.f32.mrb[0].mxu0
    %v2306 = vadd.f32 0.0, %v2305
    %v2307 = vpop.f32.mrb[0].mxu0
    %v2308 = vadd.f32 0.0, %v2307
    %2309 = vmatprep.mubr.f32.mxu0 %v2215
    %2310 = vmatmul.mubr.f32.gmra.mrb[0].mxu0 %v2189
    %v2311 = vpop.f32.mrb[0].mxu0
    %v2312 = vadd.f32 0.0, %v2311
    %v2313 = vpop.f32.mrb[0].mxu0
    %v2314 = vadd.f32 0.0, %v2313
    %2315 = vmatprep.mubr.f32.mxu0 %v2217
    %2316 = vmatmul.mubr.f32.gmra.mrb[0].mxu0 %v2193
    %v2317 = vpop.f32.mrb[0].mxu0
    %v2318 = vadd.f32 0.0, %v2317
    %v2319 = vpop.f32.mrb[0].mxu0
    %v2320 = vadd.f32 0.0, %v2319
    %2321 = vmatprep.mubr.f32.mxu0 %v2219
    %2322 = vmatmul.mubr.f32.gmra.mrb[0].mxu0 %v2197
    %v2323 = vpop.f32.mrb[0].mxu0
    %v2324 = vadd.f32 0.0, %v2323
    %v2325 = vpop.f32.mrb[0].mxu0
    %v2326 = vadd.f32 0.0, %v2325
    %2327 = vdwg.mxu0
    %v2328 = vadd.f32 %v2065, %v2288
    %v2329 = vadd.f32 %v2067, %v2290
    %v2330 = vadd.f32 %v2071, %v2294
    %v2331 = vadd.f32 %v2073, %v2296
    %v2332 = vadd.f32 %v2077, %v2300
    %v2333 = vadd.f32 %v2079, %v2302
    %v2334 = vadd.f32 %v2083, %v2306
    %v2335 = vadd.f32 %v2085, %v2308
    %v2336 = vadd.f32 %v2089, %v2312
    %v2337 = vadd.f32 %v2091, %v2314
    %v2338 = vadd.f32 %v2095, %v2318
    %v2339 = vadd.f32 %v2097, %v2320
    %v2340 = vadd.f32 %v2101, %v2324
    %v2341 = vadd.f32 %v2103, %v2326
    %v2342 = vld [vmem:[#allocation12] sm:$0x3]
    %v2344 = vlaneseq
    %v2345 = vshrl.u32 %v2344, 7
    %v2346 = vsub.s32 0, %v2345
    %v2347 = vrot.slane %v2342, %v2346
    %v2348 = vlaneseq
    %v2349 = vshrl.u32 %v2348, 7
    %v2350 = vsub.s32 1, %v2349
    %v2351 = vrot.slane %v2342, %v2350
    %v2354 = vadd.f32 %v2328, %v2347
    %v2355 = vadd.f32 %v2329, %v2351
    %v2356 = vadd.f32 %v2330, %v2347
    %v2357 = vadd.f32 %v2331, %v2351
    %v2358 = vadd.f32 %v2332, %v2347
    %v2359 = vadd.f32 %v2333, %v2351
    %v2360 = vadd.f32 %v2334, %v2347
    %v2361 = vadd.f32 %v2335, %v2351
    %v2362 = vadd.f32 %v2336, %v2347
    %v2363 = vadd.f32 %v2337, %v2351
    %v2364 = vadd.f32 %v2338, %v2347
    %v2365 = vadd.f32 %v2339, %v2351
    %v2366 = vadd.f32 %v2340, %v2347
    %v2367 = vadd.f32 %v2341, %v2351
    %v2368 = vmul.f32 %v2354, 0.01
    %v2369 = vmul.f32 %v2355, 0.01
    %v2370 = vmul.f32 %v2356, 0.01
    %v2371 = vmul.f32 %v2357, 0.01
    %v2372 = vmul.f32 %v2358, 0.01
    %v2373 = vmul.f32 %v2359, 0.01
    %v2374 = vmul.f32 %v2360, 0.01
    %v2375 = vmul.f32 %v2361, 0.01
    %v2376 = vmul.f32 %v2362, 0.01
    %v2377 = vmul.f32 %v2363, 0.01
    %v2378 = vmul.f32 %v2364, 0.01
    %v2379 = vmul.f32 %v2365, 0.01
    %v2380 = vmul.f32 %v2366, 0.01
    %v2381 = vmul.f32 %v2367, 0.01
    %v2382 = vmax.f32 %v2354, %v2368
    %v2383 = vmax.f32 %v2355, %v2369
    %v2384 = vmax.f32 %v2356, %v2370
    %v2385 = vmax.f32 %v2357, %v2371
    %v2386 = vmax.f32 %v2358, %v2372
    %v2387 = vmax.f32 %v2359, %v2373
    %v2388 = vmax.f32 %v2360, %v2374
    %v2389 = vmax.f32 %v2361, %v2375
    %v2390 = vmax.f32 %v2362, %v2376
    %v2391 = vmax.f32 %v2363, %v2377
    %v2392 = vmax.f32 %v2364, %v2378
    %v2393 = vmax.f32 %v2365, %v2379
    %v2394 = vmax.f32 %v2366, %v2380
    %v2395 = vmax.f32 %v2367, %v2381
    %v2396 = vadd.f32 %v2382, %v2384
    %v2397 = vadd.f32 %v2396, %v2386
    %v2398 = vadd.f32 %v2397, %v2388
    %v2399 = vadd.f32 %v2398, %v2390
    %v2400 = vadd.f32 %v2399, %v2392
    %v2401 = vadd.f32 %v2400, %v2394
    %v2402 = vrot.slane %v2401, 4
    %v2403 = vadd.f32 %v2401, %v2402
    %v2404 = vrot.slane %v2403, 2
    %v2405 = vadd.f32 %v2403, %v2404
    %v2406 = vrot.slane %v2405, 1
    %v2407 = vadd.f32 %v2405, %v2406
    %v2408 = vsel %vm873, %v2383, 0.0
    %v2409 = vsel %vm873, %v2385, 0.0
    %v2410 = vadd.f32 %v2408, %v2409
    %v2411 = vsel %vm873, %v2387, 0.0
    %v2412 = vadd.f32 %v2410, %v2411
    %v2413 = vsel %vm873, %v2389, 0.0
    %v2414 = vadd.f32 %v2412, %v2413
    %v2415 = vsel %vm873, %v2391, 0.0
    %v2416 = vadd.f32 %v2414, %v2415
    %v2417 = vsel %vm873, %v2393, 0.0
    %v2418 = vadd.f32 %v2416, %v2417
    %v2419 = vsel %vm873, %v2395, 0.0
    %v2420 = vadd.f32 %v2418, %v2419
    %v2421 = vrot.slane %v2420, 4
    %v2422 = vadd.f32 %v2420, %v2421
    %v2423 = vrot.slane %v2422, 2
    %v2424 = vadd.f32 %v2422, %v2423
    %v2425 = vrot.slane %v2424, 1
    %v2426 = vadd.f32 %v2424, %v2425
    %v2427 = vmul.f32 %v2382, %v2382
    %v2428 = vmul.f32 %v2383, %v2383
    %v2429 = vmul.f32 %v2384, %v2384
    %v2430 = vmul.f32 %v2385, %v2385
    %v2431 = vmul.f32 %v2386, %v2386
    %v2432 = vmul.f32 %v2387, %v2387
    %v2433 = vmul.f32 %v2388, %v2388
    %v2434 = vmul.f32 %v2389, %v2389
    %v2435 = vmul.f32 %v2390, %v2390
    %v2436 = vmul.f32 %v2391, %v2391
    %v2437 = vmul.f32 %v2392, %v2392
    %v2438 = vmul.f32 %v2393, %v2393
    %v2439 = vmul.f32 %v2394, %v2394
    %v2440 = vmul.f32 %v2395, %v2395
    %v2441 = vadd.f32 %v2427, %v2429
    %v2442 = vadd.f32 %v2441, %v2431
    %v2443 = vadd.f32 %v2442, %v2433
    %v2444 = vadd.f32 %v2443, %v2435
    %v2445 = vadd.f32 %v2444, %v2437
    %v2446 = vadd.f32 %v2445, %v2439
    %v2447 = vrot.slane %v2446, 4
    %v2448 = vadd.f32 %v2446, %v2447
    %v2449 = vrot.slane %v2448, 2
    %v2450 = vadd.f32 %v2448, %v2449
    %v2451 = vrot.slane %v2450, 1
    %v2452 = vadd.f32 %v2450, %v2451
    %v2453 = vsel %vm873, %v2428, 0.0
    %v2454 = vsel %vm873, %v2430, 0.0
    %v2455 = vadd.f32 %v2453, %v2454
    %v2456 = vsel %vm873, %v2432, 0.0
    %v2457 = vadd.f32 %v2455, %v2456
    %v2458 = vsel %vm873, %v2434, 0.0
    %v2459 = vadd.f32 %v2457, %v2458
    %v2460 = vsel %vm873, %v2436, 0.0
    %v2461 = vadd.f32 %v2459, %v2460
    %v2462 = vsel %vm873, %v2438, 0.0
    %v2463 = vadd.f32 %v2461, %v2462
    %v2464 = vsel %vm873, %v2440, 0.0
    %v2465 = vadd.f32 %v2463, %v2464
    %v2466 = vrot.slane %v2465, 4
    %v2467 = vadd.f32 %v2465, %v2466
    %v2468 = vrot.slane %v2467, 2
    %v2469 = vadd.f32 %v2467, %v2468
    %v2470 = vrot.slane %v2469, 1
    %v2471 = vadd.f32 %v2469, %v2470
    %v2472 = vld [vmem:[%s9] sm:$0xff]
    %v2473 = vld [vmem:[%s9 + $0x8] sm:$0xff]
    %v2474 = vld [vmem:[%s9 + $0x10] sm:$0xff]
    %v2475 = vld [vmem:[%s9 + $0x18] sm:$0xff]
    %v2476 = vld [vmem:[%s9 + $0x20] sm:$0xff]
    %v2477 = vld [vmem:[%s9 + $0x28] sm:$0xff]
    %v2478 = vld [vmem:[%s9 + $0x30] sm:$0xff]
    %v2479 = vld [vmem:[%s9 + $0x38] sm:$0xff]
    %v2480 = vld [vmem:[%s9 + $0x40] sm:$0xff]
    %v2481 = vld [vmem:[%s9 + $0x48] sm:$0xff]
    %v2482 = vld [vmem:[%s9 + $0x50] sm:$0xff]
    %v2483 = vld [vmem:[%s9 + $0x58] sm:$0xff]
    %v2484 = vld [vmem:[%s9 + $0x60] sm:$0xff]
    %v2485 = vld [vmem:[%s9 + $0x68] sm:$0xff]
    %v2486 = vld [vmem:[%s9 + $0x70] sm:$0xff]
    %v2487 = vld [vmem:[%s9 + $0x78] sm:$0xff]
    %v2488 = vld [vmem:[%s9 + $0x80] sm:$0xff]
    %v2489 = vld [vmem:[%s9 + $0x88] sm:$0xff]
    %v2490 = vld [vmem:[%s9 + $0x90] sm:$0xff]
    %v2491 = vld [vmem:[%s9 + $0x98] sm:$0xff]
    %v2492 = vld [vmem:[%s9 + $0xa0] sm:$0xff]
    %v2493 = vld [vmem:[%s9 + $0xa8] sm:$0xff]
    %v2494 = vld [vmem:[%s9 + $0xb0] sm:$0xff]
    %v2495 = vld [vmem:[%s9 + $0xb8] sm:$0xff]
    %v2496 = vld [vmem:[%s9 + $0xc0] sm:$0xff]
    %v2497 = vld [vmem:[%s9 + $0xc8] sm:$0xff]
    %v2498 = vld [vmem:[%s9 + $0xd0] sm:$0xff]
    %v2499 = vld [vmem:[%s9 + $0xd8] sm:$0xff]
    %v2501 = vsel %vm873, %v2426, 0
    %2503 = vmatprep.subr.mxu0 0.0
    %2504 = vmatpush1.msra.mxu0 %v2472
    %2505 = vmatprep.subr.mxu0 0.0
    %2506 = vmatpush1.msra.mxu0 %v2473
    %2507 = vmatprep.subr.mxu0 0.0
    %2508 = vmatpush1.msra.mxu0 %v2474
    %2509 = vmatprep.subr.mxu0 0.0
    %2510 = vmatpush1.msra.mxu0 %v2475
    %2511 = vmatprep.subr.mxu0 0.0
    %2512 = vmatpush1.msra.mxu0 %v2476
    %2513 = vmatprep.subr.mxu0 0.0
    %2514 = vmatpush1.msra.mxu0 %v2477
    %2515 = vmatprep.subr.mxu0 0.0
    %2516 = vmatpush1.msra.mxu0 %v2478
    %2517 = vmatprep.subr.mxu0 0.0
    %2518 = vmatpush1.msra.mxu0 %v2479
    %2519 = vmatprep.subr.mxu0 0.0
    %2520 = vmatpush1.msra.mxu0 %v2480
    %2521 = vmatprep.subr.mxu0 0.0
    %2522 = vmatpush1.msra.mxu0 %v2481
    %2523 = vmatprep.subr.mxu0 0.0
    %2524 = vmatpush1.msra.mxu0 %v2482
    %2525 = vmatprep.subr.mxu0 0.0
    %2526 = vmatpush1.msra.mxu0 %v2483
    %2527 = vmatprep.subr.mxu0 0.0
    %2528 = vmatpush1.msra.mxu0 %v2484
    %2529 = vmatprep.subr.mxu0 0.0
    %2530 = vmatpush1.msra.mxu0 %v2485
    %2531 = vmatprep.subr.mxu0 0.0
    %2532 = vmatpush1.msra.mxu0 %v2486
    %2533 = vmatprep.subr.mxu0 0.0
    %2534 = vmatpush1.msra.mxu0 %v2487
    %2535 = vmatprep.subr.mxu0 0.0
    %2536 = vmatpush1.msra.mxu0 %v2488
    %2537 = vmatprep.subr.mxu0 0.0
    %2538 = vmatpush1.msra.mxu0 %v2489
    %2539 = vmatprep.subr.mxu0 0.0
    %2540 = vmatpush1.msra.mxu0 %v2490
    %2541 = vmatprep.subr.mxu0 0.0
    %2542 = vmatpush1.msra.mxu0 %v2491
    %2543 = vmatprep.subr.mxu0 0.0
    %2544 = vmatpush1.msra.mxu0 %v2492
    %2545 = vmatprep.subr.mxu0 0.0
    %2546 = vmatpush1.msra.mxu0 %v2493
    %2547 = vmatprep.subr.mxu0 0.0
    %2548 = vmatpush1.msra.mxu0 %v2494
    %2549 = vmatprep.subr.mxu0 0.0
    %2550 = vmatpush1.msra.mxu0 %v2495
    %2551 = vmatprep.subr.mxu0 0.0
    %2552 = vmatpush1.msra.mxu0 %v2496
    %2553 = vmatprep.subr.mxu0 0.0
    %2554 = vmatpush1.msra.mxu0 %v2497
    %2555 = vmatprep.subr.mxu0 0.0
    %2556 = vmatpush1.msra.mxu0 %v2498
    %2557 = vmatprep.subr.mxu0 0.0
    %2558 = vmatpush1.msra.mxu0 %v2499
    %2559 = vmatprep.subr.mxu0 0.0
    %2560 = vmatpush1.msra.mxu0 0.0
    %2561 = vmatprep.subr.mxu0 0.0
    %2562 = vmatpush1.msra.mxu0 0.0
    %2563 = vmatprep.subr.mxu0 0.0
    %2564 = vmatpush1.msra.mxu0 0.0
    %2565 = vmatprep.subr.mxu0 0.0
    %2566 = vmatpush1.msra.mxu0 0.0
    %2567 = vmatprep.mubr.f32.mxu0 %v2501
    %2568 = vmatmul.mubr.f32.gmra.mrb[0].mxu0 %v2407
    %v2569 = vpop.f32.mrb[0].mxu0
    %v2570 = vadd.f32 0.0, %v2569
    %v2571 = vpop.f32.mrb[0].mxu0
    %2572 = vdwg.mxu0
    %v2573 = vrcp.pop 1568.0
    %v2574 = vmul.f32 %v2570, %v2573
    %v2576 = vsel %vm873, %v2471, 0
    %2578 = vmatprep.subr.mxu0 0.0
    %2579 = vmatpush1.msra.mxu0 %v2472
    %2580 = vmatprep.subr.mxu0 0.0
    %2581 = vmatpush1.msra.mxu0 %v2473
    %2582 = vmatprep.subr.mxu0 0.0
    %2583 = vmatpush1.msra.mxu0 %v2474
    %2584 = vmatprep.subr.mxu0 0.0
    %2585 = vmatpush1.msra.mxu0 %v2475
    %2586 = vmatprep.subr.mxu0 0.0
    %2587 = vmatpush1.msra.mxu0 %v2476
    %2588 = vmatprep.subr.mxu0 0.0
    %2589 = vmatpush1.msra.mxu0 %v2477
    %2590 = vmatprep.subr.mxu0 0.0
    %2591 = vmatpush1.msra.mxu0 %v2478
    %2592 = vmatprep.subr.mxu0 0.0
    %2593 = vmatpush1.msra.mxu0 %v2479
    %2594 = vmatprep.subr.mxu0 0.0
    %2595 = vmatpush1.msra.mxu0 %v2480
    %2596 = vmatprep.subr.mxu0 0.0
    %2597 = vmatpush1.msra.mxu0 %v2481
    %2598 = vmatprep.subr.mxu0 0.0
    %2599 = vmatpush1.msra.mxu0 %v2482
    %2600 = vmatprep.subr.mxu0 0.0
    %2601 = vmatpush1.msra.mxu0 %v2483
    %2602 = vmatprep.subr.mxu0 0.0
    %2603 = vmatpush1.msra.mxu0 %v2484
    %2604 = vmatprep.subr.mxu0 0.0
    %2605 = vmatpush1.msra.mxu0 %v2485
    %2606 = vmatprep.subr.mxu0 0.0
    %2607 = vmatpush1.msra.mxu0 %v2486
    %2608 = vmatprep.subr.mxu0 0.0
    %2609 = vmatpush1.msra.mxu0 %v2487
    %2610 = vmatprep.subr.mxu0 0.0
    %2611 = vmatpush1.msra.mxu0 %v2488
    %2612 = vmatprep.subr.mxu0 0.0
    %2613 = vmatpush1.msra.mxu0 %v2489
    %2614 = vmatprep.subr.mxu0 0.0
    %2615 = vmatpush1.msra.mxu0 %v2490
    %2616 = vmatprep.subr.mxu0 0.0
    %2617 = vmatpush1.msra.mxu0 %v2491
    %2618 = vmatprep.subr.mxu0 0.0
    %2619 = vmatpush1.msra.mxu0 %v2492
    %2620 = vmatprep.subr.mxu0 0.0
    %2621 = vmatpush1.msra.mxu0 %v2493
    %2622 = vmatprep.subr.mxu0 0.0
    %2623 = vmatpush1.msra.mxu0 %v2494
    %2624 = vmatprep.subr.mxu0 0.0
    %2625 = vmatpush1.msra.mxu0 %v2495
    %2626 = vmatprep.subr.mxu0 0.0
    %2627 = vmatpush1.msra.mxu0 %v2496
    %2628 = vmatprep.subr.mxu0 0.0
    %2629 = vmatpush1.msra.mxu0 %v2497
    %2630 = vmatprep.subr.mxu0 0.0
    %2631 = vmatpush1.msra.mxu0 %v2498
    %2632 = vmatprep.subr.mxu0 0.0
    %2633 = vmatpush1.msra.mxu0 %v2499
    %2634 = vmatprep.subr.mxu0 0.0
    %2635 = vmatpush1.msra.mxu0 0.0
    %2636 = vmatprep.subr.mxu0 0.0
    %2637 = vmatpush1.msra.mxu0 0.0
    %2638 = vmatprep.subr.mxu0 0.0
    %2639 = vmatpush1.msra.mxu0 0.0
    %2640 = vmatprep.subr.mxu0 0.0
    %2641 = vmatpush1.msra.mxu0 0.0
    %2642 = vmatprep.mubr.f32.mxu0 %v2576
    %2643 = vmatmul.mubr.f32.gmra.mrb[0].mxu0 %v2452
    %v2644 = vpop.f32.mrb[0].mxu0
    %v2645 = vadd.f32 0.0, %v2644
    %v2646 = vpop.f32.mrb[0].mxu0
    %2647 = vdwg.mxu0
    %v2648 = vmul.f32 %v2645, %v2573
    %v2649 = vmul.f32 %v2574, %v2574
    %v2650 = vsub.f32 %v2648, %v2649
    %v2651 = vmax.f32 %v2650, 0.0
    %v2652 = vld [vmem:[#allocation13] sm:$0x1]
    %v2653 = vadd.f32 %v2651, 1e-05
    %v2654 = vrsqrt.pop %v2653
    %v2655 = vmul.f32 %v2652, %v2654
    %v2656 = vld [vmem:[#allocation15] sm:$0x1]
    %v2657 = vmul.f32 %v2574, %v2655
    %v2658 = vsub.f32 %v2656, %v2657
    %v2659 = vld [vmem:[#allocation16] sm:$0xff]
    %v2660 = vld [vmem:[#allocation16 + $0x8] sm:$0xff]
    %vm2661 = vcmask 64512
    %v2663 = vsel %vm2661, %v2655, 0
    %2665 = vmatprep.subr.mxu0 %v2660
    %2666 = vmatpush1.msra.mxu0 %v2659
    %2667 = vmatprep.subr.mxu0 0.0
    %2668 = vmatpush1.msra.mxu0 0.0
    %2669 = vmatprep.subr.mxu0 0.0
    %2670 = vmatpush1.msra.mxu0 0.0
    %2671 = vmatprep.subr.mxu0 0.0
    %2672 = vmatpush1.msra.mxu0 0.0
    %2673 = vmatprep.subr.mxu0 0.0
    %2674 = vmatpush1.msra.mxu0 0.0
    %2675 = vmatprep.subr.mxu0 0.0
    %2676 = vmatpush1.msra.mxu0 0.0
    %2677 = vmatprep.subr.mxu0 0.0
    %2678 = vmatpush1.msra.mxu0 0.0
    %2679 = vmatprep.subr.mxu0 0.0
    %2680 = vmatpush1.msra.mxu0 0.0
    %2681 = vmatprep.subr.mxu0 0.0
    %2682 = vmatpush1.msra.mxu0 0.0
    %2683 = vmatprep.subr.mxu0 0.0
    %2684 = vmatpush1.msra.mxu0 0.0
    %2685 = vmatprep.subr.mxu0 0.0
    %2686 = vmatpush1.msra.mxu0 0.0
    %2687 = vmatprep.subr.mxu0 0.0
    %2688 = vmatpush1.msra.mxu0 0.0
    %2689 = vmatprep.subr.mxu0 0.0
    %2690 = vmatpush1.msra.mxu0 0.0
    %2691 = vmatprep.subr.mxu0 0.0
    %2692 = vmatpush1.msra.mxu0 0.0
    %2693 = vmatprep.subr.mxu0 0.0
    %2694 = vmatpush1.msra.mxu0 0.0
    %2695 = vmatprep.subr.mxu0 0.0
    %2696 = vmatpush1.msra.mxu0 0.0
    %2697 = vmatprep.subr.mxu0 0.0
    %2698 = vmatpush1.msra.mxu0 0.0
    %2699 = vmatprep.subr.mxu0 0.0
    %2700 = vmatpush1.msra.mxu0 0.0
    %2701 = vmatprep.subr.mxu0 0.0
    %2702 = vmatpush1.msra.mxu0 0.0
    %2703 = vmatprep.subr.mxu0 0.0
    %2704 = vmatpush1.msra.mxu0 0.0
    %2705 = vmatprep.subr.mxu0 0.0
    %2706 = vmatpush1.msra.mxu0 0.0
    %2707 = vmatprep.subr.mxu0 0.0
    %2708 = vmatpush1.msra.mxu0 0.0
    %2709 = vmatprep.subr.mxu0 0.0
    %2710 = vmatpush1.msra.mxu0 0.0
    %2711 = vmatprep.subr.mxu0 0.0
    %2712 = vmatpush1.msra.mxu0 0.0
    %2713 = vmatprep.subr.mxu0 0.0
    %2714 = vmatpush1.msra.mxu0 0.0
    %2715 = vmatprep.subr.mxu0 0.0
    %2716 = vmatpush1.msra.mxu0 0.0
    %2717 = vmatprep.subr.mxu0 0.0
    %2718 = vmatpush1.msra.mxu0 0.0
    %2719 = vmatprep.subr.mxu0 0.0
    %2720 = vmatpush1.msra.mxu0 0.0
    %2721 = vmatprep.subr.mxu0 0.0
    %2722 = vmatpush1.msra.mxu0 0.0
    %2723 = vmatprep.subr.mxu0 0.0
    %2724 = vmatpush1.msra.mxu0 0.0
    %2725 = vmatprep.subr.mxu0 0.0
    %2726 = vmatpush1.msra.mxu0 0.0
    %2727 = vmatprep.subr.mxu0 0.0
    %2728 = vmatpush1.msra.mxu0 0.0
    %2729 = vmatprep.mubr.f32.mxu0 0.0
    %2730 = vmatmul.mubr.f32.gmra.mrb[0].mxu0 %v2663
    %v2731 = vpop.f32.mrb[0].mxu0
    %v2732 = vadd.f32 0.0, %v2731
    %v2733 = vpop.f32.mrb[0].mxu0
    %v2734 = vadd.f32 0.0, %v2733
    %2735 = vdwg.mxu0
    %v2737 = vsel %vm2661, %v2658, 0
    %2739 = vmatprep.subr.mxu0 %v2660
    %2740 = vmatpush1.msra.mxu0 %v2659
    %2741 = vmatprep.subr.mxu0 0.0
    %2742 = vmatpush1.msra.mxu0 0.0
    %2743 = vmatprep.subr.mxu0 0.0
    %2744 = vmatpush1.msra.mxu0 0.0
    %2745 = vmatprep.subr.mxu0 0.0
    %2746 = vmatpush1.msra.mxu0 0.0
    %2747 = vmatprep.subr.mxu0 0.0
    %2748 = vmatpush1.msra.mxu0 0.0
    %2749 = vmatprep.subr.mxu0 0.0
    %2750 = vmatpush1.msra.mxu0 0.0
    %2751 = vmatprep.subr.mxu0 0.0
    %2752 = vmatpush1.msra.mxu0 0.0
    %2753 = vmatprep.subr.mxu0 0.0
    %2754 = vmatpush1.msra.mxu0 0.0
    %2755 = vmatprep.subr.mxu0 0.0
    %2756 = vmatpush1.msra.mxu0 0.0
    %2757 = vmatprep.subr.mxu0 0.0
    %2758 = vmatpush1.msra.mxu0 0.0
    %2759 = vmatprep.subr.mxu0 0.0
    %2760 = vmatpush1.msra.mxu0 0.0
    %2761 = vmatprep.subr.mxu0 0.0
    %2762 = vmatpush1.msra.mxu0 0.0
    %2763 = vmatprep.subr.mxu0 0.0
    %2764 = vmatpush1.msra.mxu0 0.0
    %2765 = vmatprep.subr.mxu0 0.0
    %2766 = vmatpush1.msra.mxu0 0.0
    %2767 = vmatprep.subr.mxu0 0.0
    %2768 = vmatpush1.msra.mxu0 0.0
    %2769 = vmatprep.subr.mxu0 0.0
    %2770 = vmatpush1.msra.mxu0 0.0
    %2771 = vmatprep.subr.mxu0 0.0
    %2772 = vmatpush1.msra.mxu0 0.0
    %2773 = vmatprep.subr.mxu0 0.0
    %2774 = vmatpush1.msra.mxu0 0.0
    %2775 = vmatprep.subr.mxu0 0.0
    %2776 = vmatpush1.msra.mxu0 0.0
    %2777 = vmatprep.subr.mxu0 0.0
    %2778 = vmatpush1.msra.mxu0 0.0
    %2779 = vmatprep.subr.mxu0 0.0
    %2780 = vmatpush1.msra.mxu0 0.0
    %2781 = vmatprep.subr.mxu0 0.0
    %2782 = vmatpush1.msra.mxu0 0.0
    %2783 = vmatprep.subr.mxu0 0.0
    %2784 = vmatpush1.msra.mxu0 0.0
    %2785 = vmatprep.subr.mxu0 0.0
    %2786 = vmatpush1.msra.mxu0 0.0
    %2787 = vmatprep.subr.mxu0 0.0
    %2788 = vmatpush1.msra.mxu0 0.0
    %2789 = vmatprep.subr.mxu0 0.0
    %2790 = vmatpush1.msra.mxu0 0.0
    %2791 = vmatprep.subr.mxu0 0.0
    %2792 = vmatpush1.msra.mxu0 0.0
    %2793 = vmatprep.subr.mxu0 0.0
    %2794 = vmatpush1.msra.mxu0 0.0
    %2795 = vmatprep.subr.mxu0 0.0
    %2796 = vmatpush1.msra.mxu0 0.0
    %2797 = vmatprep.subr.mxu0 0.0
    %2798 = vmatpush1.msra.mxu0 0.0
    %2799 = vmatprep.subr.mxu0 0.0
    %2800 = vmatpush1.msra.mxu0 0.0
    %2801 = vmatprep.subr.mxu0 0.0
    %2802 = vmatpush1.msra.mxu0 0.0
    %2803 = vmatprep.mubr.f32.mxu0 0.0
    %2804 = vmatmul.mubr.f32.gmra.mrb[0].mxu0 %v2737
    %v2805 = vpop.f32.mrb[0].mxu0
    %v2806 = vadd.f32 0.0, %v2805
    %v2807 = vpop.f32.mrb[0].mxu0
    %v2808 = vadd.f32 0.0, %v2807
    %2809 = vdwg.mxu0
    %v2810 = vlaneseq
    %v2811 = vshrl.u32 %v2810, 7
    %v2812 = vsub.s32 0, %v2811
    %v2813 = vrot.slane %v2732, %v2812
    %v2814 = vlaneseq
    %v2815 = vshrl.u32 %v2814, 7
    %v2816 = vsub.s32 0, %v2815
    %v2817 = vrot.slane %v2734, %v2816
    %v2818 = vmul.f32 %v2382, %v2813
    %v2819 = vmul.f32 %v2383, %v2817
    %v2820 = vmul.f32 %v2384, %v2813
    %v2821 = vmul.f32 %v2385, %v2817
    %v2822 = vmul.f32 %v2386, %v2813
    %v2823 = vmul.f32 %v2387, %v2817
    %v2824 = vmul.f32 %v2388, %v2813
    %v2825 = vmul.f32 %v2389, %v2817
    %v2826 = vmul.f32 %v2390, %v2813
    %v2827 = vmul.f32 %v2391, %v2817
    %v2828 = vmul.f32 %v2392, %v2813
    %v2829 = vmul.f32 %v2393, %v2817
    %v2830 = vmul.f32 %v2394, %v2813
    %v2831 = vmul.f32 %v2395, %v2817
    %v2832 = vlaneseq
    %v2833 = vshrl.u32 %v2832, 7
    %v2834 = vsub.s32 0, %v2833
    %v2835 = vrot.slane %v2806, %v2834
    %v2836 = vlaneseq
    %v2837 = vshrl.u32 %v2836, 7
    %v2838 = vsub.s32 0, %v2837
    %v2839 = vrot.slane %v2808, %v2838
    %v2840 = vadd.f32 %v2818, %v2835
    %v2841 = vadd.f32 %v2819, %v2839
    %v2842 = vadd.f32 %v2820, %v2835
    %v2843 = vadd.f32 %v2821, %v2839
    %v2844 = vadd.f32 %v2822, %v2835
    %v2845 = vadd.f32 %v2823, %v2839
    %v2846 = vadd.f32 %v2824, %v2835
    %v2847 = vadd.f32 %v2825, %v2839
    %v2848 = vadd.f32 %v2826, %v2835
    %v2849 = vadd.f32 %v2827, %v2839
    %v2850 = vadd.f32 %v2828, %v2835
    %v2851 = vadd.f32 %v2829, %v2839
    %v2852 = vadd.f32 %v2830, %v2835
    %v2853 = vadd.f32 %v2831, %v2839
    %v2854 = vld [vmem:[#allocation18] sm:$0xff]
    %v2855 = vld [vmem:[#allocation18 + $0x8] sm:$0xff]
    %v2856 = vld [vmem:[#allocation18 + $0x10] sm:$0xff]
    %v2857 = vld [vmem:[#allocation18 + $0x18] sm:$0xff]
    %v2858 = vld [vmem:[#allocation18 + $0x20] sm:$0xff]
    %v2859 = vld [vmem:[#allocation18 + $0x28] sm:$0xff]
    %v2860 = vld [vmem:[#allocation18 + $0x30] sm:$0xff]
    %v2861 = vld [vmem:[#allocation18 + $0x38] sm:$0xff]
    %v2862 = vld [vmem:[#allocation18 + $0x40] sm:$0xff]
    %v2863 = vld [vmem:[#allocation18 + $0x48] sm:$0xff]
    %v2864 = vld [vmem:[#allocation18 + $0x50] sm:$0xff]
    %v2865 = vld [vmem:[#allocation18 + $0x58] sm:$0xff]
    %v2866 = vld [vmem:[#allocation18 + $0x60] sm:$0xff]
    %v2867 = vld [vmem:[#allocation18 + $0x68] sm:$0xff]
    %v2868 = vld [vmem:[#allocation18 + $0x70] sm:$0xff]
    %v2869 = vld [vmem:[#allocation18 + $0x78] sm:$0xff]
    %v2870 = vld [vmem:[#allocation18 + $0x80] sm:$0xff]
    %v2871 = vld [vmem:[#allocation18 + $0x88] sm:$0xff]
    %v2872 = vld [vmem:[#allocation18 + $0x90] sm:$0xff]
    %v2873 = vld [vmem:[#allocation18 + $0x98] sm:$0xff]
    %v2874 = vld [vmem:[#allocation18 + $0xa0] sm:$0xff]
    %v2875 = vld [vmem:[#allocation18 + $0xa8] sm:$0xff]
    %v2876 = vld [vmem:[#allocation18 + $0xb0] sm:$0xff]
    %v2877 = vld [vmem:[#allocation18 + $0xb8] sm:$0xff]
    %v2878 = vld [vmem:[#allocation18 + $0xc0] sm:$0xff]
    %v2879 = vld [vmem:[#allocation18 + $0xc8] sm:$0xff]
    %v2880 = vld [vmem:[#allocation18 + $0xd0] sm:$0xff]
    %v2881 = vld [vmem:[#allocation18 + $0xd8] sm:$0xff]
    %v2883 = vsel %vm873, %v2841, 0
    %v2886 = vsel %vm873, %v2843, 0
    %v2889 = vsel %vm873, %v2845, 0
    %v2892 = vsel %vm873, %v2847, 0
    %v2895 = vsel %vm873, %v2849, 0
    %v2898 = vsel %vm873, %v2851, 0
    %v2901 = vsel %vm873, %v2853, 0
    %2903 = vmatprep.subr.mxu0 0.0
    %2904 = vmatpush1.msra.mxu0 %v2854
    %2905 = vmatprep.subr.mxu0 0.0
    %2906 = vmatpush1.msra.mxu0 %v2855
    %2907 = vmatprep.subr.mxu0 0.0
    %2908 = vmatpush1.msra.mxu0 %v2856
    %2909 = vmatprep.subr.mxu0 0.0
    %2910 = vmatpush1.msra.mxu0 %v2857
    %2911 = vmatprep.subr.mxu0 0.0
    %2912 = vmatpush1.msra.mxu0 %v2858
    %2913 = vmatprep.subr.mxu0 0.0
    %2914 = vmatpush1.msra.mxu0 %v2859
    %2915 = vmatprep.subr.mxu0 0.0
    %2916 = vmatpush1.msra.mxu0 %v2860
    %2917 = vmatprep.subr.mxu0 0.0
    %2918 = vmatpush1.msra.mxu0 %v2861
    %2919 = vmatprep.subr.mxu0 0.0
    %2920 = vmatpush1.msra.mxu0 %v2862
    %2921 = vmatprep.subr.mxu0 0.0
    %2922 = vmatpush1.msra.mxu0 %v2863
    %2923 = vmatprep.subr.mxu0 0.0
    %2924 = vmatpush1.msra.mxu0 %v2864
    %2925 = vmatprep.subr.mxu0 0.0
    %2926 = vmatpush1.msra.mxu0 %v2865
    %2927 = vmatprep.subr.mxu0 0.0
    %2928 = vmatpush1.msra.mxu0 %v2866
    %2929 = vmatprep.subr.mxu0 0.0
    %2930 = vmatpush1.msra.mxu0 %v2867
    %2931 = vmatprep.subr.mxu0 0.0
    %2932 = vmatpush1.msra.mxu0 %v2868
    %2933 = vmatprep.subr.mxu0 0.0
    %2934 = vmatpush1.msra.mxu0 %v2869
    %2935 = vmatprep.subr.mxu0 0.0
    %2936 = vmatpush1.msra.mxu0 %v2870
    %2937 = vmatprep.subr.mxu0 0.0
    %2938 = vmatpush1.msra.mxu0 %v2871
    %2939 = vmatprep.subr.mxu0 0.0
    %2940 = vmatpush1.msra.mxu0 %v2872
    %2941 = vmatprep.subr.mxu0 0.0
    %2942 = vmatpush1.msra.mxu0 %v2873
    %2943 = vmatprep.subr.mxu0 0.0
    %2944 = vmatpush1.msra.mxu0 %v2874
    %2945 = vmatprep.subr.mxu0 0.0
    %2946 = vmatpush1.msra.mxu0 %v2875
    %2947 = vmatprep.subr.mxu0 0.0
    %2948 = vmatpush1.msra.mxu0 %v2876
    %2949 = vmatprep.subr.mxu0 0.0
    %2950 = vmatpush1.msra.mxu0 %v2877
    %2951 = vmatprep.subr.mxu0 0.0
    %2952 = vmatpush1.msra.mxu0 %v2878
    %2953 = vmatprep.subr.mxu0 0.0
    %2954 = vmatpush1.msra.mxu0 %v2879
    %2955 = vmatprep.subr.mxu0 0.0
    %2956 = vmatpush1.msra.mxu0 %v2880
    %2957 = vmatprep.subr.mxu0 0.0
    %2958 = vmatpush1.msra.mxu0 %v2881
    %2959 = vmatprep.subr.mxu0 0.0
    %2960 = vmatpush1.msra.mxu0 0.0
    %2961 = vmatprep.subr.mxu0 0.0
    %2962 = vmatpush1.msra.mxu0 0.0
    %2963 = vmatprep.subr.mxu0 0.0
    %2964 = vmatpush1.msra.mxu0 0.0
    %2965 = vmatprep.subr.mxu0 0.0
    %2966 = vmatpush1.msra.mxu0 0.0
    %2967 = vmatprep.mubr.f32.mxu0 %v2883
    %2968 = vmatmul.mubr.f32.gmra.mrb[0].mxu0 %v2840
    %v2969 = vpop.f32.mrb[0].mxu0
    %v2970 = vadd.f32 0.0, %v2969
    %v2971 = vpop.f32.mrb[0].mxu0
    %2972 = vmatprep.mubr.f32.mxu0 %v2886
    %2973 = vmatmul.mubr.f32.gmra.mrb[0].mxu0 %v2842
    %v2974 = vpop.f32.mrb[0].mxu0
    %v2975 = vadd.f32 0.0, %v2974
    %v2976 = vpop.f32.mrb[0].mxu0
    %2977 = vmatprep.mubr.f32.mxu0 %v2889
    %2978 = vmatmul.mubr.f32.gmra.mrb[0].mxu0 %v2844
    %v2979 = vpop.f32.mrb[0].mxu0
    %v2980 = vadd.f32 0.0, %v2979
    %v2981 = vpop.f32.mrb[0].mxu0
    %2982 = vmatprep.mubr.f32.mxu0 %v2892
    %2983 = vmatmul.mubr.f32.gmra.mrb[0].mxu0 %v2846
    %v2984 = vpop.f32.mrb[0].mxu0
    %v2985 = vadd.f32 0.0, %v2984
    %v2986 = vpop.f32.mrb[0].mxu0
    %2987 = vmatprep.mubr.f32.mxu0 %v2895
    %2988 = vmatmul.mubr.f32.gmra.mrb[0].mxu0 %v2848
    %v2989 = vpop.f32.mrb[0].mxu0
    %v2990 = vadd.f32 0.0, %v2989
    %v2991 = vpop.f32.mrb[0].mxu0
    %2992 = vmatprep.mubr.f32.mxu0 %v2898
    %2993 = vmatmul.mubr.f32.gmra.mrb[0].mxu0 %v2850
    %v2994 = vpop.f32.mrb[0].mxu0
    %v2995 = vadd.f32 0.0, %v2994
    %v2996 = vpop.f32.mrb[0].mxu0
    %2997 = vmatprep.mubr.f32.mxu0 %v2901
    %2998 = vmatmul.mubr.f32.gmra.mrb[0].mxu0 %v2852
    %v2999 = vpop.f32.mrb[0].mxu0
    %v3000 = vadd.f32 0.0, %v2999
    %v3001 = vpop.f32.mrb[0].mxu0
    %3002 = vdwg.mxu0
    %s3003 = scalar_lea.vmem [#allocation18], 224
    %v3004 = vld [vmem:[%s3003] sm:$0xff]
    %v3005 = vld [vmem:[%s3003 + $0x8] sm:$0xff]
    %v3006 = vld [vmem:[%s3003 + $0x10] sm:$0xff]
    %v3007 = vld [vmem:[%s3003 + $0x18] sm:$0xff]
    %v3008 = vld [vmem:[%s3003 + $0x20] sm:$0xff]
    %v3009 = vld [vmem:[%s3003 + $0x28] sm:$0xff]
    %v3010 = vld [vmem:[%s3003 + $0x30] sm:$0xff]
    %v3011 = vld [vmem:[%s3003 + $0x38] sm:$0xff]
    %v3012 = vld [vmem:[%s3003 + $0x40] sm:$0xff]
    %v3013 = vld [vmem:[%s3003 + $0x48] sm:$0xff]
    %v3014 = vld [vmem:[%s3003 + $0x50] sm:$0xff]
    %v3015 = vld [vmem:[%s3003 + $0x58] sm:$0xff]
    %v3016 = vld [vmem:[%s3003 + $0x60] sm:$0xff]
    %v3017 = vld [vmem:[%s3003 + $0x68] sm:$0xff]
    %v3018 = vld [vmem:[%s3003 + $0x70] sm:$0xff]
    %v3019 = vld [vmem:[%s3003 + $0x78] sm:$0xff]
    %v3020 = vld [vmem:[%s3003 + $0x80] sm:$0xff]
    %v3021 = vld [vmem:[%s3003 + $0x88] sm:$0xff]
    %v3022 = vld [vmem:[%s3003 + $0x90] sm:$0xff]
    %v3023 = vld [vmem:[%s3003 + $0x98] sm:$0xff]
    %v3024 = vld [vmem:[%s3003 + $0xa0] sm:$0xff]
    %v3025 = vld [vmem:[%s3003 + $0xa8] sm:$0xff]
    %v3026 = vld [vmem:[%s3003 + $0xb0] sm:$0xff]
    %v3027 = vld [vmem:[%s3003 + $0xb8] sm:$0xff]
    %v3028 = vld [vmem:[%s3003 + $0xc0] sm:$0xff]
    %v3029 = vld [vmem:[%s3003 + $0xc8] sm:$0xff]
    %v3030 = vld [vmem:[%s3003 + $0xd0] sm:$0xff]
    %v3031 = vld [vmem:[%s3003 + $0xd8] sm:$0xff]
    %3032 = vmatprep.subr.mxu0 0.0
    %3033 = vmatpush1.msra.mxu0 %v3004
    %3034 = vmatprep.subr.mxu0 0.0
    %3035 = vmatpush1.msra.mxu0 %v3005
    %3036 = vmatprep.subr.mxu0 0.0
    %3037 = vmatpush1.msra.mxu0 %v3006
    %3038 = vmatprep.subr.mxu0 0.0
    %3039 = vmatpush1.msra.mxu0 %v3007
    %3040 = vmatprep.subr.mxu0 0.0
    %3041 = vmatpush1.msra.mxu0 %v3008
    %3042 = vmatprep.subr.mxu0 0.0
    %3043 = vmatpush1.msra.mxu0 %v3009
    %3044 = vmatprep.subr.mxu0 0.0
    %3045 = vmatpush1.msra.mxu0 %v3010
    %3046 = vmatprep.subr.mxu0 0.0
    %3047 = vmatpush1.msra.mxu0 %v3011
    %3048 = vmatprep.subr.mxu0 0.0
    %3049 = vmatpush1.msra.mxu0 %v3012
    %3050 = vmatprep.subr.mxu0 0.0
    %3051 = vmatpush1.msra.mxu0 %v3013
    %3052 = vmatprep.subr.mxu0 0.0
    %3053 = vmatpush1.msra.mxu0 %v3014
    %3054 = vmatprep.subr.mxu0 0.0
    %3055 = vmatpush1.msra.mxu0 %v3015
    %3056 = vmatprep.subr.mxu0 0.0
    %3057 = vmatpush1.msra.mxu0 %v3016
    %3058 = vmatprep.subr.mxu0 0.0
    %3059 = vmatpush1.msra.mxu0 %v3017
    %3060 = vmatprep.subr.mxu0 0.0
    %3061 = vmatpush1.msra.mxu0 %v3018
    %3062 = vmatprep.subr.mxu0 0.0
    %3063 = vmatpush1.msra.mxu0 %v3019
    %3064 = vmatprep.subr.mxu0 0.0
    %3065 = vmatpush1.msra.mxu0 %v3020
    %3066 = vmatprep.subr.mxu0 0.0
    %3067 = vmatpush1.msra.mxu0 %v3021
    %3068 = vmatprep.subr.mxu0 0.0
    %3069 = vmatpush1.msra.mxu0 %v3022
    %3070 = vmatprep.subr.mxu0 0.0
    %3071 = vmatpush1.msra.mxu0 %v3023
    %3072 = vmatprep.subr.mxu0 0.0
    %3073 = vmatpush1.msra.mxu0 %v3024
    %3074 = vmatprep.subr.mxu0 0.0
    %3075 = vmatpush1.msra.mxu0 %v3025
    %3076 = vmatprep.subr.mxu0 0.0
    %3077 = vmatpush1.msra.mxu0 %v3026
    %3078 = vmatprep.subr.mxu0 0.0
    %3079 = vmatpush1.msra.mxu0 %v3027
    %3080 = vmatprep.subr.mxu0 0.0
    %3081 = vmatpush1.msra.mxu0 %v3028
    %3082 = vmatprep.subr.mxu0 0.0
    %3083 = vmatpush1.msra.mxu0 %v3029
    %3084 = vmatprep.subr.mxu0 0.0
    %3085 = vmatpush1.msra.mxu0 %v3030
    %3086 = vmatprep.subr.mxu0 0.0
    %3087 = vmatpush1.msra.mxu0 %v3031
    %3088 = vmatprep.subr.mxu0 0.0
    %3089 = vmatpush1.msra.mxu0 0.0
    %3090 = vmatprep.subr.mxu0 0.0
    %3091 = vmatpush1.msra.mxu0 0.0
    %3092 = vmatprep.subr.mxu0 0.0
    %3093 = vmatpush1.msra.mxu0 0.0
    %3094 = vmatprep.subr.mxu0 0.0
    %3095 = vmatpush1.msra.mxu0 0.0
    %3096 = vmatprep.mubr.f32.mxu0 %v2883
    %3097 = vmatmul.mubr.f32.gmra.mrb[0].mxu0 %v2840
    %v3098 = vpop.f32.mrb[0].mxu0
    %v3099 = vadd.f32 0.0, %v3098
    %v3100 = vpop.f32.mrb[0].mxu0
    %3101 = vmatprep.mubr.f32.mxu0 %v2886
    %3102 = vmatmul.mubr.f32.gmra.mrb[0].mxu0 %v2842
    %v3103 = vpop.f32.mrb[0].mxu0
    %v3104 = vadd.f32 0.0, %v3103
    %v3105 = vpop.f32.mrb[0].mxu0
    %3106 = vmatprep.mubr.f32.mxu0 %v2889
    %3107 = vmatmul.mubr.f32.gmra.mrb[0].mxu0 %v2844
    %v3108 = vpop.f32.mrb[0].mxu0
    %v3109 = vadd.f32 0.0, %v3108
    %v3110 = vpop.f32.mrb[0].mxu0
    %3111 = vmatprep.mubr.f32.mxu0 %v2892
    %3112 = vmatmul.mubr.f32.gmra.mrb[0].mxu0 %v2846
    %v3113 = vpop.f32.mrb[0].mxu0
    %v3114 = vadd.f32 0.0, %v3113
    %v3115 = vpop.f32.mrb[0].mxu0
    %3116 = vmatprep.mubr.f32.mxu0 %v2895
    %3117 = vmatmul.mubr.f32.gmra.mrb[0].mxu0 %v2848
    %v3118 = vpop.f32.mrb[0].mxu0
    %v3119 = vadd.f32 0.0, %v3118
    %v3120 = vpop.f32.mrb[0].mxu0
    %3121 = vmatprep.mubr.f32.mxu0 %v2898
    %3122 = vmatmul.mubr.f32.gmra.mrb[0].mxu0 %v2850
    %v3123 = vpop.f32.mrb[0].mxu0
    %v3124 = vadd.f32 0.0, %v3123
    %v3125 = vpop.f32.mrb[0].mxu0
    %3126 = vmatprep.mubr.f32.mxu0 %v2901
    %3127 = vmatmul.mubr.f32.gmra.mrb[0].mxu0 %v2852
    %v3128 = vpop.f32.mrb[0].mxu0
    %v3129 = vadd.f32 0.0, %v3128
    %v3130 = vpop.f32.mrb[0].mxu0
    %3131 = vdwg.mxu0
    %v3132 = vmax.f32 %v2970, %v3099
    %v3133 = vmax.f32 %v2975, %v3104
    %v3134 = vmax.f32 %v2980, %v3109
    %v3135 = vmax.f32 %v2985, %v3114
    %v3136 = vmax.f32 %v2990, %v3119
    %v3137 = vmax.f32 %v2995, %v3124
    %v3138 = vmax.f32 %v3000, %v3129
    %v3139 = vld [vmem:[%s12] sm:$0xff]
    %v3140 = vld [vmem:[%s12 + $0x8] sm:$0xff]
    %v3141 = vld [vmem:[%s12 + $0x10] sm:$0xff]
    %v3142 = vld [vmem:[%s12 + $0x18] sm:$0xf]
    %vm3143 = vcmask 457728
    %v3145 = vsel %vm3143, %v3139, 0
    %v3148 = vsel %vm3143, %v3140, 0
    %v3151 = vsel %vm3143, %v3141, 0
    %v3154 = vsel %vm3143, %v3142, 0
    %3156 = vmatprep.subr.mxu0 0.0
    %3157 = vmatpush1.msra.mxu0 %v3132
    %3158 = vmatprep.subr.mxu0 0.0
    %3159 = vmatpush1.msra.mxu0 %v3133
    %3160 = vmatprep.subr.mxu0 0.0
    %3161 = vmatpush1.msra.mxu0 %v3134
    %3162 = vmatprep.subr.mxu0 0.0
    %3163 = vmatpush1.msra.mxu0 %v3135
    %3164 = vmatprep.subr.mxu0 0.0
    %3165 = vmatpush1.msra.mxu0 %v3136
    %3166 = vmatprep.subr.mxu0 0.0
    %3167 = vmatpush1.msra.mxu0 %v3137
    %3168 = vmatprep.subr.mxu0 0.0
    %3169 = vmatpush1.msra.mxu0 %v3138
    %3170 = vmatprep.subr.mxu0 0.0
    %3171 = vmatpush1.msra.mxu0 0.0
    %3172 = vmatprep.subr.mxu0 0.0
    %3173 = vmatpush1.msra.mxu0 0.0
    %3174 = vmatprep.subr.mxu0 0.0
    %3175 = vmatpush1.msra.mxu0 0.0
    %3176 = vmatprep.subr.mxu0 0.0
    %3177 = vmatpush1.msra.mxu0 0.0
    %3178 = vmatprep.subr.mxu0 0.0
    %3179 = vmatpush1.msra.mxu0 0.0
    %3180 = vmatprep.subr.mxu0 0.0
    %3181 = vmatpush1.msra.mxu0 0.0
    %3182 = vmatprep.subr.mxu0 0.0
    %3183 = vmatpush1.msra.mxu0 0.0
    %3184 = vmatprep.subr.mxu0 0.0
    %3185 = vmatpush1.msra.mxu0 0.0
    %3186 = vmatprep.subr.mxu0 0.0
    %3187 = vmatpush1.msra.mxu0 0.0
    %3188 = vmatprep.subr.mxu0 0.0
    %3189 = vmatpush1.msra.mxu0 0.0
    %3190 = vmatprep.subr.mxu0 0.0
    %3191 = vmatpush1.msra.mxu0 0.0
    %3192 = vmatprep.subr.mxu0 0.0
    %3193 = vmatpush1.msra.mxu0 0.0
    %3194 = vmatprep.subr.mxu0 0.0
    %3195 = vmatpush1.msra.mxu0 0.0
    %3196 = vmatprep.subr.mxu0 0.0
    %3197 = vmatpush1.msra.mxu0 0.0
    %3198 = vmatprep.subr.mxu0 0.0
    %3199 = vmatpush1.msra.mxu0 0.0
    %3200 = vmatprep.subr.mxu0 0.0
    %3201 = vmatpush1.msra.mxu0 0.0
    %3202 = vmatprep.subr.mxu0 0.0
    %3203 = vmatpush1.msra.mxu0 0.0
    %3204 = vmatprep.subr.mxu0 0.0
    %3205 = vmatpush1.msra.mxu0 0.0
    %3206 = vmatprep.subr.mxu0 0.0
    %3207 = vmatpush1.msra.mxu0 0.0
    %3208 = vmatprep.subr.mxu0 0.0
    %3209 = vmatpush1.msra.mxu0 0.0
    %3210 = vmatprep.subr.mxu0 0.0
    %3211 = vmatpush1.msra.mxu0 0.0
    %3212 = vmatprep.subr.mxu0 0.0
    %3213 = vmatpush1.msra.mxu0 0.0
    %3214 = vmatprep.subr.mxu0 0.0
    %3215 = vmatpush1.msra.mxu0 0.0
    %3216 = vmatprep.subr.mxu0 0.0
    %3217 = vmatpush1.msra.mxu0 0.0
    %3218 = vmatprep.subr.mxu0 0.0
    %3219 = vmatpush1.msra.mxu0 0.0
    %3220 = vmatprep.mubr.f32.mxu0 0.0
    %3221 = vmatmul.mubr.f32.gmra.mrb[0].mxu0 %v3145
    %v3222 = vpop.f32.mrb[0].mxu0
    %v3223 = vadd.f32 0.0, %v3222
    %v3224 = vpop.f32.mrb[0].mxu0
    %3225 = vmatprep.mubr.f32.mxu0 0.0
    %3226 = vmatmul.mubr.f32.gmra.mrb[0].mxu0 %v3148
    %v3227 = vpop.f32.mrb[0].mxu0
    %v3228 = vadd.f32 0.0, %v3227
    %v3229 = vpop.f32.mrb[0].mxu0
    %3230 = vmatprep.mubr.f32.mxu0 0.0
    %3231 = vmatmul.mubr.f32.gmra.mrb[0].mxu0 %v3151
    %v3232 = vpop.f32.mrb[0].mxu0
    %v3233 = vadd.f32 0.0, %v3232
    %v3234 = vpop.f32.mrb[0].mxu0
    %3235 = vmatprep.mubr.f32.mxu0 0.0
    %3236 = vmatmul.mubr.f32.gmra.mrb[0].mxu0 %v3154
    %v3237 = vpop.f32.mrb[0].mxu0
    %v3238 = vadd.f32 0.0, %v3237
    %v3239 = vpop.f32.mrb[0].mxu0
    %3240 = vdwg.mxu0
    %s3241 = scalar_lea.vmem %s12, 32
    %v3242 = vld [vmem:[%s3241] sm:$0xff]
    %v3243 = vld [vmem:[%s3241 + $0x8] sm:$0xff]
    %v3244 = vld [vmem:[%s3241 + $0x10] sm:$0xff]
    %v3245 = vld [vmem:[%s3241 + $0x18] sm:$0xf]
    %v3247 = vsel %vm3143, %v3242, 0
    %v3250 = vsel %vm3143, %v3243, 0
    %v3253 = vsel %vm3143, %v3244, 0
    %v3256 = vsel %vm3143, %v3245, 0
    %3258 = vmatprep.subr.mxu0 0.0
    %3259 = vmatpush1.msra.mxu0 %v3132
    %3260 = vmatprep.subr.mxu0 0.0
    %3261 = vmatpush1.msra.mxu0 %v3133
    %3262 = vmatprep.subr.mxu0 0.0
    %3263 = vmatpush1.msra.mxu0 %v3134
    %3264 = vmatprep.subr.mxu0 0.0
    %3265 = vmatpush1.msra.mxu0 %v3135
    %3266 = vmatprep.subr.mxu0 0.0
    %3267 = vmatpush1.msra.mxu0 %v3136
    %3268 = vmatprep.subr.mxu0 0.0
    %3269 = vmatpush1.msra.mxu0 %v3137
    %3270 = vmatprep.subr.mxu0 0.0
    %3271 = vmatpush1.msra.mxu0 %v3138
    %3272 = vmatprep.subr.mxu0 0.0
    %3273 = vmatpush1.msra.mxu0 0.0
    %3274 = vmatprep.subr.mxu0 0.0
    %3275 = vmatpush1.msra.mxu0 0.0
    %3276 = vmatprep.subr.mxu0 0.0
    %3277 = vmatpush1.msra.mxu0 0.0
    %3278 = vmatprep.subr.mxu0 0.0
    %3279 = vmatpush1.msra.mxu0 0.0
    %3280 = vmatprep.subr.mxu0 0.0
    %3281 = vmatpush1.msra.mxu0 0.0
    %3282 = vmatprep.subr.mxu0 0.0
    %3283 = vmatpush1.msra.mxu0 0.0
    %3284 = vmatprep.subr.mxu0 0.0
    %3285 = vmatpush1.msra.mxu0 0.0
    %3286 = vmatprep.subr.mxu0 0.0
    %3287 = vmatpush1.msra.mxu0 0.0
    %3288 = vmatprep.subr.mxu0 0.0
    %3289 = vmatpush1.msra.mxu0 0.0
    %3290 = vmatprep.subr.mxu0 0.0
    %3291 = vmatpush1.msra.mxu0 0.0
    %3292 = vmatprep.subr.mxu0 0.0
    %3293 = vmatpush1.msra.mxu0 0.0
    %3294 = vmatprep.subr.mxu0 0.0
    %3295 = vmatpush1.msra.mxu0 0.0
    %3296 = vmatprep.subr.mxu0 0.0
    %3297 = vmatpush1.msra.mxu0 0.0
    %3298 = vmatprep.subr.mxu0 0.0
    %3299 = vmatpush1.msra.mxu0 0.0
    %3300 = vmatprep.subr.mxu0 0.0
    %3301 = vmatpush1.msra.mxu0 0.0
    %3302 = vmatprep.subr.mxu0 0.0
    %3303 = vmatpush1.msra.mxu0 0.0
    %3304 = vmatprep.subr.mxu0 0.0
    %3305 = vmatpush1.msra.mxu0 0.0
    %3306 = vmatprep.subr.mxu0 0.0
    %3307 = vmatpush1.msra.mxu0 0.0
    %3308 = vmatprep.subr.mxu0 0.0
    %3309 = vmatpush1.msra.mxu0 0.0
    %3310 = vmatprep.subr.mxu0 0.0
    %3311 = vmatpush1.msra.mxu0 0.0
    %3312 = vmatprep.subr.mxu0 0.0
    %3313 = vmatpush1.msra.mxu0 0.0
    %3314 = vmatprep.subr.mxu0 0.0
    %3315 = vmatpush1.msra.mxu0 0.0
    %3316 = vmatprep.subr.mxu0 0.0
    %3317 = vmatpush1.msra.mxu0 0.0
    %3318 = vmatprep.subr.mxu0 0.0
    %3319 = vmatpush1.msra.mxu0 0.0
    %3320 = vmatprep.subr.mxu0 0.0
    %3321 = vmatpush1.msra.mxu0 0.0
    %3322 = vmatprep.mubr.f32.mxu0 0.0
    %3323 = vmatmul.mubr.f32.gmra.mrb[0].mxu0 %v3247
    %v3324 = vpop.f32.mrb[0].mxu0
    %v3325 = vadd.f32 0.0, %v3324
    %v3326 = vpop.f32.mrb[0].mxu0
    %3327 = vmatprep.mubr.f32.mxu0 0.0
    %3328 = vmatmul.mubr.f32.gmra.mrb[0].mxu0 %v3250
    %v3329 = vpop.f32.mrb[0].mxu0
    %v3330 = vadd.f32 0.0, %v3329
    %v3331 = vpop.f32.mrb[0].mxu0
    %3332 = vmatprep.mubr.f32.mxu0 0.0
    %3333 = vmatmul.mubr.f32.gmra.mrb[0].mxu0 %v3253
    %v3334 = vpop.f32.mrb[0].mxu0
    %v3335 = vadd.f32 0.0, %v3334
    %v3336 = vpop.f32.mrb[0].mxu0
    %3337 = vmatprep.mubr.f32.mxu0 0.0
    %3338 = vmatmul.mubr.f32.gmra.mrb[0].mxu0 %v3256
    %v3339 = vpop.f32.mrb[0].mxu0
    %v3340 = vadd.f32 0.0, %v3339
    %v3341 = vpop.f32.mrb[0].mxu0
    %3342 = vdwg.mxu0
    %v3343 = vmax.f32 %v3223, %v3325
    %v3344 = vmax.f32 %v3228, %v3330
    %v3345 = vmax.f32 %v3233, %v3335
    %v3346 = vmax.f32 %v3238, %v3340
    %vm3347 = vcmask 910336
    %3348 = vst.msk [vmem:[#allocation3] sm:$0x3] %vm3347, 0.0
    %3349 = vst.msk [vmem:[#allocation3 + $0x1e] sm:$0x3] %vm3347, 0.0
    %vm3350 = vcmask 916480
    %3351 = vst.msk [vmem:[#allocation3 + $0x2] sm:$0xff] %vm3350, %v3343
    %3352 = vst.msk [vmem:[#allocation3 + $0xa] sm:$0xff] %vm3350, %v3344
    %3353 = vst.msk [vmem:[#allocation3 + $0x12] sm:$0xff] %vm3350, %v3345
    %vm3354 = vcmask 912384
    %3355 = vst.msk [vmem:[#allocation3 + $0x1a] sm:$0xf] %vm3354, %v3346
    %v3356 = vld [vmem:[#allocation3] sm:$0xff]
    %v3357 = vld [vmem:[#allocation3 + $0x8] sm:$0xff]
    %v3358 = vld [vmem:[#allocation3 + $0x10] sm:$0xff]
    %v3359 = vld [vmem:[#allocation3 + $0x18] sm:$0xf]
    %v3360 = vld [vmem:[#allocation19] sm:$0xff]
    %v3361 = vld [vmem:[#allocation19 + $0x8] sm:$0xff]
    %v3362 = vld [vmem:[#allocation19 + $0x10] sm:$0xff]
    %v3363 = vld [vmem:[#allocation19 + $0x18] sm:$0xff]
    %v3364 = vld [vmem:[#allocation19 + $0x20] sm:$0xff]
    %v3365 = vld [vmem:[#allocation19 + $0x28] sm:$0xff]
    %v3366 = vld [vmem:[#allocation19 + $0x30] sm:$0xff]
    %v3367 = vld [vmem:[#allocation19 + $0x38] sm:$0xff]
    %v3368 = vld [vmem:[#allocation19 + $0x40] sm:$0xff]
    %v3369 = vld [vmem:[#allocation19 + $0x48] sm:$0xff]
    %v3370 = vld [vmem:[#allocation19 + $0x50] sm:$0xff]
    %v3371 = vld [vmem:[#allocation19 + $0x58] sm:$0xff]
    %v3372 = vld [vmem:[#allocation19 + $0x60] sm:$0xff]
    %v3373 = vld [vmem:[#allocation19 + $0x68] sm:$0xff]
    %v3374 = vld [vmem:[#allocation3 + $0x2] sm:$0xff]
    %v3375 = vld [vmem:[#allocation3 + $0xa] sm:$0xff]
    %v3376 = vld [vmem:[#allocation3 + $0x12] sm:$0xff]
    %v3377 = vld [vmem:[#allocation3 + $0x1a] sm:$0xf]
    %s3378 = scalar_lea.vmem [#allocation19], 112
    %v3379 = vld [vmem:[%s3378] sm:$0xff]
    %v3380 = vld [vmem:[%s3378 + $0x8] sm:$0xff]
    %v3381 = vld [vmem:[%s3378 + $0x10] sm:$0xff]
    %v3382 = vld [vmem:[%s3378 + $0x18] sm:$0xff]
    %v3383 = vld [vmem:[%s3378 + $0x20] sm:$0xff]
    %v3384 = vld [vmem:[%s3378 + $0x28] sm:$0xff]
    %v3385 = vld [vmem:[%s3378 + $0x30] sm:$0xff]
    %v3386 = vld [vmem:[%s3378 + $0x38] sm:$0xff]
    %v3387 = vld [vmem:[%s3378 + $0x40] sm:$0xff]
    %v3388 = vld [vmem:[%s3378 + $0x48] sm:$0xff]
    %v3389 = vld [vmem:[%s3378 + $0x50] sm:$0xff]
    %v3390 = vld [vmem:[%s3378 + $0x58] sm:$0xff]
    %v3391 = vld [vmem:[%s3378 + $0x60] sm:$0xff]
    %v3392 = vld [vmem:[%s3378 + $0x68] sm:$0xff]
    %v3394 = vsel %vm3350, %v3374, 0
    %v3397 = vsel %vm3350, %v3375, 0
    %v3400 = vsel %vm3350, %v3376, 0
    %v3403 = vsel %vm3350, %v3377, 0
    %3405 = vmatprep.subr.mxu0 0.0
    %3406 = vmatpush1.msra.mxu0 %v3379
    %3407 = vmatprep.subr.mxu0 0.0
    %3408 = vmatpush1.msra.mxu0 %v3380
    %3409 = vmatprep.subr.mxu0 0.0
    %3410 = vmatpush1.msra.mxu0 %v3381
    %3411 = vmatprep.subr.mxu0 0.0
    %3412 = vmatpush1.msra.mxu0 %v3382
    %3413 = vmatprep.subr.mxu0 0.0
    %3414 = vmatpush1.msra.mxu0 %v3383
    %3415 = vmatprep.subr.mxu0 0.0
    %3416 = vmatpush1.msra.mxu0 %v3384
    %3417 = vmatprep.subr.mxu0 0.0
    %3418 = vmatpush1.msra.mxu0 %v3385
    %3419 = vmatprep.subr.mxu0 0.0
    %3420 = vmatpush1.msra.mxu0 %v3386
    %3421 = vmatprep.subr.mxu0 0.0
    %3422 = vmatpush1.msra.mxu0 %v3387
    %3423 = vmatprep.subr.mxu0 0.0
    %3424 = vmatpush1.msra.mxu0 %v3388
    %3425 = vmatprep.subr.mxu0 0.0
    %3426 = vmatpush1.msra.mxu0 %v3389
    %3427 = vmatprep.subr.mxu0 0.0
    %3428 = vmatpush1.msra.mxu0 %v3390
    %3429 = vmatprep.subr.mxu0 0.0
    %3430 = vmatpush1.msra.mxu0 %v3391
    %3431 = vmatprep.subr.mxu0 0.0
    %3432 = vmatpush1.msra.mxu0 %v3392
    %3433 = vmatprep.subr.mxu0 0.0
    %3434 = vmatpush1.msra.mxu0 0.0
    %3435 = vmatprep.subr.mxu0 0.0
    %3436 = vmatpush1.msra.mxu0 0.0
    %3437 = vmatprep.subr.mxu0 0.0
    %3438 = vmatpush1.msra.mxu0 0.0
    %3439 = vmatprep.subr.mxu0 0.0
    %3440 = vmatpush1.msra.mxu0 0.0
    %3441 = vmatprep.subr.mxu0 0.0
    %3442 = vmatpush1.msra.mxu0 0.0
    %3443 = vmatprep.subr.mxu0 0.0
    %3444 = vmatpush1.msra.mxu0 0.0
    %3445 = vmatprep.subr.mxu0 0.0
    %3446 = vmatpush1.msra.mxu0 0.0
    %3447 = vmatprep.subr.mxu0 0.0
    %3448 = vmatpush1.msra.mxu0 0.0
    %3449 = vmatprep.subr.mxu0 0.0
    %3450 = vmatpush1.msra.mxu0 0.0
    %3451 = vmatprep.subr.mxu0 0.0
    %3452 = vmatpush1.msra.mxu0 0.0
    %3453 = vmatprep.subr.mxu0 0.0
    %3454 = vmatpush1.msra.mxu0 0.0
    %3455 = vmatprep.subr.mxu0 0.0
    %3456 = vmatpush1.msra.mxu0 0.0
    %3457 = vmatprep.subr.mxu0 0.0
    %3458 = vmatpush1.msra.mxu0 0.0
    %3459 = vmatprep.subr.mxu0 0.0
    %3460 = vmatpush1.msra.mxu0 0.0
    %3461 = vmatprep.subr.mxu0 0.0
    %3462 = vmatpush1.msra.mxu0 0.0
    %3463 = vmatprep.subr.mxu0 0.0
    %3464 = vmatpush1.msra.mxu0 0.0
    %3465 = vmatprep.subr.mxu0 0.0
    %3466 = vmatpush1.msra.mxu0 0.0
    %3467 = vmatprep.subr.mxu0 0.0
    %3468 = vmatpush1.msra.mxu0 0.0
    %3469 = vmatprep.mubr.f32.mxu0 0.0
    %3470 = vmatmul.mubr.f32.gmra.mrb[0].mxu0 %v3394
    %v3471 = vpop.f32.mrb[0].mxu0
    %v3472 = vadd.f32 0.0, %v3471
    %v3473 = vpop.f32.mrb[0].mxu0
    %3474 = vmatprep.mubr.f32.mxu0 0.0
    %3475 = vmatmul.mubr.f32.gmra.mrb[0].mxu0 %v3397
    %v3476 = vpop.f32.mrb[0].mxu0
    %v3477 = vadd.f32 0.0, %v3476
    %v3478 = vpop.f32.mrb[0].mxu0
    %3479 = vmatprep.mubr.f32.mxu0 0.0
    %3480 = vmatmul.mubr.f32.gmra.mrb[0].mxu0 %v3400
    %v3481 = vpop.f32.mrb[0].mxu0
    %v3482 = vadd.f32 0.0, %v3481
    %v3483 = vpop.f32.mrb[0].mxu0
    %3484 = vmatprep.mubr.f32.mxu0 0.0
    %3485 = vmatmul.mubr.f32.gmra.mrb[0].mxu0 %v3403
    %v3486 = vpop.f32.mrb[0].mxu0
    %v3487 = vadd.f32 0.0, %v3486
    %v3488 = vpop.f32.mrb[0].mxu0
    %3489 = vdwg.mxu0
    %v3491 = vsel %vm3350, %v3356, 0
    %v3494 = vsel %vm3350, %v3357, 0
    %v3497 = vsel %vm3350, %v3358, 0
    %v3500 = vsel %vm3350, %v3359, 0
    %3502 = vmatprep.subr.mxu0 0.0
    %3503 = vmatpush1.msra.mxu0 %v3360
    %3504 = vmatprep.subr.mxu0 0.0
    %3505 = vmatpush1.msra.mxu0 %v3361
    %3506 = vmatprep.subr.mxu0 0.0
    %3507 = vmatpush1.msra.mxu0 %v3362
    %3508 = vmatprep.subr.mxu0 0.0
    %3509 = vmatpush1.msra.mxu0 %v3363
    %3510 = vmatprep.subr.mxu0 0.0
    %3511 = vmatpush1.msra.mxu0 %v3364
    %3512 = vmatprep.subr.mxu0 0.0
    %3513 = vmatpush1.msra.mxu0 %v3365
    %3514 = vmatprep.subr.mxu0 0.0
    %3515 = vmatpush1.msra.mxu0 %v3366
    %3516 = vmatprep.subr.mxu0 0.0
    %3517 = vmatpush1.msra.mxu0 %v3367
    %3518 = vmatprep.subr.mxu0 0.0
    %3519 = vmatpush1.msra.mxu0 %v3368
    %3520 = vmatprep.subr.mxu0 0.0
    %3521 = vmatpush1.msra.mxu0 %v3369
    %3522 = vmatprep.subr.mxu0 0.0
    %3523 = vmatpush1.msra.mxu0 %v3370
    %3524 = vmatprep.subr.mxu0 0.0
    %3525 = vmatpush1.msra.mxu0 %v3371
    %3526 = vmatprep.subr.mxu0 0.0
    %3527 = vmatpush1.msra.mxu0 %v3372
    %3528 = vmatprep.subr.mxu0 0.0
    %3529 = vmatpush1.msra.mxu0 %v3373
    %3530 = vmatprep.subr.mxu0 0.0
    %3531 = vmatpush1.msra.mxu0 0.0
    %3532 = vmatprep.subr.mxu0 0.0
    %3533 = vmatpush1.msra.mxu0 0.0
    %3534 = vmatprep.subr.mxu0 0.0
    %3535 = vmatpush1.msra.mxu0 0.0
    %3536 = vmatprep.subr.mxu0 0.0
    %3537 = vmatpush1.msra.mxu0 0.0
    %3538 = vmatprep.subr.mxu0 0.0
    %3539 = vmatpush1.msra.mxu0 0.0
    %3540 = vmatprep.subr.mxu0 0.0
    %3541 = vmatpush1.msra.mxu0 0.0
    %3542 = vmatprep.subr.mxu0 0.0
    %3543 = vmatpush1.msra.mxu0 0.0
    %3544 = vmatprep.subr.mxu0 0.0
    %3545 = vmatpush1.msra.mxu0 0.0
    %3546 = vmatprep.subr.mxu0 0.0
    %3547 = vmatpush1.msra.mxu0 0.0
    %3548 = vmatprep.subr.mxu0 0.0
    %3549 = vmatpush1.msra.mxu0 0.0
    %3550 = vmatprep.subr.mxu0 0.0
    %3551 = vmatpush1.msra.mxu0 0.0
    %3552 = vmatprep.subr.mxu0 0.0
    %3553 = vmatpush1.msra.mxu0 0.0
    %3554 = vmatprep.subr.mxu0 0.0
    %3555 = vmatpush1.msra.mxu0 0.0
    %3556 = vmatprep.subr.mxu0 0.0
    %3557 = vmatpush1.msra.mxu0 0.0
    %3558 = vmatprep.subr.mxu0 0.0
    %3559 = vmatpush1.msra.mxu0 0.0
    %3560 = vmatprep.subr.mxu0 0.0
    %3561 = vmatpush1.msra.mxu0 0.0
    %3562 = vmatprep.subr.mxu0 0.0
    %3563 = vmatpush1.msra.mxu0 0.0
    %3564 = vmatprep.subr.mxu0 0.0
    %3565 = vmatpush1.msra.mxu0 0.0
    %3566 = vmatprep.mubr.f32.mxu0 0.0
    %3567 = vmatmul.mubr.f32.gmra.mrb[0].mxu0 %v3491
    %v3568 = vpop.f32.mrb[0].mxu0
    %v3569 = vadd.f32 %v3472, %v3568
    %v3570 = vpop.f32.mrb[0].mxu0
    %3571 = vmatprep.mubr.f32.mxu0 0.0
    %3572 = vmatmul.mubr.f32.gmra.mrb[0].mxu0 %v3494
    %v3573 = vpop.f32.mrb[0].mxu0
    %v3574 = vadd.f32 %v3477, %v3573
    %v3575 = vpop.f32.mrb[0].mxu0
    %3576 = vmatprep.mubr.f32.mxu0 0.0
    %3577 = vmatmul.mubr.f32.gmra.mrb[0].mxu0 %v3497
    %v3578 = vpop.f32.mrb[0].mxu0
    %v3579 = vadd.f32 %v3482, %v3578
    %v3580 = vpop.f32.mrb[0].mxu0
    %3581 = vmatprep.mubr.f32.mxu0 0.0
    %3582 = vmatmul.mubr.f32.gmra.mrb[0].mxu0 %v3500
    %v3583 = vpop.f32.mrb[0].mxu0
    %v3584 = vadd.f32 %v3487, %v3583
    %v3585 = vpop.f32.mrb[0].mxu0
    %3586 = vdwg.mxu0
    %v3587 = vld [vmem:[#allocation3 + $0x4] sm:$0xff]
    %v3588 = vld [vmem:[#allocation3 + $0xc] sm:$0xff]
    %v3589 = vld [vmem:[#allocation3 + $0x14] sm:$0xff]
    %v3590 = vld [vmem:[#allocation3 + $0x1c] sm:$0xf]
    %s3591 = scalar_lea.vmem [#allocation19], 224
    %v3592 = vld [vmem:[%s3591] sm:$0xff]
    %v3593 = vld [vmem:[%s3591 + $0x8] sm:$0xff]
    %v3594 = vld [vmem:[%s3591 + $0x10] sm:$0xff]
    %v3595 = vld [vmem:[%s3591 + $0x18] sm:$0xff]
    %v3596 = vld [vmem:[%s3591 + $0x20] sm:$0xff]
    %v3597 = vld [vmem:[%s3591 + $0x28] sm:$0xff]
    %v3598 = vld [vmem:[%s3591 + $0x30] sm:$0xff]
    %v3599 = vld [vmem:[%s3591 + $0x38] sm:$0xff]
    %v3600 = vld [vmem:[%s3591 + $0x40] sm:$0xff]
    %v3601 = vld [vmem:[%s3591 + $0x48] sm:$0xff]
    %v3602 = vld [vmem:[%s3591 + $0x50] sm:$0xff]
    %v3603 = vld [vmem:[%s3591 + $0x58] sm:$0xff]
    %v3604 = vld [vmem:[%s3591 + $0x60] sm:$0xff]
    %v3605 = vld [vmem:[%s3591 + $0x68] sm:$0xff]
    %v3607 = vsel %vm3350, %v3587, 0
    %v3610 = vsel %vm3350, %v3588, 0
    %v3613 = vsel %vm3350, %v3589, 0
    %v3616 = vsel %vm3350, %v3590, 0
    %3618 = vmatprep.subr.mxu0 0.0
    %3619 = vmatpush1.msra.mxu0 %v3592
    %3620 = vmatprep.subr.mxu0 0.0
    %3621 = vmatpush1.msra.mxu0 %v3593
    %3622 = vmatprep.subr.mxu0 0.0
    %3623 = vmatpush1.msra.mxu0 %v3594
    %3624 = vmatprep.subr.mxu0 0.0
    %3625 = vmatpush1.msra.mxu0 %v3595
    %3626 = vmatprep.subr.mxu0 0.0
    %3627 = vmatpush1.msra.mxu0 %v3596
    %3628 = vmatprep.subr.mxu0 0.0
    %3629 = vmatpush1.msra.mxu0 %v3597
    %3630 = vmatprep.subr.mxu0 0.0
    %3631 = vmatpush1.msra.mxu0 %v3598
    %3632 = vmatprep.subr.mxu0 0.0
    %3633 = vmatpush1.msra.mxu0 %v3599
    %3634 = vmatprep.subr.mxu0 0.0
    %3635 = vmatpush1.msra.mxu0 %v3600
    %3636 = vmatprep.subr.mxu0 0.0
    %3637 = vmatpush1.msra.mxu0 %v3601
    %3638 = vmatprep.subr.mxu0 0.0
    %3639 = vmatpush1.msra.mxu0 %v3602
    %3640 = vmatprep.subr.mxu0 0.0
    %3641 = vmatpush1.msra.mxu0 %v3603
    %3642 = vmatprep.subr.mxu0 0.0
    %3643 = vmatpush1.msra.mxu0 %v3604
    %3644 = vmatprep.subr.mxu0 0.0
    %3645 = vmatpush1.msra.mxu0 %v3605
    %3646 = vmatprep.subr.mxu0 0.0
    %3647 = vmatpush1.msra.mxu0 0.0
    %3648 = vmatprep.subr.mxu0 0.0
    %3649 = vmatpush1.msra.mxu0 0.0
    %3650 = vmatprep.subr.mxu0 0.0
    %3651 = vmatpush1.msra.mxu0 0.0
    %3652 = vmatprep.subr.mxu0 0.0
    %3653 = vmatpush1.msra.mxu0 0.0
    %3654 = vmatprep.subr.mxu0 0.0
    %3655 = vmatpush1.msra.mxu0 0.0
    %3656 = vmatprep.subr.mxu0 0.0
    %3657 = vmatpush1.msra.mxu0 0.0
    %3658 = vmatprep.subr.mxu0 0.0
    %3659 = vmatpush1.msra.mxu0 0.0
    %3660 = vmatprep.subr.mxu0 0.0
    %3661 = vmatpush1.msra.mxu0 0.0
    %3662 = vmatprep.subr.mxu0 0.0
    %3663 = vmatpush1.msra.mxu0 0.0
    %3664 = vmatprep.subr.mxu0 0.0
    %3665 = vmatpush1.msra.mxu0 0.0
    %3666 = vmatprep.subr.mxu0 0.0
    %3667 = vmatpush1.msra.mxu0 0.0
    %3668 = vmatprep.subr.mxu0 0.0
    %3669 = vmatpush1.msra.mxu0 0.0
    %3670 = vmatprep.subr.mxu0 0.0
    %3671 = vmatpush1.msra.mxu0 0.0
    %3672 = vmatprep.subr.mxu0 0.0
    %3673 = vmatpush1.msra.mxu0 0.0
    %3674 = vmatprep.subr.mxu0 0.0
    %3675 = vmatpush1.msra.mxu0 0.0
    %3676 = vmatprep.subr.mxu0 0.0
    %3677 = vmatpush1.msra.mxu0 0.0
    %3678 = vmatprep.subr.mxu0 0.0
    %3679 = vmatpush1.msra.mxu0 0.0
    %3680 = vmatprep.subr.mxu0 0.0
    %3681 = vmatpush1.msra.mxu0 0.0
    %3682 = vmatprep.mubr.f32.mxu0 0.0
    %3683 = vmatmul.mubr.f32.gmra.mrb[0].mxu0 %v3607
    %v3684 = vpop.f32.mrb[0].mxu0
    %v3685 = vadd.f32 0.0, %v3684
    %v3686 = vpop.f32.mrb[0].mxu0
    %3687 = vmatprep.mubr.f32.mxu0 0.0
    %3688 = vmatmul.mubr.f32.gmra.mrb[0].mxu0 %v3610
    %v3689 = vpop.f32.mrb[0].mxu0
    %v3690 = vadd.f32 0.0, %v3689
    %v3691 = vpop.f32.mrb[0].mxu0
    %3692 = vmatprep.mubr.f32.mxu0 0.0
    %3693 = vmatmul.mubr.f32.gmra.mrb[0].mxu0 %v3613
    %v3694 = vpop.f32.mrb[0].mxu0
    %v3695 = vadd.f32 0.0, %v3694
    %v3696 = vpop.f32.mrb[0].mxu0
    %3697 = vmatprep.mubr.f32.mxu0 0.0
    %3698 = vmatmul.mubr.f32.gmra.mrb[0].mxu0 %v3616
    %v3699 = vpop.f32.mrb[0].mxu0
    %v3700 = vadd.f32 0.0, %v3699
    %v3701 = vpop.f32.mrb[0].mxu0
    %3702 = vdwg.mxu0
    %v3703 = vadd.f32 %v3569, %v3685
    %v3704 = vadd.f32 %v3574, %v3690
    %v3705 = vadd.f32 %v3579, %v3695
    %v3706 = vadd.f32 %v3584, %v3700
    %v3707 = vld [vmem:[#allocation21] sm:$0x1]
    %v3709 = vlaneseq
    %v3710 = vshrl.u32 %v3709, 7
    %v3711 = vsub.s32 0, %v3710
    %v3712 = vrot.slane %v3707, %v3711
    %v3714 = vadd.f32 %v3703, %v3712
    %v3715 = vadd.f32 %v3704, %v3712
    %v3716 = vadd.f32 %v3705, %v3712
    %v3717 = vadd.f32 %v3706, %v3712
    %v3718 = vmul.f32 %v3714, 0.01
    %v3719 = vmul.f32 %v3715, 0.01
    %v3720 = vmul.f32 %v3716, 0.01
    %v3721 = vmul.f32 %v3717, 0.01
    %v3722 = vmax.f32 %v3714, %v3718
    %v3723 = vmax.f32 %v3715, %v3719
    %v3724 = vmax.f32 %v3716, %v3720
    %v3725 = vmax.f32 %v3717, %v3721
    %3726 = vst.msk [vmem:[#allocation3 + $0x2] sm:$0xff] %vm3350, %v3722
    %3727 = vst.msk [vmem:[#allocation3 + $0xa] sm:$0xff] %vm3350, %v3723
    %3728 = vst.msk [vmem:[#allocation3 + $0x12] sm:$0xff] %vm3350, %v3724
    %3729 = vst.msk [vmem:[#allocation3 + $0x1a] sm:$0xf] %vm3354, %v3725
    %v3730 = vld [vmem:[#allocation3] sm:$0xff]
    %v3731 = vld [vmem:[#allocation3 + $0x8] sm:$0xff]
    %v3732 = vld [vmem:[#allocation3 + $0x10] sm:$0xff]
    %v3733 = vld [vmem:[#allocation3 + $0x18] sm:$0xf]
    %v3734 = vld [vmem:[#allocation22] sm:$0xff]
    %v3735 = vld [vmem:[#allocation22 + $0x8] sm:$0xff]
    %v3736 = vld [vmem:[#allocation22 + $0x10] sm:$0xff]
    %v3737 = vld [vmem:[#allocation22 + $0x18] sm:$0xff]
    %v3738 = vld [vmem:[#allocation22 + $0x20] sm:$0xff]
    %v3739 = vld [vmem:[#allocation22 + $0x28] sm:$0xff]
    %v3740 = vld [vmem:[#allocation22 + $0x30] sm:$0xff]
    %v3741 = vld [vmem:[#allocation22 + $0x38] sm:$0xff]
    %v3742 = vld [vmem:[#allocation22 + $0x40] sm:$0xff]
    %v3743 = vld [vmem:[#allocation22 + $0x48] sm:$0xff]
    %v3744 = vld [vmem:[#allocation22 + $0x50] sm:$0xff]
    %v3745 = vld [vmem:[#allocation22 + $0x58] sm:$0xff]
    %v3746 = vld [vmem:[#allocation22 + $0x60] sm:$0xff]
    %v3747 = vld [vmem:[#allocation22 + $0x68] sm:$0xff]
    %v3748 = vld [vmem:[#allocation3 + $0x2] sm:$0xff]
    %v3749 = vld [vmem:[#allocation3 + $0xa] sm:$0xff]
    %v3750 = vld [vmem:[#allocation3 + $0x12] sm:$0xff]
    %v3751 = vld [vmem:[#allocation3 + $0x1a] sm:$0xf]
    %s3752 = scalar_lea.vmem [#allocation22], 112
    %v3753 = vld [vmem:[%s3752] sm:$0xff]
    %v3754 = vld [vmem:[%s3752 + $0x8] sm:$0xff]
    %v3755 = vld [vmem:[%s3752 + $0x10] sm:$0xff]
    %v3756 = vld [vmem:[%s3752 + $0x18] sm:$0xff]
    %v3757 = vld [vmem:[%s3752 + $0x20] sm:$0xff]
    %v3758 = vld [vmem:[%s3752 + $0x28] sm:$0xff]
    %v3759 = vld [vmem:[%s3752 + $0x30] sm:$0xff]
    %v3760 = vld [vmem:[%s3752 + $0x38] sm:$0xff]
    %v3761 = vld [vmem:[%s3752 + $0x40] sm:$0xff]
    %v3762 = vld [vmem:[%s3752 + $0x48] sm:$0xff]
    %v3763 = vld [vmem:[%s3752 + $0x50] sm:$0xff]
    %v3764 = vld [vmem:[%s3752 + $0x58] sm:$0xff]
    %v3765 = vld [vmem:[%s3752 + $0x60] sm:$0xff]
    %v3766 = vld [vmem:[%s3752 + $0x68] sm:$0xff]
    %v3768 = vsel %vm3350, %v3748, 0
    %v3771 = vsel %vm3350, %v3749, 0
    %v3774 = vsel %vm3350, %v3750, 0
    %v3777 = vsel %vm3350, %v3751, 0
    %3779 = vmatprep.subr.mxu0 0.0
    %3780 = vmatpush1.msra.mxu0 %v3753
    %3781 = vmatprep.subr.mxu0 0.0
    %3782 = vmatpush1.msra.mxu0 %v3754
    %3783 = vmatprep.subr.mxu0 0.0
    %3784 = vmatpush1.msra.mxu0 %v3755
    %3785 = vmatprep.subr.mxu0 0.0
    %3786 = vmatpush1.msra.mxu0 %v3756
    %3787 = vmatprep.subr.mxu0 0.0
    %3788 = vmatpush1.msra.mxu0 %v3757
    %3789 = vmatprep.subr.mxu0 0.0
    %3790 = vmatpush1.msra.mxu0 %v3758
    %3791 = vmatprep.subr.mxu0 0.0
    %3792 = vmatpush1.msra.mxu0 %v3759
    %3793 = vmatprep.subr.mxu0 0.0
    %3794 = vmatpush1.msra.mxu0 %v3760
    %3795 = vmatprep.subr.mxu0 0.0
    %3796 = vmatpush1.msra.mxu0 %v3761
    %3797 = vmatprep.subr.mxu0 0.0
    %3798 = vmatpush1.msra.mxu0 %v3762
    %3799 = vmatprep.subr.mxu0 0.0
    %3800 = vmatpush1.msra.mxu0 %v3763
    %3801 = vmatprep.subr.mxu0 0.0
    %3802 = vmatpush1.msra.mxu0 %v3764
    %3803 = vmatprep.subr.mxu0 0.0
    %3804 = vmatpush1.msra.mxu0 %v3765
    %3805 = vmatprep.subr.mxu0 0.0
    %3806 = vmatpush1.msra.mxu0 %v3766
    %3807 = vmatprep.subr.mxu0 0.0
    %3808 = vmatpush1.msra.mxu0 0.0
    %3809 = vmatprep.subr.mxu0 0.0
    %3810 = vmatpush1.msra.mxu0 0.0
    %3811 = vmatprep.subr.mxu0 0.0
    %3812 = vmatpush1.msra.mxu0 0.0
    %3813 = vmatprep.subr.mxu0 0.0
    %3814 = vmatpush1.msra.mxu0 0.0
    %3815 = vmatprep.subr.mxu0 0.0
    %3816 = vmatpush1.msra.mxu0 0.0
    %3817 = vmatprep.subr.mxu0 0.0
    %3818 = vmatpush1.msra.mxu0 0.0
    %3819 = vmatprep.subr.mxu0 0.0
    %3820 = vmatpush1.msra.mxu0 0.0
    %3821 = vmatprep.subr.mxu0 0.0
    %3822 = vmatpush1.msra.mxu0 0.0
    %3823 = vmatprep.subr.mxu0 0.0
    %3824 = vmatpush1.msra.mxu0 0.0
    %3825 = vmatprep.subr.mxu0 0.0
    %3826 = vmatpush1.msra.mxu0 0.0
    %3827 = vmatprep.subr.mxu0 0.0
    %3828 = vmatpush1.msra.mxu0 0.0
    %3829 = vmatprep.subr.mxu0 0.0
    %3830 = vmatpush1.msra.mxu0 0.0
    %3831 = vmatprep.subr.mxu0 0.0
    %3832 = vmatpush1.msra.mxu0 0.0
    %3833 = vmatprep.subr.mxu0 0.0
    %3834 = vmatpush1.msra.mxu0 0.0
    %3835 = vmatprep.subr.mxu0 0.0
    %3836 = vmatpush1.msra.mxu0 0.0
    %3837 = vmatprep.subr.mxu0 0.0
    %3838 = vmatpush1.msra.mxu0 0.0
    %3839 = vmatprep.subr.mxu0 0.0
    %3840 = vmatpush1.msra.mxu0 0.0
    %3841 = vmatprep.subr.mxu0 0.0
    %3842 = vmatpush1.msra.mxu0 0.0
    %3843 = vmatprep.mubr.f32.mxu0 0.0
    %3844 = vmatmul.mubr.f32.gmra.mrb[0].mxu0 %v3768
    %v3845 = vpop.f32.mrb[0].mxu0
    %v3846 = vadd.f32 0.0, %v3845
    %v3847 = vpop.f32.mrb[0].mxu0
    %3848 = vmatprep.mubr.f32.mxu0 0.0
    %3849 = vmatmul.mubr.f32.gmra.mrb[0].mxu0 %v3771
    %v3850 = vpop.f32.mrb[0].mxu0
    %v3851 = vadd.f32 0.0, %v3850
    %v3852 = vpop.f32.mrb[0].mxu0
    %3853 = vmatprep.mubr.f32.mxu0 0.0
    %3854 = vmatmul.mubr.f32.gmra.mrb[0].mxu0 %v3774
    %v3855 = vpop.f32.mrb[0].mxu0
    %v3856 = vadd.f32 0.0, %v3855
    %v3857 = vpop.f32.mrb[0].mxu0
    %3858 = vmatprep.mubr.f32.mxu0 0.0
    %3859 = vmatmul.mubr.f32.gmra.mrb[0].mxu0 %v3777
    %v3860 = vpop.f32.mrb[0].mxu0
    %v3861 = vadd.f32 0.0, %v3860
    %v3862 = vpop.f32.mrb[0].mxu0
    %3863 = vdwg.mxu0
    %v3865 = vsel %vm3350, %v3730, 0
    %v3868 = vsel %vm3350, %v3731, 0
    %v3871 = vsel %vm3350, %v3732, 0
    %v3874 = vsel %vm3350, %v3733, 0
    %3876 = vmatprep.subr.mxu0 0.0
    %3877 = vmatpush1.msra.mxu0 %v3734
    %3878 = vmatprep.subr.mxu0 0.0
    %3879 = vmatpush1.msra.mxu0 %v3735
    %3880 = vmatprep.subr.mxu0 0.0
    %3881 = vmatpush1.msra.mxu0 %v3736
    %3882 = vmatprep.subr.mxu0 0.0
    %3883 = vmatpush1.msra.mxu0 %v3737
    %3884 = vmatprep.subr.mxu0 0.0
    %3885 = vmatpush1.msra.mxu0 %v3738
    %3886 = vmatprep.subr.mxu0 0.0
    %3887 = vmatpush1.msra.mxu0 %v3739
    %3888 = vmatprep.subr.mxu0 0.0
    %3889 = vmatpush1.msra.mxu0 %v3740
    %3890 = vmatprep.subr.mxu0 0.0
    %3891 = vmatpush1.msra.mxu0 %v3741
    %3892 = vmatprep.subr.mxu0 0.0
    %3893 = vmatpush1.msra.mxu0 %v3742
    %3894 = vmatprep.subr.mxu0 0.0
    %3895 = vmatpush1.msra.mxu0 %v3743
    %3896 = vmatprep.subr.mxu0 0.0
    %3897 = vmatpush1.msra.mxu0 %v3744
    %3898 = vmatprep.subr.mxu0 0.0
    %3899 = vmatpush1.msra.mxu0 %v3745
    %3900 = vmatprep.subr.mxu0 0.0
    %3901 = vmatpush1.msra.mxu0 %v3746
    %3902 = vmatprep.subr.mxu0 0.0
    %3903 = vmatpush1.msra.mxu0 %v3747
    %3904 = vmatprep.subr.mxu0 0.0
    %3905 = vmatpush1.msra.mxu0 0.0
    %3906 = vmatprep.subr.mxu0 0.0
    %3907 = vmatpush1.msra.mxu0 0.0
    %3908 = vmatprep.subr.mxu0 0.0
    %3909 = vmatpush1.msra.mxu0 0.0
    %3910 = vmatprep.subr.mxu0 0.0
    %3911 = vmatpush1.msra.mxu0 0.0
    %3912 = vmatprep.subr.mxu0 0.0
    %3913 = vmatpush1.msra.mxu0 0.0
    %3914 = vmatprep.subr.mxu0 0.0
    %3915 = vmatpush1.msra.mxu0 0.0
    %3916 = vmatprep.subr.mxu0 0.0
    %3917 = vmatpush1.msra.mxu0 0.0
    %3918 = vmatprep.subr.mxu0 0.0
    %3919 = vmatpush1.msra.mxu0 0.0
    %3920 = vmatprep.subr.mxu0 0.0
    %3921 = vmatpush1.msra.mxu0 0.0
    %3922 = vmatprep.subr.mxu0 0.0
    %3923 = vmatpush1.msra.mxu0 0.0
    %3924 = vmatprep.subr.mxu0 0.0
    %3925 = vmatpush1.msra.mxu0 0.0
    %3926 = vmatprep.subr.mxu0 0.0
    %3927 = vmatpush1.msra.mxu0 0.0
    %3928 = vmatprep.subr.mxu0 0.0
    %3929 = vmatpush1.msra.mxu0 0.0
    %3930 = vmatprep.subr.mxu0 0.0
    %3931 = vmatpush1.msra.mxu0 0.0
    %3932 = vmatprep.subr.mxu0 0.0
    %3933 = vmatpush1.msra.mxu0 0.0
    %3934 = vmatprep.subr.mxu0 0.0
    %3935 = vmatpush1.msra.mxu0 0.0
    %3936 = vmatprep.subr.mxu0 0.0
    %3937 = vmatpush1.msra.mxu0 0.0
    %3938 = vmatprep.subr.mxu0 0.0
    %3939 = vmatpush1.msra.mxu0 0.0
    %3940 = vmatprep.mubr.f32.mxu0 0.0
    %3941 = vmatmul.mubr.f32.gmra.mrb[0].mxu0 %v3865
    %v3942 = vpop.f32.mrb[0].mxu0
    %v3943 = vadd.f32 %v3846, %v3942
    %v3944 = vpop.f32.mrb[0].mxu0
    %3945 = vmatprep.mubr.f32.mxu0 0.0
    %3946 = vmatmul.mubr.f32.gmra.mrb[0].mxu0 %v3868
    %v3947 = vpop.f32.mrb[0].mxu0
    %v3948 = vadd.f32 %v3851, %v3947
    %v3949 = vpop.f32.mrb[0].mxu0
    %3950 = vmatprep.mubr.f32.mxu0 0.0
    %3951 = vmatmul.mubr.f32.gmra.mrb[0].mxu0 %v3871
    %v3952 = vpop.f32.mrb[0].mxu0
    %v3953 = vadd.f32 %v3856, %v3952
    %v3954 = vpop.f32.mrb[0].mxu0
    %3955 = vmatprep.mubr.f32.mxu0 0.0
    %3956 = vmatmul.mubr.f32.gmra.mrb[0].mxu0 %v3874
    %v3957 = vpop.f32.mrb[0].mxu0
    %v3958 = vadd.f32 %v3861, %v3957
    %v3959 = vpop.f32.mrb[0].mxu0
    %3960 = vdwg.mxu0
    %v3961 = vld [vmem:[#allocation3 + $0x4] sm:$0xff]
    %v3962 = vld [vmem:[#allocation3 + $0xc] sm:$0xff]
    %v3963 = vld [vmem:[#allocation3 + $0x14] sm:$0xff]
    %v3964 = vld [vmem:[#allocation3 + $0x1c] sm:$0xf]
    %s3965 = scalar_lea.vmem [#allocation22], 224
    %v3966 = vld [vmem:[%s3965] sm:$0xff]
    %v3967 = vld [vmem:[%s3965 + $0x8] sm:$0xff]
    %v3968 = vld [vmem:[%s3965 + $0x10] sm:$0xff]
    %v3969 = vld [vmem:[%s3965 + $0x18] sm:$0xff]
    %v3970 = vld [vmem:[%s3965 + $0x20] sm:$0xff]
    %v3971 = vld [vmem:[%s3965 + $0x28] sm:$0xff]
    %v3972 = vld [vmem:[%s3965 + $0x30] sm:$0xff]
    %v3973 = vld [vmem:[%s3965 + $0x38] sm:$0xff]
    %v3974 = vld [vmem:[%s3965 + $0x40] sm:$0xff]
    %v3975 = vld [vmem:[%s3965 + $0x48] sm:$0xff]
    %v3976 = vld [vmem:[%s3965 + $0x50] sm:$0xff]
    %v3977 = vld [vmem:[%s3965 + $0x58] sm:$0xff]
    %v3978 = vld [vmem:[%s3965 + $0x60] sm:$0xff]
    %v3979 = vld [vmem:[%s3965 + $0x68] sm:$0xff]
    %v3981 = vsel %vm3350, %v3961, 0
    %v3984 = vsel %vm3350, %v3962, 0
    %v3987 = vsel %vm3350, %v3963, 0
    %v3990 = vsel %vm3350, %v3964, 0
    %3992 = vmatprep.subr.mxu0 0.0
    %3993 = vmatpush1.msra.mxu0 %v3966
    %3994 = vmatprep.subr.mxu0 0.0
    %3995 = vmatpush1.msra.mxu0 %v3967
    %3996 = vmatprep.subr.mxu0 0.0
    %3997 = vmatpush1.msra.mxu0 %v3968
    %3998 = vmatprep.subr.mxu0 0.0
    %3999 = vmatpush1.msra.mxu0 %v3969
    %4000 = vmatprep.subr.mxu0 0.0
    %4001 = vmatpush1.msra.mxu0 %v3970
    %4002 = vmatprep.subr.mxu0 0.0
    %4003 = vmatpush1.msra.mxu0 %v3971
    %4004 = vmatprep.subr.mxu0 0.0
    %4005 = vmatpush1.msra.mxu0 %v3972
    %4006 = vmatprep.subr.mxu0 0.0
    %4007 = vmatpush1.msra.mxu0 %v3973
    %4008 = vmatprep.subr.mxu0 0.0
    %4009 = vmatpush1.msra.mxu0 %v3974
    %4010 = vmatprep.subr.mxu0 0.0
    %4011 = vmatpush1.msra.mxu0 %v3975
    %4012 = vmatprep.subr.mxu0 0.0
    %4013 = vmatpush1.msra.mxu0 %v3976
    %4014 = vmatprep.subr.mxu0 0.0
    %4015 = vmatpush1.msra.mxu0 %v3977
    %4016 = vmatprep.subr.mxu0 0.0
    %4017 = vmatpush1.msra.mxu0 %v3978
    %4018 = vmatprep.subr.mxu0 0.0
    %4019 = vmatpush1.msra.mxu0 %v3979
    %4020 = vmatprep.subr.mxu0 0.0
    %4021 = vmatpush1.msra.mxu0 0.0
    %4022 = vmatprep.subr.mxu0 0.0
    %4023 = vmatpush1.msra.mxu0 0.0
    %4024 = vmatprep.subr.mxu0 0.0
    %4025 = vmatpush1.msra.mxu0 0.0
    %4026 = vmatprep.subr.mxu0 0.0
    %4027 = vmatpush1.msra.mxu0 0.0
    %4028 = vmatprep.subr.mxu0 0.0
    %4029 = vmatpush1.msra.mxu0 0.0
    %4030 = vmatprep.subr.mxu0 0.0
    %4031 = vmatpush1.msra.mxu0 0.0
    %4032 = vmatprep.subr.mxu0 0.0
    %4033 = vmatpush1.msra.mxu0 0.0
    %4034 = vmatprep.subr.mxu0 0.0
    %4035 = vmatpush1.msra.mxu0 0.0
    %4036 = vmatprep.subr.mxu0 0.0
    %4037 = vmatpush1.msra.mxu0 0.0
    %4038 = vmatprep.subr.mxu0 0.0
    %4039 = vmatpush1.msra.mxu0 0.0
    %4040 = vmatprep.subr.mxu0 0.0
    %4041 = vmatpush1.msra.mxu0 0.0
    %4042 = vmatprep.subr.mxu0 0.0
    %4043 = vmatpush1.msra.mxu0 0.0
    %4044 = vmatprep.subr.mxu0 0.0
    %4045 = vmatpush1.msra.mxu0 0.0
    %4046 = vmatprep.subr.mxu0 0.0
    %4047 = vmatpush1.msra.mxu0 0.0
    %4048 = vmatprep.subr.mxu0 0.0
    %4049 = vmatpush1.msra.mxu0 0.0
    %4050 = vmatprep.subr.mxu0 0.0
    %4051 = vmatpush1.msra.mxu0 0.0
    %4052 = vmatprep.subr.mxu0 0.0
    %4053 = vmatpush1.msra.mxu0 0.0
    %4054 = vmatprep.subr.mxu0 0.0
    %4055 = vmatpush1.msra.mxu0 0.0
    %4056 = vmatprep.mubr.f32.mxu0 0.0
    %4057 = vmatmul.mubr.f32.gmra.mrb[0].mxu0 %v3981
    %v4058 = vpop.f32.mrb[0].mxu0
    %v4059 = vadd.f32 0.0, %v4058
    %v4060 = vpop.f32.mrb[0].mxu0
    %4061 = vmatprep.mubr.f32.mxu0 0.0
    %4062 = vmatmul.mubr.f32.gmra.mrb[0].mxu0 %v3984
    %v4063 = vpop.f32.mrb[0].mxu0
    %v4064 = vadd.f32 0.0, %v4063
    %v4065 = vpop.f32.mrb[0].mxu0
    %4066 = vmatprep.mubr.f32.mxu0 0.0
    %4067 = vmatmul.mubr.f32.gmra.mrb[0].mxu0 %v3987
    %v4068 = vpop.f32.mrb[0].mxu0
    %v4069 = vadd.f32 0.0, %v4068
    %v4070 = vpop.f32.mrb[0].mxu0
    %4071 = vmatprep.mubr.f32.mxu0 0.0
    %4072 = vmatmul.mubr.f32.gmra.mrb[0].mxu0 %v3990
    %v4073 = vpop.f32.mrb[0].mxu0
    %v4074 = vadd.f32 0.0, %v4073
    %v4075 = vpop.f32.mrb[0].mxu0
    %4076 = vdwg.mxu0
    %v4077 = vadd.f32 %v3943, %v4059
    %v4078 = vadd.f32 %v3948, %v4064
    %v4079 = vadd.f32 %v3953, %v4069
    %v4080 = vadd.f32 %v3958, %v4074
    %v4081 = vld [vmem:[#allocation24] sm:$0x1]
    %v4083 = vlaneseq
    %v4084 = vshrl.u32 %v4083, 7
    %v4085 = vsub.s32 0, %v4084
    %v4086 = vrot.slane %v4081, %v4085
    %v4088 = vadd.f32 %v4077, %v4086
    %v4089 = vadd.f32 %v4078, %v4086
    %v4090 = vadd.f32 %v4079, %v4086
    %v4091 = vadd.f32 %v4080, %v4086
    %v4092 = vmul.f32 %v4088, 0.01
    %v4093 = vmul.f32 %v4089, 0.01
    %v4094 = vmul.f32 %v4090, 0.01
    %v4095 = vmul.f32 %v4091, 0.01
    %v4096 = vmax.f32 %v4088, %v4092
    %v4097 = vmax.f32 %v4089, %v4093
    %v4098 = vmax.f32 %v4090, %v4094
    %v4099 = vmax.f32 %v4091, %v4095
    %4100 = vst.msk [vmem:[#allocation3 + $0x2] sm:$0xff] %vm3350, %v4096
    %4101 = vst.msk [vmem:[#allocation3 + $0xa] sm:$0xff] %vm3350, %v4097
    %4102 = vst.msk [vmem:[#allocation3 + $0x12] sm:$0xff] %vm3350, %v4098
    %4103 = vst.msk [vmem:[#allocation3 + $0x1a] sm:$0xf] %vm3354, %v4099
    %v4104 = vld [vmem:[#allocation3] sm:$0xff]
    %v4105 = vld [vmem:[#allocation3 + $0x8] sm:$0xff]
    %v4106 = vld [vmem:[#allocation3 + $0x10] sm:$0xff]
    %v4107 = vld [vmem:[#allocation3 + $0x18] sm:$0xf]
    %v4108 = vld [vmem:[#allocation25] sm:$0xff]
    %v4109 = vld [vmem:[#allocation25 + $0x8] sm:$0xff]
    %v4110 = vld [vmem:[#allocation25 + $0x10] sm:$0xff]
    %v4111 = vld [vmem:[#allocation25 + $0x18] sm:$0xff]
    %v4112 = vld [vmem:[#allocation25 + $0x20] sm:$0xff]
    %v4113 = vld [vmem:[#allocation25 + $0x28] sm:$0xff]
    %v4114 = vld [vmem:[#allocation25 + $0x30] sm:$0xff]
    %v4115 = vld [vmem:[#allocation25 + $0x38] sm:$0xff]
    %v4116 = vld [vmem:[#allocation25 + $0x40] sm:$0xff]
    %v4117 = vld [vmem:[#allocation25 + $0x48] sm:$0xff]
    %v4118 = vld [vmem:[#allocation25 + $0x50] sm:$0xff]
    %v4119 = vld [vmem:[#allocation25 + $0x58] sm:$0xff]
    %v4120 = vld [vmem:[#allocation25 + $0x60] sm:$0xff]
    %v4121 = vld [vmem:[#allocation25 + $0x68] sm:$0xff]
    %v4122 = vld [vmem:[#allocation3 + $0x2] sm:$0xff]
    %v4123 = vld [vmem:[#allocation3 + $0xa] sm:$0xff]
    %v4124 = vld [vmem:[#allocation3 + $0x12] sm:$0xff]
    %v4125 = vld [vmem:[#allocation3 + $0x1a] sm:$0xf]
    %s4126 = scalar_lea.vmem [#allocation25], 112
    %v4127 = vld [vmem:[%s4126] sm:$0xff]
    %v4128 = vld [vmem:[%s4126 + $0x8] sm:$0xff]
    %v4129 = vld [vmem:[%s4126 + $0x10] sm:$0xff]
    %v4130 = vld [vmem:[%s4126 + $0x18] sm:$0xff]
    %v4131 = vld [vmem:[%s4126 + $0x20] sm:$0xff]
    %v4132 = vld [vmem:[%s4126 + $0x28] sm:$0xff]
    %v4133 = vld [vmem:[%s4126 + $0x30] sm:$0xff]
    %v4134 = vld [vmem:[%s4126 + $0x38] sm:$0xff]
    %v4135 = vld [vmem:[%s4126 + $0x40] sm:$0xff]
    %v4136 = vld [vmem:[%s4126 + $0x48] sm:$0xff]
    %v4137 = vld [vmem:[%s4126 + $0x50] sm:$0xff]
    %v4138 = vld [vmem:[%s4126 + $0x58] sm:$0xff]
    %v4139 = vld [vmem:[%s4126 + $0x60] sm:$0xff]
    %v4140 = vld [vmem:[%s4126 + $0x68] sm:$0xff]
    %v4142 = vsel %vm3350, %v4122, 0
    %v4145 = vsel %vm3350, %v4123, 0
    %v4148 = vsel %vm3350, %v4124, 0
    %v4151 = vsel %vm3350, %v4125, 0
    %4153 = vmatprep.subr.mxu0 0.0
    %4154 = vmatpush1.msra.mxu0 %v4127
    %4155 = vmatprep.subr.mxu0 0.0
    %4156 = vmatpush1.msra.mxu0 %v4128
    %4157 = vmatprep.subr.mxu0 0.0
    %4158 = vmatpush1.msra.mxu0 %v4129
    %4159 = vmatprep.subr.mxu0 0.0
    %4160 = vmatpush1.msra.mxu0 %v4130
    %4161 = vmatprep.subr.mxu0 0.0
    %4162 = vmatpush1.msra.mxu0 %v4131
    %4163 = vmatprep.subr.mxu0 0.0
    %4164 = vmatpush1.msra.mxu0 %v4132
    %4165 = vmatprep.subr.mxu0 0.0
    %4166 = vmatpush1.msra.mxu0 %v4133
    %4167 = vmatprep.subr.mxu0 0.0
    %4168 = vmatpush1.msra.mxu0 %v4134
    %4169 = vmatprep.subr.mxu0 0.0
    %4170 = vmatpush1.msra.mxu0 %v4135
    %4171 = vmatprep.subr.mxu0 0.0
    %4172 = vmatpush1.msra.mxu0 %v4136
    %4173 = vmatprep.subr.mxu0 0.0
    %4174 = vmatpush1.msra.mxu0 %v4137
    %4175 = vmatprep.subr.mxu0 0.0
    %4176 = vmatpush1.msra.mxu0 %v4138
    %4177 = vmatprep.subr.mxu0 0.0
    %4178 = vmatpush1.msra.mxu0 %v4139
    %4179 = vmatprep.subr.mxu0 0.0
    %4180 = vmatpush1.msra.mxu0 %v4140
    %4181 = vmatprep.subr.mxu0 0.0
    %4182 = vmatpush1.msra.mxu0 0.0
    %4183 = vmatprep.subr.mxu0 0.0
    %4184 = vmatpush1.msra.mxu0 0.0
    %4185 = vmatprep.subr.mxu0 0.0
    %4186 = vmatpush1.msra.mxu0 0.0
    %4187 = vmatprep.subr.mxu0 0.0
    %4188 = vmatpush1.msra.mxu0 0.0
    %4189 = vmatprep.subr.mxu0 0.0
    %4190 = vmatpush1.msra.mxu0 0.0
    %4191 = vmatprep.subr.mxu0 0.0
    %4192 = vmatpush1.msra.mxu0 0.0
    %4193 = vmatprep.subr.mxu0 0.0
    %4194 = vmatpush1.msra.mxu0 0.0
    %4195 = vmatprep.subr.mxu0 0.0
    %4196 = vmatpush1.msra.mxu0 0.0
    %4197 = vmatprep.subr.mxu0 0.0
    %4198 = vmatpush1.msra.mxu0 0.0
    %4199 = vmatprep.subr.mxu0 0.0
    %4200 = vmatpush1.msra.mxu0 0.0
    %4201 = vmatprep.subr.mxu0 0.0
    %4202 = vmatpush1.msra.mxu0 0.0
    %4203 = vmatprep.subr.mxu0 0.0
    %4204 = vmatpush1.msra.mxu0 0.0
    %4205 = vmatprep.subr.mxu0 0.0
    %4206 = vmatpush1.msra.mxu0 0.0
    %4207 = vmatprep.subr.mxu0 0.0
    %4208 = vmatpush1.msra.mxu0 0.0
    %4209 = vmatprep.subr.mxu0 0.0
    %4210 = vmatpush1.msra.mxu0 0.0
    %4211 = vmatprep.subr.mxu0 0.0
    %4212 = vmatpush1.msra.mxu0 0.0
    %4213 = vmatprep.subr.mxu0 0.0
    %4214 = vmatpush1.msra.mxu0 0.0
    %4215 = vmatprep.subr.mxu0 0.0
    %4216 = vmatpush1.msra.mxu0 0.0
    %4217 = vmatprep.mubr.f32.mxu0 0.0
    %4218 = vmatmul.mubr.f32.gmra.mrb[0].mxu0 %v4142
    %v4219 = vpop.f32.mrb[0].mxu0
    %v4220 = vadd.f32 0.0, %v4219
    %v4221 = vpop.f32.mrb[0].mxu0
    %4222 = vmatprep.mubr.f32.mxu0 0.0
    %4223 = vmatmul.mubr.f32.gmra.mrb[0].mxu0 %v4145
    %v4224 = vpop.f32.mrb[0].mxu0
    %v4225 = vadd.f32 0.0, %v4224
    %v4226 = vpop.f32.mrb[0].mxu0
    %4227 = vmatprep.mubr.f32.mxu0 0.0
    %4228 = vmatmul.mubr.f32.gmra.mrb[0].mxu0 %v4148
    %v4229 = vpop.f32.mrb[0].mxu0
    %v4230 = vadd.f32 0.0, %v4229
    %v4231 = vpop.f32.mrb[0].mxu0
    %4232 = vmatprep.mubr.f32.mxu0 0.0
    %4233 = vmatmul.mubr.f32.gmra.mrb[0].mxu0 %v4151
    %v4234 = vpop.f32.mrb[0].mxu0
    %v4235 = vadd.f32 0.0, %v4234
    %v4236 = vpop.f32.mrb[0].mxu0
    %4237 = vdwg.mxu0
    %v4239 = vsel %vm3350, %v4104, 0
    %v4242 = vsel %vm3350, %v4105, 0
    %v4245 = vsel %vm3350, %v4106, 0
    %v4248 = vsel %vm3350, %v4107, 0
    %4250 = vmatprep.subr.mxu0 0.0
    %4251 = vmatpush1.msra.mxu0 %v4108
    %4252 = vmatprep.subr.mxu0 0.0
    %4253 = vmatpush1.msra.mxu0 %v4109
    %4254 = vmatprep.subr.mxu0 0.0
    %4255 = vmatpush1.msra.mxu0 %v4110
    %4256 = vmatprep.subr.mxu0 0.0
    %4257 = vmatpush1.msra.mxu0 %v4111
    %4258 = vmatprep.subr.mxu0 0.0
    %4259 = vmatpush1.msra.mxu0 %v4112
    %4260 = vmatprep.subr.mxu0 0.0
    %4261 = vmatpush1.msra.mxu0 %v4113
    %4262 = vmatprep.subr.mxu0 0.0
    %4263 = vmatpush1.msra.mxu0 %v4114
    %4264 = vmatprep.subr.mxu0 0.0
    %4265 = vmatpush1.msra.mxu0 %v4115
    %4266 = vmatprep.subr.mxu0 0.0
    %4267 = vmatpush1.msra.mxu0 %v4116
    %4268 = vmatprep.subr.mxu0 0.0
    %4269 = vmatpush1.msra.mxu0 %v4117
    %4270 = vmatprep.subr.mxu0 0.0
    %4271 = vmatpush1.msra.mxu0 %v4118
    %4272 = vmatprep.subr.mxu0 0.0
    %4273 = vmatpush1.msra.mxu0 %v4119
    %4274 = vmatprep.subr.mxu0 0.0
    %4275 = vmatpush1.msra.mxu0 %v4120
    %4276 = vmatprep.subr.mxu0 0.0
    %4277 = vmatpush1.msra.mxu0 %v4121
    %4278 = vmatprep.subr.mxu0 0.0
    %4279 = vmatpush1.msra.mxu0 0.0
    %4280 = vmatprep.subr.mxu0 0.0
    %4281 = vmatpush1.msra.mxu0 0.0
    %4282 = vmatprep.subr.mxu0 0.0
    %4283 = vmatpush1.msra.mxu0 0.0
    %4284 = vmatprep.subr.mxu0 0.0
    %4285 = vmatpush1.msra.mxu0 0.0
    %4286 = vmatprep.subr.mxu0 0.0
    %4287 = vmatpush1.msra.mxu0 0.0
    %4288 = vmatprep.subr.mxu0 0.0
    %4289 = vmatpush1.msra.mxu0 0.0
    %4290 = vmatprep.subr.mxu0 0.0
    %4291 = vmatpush1.msra.mxu0 0.0
    %4292 = vmatprep.subr.mxu0 0.0
    %4293 = vmatpush1.msra.mxu0 0.0
    %4294 = vmatprep.subr.mxu0 0.0
    %4295 = vmatpush1.msra.mxu0 0.0
    %4296 = vmatprep.subr.mxu0 0.0
    %4297 = vmatpush1.msra.mxu0 0.0
    %4298 = vmatprep.subr.mxu0 0.0
    %4299 = vmatpush1.msra.mxu0 0.0
    %4300 = vmatprep.subr.mxu0 0.0
    %4301 = vmatpush1.msra.mxu0 0.0
    %4302 = vmatprep.subr.mxu0 0.0
    %4303 = vmatpush1.msra.mxu0 0.0
    %4304 = vmatprep.subr.mxu0 0.0
    %4305 = vmatpush1.msra.mxu0 0.0
    %4306 = vmatprep.subr.mxu0 0.0
    %4307 = vmatpush1.msra.mxu0 0.0
    %4308 = vmatprep.subr.mxu0 0.0
    %4309 = vmatpush1.msra.mxu0 0.0
    %4310 = vmatprep.subr.mxu0 0.0
    %4311 = vmatpush1.msra.mxu0 0.0
    %4312 = vmatprep.subr.mxu0 0.0
    %4313 = vmatpush1.msra.mxu0 0.0
    %4314 = vmatprep.mubr.f32.mxu0 0.0
    %4315 = vmatmul.mubr.f32.gmra.mrb[0].mxu0 %v4239
    %v4316 = vpop.f32.mrb[0].mxu0
    %v4317 = vadd.f32 %v4220, %v4316
    %v4318 = vpop.f32.mrb[0].mxu0
    %4319 = vmatprep.mubr.f32.mxu0 0.0
    %4320 = vmatmul.mubr.f32.gmra.mrb[0].mxu0 %v4242
    %v4321 = vpop.f32.mrb[0].mxu0
    %v4322 = vadd.f32 %v4225, %v4321
    %v4323 = vpop.f32.mrb[0].mxu0
    %4324 = vmatprep.mubr.f32.mxu0 0.0
    %4325 = vmatmul.mubr.f32.gmra.mrb[0].mxu0 %v4245
    %v4326 = vpop.f32.mrb[0].mxu0
    %v4327 = vadd.f32 %v4230, %v4326
    %v4328 = vpop.f32.mrb[0].mxu0
    %4329 = vmatprep.mubr.f32.mxu0 0.0
    %4330 = vmatmul.mubr.f32.gmra.mrb[0].mxu0 %v4248
    %v4331 = vpop.f32.mrb[0].mxu0
    %v4332 = vadd.f32 %v4235, %v4331
    %v4333 = vpop.f32.mrb[0].mxu0
    %4334 = vdwg.mxu0
    %v4335 = vld [vmem:[#allocation3 + $0x4] sm:$0xff]
    %v4336 = vld [vmem:[#allocation3 + $0xc] sm:$0xff]
    %v4337 = vld [vmem:[#allocation3 + $0x14] sm:$0xff]
    %v4338 = vld [vmem:[#allocation3 + $0x1c] sm:$0xf]
    %s4339 = scalar_lea.vmem [#allocation25], 224
    %v4340 = vld [vmem:[%s4339] sm:$0xff]
    %v4341 = vld [vmem:[%s4339 + $0x8] sm:$0xff]
    %v4342 = vld [vmem:[%s4339 + $0x10] sm:$0xff]
    %v4343 = vld [vmem:[%s4339 + $0x18] sm:$0xff]
    %v4344 = vld [vmem:[%s4339 + $0x20] sm:$0xff]
    %v4345 = vld [vmem:[%s4339 + $0x28] sm:$0xff]
    %v4346 = vld [vmem:[%s4339 + $0x30] sm:$0xff]
    %v4347 = vld [vmem:[%s4339 + $0x38] sm:$0xff]
    %v4348 = vld [vmem:[%s4339 + $0x40] sm:$0xff]
    %v4349 = vld [vmem:[%s4339 + $0x48] sm:$0xff]
    %v4350 = vld [vmem:[%s4339 + $0x50] sm:$0xff]
    %v4351 = vld [vmem:[%s4339 + $0x58] sm:$0xff]
    %v4352 = vld [vmem:[%s4339 + $0x60] sm:$0xff]
    %v4353 = vld [vmem:[%s4339 + $0x68] sm:$0xff]
    %v4355 = vsel %vm3350, %v4335, 0
    %v4358 = vsel %vm3350, %v4336, 0
    %v4361 = vsel %vm3350, %v4337, 0
    %v4364 = vsel %vm3350, %v4338, 0
    %4366 = vmatprep.subr.mxu0 0.0
    %4367 = vmatpush1.msra.mxu0 %v4340
    %4368 = vmatprep.subr.mxu0 0.0
    %4369 = vmatpush1.msra.mxu0 %v4341
    %4370 = vmatprep.subr.mxu0 0.0
    %4371 = vmatpush1.msra.mxu0 %v4342
    %4372 = vmatprep.subr.mxu0 0.0
    %4373 = vmatpush1.msra.mxu0 %v4343
    %4374 = vmatprep.subr.mxu0 0.0
    %4375 = vmatpush1.msra.mxu0 %v4344
    %4376 = vmatprep.subr.mxu0 0.0
    %4377 = vmatpush1.msra.mxu0 %v4345
    %4378 = vmatprep.subr.mxu0 0.0
    %4379 = vmatpush1.msra.mxu0 %v4346
    %4380 = vmatprep.subr.mxu0 0.0
    %4381 = vmatpush1.msra.mxu0 %v4347
    %4382 = vmatprep.subr.mxu0 0.0
    %4383 = vmatpush1.msra.mxu0 %v4348
    %4384 = vmatprep.subr.mxu0 0.0
    %4385 = vmatpush1.msra.mxu0 %v4349
    %4386 = vmatprep.subr.mxu0 0.0
    %4387 = vmatpush1.msra.mxu0 %v4350
    %4388 = vmatprep.subr.mxu0 0.0
    %4389 = vmatpush1.msra.mxu0 %v4351
    %4390 = vmatprep.subr.mxu0 0.0
    %4391 = vmatpush1.msra.mxu0 %v4352
    %4392 = vmatprep.subr.mxu0 0.0
    %4393 = vmatpush1.msra.mxu0 %v4353
    %4394 = vmatprep.subr.mxu0 0.0
    %4395 = vmatpush1.msra.mxu0 0.0
    %4396 = vmatprep.subr.mxu0 0.0
    %4397 = vmatpush1.msra.mxu0 0.0
    %4398 = vmatprep.subr.mxu0 0.0
    %4399 = vmatpush1.msra.mxu0 0.0
    %4400 = vmatprep.subr.mxu0 0.0
    %4401 = vmatpush1.msra.mxu0 0.0
    %4402 = vmatprep.subr.mxu0 0.0
    %4403 = vmatpush1.msra.mxu0 0.0
    %4404 = vmatprep.subr.mxu0 0.0
    %4405 = vmatpush1.msra.mxu0 0.0
    %4406 = vmatprep.subr.mxu0 0.0
    %4407 = vmatpush1.msra.mxu0 0.0
    %4408 = vmatprep.subr.mxu0 0.0
    %4409 = vmatpush1.msra.mxu0 0.0
    %4410 = vmatprep.subr.mxu0 0.0
    %4411 = vmatpush1.msra.mxu0 0.0
    %4412 = vmatprep.subr.mxu0 0.0
    %4413 = vmatpush1.msra.mxu0 0.0
    %4414 = vmatprep.subr.mxu0 0.0
    %4415 = vmatpush1.msra.mxu0 0.0
    %4416 = vmatprep.subr.mxu0 0.0
    %4417 = vmatpush1.msra.mxu0 0.0
    %4418 = vmatprep.subr.mxu0 0.0
    %4419 = vmatpush1.msra.mxu0 0.0
    %4420 = vmatprep.subr.mxu0 0.0
    %4421 = vmatpush1.msra.mxu0 0.0
    %4422 = vmatprep.subr.mxu0 0.0
    %4423 = vmatpush1.msra.mxu0 0.0
    %4424 = vmatprep.subr.mxu0 0.0
    %4425 = vmatpush1.msra.mxu0 0.0
    %4426 = vmatprep.subr.mxu0 0.0
    %4427 = vmatpush1.msra.mxu0 0.0
    %4428 = vmatprep.subr.mxu0 0.0
    %4429 = vmatpush1.msra.mxu0 0.0
    %4430 = vmatprep.mubr.f32.mxu0 0.0
    %4431 = vmatmul.mubr.f32.gmra.mrb[0].mxu0 %v4355
    %v4432 = vpop.f32.mrb[0].mxu0
    %v4433 = vadd.f32 0.0, %v4432
    %v4434 = vpop.f32.mrb[0].mxu0
    %4435 = vmatprep.mubr.f32.mxu0 0.0
    %4436 = vmatmul.mubr.f32.gmra.mrb[0].mxu0 %v4358
    %v4437 = vpop.f32.mrb[0].mxu0
    %v4438 = vadd.f32 0.0, %v4437
    %v4439 = vpop.f32.mrb[0].mxu0
    %4440 = vmatprep.mubr.f32.mxu0 0.0
    %4441 = vmatmul.mubr.f32.gmra.mrb[0].mxu0 %v4361
    %v4442 = vpop.f32.mrb[0].mxu0
    %v4443 = vadd.f32 0.0, %v4442
    %v4444 = vpop.f32.mrb[0].mxu0
    %4445 = vmatprep.mubr.f32.mxu0 0.0
    %4446 = vmatmul.mubr.f32.gmra.mrb[0].mxu0 %v4364
    %v4447 = vpop.f32.mrb[0].mxu0
    %v4448 = vadd.f32 0.0, %v4447
    %v4449 = vpop.f32.mrb[0].mxu0
    %4450 = vdwg.mxu0
    %v4451 = vadd.f32 %v4317, %v4433
    %v4452 = vadd.f32 %v4322, %v4438
    %v4453 = vadd.f32 %v4327, %v4443
    %v4454 = vadd.f32 %v4332, %v4448
    %v4455 = vld [vmem:[#allocation27] sm:$0x1]
    %v4457 = vlaneseq
    %v4458 = vshrl.u32 %v4457, 7
    %v4459 = vsub.s32 0, %v4458
    %v4460 = vrot.slane %v4455, %v4459
    %v4462 = vadd.f32 %v4451, %v4460
    %v4463 = vadd.f32 %v4452, %v4460
    %v4464 = vadd.f32 %v4453, %v4460
    %v4465 = vadd.f32 %v4454, %v4460
    %v4466 = vmul.f32 %v4462, 0.01
    %v4467 = vmul.f32 %v4463, 0.01
    %v4468 = vmul.f32 %v4464, 0.01
    %v4469 = vmul.f32 %v4465, 0.01
    %v4470 = vmax.f32 %v4462, %v4466
    %v4471 = vmax.f32 %v4463, %v4467
    %v4472 = vmax.f32 %v4464, %v4468
    %v4473 = vmax.f32 %v4465, %v4469
    %v4474 = vsel %vm3350, %v4470, 0.0
    %v4475 = vsel %vm3350, %v4471, 0.0
    %v4476 = vadd.f32 %v4474, %v4475
    %v4477 = vsel %vm3350, %v4472, 0.0
    %v4478 = vadd.f32 %v4476, %v4477
    %v4479 = vsel %vm3354, %v4473, 0.0
    %v4480 = vadd.f32 %v4478, %v4479
    %v4481 = vrot.slane %v4480, 4
    %v4482 = vadd.f32 %v4480, %v4481
    %v4483 = vrot.slane %v4482, 2
    %v4484 = vadd.f32 %v4482, %v4483
    %v4485 = vrot.slane %v4484, 1
    %v4486 = vadd.f32 %v4484, %v4485
    %v4487 = vmul.f32 %v4470, %v4470
    %v4488 = vmul.f32 %v4471, %v4471
    %v4489 = vmul.f32 %v4472, %v4472
    %v4490 = vmul.f32 %v4473, %v4473
    %v4491 = vsel %vm3350, %v4487, 0.0
    %v4492 = vsel %vm3350, %v4488, 0.0
    %v4493 = vadd.f32 %v4491, %v4492
    %v4494 = vsel %vm3350, %v4489, 0.0
    %v4495 = vadd.f32 %v4493, %v4494
    %v4496 = vsel %vm3354, %v4490, 0.0
    %v4497 = vadd.f32 %v4495, %v4496
    %v4498 = vrot.slane %v4497, 4
    %v4499 = vadd.f32 %v4497, %v4498
    %v4500 = vrot.slane %v4499, 2
    %v4501 = vadd.f32 %v4499, %v4500
    %v4502 = vrot.slane %v4501, 1
    %v4503 = vadd.f32 %v4501, %v4502
    %v4504 = vld [vmem:[%s21] sm:$0xff]
    %v4505 = vld [vmem:[%s21 + $0x8] sm:$0xff]
    %v4506 = vld [vmem:[%s21 + $0x10] sm:$0xff]
    %v4507 = vld [vmem:[%s21 + $0x18] sm:$0xff]
    %v4508 = vld [vmem:[%s21 + $0x20] sm:$0xff]
    %v4509 = vld [vmem:[%s21 + $0x28] sm:$0xff]
    %v4510 = vld [vmem:[%s21 + $0x30] sm:$0xff]
    %v4511 = vld [vmem:[%s21 + $0x38] sm:$0xff]
    %v4512 = vld [vmem:[%s21 + $0x40] sm:$0xff]
    %v4513 = vld [vmem:[%s21 + $0x48] sm:$0xff]
    %v4514 = vld [vmem:[%s21 + $0x50] sm:$0xff]
    %v4515 = vld [vmem:[%s21 + $0x58] sm:$0xff]
    %v4516 = vld [vmem:[%s21 + $0x60] sm:$0xff]
    %v4517 = vld [vmem:[%s21 + $0x68] sm:$0xff]
    %v4519 = vsel %vm3350, %v4486, 0
    %4521 = vmatprep.subr.mxu0 0.0
    %4522 = vmatpush1.msra.mxu0 %v4504
    %4523 = vmatprep.subr.mxu0 0.0
    %4524 = vmatpush1.msra.mxu0 %v4505
    %4525 = vmatprep.subr.mxu0 0.0
    %4526 = vmatpush1.msra.mxu0 %v4506
    %4527 = vmatprep.subr.mxu0 0.0
    %4528 = vmatpush1.msra.mxu0 %v4507
    %4529 = vmatprep.subr.mxu0 0.0
    %4530 = vmatpush1.msra.mxu0 %v4508
    %4531 = vmatprep.subr.mxu0 0.0
    %4532 = vmatpush1.msra.mxu0 %v4509
    %4533 = vmatprep.subr.mxu0 0.0
    %4534 = vmatpush1.msra.mxu0 %v4510
    %4535 = vmatprep.subr.mxu0 0.0
    %4536 = vmatpush1.msra.mxu0 %v4511
    %4537 = vmatprep.subr.mxu0 0.0
    %4538 = vmatpush1.msra.mxu0 %v4512
    %4539 = vmatprep.subr.mxu0 0.0
    %4540 = vmatpush1.msra.mxu0 %v4513
    %4541 = vmatprep.subr.mxu0 0.0
    %4542 = vmatpush1.msra.mxu0 %v4514
    %4543 = vmatprep.subr.mxu0 0.0
    %4544 = vmatpush1.msra.mxu0 %v4515
    %4545 = vmatprep.subr.mxu0 0.0
    %4546 = vmatpush1.msra.mxu0 %v4516
    %4547 = vmatprep.subr.mxu0 0.0
    %4548 = vmatpush1.msra.mxu0 %v4517
    %4549 = vmatprep.subr.mxu0 0.0
    %4550 = vmatpush1.msra.mxu0 0.0
    %4551 = vmatprep.subr.mxu0 0.0
    %4552 = vmatpush1.msra.mxu0 0.0
    %4553 = vmatprep.subr.mxu0 0.0
    %4554 = vmatpush1.msra.mxu0 0.0
    %4555 = vmatprep.subr.mxu0 0.0
    %4556 = vmatpush1.msra.mxu0 0.0
    %4557 = vmatprep.subr.mxu0 0.0
    %4558 = vmatpush1.msra.mxu0 0.0
    %4559 = vmatprep.subr.mxu0 0.0
    %4560 = vmatpush1.msra.mxu0 0.0
    %4561 = vmatprep.subr.mxu0 0.0
    %4562 = vmatpush1.msra.mxu0 0.0
    %4563 = vmatprep.subr.mxu0 0.0
    %4564 = vmatpush1.msra.mxu0 0.0
    %4565 = vmatprep.subr.mxu0 0.0
    %4566 = vmatpush1.msra.mxu0 0.0
    %4567 = vmatprep.subr.mxu0 0.0
    %4568 = vmatpush1.msra.mxu0 0.0
    %4569 = vmatprep.subr.mxu0 0.0
    %4570 = vmatpush1.msra.mxu0 0.0
    %4571 = vmatprep.subr.mxu0 0.0
    %4572 = vmatpush1.msra.mxu0 0.0
    %4573 = vmatprep.subr.mxu0 0.0
    %4574 = vmatpush1.msra.mxu0 0.0
    %4575 = vmatprep.subr.mxu0 0.0
    %4576 = vmatpush1.msra.mxu0 0.0
    %4577 = vmatprep.subr.mxu0 0.0
    %4578 = vmatpush1.msra.mxu0 0.0
    %4579 = vmatprep.subr.mxu0 0.0
    %4580 = vmatpush1.msra.mxu0 0.0
    %4581 = vmatprep.subr.mxu0 0.0
    %4582 = vmatpush1.msra.mxu0 0.0
    %4583 = vmatprep.subr.mxu0 0.0
    %4584 = vmatpush1.msra.mxu0 0.0
    %4585 = vmatprep.mubr.f32.mxu0 0.0
    %4586 = vmatmul.mubr.f32.gmra.mrb[0].mxu0 %v4519
    %v4587 = vpop.f32.mrb[0].mxu0
    %v4588 = vadd.f32 0.0, %v4587
    %v4589 = vpop.f32.mrb[0].mxu0
    %4590 = vdwg.mxu0
    %v4591 = vrcp.pop 392.0
    %v4592 = vmul.f32 %v4588, %v4591
    %v4594 = vsel %vm3350, %v4503, 0
    %4596 = vmatprep.subr.mxu0 0.0
    %4597 = vmatpush1.msra.mxu0 %v4504
    %4598 = vmatprep.subr.mxu0 0.0
    %4599 = vmatpush1.msra.mxu0 %v4505
    %4600 = vmatprep.subr.mxu0 0.0
    %4601 = vmatpush1.msra.mxu0 %v4506
    %4602 = vmatprep.subr.mxu0 0.0
    %4603 = vmatpush1.msra.mxu0 %v4507
    %4604 = vmatprep.subr.mxu0 0.0
    %4605 = vmatpush1.msra.mxu0 %v4508
    %4606 = vmatprep.subr.mxu0 0.0
    %4607 = vmatpush1.msra.mxu0 %v4509
    %4608 = vmatprep.subr.mxu0 0.0
    %4609 = vmatpush1.msra.mxu0 %v4510
    %4610 = vmatprep.subr.mxu0 0.0
    %4611 = vmatpush1.msra.mxu0 %v4511
    %4612 = vmatprep.subr.mxu0 0.0
    %4613 = vmatpush1.msra.mxu0 %v4512
    %4614 = vmatprep.subr.mxu0 0.0
    %4615 = vmatpush1.msra.mxu0 %v4513
    %4616 = vmatprep.subr.mxu0 0.0
    %4617 = vmatpush1.msra.mxu0 %v4514
    %4618 = vmatprep.subr.mxu0 0.0
    %4619 = vmatpush1.msra.mxu0 %v4515
    %4620 = vmatprep.subr.mxu0 0.0
    %4621 = vmatpush1.msra.mxu0 %v4516
    %4622 = vmatprep.subr.mxu0 0.0
    %4623 = vmatpush1.msra.mxu0 %v4517
    %4624 = vmatprep.subr.mxu0 0.0
    %4625 = vmatpush1.msra.mxu0 0.0
    %4626 = vmatprep.subr.mxu0 0.0
    %4627 = vmatpush1.msra.mxu0 0.0
    %4628 = vmatprep.subr.mxu0 0.0
    %4629 = vmatpush1.msra.mxu0 0.0
    %4630 = vmatprep.subr.mxu0 0.0
    %4631 = vmatpush1.msra.mxu0 0.0
    %4632 = vmatprep.subr.mxu0 0.0
    %4633 = vmatpush1.msra.mxu0 0.0
    %4634 = vmatprep.subr.mxu0 0.0
    %4635 = vmatpush1.msra.mxu0 0.0
    %4636 = vmatprep.subr.mxu0 0.0
    %4637 = vmatpush1.msra.mxu0 0.0
    %4638 = vmatprep.subr.mxu0 0.0
    %4639 = vmatpush1.msra.mxu0 0.0
    %4640 = vmatprep.subr.mxu0 0.0
    %4641 = vmatpush1.msra.mxu0 0.0
    %4642 = vmatprep.subr.mxu0 0.0
    %4643 = vmatpush1.msra.mxu0 0.0
    %4644 = vmatprep.subr.mxu0 0.0
    %4645 = vmatpush1.msra.mxu0 0.0
    %4646 = vmatprep.subr.mxu0 0.0
    %4647 = vmatpush1.msra.mxu0 0.0
    %4648 = vmatprep.subr.mxu0 0.0
    %4649 = vmatpush1.msra.mxu0 0.0
    %4650 = vmatprep.subr.mxu0 0.0
    %4651 = vmatpush1.msra.mxu0 0.0
    %4652 = vmatprep.subr.mxu0 0.0
    %4653 = vmatpush1.msra.mxu0 0.0
    %4654 = vmatprep.subr.mxu0 0.0
    %4655 = vmatpush1.msra.mxu0 0.0
    %4656 = vmatprep.subr.mxu0 0.0
    %4657 = vmatpush1.msra.mxu0 0.0
    %4658 = vmatprep.subr.mxu0 0.0
    %4659 = vmatpush1.msra.mxu0 0.0
    %4660 = vmatprep.mubr.f32.mxu0 0.0
    %4661 = vmatmul.mubr.f32.gmra.mrb[0].mxu0 %v4594
    %v4662 = vpop.f32.mrb[0].mxu0
    %v4663 = vadd.f32 0.0, %v4662
    %v4664 = vpop.f32.mrb[0].mxu0
    %4665 = vdwg.mxu0
    %v4666 = vmul.f32 %v4663, %v4591
    %v4667 = vmul.f32 %v4592, %v4592
    %v4668 = vsub.f32 %v4666, %v4667
    %v4669 = vmax.f32 %v4668, 0.0
    %v4670 = vld [vmem:[#allocation28] sm:$0x1]
    %v4671 = vadd.f32 %v4669, 1e-05
    %v4672 = vrsqrt.pop %v4671
    %v4673 = vmul.f32 %v4670, %v4672
    %v4674 = vld [vmem:[%s20] sm:$0x1]
    %v4675 = vmul.f32 %v4592, %v4673
    %v4676 = vsub.f32 %v4674, %v4675
    %v4677 = vld [vmem:[%s22] sm:$0xff]
    %v4679 = vsel %vm2661, %v4673, 0
    %4681 = vmatprep.subr.mxu0 0.0
    %4682 = vmatpush1.msra.mxu0 %v4677
    %4683 = vmatprep.subr.mxu0 0.0
    %4684 = vmatpush1.msra.mxu0 0.0
    %4685 = vmatprep.subr.mxu0 0.0
    %4686 = vmatpush1.msra.mxu0 0.0
    %4687 = vmatprep.subr.mxu0 0.0
    %4688 = vmatpush1.msra.mxu0 0.0
    %4689 = vmatprep.subr.mxu0 0.0
    %4690 = vmatpush1.msra.mxu0 0.0
    %4691 = vmatprep.subr.mxu0 0.0
    %4692 = vmatpush1.msra.mxu0 0.0
    %4693 = vmatprep.subr.mxu0 0.0
    %4694 = vmatpush1.msra.mxu0 0.0
    %4695 = vmatprep.subr.mxu0 0.0
    %4696 = vmatpush1.msra.mxu0 0.0
    %4697 = vmatprep.subr.mxu0 0.0
    %4698 = vmatpush1.msra.mxu0 0.0
    %4699 = vmatprep.subr.mxu0 0.0
    %4700 = vmatpush1.msra.mxu0 0.0
    %4701 = vmatprep.subr.mxu0 0.0
    %4702 = vmatpush1.msra.mxu0 0.0
    %4703 = vmatprep.subr.mxu0 0.0
    %4704 = vmatpush1.msra.mxu0 0.0
    %4705 = vmatprep.subr.mxu0 0.0
    %4706 = vmatpush1.msra.mxu0 0.0
    %4707 = vmatprep.subr.mxu0 0.0
    %4708 = vmatpush1.msra.mxu0 0.0
    %4709 = vmatprep.subr.mxu0 0.0
    %4710 = vmatpush1.msra.mxu0 0.0
    %4711 = vmatprep.subr.mxu0 0.0
    %4712 = vmatpush1.msra.mxu0 0.0
    %4713 = vmatprep.subr.mxu0 0.0
    %4714 = vmatpush1.msra.mxu0 0.0
    %4715 = vmatprep.subr.mxu0 0.0
    %4716 = vmatpush1.msra.mxu0 0.0
    %4717 = vmatprep.subr.mxu0 0.0
    %4718 = vmatpush1.msra.mxu0 0.0
    %4719 = vmatprep.subr.mxu0 0.0
    %4720 = vmatpush1.msra.mxu0 0.0
    %4721 = vmatprep.subr.mxu0 0.0
    %4722 = vmatpush1.msra.mxu0 0.0
    %4723 = vmatprep.subr.mxu0 0.0
    %4724 = vmatpush1.msra.mxu0 0.0
    %4725 = vmatprep.subr.mxu0 0.0
    %4726 = vmatpush1.msra.mxu0 0.0
    %4727 = vmatprep.subr.mxu0 0.0
    %4728 = vmatpush1.msra.mxu0 0.0
    %4729 = vmatprep.subr.mxu0 0.0
    %4730 = vmatpush1.msra.mxu0 0.0
    %4731 = vmatprep.subr.mxu0 0.0
    %4732 = vmatpush1.msra.mxu0 0.0
    %4733 = vmatprep.subr.mxu0 0.0
    %4734 = vmatpush1.msra.mxu0 0.0
    %4735 = vmatprep.subr.mxu0 0.0
    %4736 = vmatpush1.msra.mxu0 0.0
    %4737 = vmatprep.subr.mxu0 0.0
    %4738 = vmatpush1.msra.mxu0 0.0
    %4739 = vmatprep.subr.mxu0 0.0
    %4740 = vmatpush1.msra.mxu0 0.0
    %4741 = vmatprep.subr.mxu0 0.0
    %4742 = vmatpush1.msra.mxu0 0.0
    %4743 = vmatprep.subr.mxu0 0.0
    %4744 = vmatpush1.msra.mxu0 0.0
    %4745 = vmatprep.mubr.f32.mxu0 0.0
    %4746 = vmatmul.mubr.f32.gmra.mrb[0].mxu0 %v4679
    %v4747 = vpop.f32.mrb[0].mxu0
    %v4748 = vadd.f32 0.0, %v4747
    %v4749 = vpop.f32.mrb[0].mxu0
    %4750 = vdwg.mxu0
    %v4752 = vsel %vm2661, %v4676, 0
    %4754 = vmatprep.subr.mxu0 0.0
    %4755 = vmatpush1.msra.mxu0 %v4677
    %4756 = vmatprep.subr.mxu0 0.0
    %4757 = vmatpush1.msra.mxu0 0.0
    %4758 = vmatprep.subr.mxu0 0.0
    %4759 = vmatpush1.msra.mxu0 0.0
    %4760 = vmatprep.subr.mxu0 0.0
    %4761 = vmatpush1.msra.mxu0 0.0
    %4762 = vmatprep.subr.mxu0 0.0
    %4763 = vmatpush1.msra.mxu0 0.0
    %4764 = vmatprep.subr.mxu0 0.0
    %4765 = vmatpush1.msra.mxu0 0.0
    %4766 = vmatprep.subr.mxu0 0.0
    %4767 = vmatpush1.msra.mxu0 0.0
    %4768 = vmatprep.subr.mxu0 0.0
    %4769 = vmatpush1.msra.mxu0 0.0
    %4770 = vmatprep.subr.mxu0 0.0
    %4771 = vmatpush1.msra.mxu0 0.0
    %4772 = vmatprep.subr.mxu0 0.0
    %4773 = vmatpush1.msra.mxu0 0.0
    %4774 = vmatprep.subr.mxu0 0.0
    %4775 = vmatpush1.msra.mxu0 0.0
    %4776 = vmatprep.subr.mxu0 0.0
    %4777 = vmatpush1.msra.mxu0 0.0
    %4778 = vmatprep.subr.mxu0 0.0
    %4779 = vmatpush1.msra.mxu0 0.0
    %4780 = vmatprep.subr.mxu0 0.0
    %4781 = vmatpush1.msra.mxu0 0.0
    %4782 = vmatprep.subr.mxu0 0.0
    %4783 = vmatpush1.msra.mxu0 0.0
    %4784 = vmatprep.subr.mxu0 0.0
    %4785 = vmatpush1.msra.mxu0 0.0
    %4786 = vmatprep.subr.mxu0 0.0
    %4787 = vmatpush1.msra.mxu0 0.0
    %4788 = vmatprep.subr.mxu0 0.0
    %4789 = vmatpush1.msra.mxu0 0.0
    %4790 = vmatprep.subr.mxu0 0.0
    %4791 = vmatpush1.msra.mxu0 0.0
    %4792 = vmatprep.subr.mxu0 0.0
    %4793 = vmatpush1.msra.mxu0 0.0
    %4794 = vmatprep.subr.mxu0 0.0
    %4795 = vmatpush1.msra.mxu0 0.0
    %4796 = vmatprep.subr.mxu0 0.0
    %4797 = vmatpush1.msra.mxu0 0.0
    %4798 = vmatprep.subr.mxu0 0.0
    %4799 = vmatpush1.msra.mxu0 0.0
    %4800 = vmatprep.subr.mxu0 0.0
    %4801 = vmatpush1.msra.mxu0 0.0
    %4802 = vmatprep.subr.mxu0 0.0
    %4803 = vmatpush1.msra.mxu0 0.0
    %4804 = vmatprep.subr.mxu0 0.0
    %4805 = vmatpush1.msra.mxu0 0.0
    %4806 = vmatprep.subr.mxu0 0.0
    %4807 = vmatpush1.msra.mxu0 0.0
    %4808 = vmatprep.subr.mxu0 0.0
    %4809 = vmatpush1.msra.mxu0 0.0
    %4810 = vmatprep.subr.mxu0 0.0
    %4811 = vmatpush1.msra.mxu0 0.0
    %4812 = vmatprep.subr.mxu0 0.0
    %4813 = vmatpush1.msra.mxu0 0.0
    %4814 = vmatprep.subr.mxu0 0.0
    %4815 = vmatpush1.msra.mxu0 0.0
    %4816 = vmatprep.subr.mxu0 0.0
    %4817 = vmatpush1.msra.mxu0 0.0
    %4818 = vmatprep.mubr.f32.mxu0 0.0
    %4819 = vmatmul.mubr.f32.gmra.mrb[0].mxu0 %v4752
    %v4820 = vpop.f32.mrb[0].mxu0
    %v4821 = vadd.f32 0.0, %v4820
    %v4822 = vpop.f32.mrb[0].mxu0
    %4823 = vdwg.mxu0
    %v4824 = vlaneseq
    %v4825 = vshrl.u32 %v4824, 7
    %v4826 = vsub.s32 0, %v4825
    %v4827 = vrot.slane %v4748, %v4826
    %v4828 = vmul.f32 %v4470, %v4827
    %v4829 = vmul.f32 %v4471, %v4827
    %v4830 = vmul.f32 %v4472, %v4827
    %v4831 = vmul.f32 %v4473, %v4827
    %v4832 = vlaneseq
    %v4833 = vshrl.u32 %v4832, 7
    %v4834 = vsub.s32 0, %v4833
    %v4835 = vrot.slane %v4821, %v4834
    %v4836 = vadd.f32 %v4828, %v4835
    %v4837 = vadd.f32 %v4829, %v4835
    %v4838 = vadd.f32 %v4830, %v4835
    %v4839 = vadd.f32 %v4831, %v4835
    %v4840 = vld [vmem:[%s23] sm:$0xff]
    %v4841 = vld [vmem:[%s23 + $0x8] sm:$0xff]
    %v4842 = vld [vmem:[%s23 + $0x10] sm:$0xff]
    %v4843 = vld [vmem:[%s23 + $0x18] sm:$0xff]
    %v4844 = vld [vmem:[%s23 + $0x20] sm:$0xff]
    %v4845 = vld [vmem:[%s23 + $0x28] sm:$0xff]
    %v4846 = vld [vmem:[%s23 + $0x30] sm:$0xff]
    %v4847 = vld [vmem:[%s23 + $0x38] sm:$0xff]
    %v4848 = vld [vmem:[%s23 + $0x40] sm:$0xff]
    %v4849 = vld [vmem:[%s23 + $0x48] sm:$0xff]
    %v4850 = vld [vmem:[%s23 + $0x50] sm:$0xff]
    %v4851 = vld [vmem:[%s23 + $0x58] sm:$0xff]
    %v4852 = vld [vmem:[%s23 + $0x60] sm:$0xff]
    %v4853 = vld [vmem:[%s23 + $0x68] sm:$0xff]
    %v4855 = vsel %vm3350, %v4836, 0
    %v4858 = vsel %vm3350, %v4837, 0
    %v4861 = vsel %vm3350, %v4838, 0
    %v4864 = vsel %vm3350, %v4839, 0
    %4866 = vmatprep.subr.mxu0 0.0
    %4867 = vmatpush1.msra.mxu0 %v4840
    %4868 = vmatprep.subr.mxu0 0.0
    %4869 = vmatpush1.msra.mxu0 %v4841
    %4870 = vmatprep.subr.mxu0 0.0
    %4871 = vmatpush1.msra.mxu0 %v4842
    %4872 = vmatprep.subr.mxu0 0.0
    %4873 = vmatpush1.msra.mxu0 %v4843
    %4874 = vmatprep.subr.mxu0 0.0
    %4875 = vmatpush1.msra.mxu0 %v4844
    %4876 = vmatprep.subr.mxu0 0.0
    %4877 = vmatpush1.msra.mxu0 %v4845
    %4878 = vmatprep.subr.mxu0 0.0
    %4879 = vmatpush1.msra.mxu0 %v4846
    %4880 = vmatprep.subr.mxu0 0.0
    %4881 = vmatpush1.msra.mxu0 %v4847
    %4882 = vmatprep.subr.mxu0 0.0
    %4883 = vmatpush1.msra.mxu0 %v4848
    %4884 = vmatprep.subr.mxu0 0.0
    %4885 = vmatpush1.msra.mxu0 %v4849
    %4886 = vmatprep.subr.mxu0 0.0
    %4887 = vmatpush1.msra.mxu0 %v4850
    %4888 = vmatprep.subr.mxu0 0.0
    %4889 = vmatpush1.msra.mxu0 %v4851
    %4890 = vmatprep.subr.mxu0 0.0
    %4891 = vmatpush1.msra.mxu0 %v4852
    %4892 = vmatprep.subr.mxu0 0.0
    %4893 = vmatpush1.msra.mxu0 %v4853
    %4894 = vmatprep.subr.mxu0 0.0
    %4895 = vmatpush1.msra.mxu0 0.0
    %4896 = vmatprep.subr.mxu0 0.0
    %4897 = vmatpush1.msra.mxu0 0.0
    %4898 = vmatprep.subr.mxu0 0.0
    %4899 = vmatpush1.msra.mxu0 0.0
    %4900 = vmatprep.subr.mxu0 0.0
    %4901 = vmatpush1.msra.mxu0 0.0
    %4902 = vmatprep.subr.mxu0 0.0
    %4903 = vmatpush1.msra.mxu0 0.0
    %4904 = vmatprep.subr.mxu0 0.0
    %4905 = vmatpush1.msra.mxu0 0.0
    %4906 = vmatprep.subr.mxu0 0.0
    %4907 = vmatpush1.msra.mxu0 0.0
    %4908 = vmatprep.subr.mxu0 0.0
    %4909 = vmatpush1.msra.mxu0 0.0
    %4910 = vmatprep.subr.mxu0 0.0
    %4911 = vmatpush1.msra.mxu0 0.0
    %4912 = vmatprep.subr.mxu0 0.0
    %4913 = vmatpush1.msra.mxu0 0.0
    %4914 = vmatprep.subr.mxu0 0.0
    %4915 = vmatpush1.msra.mxu0 0.0
    %4916 = vmatprep.subr.mxu0 0.0
    %4917 = vmatpush1.msra.mxu0 0.0
    %4918 = vmatprep.subr.mxu0 0.0
    %4919 = vmatpush1.msra.mxu0 0.0
    %4920 = vmatprep.subr.mxu0 0.0
    %4921 = vmatpush1.msra.mxu0 0.0
    %4922 = vmatprep.subr.mxu0 0.0
    %4923 = vmatpush1.msra.mxu0 0.0
    %4924 = vmatprep.subr.mxu0 0.0
    %4925 = vmatpush1.msra.mxu0 0.0
    %4926 = vmatprep.subr.mxu0 0.0
    %4927 = vmatpush1.msra.mxu0 0.0
    %4928 = vmatprep.subr.mxu0 0.0
    %4929 = vmatpush1.msra.mxu0 0.0
    %4930 = vmatprep.mubr.f32.mxu0 0.0
    %4931 = vmatmul.mubr.f32.gmra.mrb[0].mxu0 %v4855
    %v4932 = vpop.f32.mrb[0].mxu0
    %v4933 = vadd.f32 0.0, %v4932
    %v4934 = vpop.f32.mrb[0].mxu0
    %4935 = vmatprep.mubr.f32.mxu0 0.0
    %4936 = vmatmul.mubr.f32.gmra.mrb[0].mxu0 %v4858
    %v4937 = vpop.f32.mrb[0].mxu0
    %v4938 = vadd.f32 0.0, %v4937
    %v4939 = vpop.f32.mrb[0].mxu0
    %4940 = vmatprep.mubr.f32.mxu0 0.0
    %4941 = vmatmul.mubr.f32.gmra.mrb[0].mxu0 %v4861
    %v4942 = vpop.f32.mrb[0].mxu0
    %v4943 = vadd.f32 0.0, %v4942
    %v4944 = vpop.f32.mrb[0].mxu0
    %4945 = vmatprep.mubr.f32.mxu0 0.0
    %4946 = vmatmul.mubr.f32.gmra.mrb[0].mxu0 %v4864
    %v4947 = vpop.f32.mrb[0].mxu0
    %v4948 = vadd.f32 0.0, %v4947
    %v4949 = vpop.f32.mrb[0].mxu0
    %4950 = vdwg.mxu0
    %s4951 = scalar_lea.vmem %s23, 112
    %v4952 = vld [vmem:[%s4951] sm:$0xff]
    %v4953 = vld [vmem:[%s4951 + $0x8] sm:$0xff]
    %v4954 = vld [vmem:[%s4951 + $0x10] sm:$0xff]
    %v4955 = vld [vmem:[%s4951 + $0x18] sm:$0xff]
    %v4956 = vld [vmem:[%s4951 + $0x20] sm:$0xff]
    %v4957 = vld [vmem:[%s4951 + $0x28] sm:$0xff]
    %v4958 = vld [vmem:[%s4951 + $0x30] sm:$0xff]
    %v4959 = vld [vmem:[%s4951 + $0x38] sm:$0xff]
    %v4960 = vld [vmem:[%s4951 + $0x40] sm:$0xff]
    %v4961 = vld [vmem:[%s4951 + $0x48] sm:$0xff]
    %v4962 = vld [vmem:[%s4951 + $0x50] sm:$0xff]
    %v4963 = vld [vmem:[%s4951 + $0x58] sm:$0xff]
    %v4964 = vld [vmem:[%s4951 + $0x60] sm:$0xff]
    %v4965 = vld [vmem:[%s4951 + $0x68] sm:$0xff]
    %4966 = vmatprep.subr.mxu0 0.0
    %4967 = vmatpush1.msra.mxu0 %v4952
    %4968 = vmatprep.subr.mxu0 0.0
    %4969 = vmatpush1.msra.mxu0 %v4953
    %4970 = vmatprep.subr.mxu0 0.0
    %4971 = vmatpush1.msra.mxu0 %v4954
    %4972 = vmatprep.subr.mxu0 0.0
    %4973 = vmatpush1.msra.mxu0 %v4955
    %4974 = vmatprep.subr.mxu0 0.0
    %4975 = vmatpush1.msra.mxu0 %v4956
    %4976 = vmatprep.subr.mxu0 0.0
    %4977 = vmatpush1.msra.mxu0 %v4957
    %4978 = vmatprep.subr.mxu0 0.0
    %4979 = vmatpush1.msra.mxu0 %v4958
    %4980 = vmatprep.subr.mxu0 0.0
    %4981 = vmatpush1.msra.mxu0 %v4959
    %4982 = vmatprep.subr.mxu0 0.0
    %4983 = vmatpush1.msra.mxu0 %v4960
    %4984 = vmatprep.subr.mxu0 0.0
    %4985 = vmatpush1.msra.mxu0 %v4961
    %4986 = vmatprep.subr.mxu0 0.0
    %4987 = vmatpush1.msra.mxu0 %v4962
    %4988 = vmatprep.subr.mxu0 0.0
    %4989 = vmatpush1.msra.mxu0 %v4963
    %4990 = vmatprep.subr.mxu0 0.0
    %4991 = vmatpush1.msra.mxu0 %v4964
    %4992 = vmatprep.subr.mxu0 0.0
    %4993 = vmatpush1.msra.mxu0 %v4965
    %4994 = vmatprep.subr.mxu0 0.0
    %4995 = vmatpush1.msra.mxu0 0.0
    %4996 = vmatprep.subr.mxu0 0.0
    %4997 = vmatpush1.msra.mxu0 0.0
    %4998 = vmatprep.subr.mxu0 0.0
    %4999 = vmatpush1.msra.mxu0 0.0
    %5000 = vmatprep.subr.mxu0 0.0
    %5001 = vmatpush1.msra.mxu0 0.0
    %5002 = vmatprep.subr.mxu0 0.0
    %5003 = vmatpush1.msra.mxu0 0.0
    %5004 = vmatprep.subr.mxu0 0.0
    %5005 = vmatpush1.msra.mxu0 0.0
    %5006 = vmatprep.subr.mxu0 0.0
    %5007 = vmatpush1.msra.mxu0 0.0
    %5008 = vmatprep.subr.mxu0 0.0
    %5009 = vmatpush1.msra.mxu0 0.0
    %5010 = vmatprep.subr.mxu0 0.0
    %5011 = vmatpush1.msra.mxu0 0.0
    %5012 = vmatprep.subr.mxu0 0.0
    %5013 = vmatpush1.msra.mxu0 0.0
    %5014 = vmatprep.subr.mxu0 0.0
    %5015 = vmatpush1.msra.mxu0 0.0
    %5016 = vmatprep.subr.mxu0 0.0
    %5017 = vmatpush1.msra.mxu0 0.0
    %5018 = vmatprep.subr.mxu0 0.0
    %5019 = vmatpush1.msra.mxu0 0.0
    %5020 = vmatprep.subr.mxu0 0.0
    %5021 = vmatpush1.msra.mxu0 0.0
    %5022 = vmatprep.subr.mxu0 0.0
    %5023 = vmatpush1.msra.mxu0 0.0
    %5024 = vmatprep.subr.mxu0 0.0
    %5025 = vmatpush1.msra.mxu0 0.0
    %5026 = vmatprep.subr.mxu0 0.0
    %5027 = vmatpush1.msra.mxu0 0.0
    %5028 = vmatprep.subr.mxu0 0.0
    %5029 = vmatpush1.msra.mxu0 0.0
    %5030 = vmatprep.mubr.f32.mxu0 0.0
    %5031 = vmatmul.mubr.f32.gmra.mrb[0].mxu0 %v4855
    %v5032 = vpop.f32.mrb[0].mxu0
    %v5033 = vadd.f32 0.0, %v5032
    %v5034 = vpop.f32.mrb[0].mxu0
    %5035 = vmatprep.mubr.f32.mxu0 0.0
    %5036 = vmatmul.mubr.f32.gmra.mrb[0].mxu0 %v4858
    %v5037 = vpop.f32.mrb[0].mxu0
    %v5038 = vadd.f32 0.0, %v5037
    %v5039 = vpop.f32.mrb[0].mxu0
    %5040 = vmatprep.mubr.f32.mxu0 0.0
    %5041 = vmatmul.mubr.f32.gmra.mrb[0].mxu0 %v4861
    %v5042 = vpop.f32.mrb[0].mxu0
    %v5043 = vadd.f32 0.0, %v5042
    %v5044 = vpop.f32.mrb[0].mxu0
    %5045 = vmatprep.mubr.f32.mxu0 0.0
    %5046 = vmatmul.mubr.f32.gmra.mrb[0].mxu0 %v4864
    %v5047 = vpop.f32.mrb[0].mxu0
    %v5048 = vadd.f32 0.0, %v5047
    %v5049 = vpop.f32.mrb[0].mxu0
    %5050 = vdwg.mxu0
    %v5051 = vmax.f32 %v4933, %v5033
    %v5052 = vmax.f32 %v4938, %v5038
    %v5053 = vmax.f32 %v4943, %v5043
    %v5054 = vmax.f32 %v4948, %v5048
    %v5055 = vld [vmem:[%s24] sm:$0xff]
    %v5056 = vld [vmem:[%s24 + $0x8] sm:$0x3f]
    %v5058 = vsel %vm318, %v5055, 0
    %v5061 = vsel %vm318, %v5056, 0
    %v5064 = vsel %vm340, %v5054, 0
    %5066 = vmatprep.subr.mxu0 0.0
    %5067 = vmatpush1.msra.mxu0 %v5051
    %5068 = vmatprep.subr.mxu0 0.0
    %5069 = vmatpush1.msra.mxu0 %v5052
    %5070 = vmatprep.subr.mxu0 0.0
    %5071 = vmatpush1.msra.mxu0 %v5053
    %5072 = vmatprep.subr.mxu0 0.0
    %5073 = vmatpush1.msra.mxu0 %v5064
    %5074 = vmatprep.subr.mxu0 0.0
    %5075 = vmatpush1.msra.mxu0 0.0
    %5076 = vmatprep.subr.mxu0 0.0
    %5077 = vmatpush1.msra.mxu0 0.0
    %5078 = vmatprep.subr.mxu0 0.0
    %5079 = vmatpush1.msra.mxu0 0.0
    %5080 = vmatprep.subr.mxu0 0.0
    %5081 = vmatpush1.msra.mxu0 0.0
    %5082 = vmatprep.subr.mxu0 0.0
    %5083 = vmatpush1.msra.mxu0 0.0
    %5084 = vmatprep.subr.mxu0 0.0
    %5085 = vmatpush1.msra.mxu0 0.0
    %5086 = vmatprep.subr.mxu0 0.0
    %5087 = vmatpush1.msra.mxu0 0.0
    %5088 = vmatprep.subr.mxu0 0.0
    %5089 = vmatpush1.msra.mxu0 0.0
    %5090 = vmatprep.subr.mxu0 0.0
    %5091 = vmatpush1.msra.mxu0 0.0
    %5092 = vmatprep.subr.mxu0 0.0
    %5093 = vmatpush1.msra.mxu0 0.0
    %5094 = vmatprep.subr.mxu0 0.0
    %5095 = vmatpush1.msra.mxu0 0.0
    %5096 = vmatprep.subr.mxu0 0.0
    %5097 = vmatpush1.msra.mxu0 0.0
    %5098 = vmatprep.subr.mxu0 0.0
    %5099 = vmatpush1.msra.mxu0 0.0
    %5100 = vmatprep.subr.mxu0 0.0
    %5101 = vmatpush1.msra.mxu0 0.0
    %5102 = vmatprep.subr.mxu0 0.0
    %5103 = vmatpush1.msra.mxu0 0.0
    %5104 = vmatprep.subr.mxu0 0.0
    %5105 = vmatpush1.msra.mxu0 0.0
    %5106 = vmatprep.subr.mxu0 0.0
    %5107 = vmatpush1.msra.mxu0 0.0
    %5108 = vmatprep.subr.mxu0 0.0
    %5109 = vmatpush1.msra.mxu0 0.0
    %5110 = vmatprep.subr.mxu0 0.0
    %5111 = vmatpush1.msra.mxu0 0.0
    %5112 = vmatprep.subr.mxu0 0.0
    %5113 = vmatpush1.msra.mxu0 0.0
    %5114 = vmatprep.subr.mxu0 0.0
    %5115 = vmatpush1.msra.mxu0 0.0
    %5116 = vmatprep.subr.mxu0 0.0
    %5117 = vmatpush1.msra.mxu0 0.0
    %5118 = vmatprep.subr.mxu0 0.0
    %5119 = vmatpush1.msra.mxu0 0.0
    %5120 = vmatprep.subr.mxu0 0.0
    %5121 = vmatpush1.msra.mxu0 0.0
    %5122 = vmatprep.subr.mxu0 0.0
    %5123 = vmatpush1.msra.mxu0 0.0
    %5124 = vmatprep.subr.mxu0 0.0
    %5125 = vmatpush1.msra.mxu0 0.0
    %5126 = vmatprep.subr.mxu0 0.0
    %5127 = vmatpush1.msra.mxu0 0.0
    %5128 = vmatprep.subr.mxu0 0.0
    %5129 = vmatpush1.msra.mxu0 0.0
    %5130 = vmatprep.mubr.f32.mxu0 0.0
    %5131 = vmatmul.mubr.f32.gmra.mrb[0].mxu0 %v5058
    %v5132 = vpop.f32.mrb[0].mxu0
    %v5133 = vadd.f32 0.0, %v5132
    %v5134 = vpop.f32.mrb[0].mxu0
    %5135 = vmatprep.mubr.f32.mxu0 0.0
    %5136 = vmatmul.mubr.f32.gmra.mrb[0].mxu0 %v5061
    %v5137 = vpop.f32.mrb[0].mxu0
    %v5138 = vadd.f32 0.0, %v5137
    %v5139 = vpop.f32.mrb[0].mxu0
    %5140 = vdwg.mxu0
    %s5141 = scalar_lea.vmem %s24, 16
    %v5142 = vld [vmem:[%s5141] sm:$0xff]
    %v5143 = vld [vmem:[%s5141 + $0x8] sm:$0x3f]
    %v5145 = vsel %vm318, %v5142, 0
    %v5148 = vsel %vm318, %v5143, 0
    %5150 = vmatprep.subr.mxu0 0.0
    %5151 = vmatpush1.msra.mxu0 %v5051
    %5152 = vmatprep.subr.mxu0 0.0
    %5153 = vmatpush1.msra.mxu0 %v5052
    %5154 = vmatprep.subr.mxu0 0.0
    %5155 = vmatpush1.msra.mxu0 %v5053
    %5156 = vmatprep.subr.mxu0 0.0
    %5157 = vmatpush1.msra.mxu0 %v5064
    %5158 = vmatprep.subr.mxu0 0.0
    %5159 = vmatpush1.msra.mxu0 0.0
    %5160 = vmatprep.subr.mxu0 0.0
    %5161 = vmatpush1.msra.mxu0 0.0
    %5162 = vmatprep.subr.mxu0 0.0
    %5163 = vmatpush1.msra.mxu0 0.0
    %5164 = vmatprep.subr.mxu0 0.0
    %5165 = vmatpush1.msra.mxu0 0.0
    %5166 = vmatprep.subr.mxu0 0.0
    %5167 = vmatpush1.msra.mxu0 0.0
    %5168 = vmatprep.subr.mxu0 0.0
    %5169 = vmatpush1.msra.mxu0 0.0
    %5170 = vmatprep.subr.mxu0 0.0
    %5171 = vmatpush1.msra.mxu0 0.0
    %5172 = vmatprep.subr.mxu0 0.0
    %5173 = vmatpush1.msra.mxu0 0.0
    %5174 = vmatprep.subr.mxu0 0.0
    %5175 = vmatpush1.msra.mxu0 0.0
    %5176 = vmatprep.subr.mxu0 0.0
    %5177 = vmatpush1.msra.mxu0 0.0
    %5178 = vmatprep.subr.mxu0 0.0
    %5179 = vmatpush1.msra.mxu0 0.0
    %5180 = vmatprep.subr.mxu0 0.0
    %5181 = vmatpush1.msra.mxu0 0.0
    %5182 = vmatprep.subr.mxu0 0.0
    %5183 = vmatpush1.msra.mxu0 0.0
    %5184 = vmatprep.subr.mxu0 0.0
    %5185 = vmatpush1.msra.mxu0 0.0
    %5186 = vmatprep.subr.mxu0 0.0
    %5187 = vmatpush1.msra.mxu0 0.0
    %5188 = vmatprep.subr.mxu0 0.0
    %5189 = vmatpush1.msra.mxu0 0.0
    %5190 = vmatprep.subr.mxu0 0.0
    %5191 = vmatpush1.msra.mxu0 0.0
    %5192 = vmatprep.subr.mxu0 0.0
    %5193 = vmatpush1.msra.mxu0 0.0
    %5194 = vmatprep.subr.mxu0 0.0
    %5195 = vmatpush1.msra.mxu0 0.0
    %5196 = vmatprep.subr.mxu0 0.0
    %5197 = vmatpush1.msra.mxu0 0.0
    %5198 = vmatprep.subr.mxu0 0.0
    %5199 = vmatpush1.msra.mxu0 0.0
    %5200 = vmatprep.subr.mxu0 0.0
    %5201 = vmatpush1.msra.mxu0 0.0
    %5202 = vmatprep.subr.mxu0 0.0
    %5203 = vmatpush1.msra.mxu0 0.0
    %5204 = vmatprep.subr.mxu0 0.0
    %5205 = vmatpush1.msra.mxu0 0.0
    %5206 = vmatprep.subr.mxu0 0.0
    %5207 = vmatpush1.msra.mxu0 0.0
    %5208 = vmatprep.subr.mxu0 0.0
    %5209 = vmatpush1.msra.mxu0 0.0
    %5210 = vmatprep.subr.mxu0 0.0
    %5211 = vmatpush1.msra.mxu0 0.0
    %5212 = vmatprep.subr.mxu0 0.0
    %5213 = vmatpush1.msra.mxu0 0.0
    %5214 = vmatprep.mubr.f32.mxu0 0.0
    %5215 = vmatmul.mubr.f32.gmra.mrb[0].mxu0 %v5145
    %v5216 = vpop.f32.mrb[0].mxu0
    %v5217 = vadd.f32 0.0, %v5216
    %v5218 = vpop.f32.mrb[0].mxu0
    %5219 = vmatprep.mubr.f32.mxu0 0.0
    %5220 = vmatmul.mubr.f32.gmra.mrb[0].mxu0 %v5148
    %v5221 = vpop.f32.mrb[0].mxu0
    %v5222 = vadd.f32 0.0, %v5221
    %v5223 = vpop.f32.mrb[0].mxu0
    %5224 = vdwg.mxu0
    %v5225 = vmax.f32 %v5133, %v5217
    %v5226 = vmax.f32 %v5138, %v5222
    %v5227 = vld [vmem:[%s26] sm:$0x1]
    %v5229 = vlaneseq
    %v5230 = vshrl.u32 %v5229, 7
    %v5231 = vsub.s32 0, %v5230
    %v5232 = vrot.slane %v5227, %v5231
    %v5234 = vadd.f32 %v5232, 0.0
    %v5235 = vld [vmem:[%s25] sm:$0xff]
    %v5236 = vld [vmem:[%s25 + $0x8] sm:$0xff]
    %v5237 = vld [vmem:[%s25 + $0x10] sm:$0xff]
    %v5238 = vld [vmem:[%s25 + $0x18] sm:$0xff]
    %v5239 = vld [vmem:[%s25 + $0x20] sm:$0xff]
    %v5240 = vld [vmem:[%s25 + $0x28] sm:$0xff]
    %v5241 = vld [vmem:[%s25 + $0x30] sm:$0xff]
    %v5243 = vsel %vm3143, %v5225, 0
    %5245 = vmatprep.subr.mxu0 0.0
    %5246 = vmatpush1.msra.mxu0 %v5235
    %5247 = vmatprep.subr.mxu0 0.0
    %5248 = vmatpush1.msra.mxu0 %v5236
    %5249 = vmatprep.subr.mxu0 0.0
    %5250 = vmatpush1.msra.mxu0 %v5237
    %5251 = vmatprep.subr.mxu0 0.0
    %5252 = vmatpush1.msra.mxu0 %v5238
    %5253 = vmatprep.subr.mxu0 0.0
    %5254 = vmatpush1.msra.mxu0 %v5239
    %5255 = vmatprep.subr.mxu0 0.0
    %5256 = vmatpush1.msra.mxu0 %v5240
    %5257 = vmatprep.subr.mxu0 0.0
    %5258 = vmatpush1.msra.mxu0 %v5241
    %5259 = vmatprep.subr.mxu0 0.0
    %5260 = vmatpush1.msra.mxu0 0.0
    %5261 = vmatprep.subr.mxu0 0.0
    %5262 = vmatpush1.msra.mxu0 0.0
    %5263 = vmatprep.subr.mxu0 0.0
    %5264 = vmatpush1.msra.mxu0 0.0
    %5265 = vmatprep.subr.mxu0 0.0
    %5266 = vmatpush1.msra.mxu0 0.0
    %5267 = vmatprep.subr.mxu0 0.0
    %5268 = vmatpush1.msra.mxu0 0.0
    %5269 = vmatprep.subr.mxu0 0.0
    %5270 = vmatpush1.msra.mxu0 0.0
    %5271 = vmatprep.subr.mxu0 0.0
    %5272 = vmatpush1.msra.mxu0 0.0
    %5273 = vmatprep.subr.mxu0 0.0
    %5274 = vmatpush1.msra.mxu0 0.0
    %5275 = vmatprep.subr.mxu0 0.0
    %5276 = vmatpush1.msra.mxu0 0.0
    %5277 = vmatprep.subr.mxu0 0.0
    %5278 = vmatpush1.msra.mxu0 0.0
    %5279 = vmatprep.subr.mxu0 0.0
    %5280 = vmatpush1.msra.mxu0 0.0
    %5281 = vmatprep.subr.mxu0 0.0
    %5282 = vmatpush1.msra.mxu0 0.0
    %5283 = vmatprep.subr.mxu0 0.0
    %5284 = vmatpush1.msra.mxu0 0.0
    %5285 = vmatprep.subr.mxu0 0.0
    %5286 = vmatpush1.msra.mxu0 0.0
    %5287 = vmatprep.subr.mxu0 0.0
    %5288 = vmatpush1.msra.mxu0 0.0
    %5289 = vmatprep.subr.mxu0 0.0
    %5290 = vmatpush1.msra.mxu0 0.0
    %5291 = vmatprep.subr.mxu0 0.0
    %5292 = vmatpush1.msra.mxu0 0.0
    %5293 = vmatprep.subr.mxu0 0.0
    %5294 = vmatpush1.msra.mxu0 0.0
    %5295 = vmatprep.subr.mxu0 0.0
    %5296 = vmatpush1.msra.mxu0 0.0
    %5297 = vmatprep.subr.mxu0 0.0
    %5298 = vmatpush1.msra.mxu0 0.0
    %5299 = vmatprep.subr.mxu0 0.0
    %5300 = vmatpush1.msra.mxu0 0.0
    %5301 = vmatprep.subr.mxu0 0.0
    %5302 = vmatpush1.msra.mxu0 0.0
    %5303 = vmatprep.subr.mxu0 0.0
    %5304 = vmatpush1.msra.mxu0 0.0
    %5305 = vmatprep.subr.mxu0 0.0
    %5306 = vmatpush1.msra.mxu0 0.0
    %5307 = vmatprep.subr.mxu0 0.0
    %5308 = vmatpush1.msra.mxu0 0.0
    %5309 = vmatprep.mubr.f32.mxu0 0.0
    %5310 = vmatmul.mubr.f32.gmra.mrb[0].mxu0 %v5243
    %v5311 = vpop.f32.mrb[0].mxu0
    %v5312 = vadd.f32 0.0, %v5311
    %v5313 = vpop.f32.mrb[0].mxu0
    %5314 = vdwg.mxu0
    %v5315 = vadd.f32 %v5234, %v5312
    %s5316 = scalar_lea.vmem %s25, 56
    %v5317 = vld [vmem:[%s5316] sm:$0xff]
    %v5318 = vld [vmem:[%s5316 + $0x8] sm:$0xff]
    %v5319 = vld [vmem:[%s5316 + $0x10] sm:$0xff]
    %v5320 = vld [vmem:[%s5316 + $0x18] sm:$0xff]
    %v5321 = vld [vmem:[%s5316 + $0x20] sm:$0xff]
    %v5322 = vld [vmem:[%s5316 + $0x28] sm:$0xff]
    %v5323 = vld [vmem:[%s5316 + $0x30] sm:$0xff]
    %v5324 = vrot.slane %v5225, 2
    %v5325 = vsel %vm3143, %v5324, 0
    %5327 = vmatprep.subr.mxu0 0.0
    %5328 = vmatpush1.msra.mxu0 %v5317
    %5329 = vmatprep.subr.mxu0 0.0
    %5330 = vmatpush1.msra.mxu0 %v5318
    %5331 = vmatprep.subr.mxu0 0.0
    %5332 = vmatpush1.msra.mxu0 %v5319
    %5333 = vmatprep.subr.mxu0 0.0
    %5334 = vmatpush1.msra.mxu0 %v5320
    %5335 = vmatprep.subr.mxu0 0.0
    %5336 = vmatpush1.msra.mxu0 %v5321
    %5337 = vmatprep.subr.mxu0 0.0
    %5338 = vmatpush1.msra.mxu0 %v5322
    %5339 = vmatprep.subr.mxu0 0.0
    %5340 = vmatpush1.msra.mxu0 %v5323
    %5341 = vmatprep.subr.mxu0 0.0
    %5342 = vmatpush1.msra.mxu0 0.0
    %5343 = vmatprep.subr.mxu0 0.0
    %5344 = vmatpush1.msra.mxu0 0.0
    %5345 = vmatprep.subr.mxu0 0.0
    %5346 = vmatpush1.msra.mxu0 0.0
    %5347 = vmatprep.subr.mxu0 0.0
    %5348 = vmatpush1.msra.mxu0 0.0
    %5349 = vmatprep.subr.mxu0 0.0
    %5350 = vmatpush1.msra.mxu0 0.0
    %5351 = vmatprep.subr.mxu0 0.0
    %5352 = vmatpush1.msra.mxu0 0.0
    %5353 = vmatprep.subr.mxu0 0.0
    %5354 = vmatpush1.msra.mxu0 0.0
    %5355 = vmatprep.subr.mxu0 0.0
    %5356 = vmatpush1.msra.mxu0 0.0
    %5357 = vmatprep.subr.mxu0 0.0
    %5358 = vmatpush1.msra.mxu0 0.0
    %5359 = vmatprep.subr.mxu0 0.0
    %5360 = vmatpush1.msra.mxu0 0.0
    %5361 = vmatprep.subr.mxu0 0.0
    %5362 = vmatpush1.msra.mxu0 0.0
    %5363 = vmatprep.subr.mxu0 0.0
    %5364 = vmatpush1.msra.mxu0 0.0
    %5365 = vmatprep.subr.mxu0 0.0
    %5366 = vmatpush1.msra.mxu0 0.0
    %5367 = vmatprep.subr.mxu0 0.0
    %5368 = vmatpush1.msra.mxu0 0.0
    %5369 = vmatprep.subr.mxu0 0.0
    %5370 = vmatpush1.msra.mxu0 0.0
    %5371 = vmatprep.subr.mxu0 0.0
    %5372 = vmatpush1.msra.mxu0 0.0
    %5373 = vmatprep.subr.mxu0 0.0
    %5374 = vmatpush1.msra.mxu0 0.0
    %5375 = vmatprep.subr.mxu0 0.0
    %5376 = vmatpush1.msra.mxu0 0.0
    %5377 = vmatprep.subr.mxu0 0.0
    %5378 = vmatpush1.msra.mxu0 0.0
    %5379 = vmatprep.subr.mxu0 0.0
    %5380 = vmatpush1.msra.mxu0 0.0
    %5381 = vmatprep.subr.mxu0 0.0
    %5382 = vmatpush1.msra.mxu0 0.0
    %5383 = vmatprep.subr.mxu0 0.0
    %5384 = vmatpush1.msra.mxu0 0.0
    %5385 = vmatprep.subr.mxu0 0.0
    %5386 = vmatpush1.msra.mxu0 0.0
    %5387 = vmatprep.subr.mxu0 0.0
    %5388 = vmatpush1.msra.mxu0 0.0
    %5389 = vmatprep.subr.mxu0 0.0
    %5390 = vmatpush1.msra.mxu0 0.0
    %5391 = vmatprep.mubr.f32.mxu0 0.0
    %5392 = vmatmul.mubr.f32.gmra.mrb[0].mxu0 %v5325
    %v5393 = vpop.f32.mrb[0].mxu0
    %v5394 = vadd.f32 0.0, %v5393
    %v5395 = vpop.f32.mrb[0].mxu0
    %5396 = vdwg.mxu0
    %v5397 = vadd.f32 %v5315, %v5394
    %s5398 = scalar_lea.vmem %s25, 112
    %v5399 = vld [vmem:[%s5398] sm:$0xff]
    %v5400 = vld [vmem:[%s5398 + $0x8] sm:$0xff]
    %v5401 = vld [vmem:[%s5398 + $0x10] sm:$0xff]
    %v5402 = vld [vmem:[%s5398 + $0x18] sm:$0xff]
    %v5403 = vld [vmem:[%s5398 + $0x20] sm:$0xff]
    %v5404 = vld [vmem:[%s5398 + $0x28] sm:$0xff]
    %v5405 = vld [vmem:[%s5398 + $0x30] sm:$0xff]
    %v5406 = vrot.slane %v5225, 4
    %v5407 = vsel %vm3143, %v5406, 0
    %5409 = vmatprep.subr.mxu0 0.0
    %5410 = vmatpush1.msra.mxu0 %v5399
    %5411 = vmatprep.subr.mxu0 0.0
    %5412 = vmatpush1.msra.mxu0 %v5400
    %5413 = vmatprep.subr.mxu0 0.0
    %5414 = vmatpush1.msra.mxu0 %v5401
    %5415 = vmatprep.subr.mxu0 0.0
    %5416 = vmatpush1.msra.mxu0 %v5402
    %5417 = vmatprep.subr.mxu0 0.0
    %5418 = vmatpush1.msra.mxu0 %v5403
    %5419 = vmatprep.subr.mxu0 0.0
    %5420 = vmatpush1.msra.mxu0 %v5404
    %5421 = vmatprep.subr.mxu0 0.0
    %5422 = vmatpush1.msra.mxu0 %v5405
    %5423 = vmatprep.subr.mxu0 0.0
    %5424 = vmatpush1.msra.mxu0 0.0
    %5425 = vmatprep.subr.mxu0 0.0
    %5426 = vmatpush1.msra.mxu0 0.0
    %5427 = vmatprep.subr.mxu0 0.0
    %5428 = vmatpush1.msra.mxu0 0.0
    %5429 = vmatprep.subr.mxu0 0.0
    %5430 = vmatpush1.msra.mxu0 0.0
    %5431 = vmatprep.subr.mxu0 0.0
    %5432 = vmatpush1.msra.mxu0 0.0
    %5433 = vmatprep.subr.mxu0 0.0
    %5434 = vmatpush1.msra.mxu0 0.0
    %5435 = vmatprep.subr.mxu0 0.0
    %5436 = vmatpush1.msra.mxu0 0.0
    %5437 = vmatprep.subr.mxu0 0.0
    %5438 = vmatpush1.msra.mxu0 0.0
    %5439 = vmatprep.subr.mxu0 0.0
    %5440 = vmatpush1.msra.mxu0 0.0
    %5441 = vmatprep.subr.mxu0 0.0
    %5442 = vmatpush1.msra.mxu0 0.0
    %5443 = vmatprep.subr.mxu0 0.0
    %5444 = vmatpush1.msra.mxu0 0.0
    %5445 = vmatprep.subr.mxu0 0.0
    %5446 = vmatpush1.msra.mxu0 0.0
    %5447 = vmatprep.subr.mxu0 0.0
    %5448 = vmatpush1.msra.mxu0 0.0
    %5449 = vmatprep.subr.mxu0 0.0
    %5450 = vmatpush1.msra.mxu0 0.0
    %5451 = vmatprep.subr.mxu0 0.0
    %5452 = vmatpush1.msra.mxu0 0.0
    %5453 = vmatprep.subr.mxu0 0.0
    %5454 = vmatpush1.msra.mxu0 0.0
    %5455 = vmatprep.subr.mxu0 0.0
    %5456 = vmatpush1.msra.mxu0 0.0
    %5457 = vmatprep.subr.mxu0 0.0
    %5458 = vmatpush1.msra.mxu0 0.0
    %5459 = vmatprep.subr.mxu0 0.0
    %5460 = vmatpush1.msra.mxu0 0.0
    %5461 = vmatprep.subr.mxu0 0.0
    %5462 = vmatpush1.msra.mxu0 0.0
    %5463 = vmatprep.subr.mxu0 0.0
    %5464 = vmatpush1.msra.mxu0 0.0
    %5465 = vmatprep.subr.mxu0 0.0
    %5466 = vmatpush1.msra.mxu0 0.0
    %5467 = vmatprep.subr.mxu0 0.0
    %5468 = vmatpush1.msra.mxu0 0.0
    %5469 = vmatprep.subr.mxu0 0.0
    %5470 = vmatpush1.msra.mxu0 0.0
    %5471 = vmatprep.subr.mxu0 0.0
    %5472 = vmatpush1.msra.mxu0 0.0
    %5473 = vmatprep.mubr.f32.mxu0 0.0
    %5474 = vmatmul.mubr.f32.gmra.mrb[0].mxu0 %v5407
    %v5475 = vpop.f32.mrb[0].mxu0
    %v5476 = vadd.f32 0.0, %v5475
    %v5477 = vpop.f32.mrb[0].mxu0
    %5478 = vdwg.mxu0
    %v5479 = vadd.f32 %v5397, %v5476
    %s5480 = scalar_lea.vmem %s25, 168
    %v5481 = vld [vmem:[%s5480] sm:$0xff]
    %v5482 = vld [vmem:[%s5480 + $0x8] sm:$0xff]
    %v5483 = vld [vmem:[%s5480 + $0x10] sm:$0xff]
    %v5484 = vld [vmem:[%s5480 + $0x18] sm:$0xff]
    %v5485 = vld [vmem:[%s5480 + $0x20] sm:$0xff]
    %v5486 = vld [vmem:[%s5480 + $0x28] sm:$0xff]
    %v5487 = vld [vmem:[%s5480 + $0x30] sm:$0xff]
    %v5488 = vrot.slane %v5225, 6
    %v5489 = vsel %vm3143, %v5488, 0
    %5491 = vmatprep.subr.mxu0 0.0
    %5492 = vmatpush1.msra.mxu0 %v5481
    %5493 = vmatprep.subr.mxu0 0.0
    %5494 = vmatpush1.msra.mxu0 %v5482
    %5495 = vmatprep.subr.mxu0 0.0
    %5496 = vmatpush1.msra.mxu0 %v5483
    %5497 = vmatprep.subr.mxu0 0.0
    %5498 = vmatpush1.msra.mxu0 %v5484
    %5499 = vmatprep.subr.mxu0 0.0
    %5500 = vmatpush1.msra.mxu0 %v5485
    %5501 = vmatprep.subr.mxu0 0.0
    %5502 = vmatpush1.msra.mxu0 %v5486
    %5503 = vmatprep.subr.mxu0 0.0
    %5504 = vmatpush1.msra.mxu0 %v5487
    %5505 = vmatprep.subr.mxu0 0.0
    %5506 = vmatpush1.msra.mxu0 0.0
    %5507 = vmatprep.subr.mxu0 0.0
    %5508 = vmatpush1.msra.mxu0 0.0
    %5509 = vmatprep.subr.mxu0 0.0
    %5510 = vmatpush1.msra.mxu0 0.0
    %5511 = vmatprep.subr.mxu0 0.0
    %5512 = vmatpush1.msra.mxu0 0.0
    %5513 = vmatprep.subr.mxu0 0.0
    %5514 = vmatpush1.msra.mxu0 0.0
    %5515 = vmatprep.subr.mxu0 0.0
    %5516 = vmatpush1.msra.mxu0 0.0
    %5517 = vmatprep.subr.mxu0 0.0
    %5518 = vmatpush1.msra.mxu0 0.0
    %5519 = vmatprep.subr.mxu0 0.0
    %5520 = vmatpush1.msra.mxu0 0.0
    %5521 = vmatprep.subr.mxu0 0.0
    %5522 = vmatpush1.msra.mxu0 0.0
    %5523 = vmatprep.subr.mxu0 0.0
    %5524 = vmatpush1.msra.mxu0 0.0
    %5525 = vmatprep.subr.mxu0 0.0
    %5526 = vmatpush1.msra.mxu0 0.0
    %5527 = vmatprep.subr.mxu0 0.0
    %5528 = vmatpush1.msra.mxu0 0.0
    %5529 = vmatprep.subr.mxu0 0.0
    %5530 = vmatpush1.msra.mxu0 0.0
    %5531 = vmatprep.subr.mxu0 0.0
    %5532 = vmatpush1.msra.mxu0 0.0
    %5533 = vmatprep.subr.mxu0 0.0
    %5534 = vmatpush1.msra.mxu0 0.0
    %5535 = vmatprep.subr.mxu0 0.0
    %5536 = vmatpush1.msra.mxu0 0.0
    %5537 = vmatprep.subr.mxu0 0.0
    %5538 = vmatpush1.msra.mxu0 0.0
    %5539 = vmatprep.subr.mxu0 0.0
    %5540 = vmatpush1.msra.mxu0 0.0
    %5541 = vmatprep.subr.mxu0 0.0
    %5542 = vmatpush1.msra.mxu0 0.0
    %5543 = vmatprep.subr.mxu0 0.0
    %5544 = vmatpush1.msra.mxu0 0.0
    %5545 = vmatprep.subr.mxu0 0.0
    %5546 = vmatpush1.msra.mxu0 0.0
    %5547 = vmatprep.subr.mxu0 0.0
    %5548 = vmatpush1.msra.mxu0 0.0
    %5549 = vmatprep.subr.mxu0 0.0
    %5550 = vmatpush1.msra.mxu0 0.0
    %5551 = vmatprep.subr.mxu0 0.0
    %5552 = vmatpush1.msra.mxu0 0.0
    %5553 = vmatprep.subr.mxu0 0.0
    %5554 = vmatpush1.msra.mxu0 0.0
    %5555 = vmatprep.mubr.f32.mxu0 0.0
    %5556 = vmatmul.mubr.f32.gmra.mrb[0].mxu0 %v5489
    %v5557 = vpop.f32.mrb[0].mxu0
    %v5558 = vadd.f32 0.0, %v5557
    %v5559 = vpop.f32.mrb[0].mxu0
    %5560 = vdwg.mxu0
    %v5561 = vadd.f32 %v5479, %v5558
    %s5562 = scalar_lea.vmem %s25, 224
    %v5563 = vld [vmem:[%s5562] sm:$0xff]
    %v5564 = vld [vmem:[%s5562 + $0x8] sm:$0xff]
    %v5565 = vld [vmem:[%s5562 + $0x10] sm:$0xff]
    %v5566 = vld [vmem:[%s5562 + $0x18] sm:$0xff]
    %v5567 = vld [vmem:[%s5562 + $0x20] sm:$0xff]
    %v5568 = vld [vmem:[%s5562 + $0x28] sm:$0xff]
    %v5569 = vld [vmem:[%s5562 + $0x30] sm:$0xff]
    %v5571 = vsel %vm3143, %v5226, 0
    %5573 = vmatprep.subr.mxu0 0.0
    %5574 = vmatpush1.msra.mxu0 %v5563
    %5575 = vmatprep.subr.mxu0 0.0
    %5576 = vmatpush1.msra.mxu0 %v5564
    %5577 = vmatprep.subr.mxu0 0.0
    %5578 = vmatpush1.msra.mxu0 %v5565
    %5579 = vmatprep.subr.mxu0 0.0
    %5580 = vmatpush1.msra.mxu0 %v5566
    %5581 = vmatprep.subr.mxu0 0.0
    %5582 = vmatpush1.msra.mxu0 %v5567
    %5583 = vmatprep.subr.mxu0 0.0
    %5584 = vmatpush1.msra.mxu0 %v5568
    %5585 = vmatprep.subr.mxu0 0.0
    %5586 = vmatpush1.msra.mxu0 %v5569
    %5587 = vmatprep.subr.mxu0 0.0
    %5588 = vmatpush1.msra.mxu0 0.0
    %5589 = vmatprep.subr.mxu0 0.0
    %5590 = vmatpush1.msra.mxu0 0.0
    %5591 = vmatprep.subr.mxu0 0.0
    %5592 = vmatpush1.msra.mxu0 0.0
    %5593 = vmatprep.subr.mxu0 0.0
    %5594 = vmatpush1.msra.mxu0 0.0
    %5595 = vmatprep.subr.mxu0 0.0
    %5596 = vmatpush1.msra.mxu0 0.0
    %5597 = vmatprep.subr.mxu0 0.0
    %5598 = vmatpush1.msra.mxu0 0.0
    %5599 = vmatprep.subr.mxu0 0.0
    %5600 = vmatpush1.msra.mxu0 0.0
    %5601 = vmatprep.subr.mxu0 0.0
    %5602 = vmatpush1.msra.mxu0 0.0
    %5603 = vmatprep.subr.mxu0 0.0
    %5604 = vmatpush1.msra.mxu0 0.0
    %5605 = vmatprep.subr.mxu0 0.0
    %5606 = vmatpush1.msra.mxu0 0.0
    %5607 = vmatprep.subr.mxu0 0.0
    %5608 = vmatpush1.msra.mxu0 0.0
    %5609 = vmatprep.subr.mxu0 0.0
    %5610 = vmatpush1.msra.mxu0 0.0
    %5611 = vmatprep.subr.mxu0 0.0
    %5612 = vmatpush1.msra.mxu0 0.0
    %5613 = vmatprep.subr.mxu0 0.0
    %5614 = vmatpush1.msra.mxu0 0.0
    %5615 = vmatprep.subr.mxu0 0.0
    %5616 = vmatpush1.msra.mxu0 0.0
    %5617 = vmatprep.subr.mxu0 0.0
    %5618 = vmatpush1.msra.mxu0 0.0
    %5619 = vmatprep.subr.mxu0 0.0
    %5620 = vmatpush1.msra.mxu0 0.0
    %5621 = vmatprep.subr.mxu0 0.0
    %5622 = vmatpush1.msra.mxu0 0.0
    %5623 = vmatprep.subr.mxu0 0.0
    %5624 = vmatpush1.msra.mxu0 0.0
    %5625 = vmatprep.subr.mxu0 0.0
    %5626 = vmatpush1.msra.mxu0 0.0
    %5627 = vmatprep.subr.mxu0 0.0
    %5628 = vmatpush1.msra.mxu0 0.0
    %5629 = vmatprep.subr.mxu0 0.0
    %5630 = vmatpush1.msra.mxu0 0.0
    %5631 = vmatprep.subr.mxu0 0.0
    %5632 = vmatpush1.msra.mxu0 0.0
    %5633 = vmatprep.subr.mxu0 0.0
    %5634 = vmatpush1.msra.mxu0 0.0
    %5635 = vmatprep.subr.mxu0 0.0
    %5636 = vmatpush1.msra.mxu0 0.0
    %5637 = vmatprep.mubr.f32.mxu0 0.0
    %5638 = vmatmul.mubr.f32.gmra.mrb[0].mxu0 %v5571
    %v5639 = vpop.f32.mrb[0].mxu0
    %v5640 = vadd.f32 0.0, %v5639
    %v5641 = vpop.f32.mrb[0].mxu0
    %5642 = vdwg.mxu0
    %v5643 = vadd.f32 %v5561, %v5640
    %s5644 = scalar_lea.vmem %s25, 280
    %v5645 = vld [vmem:[%s5644] sm:$0xff]
    %v5646 = vld [vmem:[%s5644 + $0x8] sm:$0xff]
    %v5647 = vld [vmem:[%s5644 + $0x10] sm:$0xff]
    %v5648 = vld [vmem:[%s5644 + $0x18] sm:$0xff]
    %v5649 = vld [vmem:[%s5644 + $0x20] sm:$0xff]
    %v5650 = vld [vmem:[%s5644 + $0x28] sm:$0xff]
    %v5651 = vld [vmem:[%s5644 + $0x30] sm:$0xff]
    %v5652 = vrot.slane %v5226, 2
    %v5653 = vsel %vm3143, %v5652, 0
    %5655 = vmatprep.subr.mxu0 0.0
    %5656 = vmatpush1.msra.mxu0 %v5645
    %5657 = vmatprep.subr.mxu0 0.0
    %5658 = vmatpush1.msra.mxu0 %v5646
    %5659 = vmatprep.subr.mxu0 0.0
    %5660 = vmatpush1.msra.mxu0 %v5647
    %5661 = vmatprep.subr.mxu0 0.0
    %5662 = vmatpush1.msra.mxu0 %v5648
    %5663 = vmatprep.subr.mxu0 0.0
    %5664 = vmatpush1.msra.mxu0 %v5649
    %5665 = vmatprep.subr.mxu0 0.0
    %5666 = vmatpush1.msra.mxu0 %v5650
    %5667 = vmatprep.subr.mxu0 0.0
    %5668 = vmatpush1.msra.mxu0 %v5651
    %5669 = vmatprep.subr.mxu0 0.0
    %5670 = vmatpush1.msra.mxu0 0.0
    %5671 = vmatprep.subr.mxu0 0.0
    %5672 = vmatpush1.msra.mxu0 0.0
    %5673 = vmatprep.subr.mxu0 0.0
    %5674 = vmatpush1.msra.mxu0 0.0
    %5675 = vmatprep.subr.mxu0 0.0
    %5676 = vmatpush1.msra.mxu0 0.0
    %5677 = vmatprep.subr.mxu0 0.0
    %5678 = vmatpush1.msra.mxu0 0.0
    %5679 = vmatprep.subr.mxu0 0.0
    %5680 = vmatpush1.msra.mxu0 0.0
    %5681 = vmatprep.subr.mxu0 0.0
    %5682 = vmatpush1.msra.mxu0 0.0
    %5683 = vmatprep.subr.mxu0 0.0
    %5684 = vmatpush1.msra.mxu0 0.0
    %5685 = vmatprep.subr.mxu0 0.0
    %5686 = vmatpush1.msra.mxu0 0.0
    %5687 = vmatprep.subr.mxu0 0.0
    %5688 = vmatpush1.msra.mxu0 0.0
    %5689 = vmatprep.subr.mxu0 0.0
    %5690 = vmatpush1.msra.mxu0 0.0
    %5691 = vmatprep.subr.mxu0 0.0
    %5692 = vmatpush1.msra.mxu0 0.0
    %5693 = vmatprep.subr.mxu0 0.0
    %5694 = vmatpush1.msra.mxu0 0.0
    %5695 = vmatprep.subr.mxu0 0.0
    %5696 = vmatpush1.msra.mxu0 0.0
    %5697 = vmatprep.subr.mxu0 0.0
    %5698 = vmatpush1.msra.mxu0 0.0
    %5699 = vmatprep.subr.mxu0 0.0
    %5700 = vmatpush1.msra.mxu0 0.0
    %5701 = vmatprep.subr.mxu0 0.0
    %5702 = vmatpush1.msra.mxu0 0.0
    %5703 = vmatprep.subr.mxu0 0.0
    %5704 = vmatpush1.msra.mxu0 0.0
    %5705 = vmatprep.subr.mxu0 0.0
    %5706 = vmatpush1.msra.mxu0 0.0
    %5707 = vmatprep.subr.mxu0 0.0
    %5708 = vmatpush1.msra.mxu0 0.0
    %5709 = vmatprep.subr.mxu0 0.0
    %5710 = vmatpush1.msra.mxu0 0.0
    %5711 = vmatprep.subr.mxu0 0.0
    %5712 = vmatpush1.msra.mxu0 0.0
    %5713 = vmatprep.subr.mxu0 0.0
    %5714 = vmatpush1.msra.mxu0 0.0
    %5715 = vmatprep.subr.mxu0 0.0
    %5716 = vmatpush1.msra.mxu0 0.0
    %5717 = vmatprep.subr.mxu0 0.0
    %5718 = vmatpush1.msra.mxu0 0.0
    %5719 = vmatprep.mubr.f32.mxu0 0.0
    %5720 = vmatmul.mubr.f32.gmra.mrb[0].mxu0 %v5653
    %v5721 = vpop.f32.mrb[0].mxu0
    %v5722 = vadd.f32 0.0, %v5721
    %v5723 = vpop.f32.mrb[0].mxu0
    %5724 = vdwg.mxu0
    %v5725 = vadd.f32 %v5643, %v5722
    %s5726 = scalar_lea.vmem %s25, 336
    %v5727 = vld [vmem:[%s5726] sm:$0xff]
    %v5728 = vld [vmem:[%s5726 + $0x8] sm:$0xff]
    %v5729 = vld [vmem:[%s5726 + $0x10] sm:$0xff]
    %v5730 = vld [vmem:[%s5726 + $0x18] sm:$0xff]
    %v5731 = vld [vmem:[%s5726 + $0x20] sm:$0xff]
    %v5732 = vld [vmem:[%s5726 + $0x28] sm:$0xff]
    %v5733 = vld [vmem:[%s5726 + $0x30] sm:$0xff]
    %v5734 = vrot.slane %v5226, 4
    %v5735 = vsel %vm3143, %v5734, 0
    %5737 = vmatprep.subr.mxu0 0.0
    %5738 = vmatpush1.msra.mxu0 %v5727
    %5739 = vmatprep.subr.mxu0 0.0
    %5740 = vmatpush1.msra.mxu0 %v5728
    %5741 = vmatprep.subr.mxu0 0.0
    %5742 = vmatpush1.msra.mxu0 %v5729
    %5743 = vmatprep.subr.mxu0 0.0
    %5744 = vmatpush1.msra.mxu0 %v5730
    %5745 = vmatprep.subr.mxu0 0.0
    %5746 = vmatpush1.msra.mxu0 %v5731
    %5747 = vmatprep.subr.mxu0 0.0
    %5748 = vmatpush1.msra.mxu0 %v5732
    %5749 = vmatprep.subr.mxu0 0.0
    %5750 = vmatpush1.msra.mxu0 %v5733
    %5751 = vmatprep.subr.mxu0 0.0
    %5752 = vmatpush1.msra.mxu0 0.0
    %5753 = vmatprep.subr.mxu0 0.0
    %5754 = vmatpush1.msra.mxu0 0.0
    %5755 = vmatprep.subr.mxu0 0.0
    %5756 = vmatpush1.msra.mxu0 0.0
    %5757 = vmatprep.subr.mxu0 0.0
    %5758 = vmatpush1.msra.mxu0 0.0
    %5759 = vmatprep.subr.mxu0 0.0
    %5760 = vmatpush1.msra.mxu0 0.0
    %5761 = vmatprep.subr.mxu0 0.0
    %5762 = vmatpush1.msra.mxu0 0.0
    %5763 = vmatprep.subr.mxu0 0.0
    %5764 = vmatpush1.msra.mxu0 0.0
    %5765 = vmatprep.subr.mxu0 0.0
    %5766 = vmatpush1.msra.mxu0 0.0
    %5767 = vmatprep.subr.mxu0 0.0
    %5768 = vmatpush1.msra.mxu0 0.0
    %5769 = vmatprep.subr.mxu0 0.0
    %5770 = vmatpush1.msra.mxu0 0.0
    %5771 = vmatprep.subr.mxu0 0.0
    %5772 = vmatpush1.msra.mxu0 0.0
    %5773 = vmatprep.subr.mxu0 0.0
    %5774 = vmatpush1.msra.mxu0 0.0
    %5775 = vmatprep.subr.mxu0 0.0
    %5776 = vmatpush1.msra.mxu0 0.0
    %5777 = vmatprep.subr.mxu0 0.0
    %5778 = vmatpush1.msra.mxu0 0.0
    %5779 = vmatprep.subr.mxu0 0.0
    %5780 = vmatpush1.msra.mxu0 0.0
    %5781 = vmatprep.subr.mxu0 0.0
    %5782 = vmatpush1.msra.mxu0 0.0
    %5783 = vmatprep.subr.mxu0 0.0
    %5784 = vmatpush1.msra.mxu0 0.0
    %5785 = vmatprep.subr.mxu0 0.0
    %5786 = vmatpush1.msra.mxu0 0.0
    %5787 = vmatprep.subr.mxu0 0.0
    %5788 = vmatpush1.msra.mxu0 0.0
    %5789 = vmatprep.subr.mxu0 0.0
    %5790 = vmatpush1.msra.mxu0 0.0
    %5791 = vmatprep.subr.mxu0 0.0
    %5792 = vmatpush1.msra.mxu0 0.0
    %5793 = vmatprep.subr.mxu0 0.0
    %5794 = vmatpush1.msra.mxu0 0.0
    %5795 = vmatprep.subr.mxu0 0.0
    %5796 = vmatpush1.msra.mxu0 0.0
    %5797 = vmatprep.subr.mxu0 0.0
    %5798 = vmatpush1.msra.mxu0 0.0
    %5799 = vmatprep.subr.mxu0 0.0
    %5800 = vmatpush1.msra.mxu0 0.0
    %5801 = vmatprep.mubr.f32.mxu0 0.0
    %5802 = vmatmul.mubr.f32.gmra.mrb[0].mxu0 %v5735
    %v5803 = vpop.f32.mrb[0].mxu0
    %v5804 = vadd.f32 0.0, %v5803
    %v5805 = vpop.f32.mrb[0].mxu0
    %5806 = vdwg.mxu0
    %v5807 = vadd.f32 %v5725, %v5804
    %v5808 = vmul.f32 %v5807, 0.01
    %v5809 = vmax.f32 %v5807, %v5808
    %vm5810 = vcmask 123904
    %5811 = vst.msk [vmem:[#allocation30] sm:$0x3] %vm5810, %v5809
    %v5812 = vmul.f32 %v5807, 1.442695
    %v5813 = vpow.pop %v5812
    %5815 = vrot.lane.b32.xlu0 %v5813, 112
    %v5816 = vpop.permute.xlu0 %5815
    %5818 = vst.msk [vmem:[#allocation31] sm:$0x3] %vm5810, %v5816
    // Predicated region
    $region174: #{tpu_custom_call.1} parent=1 // pred_check
      _
    $region175: #{tpu_custom_call.1} parent=1 // pred_check_branch
      %5820 = sbr.rel (0) target = $region177
    $region176: #{tpu_custom_call.1} parent=1 // pred_region
      %s5822 = ssub.s32 32, 32
      %5823 = vsyncadd [#allocation6], %s5822
      %s5825 = sshll.u32 [#allocation30], 4
      %s5826 = int_to_ptr.vmem [resolvable:$true] %s5825
      %5828 = dma.vmem_to_hbm [thread:$0]  %s5826, 32, %s27, [#allocation6]
    $region177: #{tpu_custom_call.1} parent=1 // pred_fallthru
      _
    // Predicated region
    $region178: #{tpu_custom_call.1} parent=1 // pred_check
      _
    $region179: #{tpu_custom_call.1} parent=1 // pred_check_branch
      %5830 = sbr.rel (0) target = $region181
    $region180: #{tpu_custom_call.1} parent=1 // pred_region
      %s5832 = ssub.s32 32, 32
      %5833 = vsyncadd [#allocation32], %s5832
      %s5835 = sshll.u32 [#allocation31], 4
      %s5836 = int_to_ptr.vmem [resolvable:$true] %s5835
      %5838 = dma.vmem_to_hbm [thread:$0]  %s5836, 32, %s28, [#allocation32]
    $region181: #{tpu_custom_call.1} parent=1 // pred_fallthru
      _
    // Predicated region
    $region182: #{tpu_custom_call.1} parent=1 // pred_check
      _
    $region183: #{tpu_custom_call.1} parent=1 // pred_check_branch
      %5840 = sbr.rel (0) target = $region185
    $region184: #{tpu_custom_call.1} parent=1 // pred_region
      %5841 = dma.done [#allocation6], 32
    $region185: #{tpu_custom_call.1} parent=1 // pred_fallthru
      _
    // Predicated region
    $region186: #{tpu_custom_call.1} parent=1 // pred_check
      _
    $region187: #{tpu_custom_call.1} parent=1 // pred_check_branch
      %5843 = sbr.rel (0) target = $region189
    $region188: #{tpu_custom_call.1} parent=1 // pred_region
      %5844 = dma.done [#allocation32], 32
    $region189: #{tpu_custom_call.1} parent=1 // pred_fallthru
      _
    %5845 = vsyncpa [#allocation5], 1
    %5846 = vsyncpa [#allocation8], 1
    %5847 = vsyncpa [#allocation11], 1
    %5848 = vsyncpa [#allocation14], 1
    %5849 = vsyncpa [#allocation17], 1
    %5850 = vsyncpa [#allocation20], 1
    %5851 = vsyncpa [#allocation23], 1
    %5852 = vsyncpa [#allocation26], 1
    %5853 = vsyncpa [#allocation29], 1
    %5854 = vsyncpa [#allocation6], 1
    %5855 = vsyncpa [#allocation32], 1

</llo_original>
